<compile_context>
chip_gen: v7x
topology: tpu7x:2x2x1
jax: 0.10.0
libtpu: 0.0.40
codegen_flags: <defaults>
</compile_context>

<pallas_src>
import functools

import jax
import jax.numpy as jnp
from jax.experimental import pallas as pl
from jax.experimental.pallas import tpu as pltpu


_IN_DIM = 512 * 7 * 7      # 25088
_TN = 512                  # N tile: j=0 -> orientation+confidence, j=1 -> dimension, j=2 -> depth_bias
_OUT_PAD = 128             # lane-padded per-tile output width


def _pick_tk(K, target):
    """Largest divisor of K that is a multiple of 128 and <= target."""
    assert K % 128 == 0, "K must be a multiple of 128"
    best = None
    for mult in range(1, K // 128 + 1):
        cand = 128 * mult
        if cand <= target and K % cand == 0:
            best = cand
    assert best is not None
    return best


# ----------------------------------------------------------------------------
# Fused kernel: for each N tile j
#   acc = b1_j                                   (k == 0)
#   acc += x[:, k-block] @ W1_j[k-block]          (bf16 weights, f32 acc)
#   epilogue (k == last):
#     h1  = relu(acc)
#     h2  = relu(h1 @ W2_j + b2_j)
#     out = h2 @ W3_j + b3_j   -> o[j]
# ----------------------------------------------------------------------------
def _fused_model_kernel(x_ref, w1_ref, b1_ref, w2_ref, b2_ref, w3_ref, b3_ref,
                        o_ref, acc_ref):
    k = pl.program_id(1)
    nk = pl.num_programs(1)
    tk = w1_ref.shape[0]

    @pl.when(k == 0)
    def _():
        # Bias initializes the accumulator: no separate epilogue add.
        acc_ref[...] = jnp.broadcast_to(b1_ref[...], acc_ref.shape)

    start = pl.multiple_of(k * tk, 128)
    xk = x_ref[:, pl.ds(start, tk)].astype(w1_ref.dtype)   # (M, tk) bf16
    acc_ref[...] += jnp.dot(xk, w1_ref[...], preferred_element_type=jnp.float32)

    @pl.when(k == nk - 1)
    def _():
        h1 = jnp.maximum(acc_ref[...], 0.0)                          # (M, 512) f32
        h2 = jnp.dot(h1, w2_ref[0], preferred_element_type=jnp.float32)
        h2 = jnp.maximum(h2 + b2_ref[0], 0.0)                        # (M, 512)
        out = jnp.dot(h2, w3_ref[0], preferred_element_type=jnp.float32)
        out = out + b3_ref[0]                                        # (M, 128)
        o_ref[0] = out.astype(o_ref.dtype)


def fused_model_call(xf, w1_cat, b1_cat, w2_stack, b2_stack, w3_stack, b3_stack,
                     *, tk_target=6272, vmem_limit_bytes=48 * 1024 * 1024):
    M, K = xf.shape
    Kw, N = w1_cat.shape
    nj = w2_stack.shape[0]
    no_pad = w3_stack.shape[-1]
    assert K == Kw and N == nj * _TN
    assert b1_cat.shape == (1, N)
    assert w2_stack.shape == (nj, _TN, _TN)
    assert b2_stack.shape == (nj, 1, _TN)
    assert w3_stack.shape == (nj, _TN, no_pad)
    assert b3_stack.shape == (nj, 1, no_pad)
    assert no_pad % 128 == 0

    tk = _pick_tk(K, tk_target)
    nk = K // tk

    return pl.pallas_call(
        _fused_model_kernel,
        out_shape=jax.ShapeDtypeStruct((nj, M, no_pad), jnp.float32),
        grid_spec=pltpu.PrefetchScalarGridSpec(
            num_scalar_prefetch=0,
            grid=(nj, nk),  # N tiles outer (parallel), K reduction innermost
            in_specs=[
                pl.BlockSpec((M, K), lambda j, k: (0, 0)),             # x: VMEM-resident
                pl.BlockSpec((tk, _TN), lambda j, k: (k, j)),          # W1 (bf16 stream)
                pl.BlockSpec((1, _TN), lambda j, k: (0, j)),           # b1
                pl.BlockSpec((1, _TN, _TN), lambda j, k: (j, 0, 0)),   # W2_j (once per j)
                pl.BlockSpec((1, 1, _TN), lambda j, k: (j, 0, 0)),     # b2_j
                pl.BlockSpec((1, _TN, no_pad), lambda j, k: (j, 0, 0)),  # W3_j
                pl.BlockSpec((1, 1, no_pad), lambda j, k: (j, 0, 0)),    # b3_j
            ],
            out_specs=pl.BlockSpec((1, M, no_pad), lambda j, k: (j, 0, 0)),
            scratch_shapes=[pltpu.VMEM((M, _TN), jnp.float32)],
        ),
        compiler_params=pltpu.CompilerParams(
            dimension_semantics=("parallel", "arbitrary"),
            vmem_limit_bytes=vmem_limit_bytes,
        ),
    )(xf, w1_cat, b1_cat, w2_stack, b2_stack, w3_stack, b3_stack)


# ----------------------------------------------------------------------------
# Parameter construction / packing
# ----------------------------------------------------------------------------
def init_params(key, bins=4, dtype=jnp.float32):
    in_dim = _IN_DIM

    def linear_init(k, fan_in, fan_out):
        kw, kb = jax.random.split(k)
        w = jax.random.normal(kw, (fan_in, fan_out), dtype) * 0.02
        b = jax.random.normal(kb, (fan_out,), dtype) * 0.02
        return (w, b)

    keys = jax.random.split(key, 12)
    orientation = (linear_init(keys[0], in_dim, 256),
                   linear_init(keys[1], 256, 256),
                   linear_init(keys[2], 256, bins))
    confidence = (linear_init(keys[3], in_dim, 256),
                  linear_init(keys[4], 256, 256),
                  linear_init(keys[5], 256, bins))
    dimension = (linear_init(keys[6], in_dim, 512),
                 linear_init(keys[7], 512, 512),
                 linear_init(keys[8], 512, 3))
    depth_bias = (linear_init(keys[9], in_dim, 512),
                  linear_init(keys[10], 512, 512),
                  linear_init(keys[11], 512, 1))
    return dict(orientation=orientation, confidence=confidence,
                dimension=dimension, depth_bias=depth_bias)


def prepare_params(params, bins=4):
    """Pack per-head params into the fused layout (done once, outside jit)."""
    (wo1, bo1), (wo2, bo2), (wo3, bo3) = params["orientation"]
    (wc1, bc1), (wc2, bc2), (wc3, bc3) = params["confidence"]
    (wd1, bd1), (wd2, bd2), (wd3, bd3) = params["dimension"]
    (wb1, bb1), (wb2, bb2), (wb3, bb3) = params["depth_bias"]
    assert 2 * bins <= _OUT_PAD
    f32 = jnp.float32

    # First layers, concatenated along N: [ori(256) | conf(256) | dim(512) | db(512)]
    # Streamed as bf16 (bandwidth-bound part), f32 bias / f32 accumulation.
    w1_cat = jnp.concatenate([wo1, wc1, wd1, wb1], axis=1).astype(jnp.bfloat16)
    b1_cat = jnp.concatenate([bo1, bc1, bd1, bb1])[None, :].astype(f32)

    # j = 0 tail: block-diagonal packing of the two 256-wide heads.
    w2_0 = jnp.zeros((_TN, _TN), f32)
    w2_0 = w2_0.at[:256, :256].set(wo2.astype(f32))
    w2_0 = w2_0.at[256:, 256:].set(wc2.astype(f32))
    b2_0 = jnp.concatenate([bo2, bc2]).astype(f32)
    w3_0 = jnp.zeros((_TN, _OUT_PAD), f32)
    w3_0 = w3_0.at[:256, :bins].set(wo3.astype(f32))
    w3_0 = w3_0.at[256:, bins:2 * bins].set(wc3.astype(f32))
    b3_0 = jnp.zeros((_OUT_PAD,), f32)
    b3_0 = b3_0.at[:bins].set(bo3.astype(f32))
    b3_0 = b3_0.at[bins:2 * bins].set(bc3.astype(f32))

    # j = 1 tail: dimension head (3 outputs, lane-padded to 128).
    w2_1 = wd2.astype(f32)
    b2_1 = bd2.astype(f32)
    w3_1 = jnp.zeros((_TN, _OUT_PAD), f32).at[:, :3].set(wd3.astype(f32))
    b3_1 = jnp.zeros((_OUT_PAD,), f32).at[:3].set(bd3.astype(f32))

    # j = 2 tail: depth-bias head (1 output, lane-padded to 128).
    w2_2 = wb2.astype(f32)
    b2_2 = bb2.astype(f32)
    w3_2 = jnp.zeros((_TN, _OUT_PAD), f32).at[:, :1].set(wb3.astype(f32))
    b3_2 = jnp.zeros((_OUT_PAD,), f32).at[:1].set(bb3.astype(f32))

    return dict(
        w1_cat=w1_cat,
        b1_cat=b1_cat,
        w2_stack=jnp.stack([w2_0, w2_1, w2_2]),
        b2_stack=jnp.stack([b2_0, b2_1, b2_2])[:, None, :],
        w3_stack=jnp.stack([w3_0, w3_1, w3_2]),
        b3_stack=jnp.stack([b3_0, b3_1, b3_2])[:, None, :],
    )


# ----------------------------------------------------------------------------
# Forward
# ----------------------------------------------------------------------------
@functools.partial(jax.jit, static_argnames=("bins",))
def model_forward(x, packed, bins=4):
    # features=None -> identity backbone; flatten like x.view(-1, 512*7*7)
    B = x.shape[0]
    xf = x.reshape(B, _IN_DIM)

    out = fused_model_call(
        xf, packed["w1_cat"], packed["b1_cat"],
        packed["w2_stack"], packed["b2_stack"],
        packed["w3_stack"], packed["b3_stack"])

    orientation = out[0, :, :bins]
    confidence = out[0, :, bins:2 * bins]
    dimension = out[1, :, :3]
    depth_bias = out[2, :, :1]
    return orientation, confidence, dimension, depth_bias


def _reference_forward(x, params, w1_dtype=jnp.float32):
    B = x.shape[0]
    xf = x.reshape(B, _IN_DIM)

    def head(h, ps):
        (w1, b1), (w2, b2), (w3, b3) = ps
        h1 = jnp.dot(h.astype(w1_dtype), w1.astype(w1_dtype),
                     preferred_element_type=jnp.float32) + b1
        h1 = jnp.maximum(h1, 0.0)
        h2 = jnp.maximum(h1 @ w2 + b2, 0.0)
        return h2 @ w3 + b3

    return (head(xf, params["orientation"]),
            head(xf, params["confidence"]),
            head(xf, params["dimension"]),
            head(xf, params["depth_bias"]))


if __name__ == "__main__":
    key = jax.random.PRNGKey(0)
    kx, kp = jax.random.split(key)

    B, bins = 2, 4
    # input shaped like the (identity) backbone output: NCHW (B, 512, 7, 7)
    x = jax.random.normal(kx, (B, 512, 7, 7), jnp.float32)
    params = init_params(kp, bins=bins)
    packed = prepare_params(params, bins=bins)

    out = jax.block_until_ready(model_forward(x, packed, bins=bins))

    orientation, confidence, dimension, depth_bias = out
    assert orientation.shape == (B, bins)
    assert confidence.shape == (B, bins)
    assert dimension.shape == (B, 3)
    assert depth_bias.shape == (B, 1)

    # Tight check vs a reference that streams the first-layer weights in bf16
    # exactly like the kernel does (proves the kernel math / packing).
    ref_bf16 = _reference_forward(x, params, w1_dtype=jnp.bfloat16)
    for got, want in zip(out, ref_bf16):
        assert jnp.allclose(got, want, atol=3e-3, rtol=3e-3), float(
            jnp.max(jnp.abs(got - want)))

    # Looser check vs the full-f32 PyTorch-equivalent reference (bf16 first-layer
    # weight streaming is an intentional bandwidth/accuracy tradeoff).
    ref_f32 = _reference_forward(x, params, w1_dtype=jnp.float32)
    for got, want in zip(out, ref_f32):
        assert jnp.allclose(got, want, atol=5e-2, rtol=5e-2), float(
            jnp.max(jnp.abs(got - want)))

    print("KERNEL_OK")
</pallas_src>

<mosaic_0001>
module attributes {stable_mosaic.version = 11 : i64} {
  func.func @_fused_model_kernel(%arg0: i32, %arg1: i32, %arg2: memref<2x25088xf32, #tpu.memory_space<vmem>>, %arg3: memref<6272x512xbf16, #tpu.memory_space<vmem>>, %arg4: memref<1x512xf32, #tpu.memory_space<vmem>>, %arg5: memref<1x512x512xf32, #tpu.memory_space<vmem>>, %arg6: memref<1x1x512xf32, #tpu.memory_space<vmem>>, %arg7: memref<1x512x128xf32, #tpu.memory_space<vmem>>, %arg8: memref<1x1x128xf32, #tpu.memory_space<vmem>>, %arg9: memref<1x2x128xf32, #tpu.memory_space<vmem>>, %arg10: memref<2x512xf32, #tpu.memory_space<vmem>>) attributes {dimension_semantics = [#tpu.dimension_semantics<parallel>, #tpu.dimension_semantics<arbitrary>], iteration_bounds = array<i64: 3, 4>, scalar_prefetch = 0 : i64, scratch_operands = 1 : i64, tpu.core_type = #tpu.core_type<tc>, window_params = [{pipeline_mode = #tpu.pipeline_mode<synchronous>, transform_indices = @transform_0, window_bounds = array<i64: 2, 25088>}, {transform_indices = @transform_1, window_bounds = array<i64: 6272, 512>}, {transform_indices = @transform_2, window_bounds = array<i64: 1, 512>}, {transform_indices = @transform_3, window_bounds = array<i64: 1, 512, 512>}, {transform_indices = @transform_4, window_bounds = array<i64: 1, 1, 512>}, {transform_indices = @transform_5, window_bounds = array<i64: 1, 512, 128>}, {transform_indices = @transform_6, window_bounds = array<i64: 1, 1, 128>}, {transform_indices = @transform_7, window_bounds = array<i64: 1, 2, 128>}]} {
    %c0_i32 = arith.constant 0 : i32
    %0 = arith.cmpi eq, %arg1, %c0_i32 : i32
    %1 = arith.extui %0 : i1 to i32
    %c0_i32_0 = arith.constant 0 : i32
    %2 = arith.cmpi ne, %1, %c0_i32_0 : i32
    scf.if %2 {
      %c0_8 = arith.constant 0 : index
      %c0_9 = arith.constant 0 : index
      %16 = vector.load %arg4[%c0_8, %c0_9] : memref<1x512xf32, #tpu.memory_space<vmem>>, vector<1x512xf32>
      %17 = vector.shape_cast %16 : vector<1x512xf32> to vector<1x512xf32>
      %18 = vector.broadcast %17 : vector<1x512xf32> to vector<2x512xf32>
      %c0_10 = arith.constant 0 : index
      %c0_11 = arith.constant 0 : index
      %19 = vector.load %arg10[%c0_10, %c0_11] : memref<2x512xf32, #tpu.memory_space<vmem>>, vector<2x512xf32>
      tpu.vector_store %arg10[%c0_10, %c0_11], %18 {strides = array<i32>} : memref<2x512xf32, #tpu.memory_space<vmem>>, vector<2x512xf32>,
    } else {
    }
    %c6272_i32 = arith.constant 6272 : i32
    %3 = arith.muli %arg1, %c6272_i32 : i32
    %4 = tpu.assume_multiple %3, 128 : i32
    %c0 = arith.constant 0 : index
    %5 = arith.index_cast %4 : i32 to index
    %6 = vector.load %arg2[%c0, %5] : memref<2x25088xf32, #tpu.memory_space<vmem>>, vector<2x6272xf32>
    %7 = arith.truncf %6 : vector<2x6272xf32> to vector<2x6272xbf16>
    %c0_1 = arith.constant 0 : index
    %c0_2 = arith.constant 0 : index
    %8 = vector.load %arg10[%c0_1, %c0_2] : memref<2x512xf32, #tpu.memory_space<vmem>>, vector<2x512xf32>
    %c0_3 = arith.constant 0 : index
    %c0_4 = arith.constant 0 : index
    %9 = vector.load %arg3[%c0_3, %c0_4] : memref<6272x512xbf16, #tpu.memory_space<vmem>>, vector<6272x512xbf16>
    %cst = arith.constant dense<0.000000e+00> : vector<2x512xf32>
    %10 = tpu.matmul %7, %9, %cst {dimension_numbers = #tpu.dot_dimension_numbers<[1], [0], [0], [1], [0, 0, 1, 1], [], []>} : vector<2x6272xbf16>, vector<6272x512xbf16>, vector<2x512xf32> -> vector<2x512xf32>
    %11 = arith.addf %8, %10 : vector<2x512xf32>
    %c0_5 = arith.constant 0 : index
    %c0_6 = arith.constant 0 : index
    %12 = vector.load %arg10[%c0_5, %c0_6] : memref<2x512xf32, #tpu.memory_space<vmem>>, vector<2x512xf32>
    tpu.vector_store %arg10[%c0_5, %c0_6], %11 {strides = array<i32>} : memref<2x512xf32, #tpu.memory_space<vmem>>, vector<2x512xf32>,
    %c3_i32 = arith.constant 3 : i32
    %13 = arith.cmpi eq, %arg1, %c3_i32 : i32
    %14 = arith.extui %13 : i1 to i32
    %c0_i32_7 = arith.constant 0 : i32
    %15 = arith.cmpi ne, %14, %c0_i32_7 : i32
    scf.if %15 {
      %c0_8 = arith.constant 0 : index
      %c0_9 = arith.constant 0 : index
      %16 = vector.load %arg10[%c0_8, %c0_9] : memref<2x512xf32, #tpu.memory_space<vmem>>, vector<2x512xf32>
      %cst_10 = arith.constant 0.000000e+00 : f32
      %17 = vector.broadcast %cst_10 : f32 to vector<2x512xf32>
      %18 = arith.maximumf %16, %17 : vector<2x512xf32>
      %c0_11 = arith.constant 0 : index
      %c0_12 = arith.constant 0 : index
      %c0_13 = arith.constant 0 : index
      %19 = vector.load %arg5[%c0_11, %c0_12, %c0_13] : memref<1x512x512xf32, #tpu.memory_space<vmem>>, vector<1x512x512xf32>
      %20 = vector.shape_cast %19 : vector<1x512x512xf32> to vector<512x512xf32>
      %cst_14 = arith.constant dense<0.000000e+00> : vector<2x512xf32>
      %21 = tpu.matmul %18, %20, %cst_14 {dimension_numbers = #tpu.dot_dimension_numbers<[1], [0], [0], [1], [0, 0, 1, 1], [], []>} : vector<2x512xf32>, vector<512x512xf32>, vector<2x512xf32> -> vector<2x512xf32>
      %c0_15 = arith.constant 0 : index
      %c0_16 = arith.constant 0 : index
      %c0_17 = arith.constant 0 : index
      %22 = vector.load %arg6[%c0_15, %c0_16, %c0_17] : memref<1x1x512xf32, #tpu.memory_space<vmem>>, vector<1x1x512xf32>
      %23 = vector.shape_cast %22 : vector<1x1x512xf32> to vector<1x512xf32>
      %24 = vector.broadcast %23 : vector<1x512xf32> to vector<2x512xf32>
      %25 = arith.addf %21, %24 : vector<2x512xf32>
      %cst_18 = arith.constant 0.000000e+00 : f32
      %26 = vector.broadcast %cst_18 : f32 to vector<2x512xf32>
      %27 = arith.maximumf %25, %26 : vector<2x512xf32>
      %c0_19 = arith.constant 0 : index
      %c0_20 = arith.constant 0 : index
      %c0_21 = arith.constant 0 : index
      %28 = vector.load %arg7[%c0_19, %c0_20, %c0_21] : memref<1x512x128xf32, #tpu.memory_space<vmem>>, vector<1x512x128xf32>
      %29 = vector.shape_cast %28 : vector<1x512x128xf32> to vector<512x128xf32>
      %cst_22 = arith.constant dense<0.000000e+00> : vector<2x128xf32>
      %30 = tpu.matmul %27, %29, %cst_22 {dimension_numbers = #tpu.dot_dimension_numbers<[1], [0], [0], [1], [0, 0, 1, 1], [], []>} : vector<2x512xf32>, vector<512x128xf32>, vector<2x128xf32> -> vector<2x128xf32>
      %c0_23 = arith.constant 0 : index
      %c0_24 = arith.constant 0 : index
      %c0_25 = arith.constant 0 : index
      %31 = vector.load %arg8[%c0_23, %c0_24, %c0_25] : memref<1x1x128xf32, #tpu.memory_space<vmem>>, vector<1x1x128xf32>
      %32 = vector.shape_cast %31 : vector<1x1x128xf32> to vector<1x128xf32>
      %33 = vector.broadcast %32 : vector<1x128xf32> to vector<2x128xf32>
      %34 = arith.addf %30, %33 : vector<2x128xf32>
      %c0_26 = arith.constant 0 : index
      %c0_27 = arith.constant 0 : index
      %c0_28 = arith.constant 0 : index
      %35 = vector.load %arg9[%c0_26, %c0_27, %c0_28] : memref<1x2x128xf32, #tpu.memory_space<vmem>>, vector<1x2x128xf32>
      %36 = vector.shape_cast %35 : vector<1x2x128xf32> to vector<2x128xf32>
      %37 = vector.shape_cast %34 : vector<2x128xf32> to vector<1x2x128xf32>
      tpu.vector_store %arg9[%c0_26, %c0_27, %c0_28], %37 {strides = array<i32>} : memref<1x2x128xf32, #tpu.memory_space<vmem>>, vector<1x2x128xf32>,
    } else {
    }
    return
  }
  func.func @transform_0(%arg0: i32, %arg1: i32) -> (i32, i32) {
    %c0_i32 = arith.constant 0 : i32
    %c0_i32_0 = arith.constant 0 : i32
    %c0_i32_1 = arith.constant 0 : i32
    return %c0_i32, %c0_i32_0 : i32, i32
  }
  func.func @transform_1(%arg0: i32, %arg1: i32) -> (i32, i32) {
    %c0_i32 = arith.constant 0 : i32
    return %arg1, %arg0 : i32, i32
  }
  func.func @transform_2(%arg0: i32, %arg1: i32) -> (i32, i32) {
    %c0_i32 = arith.constant 0 : i32
    %c0_i32_0 = arith.constant 0 : i32
    return %c0_i32, %arg0 : i32, i32
  }
  func.func @transform_3(%arg0: i32, %arg1: i32) -> (i32, i32, i32) {
    %c0_i32 = arith.constant 0 : i32
    %c0_i32_0 = arith.constant 0 : i32
    %c0_i32_1 = arith.constant 0 : i32
    return %arg0, %c0_i32, %c0_i32_0 : i32, i32, i32
  }
  func.func @transform_4(%arg0: i32, %arg1: i32) -> (i32, i32, i32) {
    %c0_i32 = arith.constant 0 : i32
    %c0_i32_0 = arith.constant 0 : i32
    %c0_i32_1 = arith.constant 0 : i32
    return %arg0, %c0_i32, %c0_i32_0 : i32, i32, i32
  }
  func.func @transform_5(%arg0: i32, %arg1: i32) -> (i32, i32, i32) {
    %c0_i32 = arith.constant 0 : i32
    %c0_i32_0 = arith.constant 0 : i32
    %c0_i32_1 = arith.constant 0 : i32
    return %arg0, %c0_i32, %c0_i32_0 : i32, i32, i32
  }
  func.func @transform_6(%arg0: i32, %arg1: i32) -> (i32, i32, i32) {
    %c0_i32 = arith.constant 0 : i32
    %c0_i32_0 = arith.constant 0 : i32
    %c0_i32_1 = arith.constant 0 : i32
    return %arg0, %c0_i32, %c0_i32_0 : i32, i32, i32
  }
  func.func @transform_7(%arg0: i32, %arg1: i32) -> (i32, i32, i32) {
    %c0_i32 = arith.constant 0 : i32
    %c0_i32_0 = arith.constant 0 : i32
    %c0_i32_1 = arith.constant 0 : i32
    return %arg0, %c0_i32, %c0_i32_0 : i32, i32, i32
  }
}

</mosaic_0001>

<llo_original>
// kernel: model_forward.1
$region0: #{model_forward.1}
  #allocation0 [shape = 'u32[]', space=smem, size = 0x4, offset = 0x4, fixed_abs, tag = 'smem constant byte address 0x4 - core index']
  #allocation1 [shape = 'u32[144,128]{1,0:T(1,128)}', space=vmem, size = 0x12000, scoped, tag = 'internal scratch']
  #allocation2 [shape = 'f32[2,512]{1,0:T(2,128)}', space=vmem, size = 0x1000, scoped, tag = 'scratch operand']
  %s0 = inlined_call_operand.vmem [shape: f32[2,25088], index: 0, kind: input, shape index: {}]
  %s1 = inlined_call_operand.hbm [shape: bf16[25088,1536], index: 1, kind: input, shape index: {}]
  %s2 = inlined_call_operand.vmem [shape: f32[1,1536], index: 2, kind: input, shape index: {}]
  %s3 = inlined_call_operand.vmem [shape: f32[3,512,512], index: 3, kind: input, shape index: {}]
  %s4 = inlined_call_operand.vmem [shape: f32[3,1,512], index: 4, kind: input, shape index: {}]
  %s5 = inlined_call_operand.vmem [shape: f32[3,512,128], index: 5, kind: input, shape index: {}]
  %s6 = inlined_call_operand.vmem [shape: f32[3,1,128], index: 6, kind: input, shape index: {}]
  %s7 = inlined_call_operand.vmem [shape: f32[3,2,128], index: 7, kind: output, shape index: {}]
  %s8 = sld [smem:[#allocation0]]
  $region73: #{model_forward.1} parent=0
    _
  %s10 = ssub.s32 1, %s8
  %s11 = scalar_select 0, %s10, %s8
  $region1: #{model_forward.1} parent=0
    #allocation3 [shape = 'u8[12845056]{0}', space=vmem, size = 0xc40000, scoped, tag = 'input window, operand 1']
    #allocation4 [shape = 's32[2]{0}', space=sflag, size = 0x8, scoped, tag = 'scoped memory for model_forward.1']
    %12 = vsyncpa [#allocation4], 0
    %s13 = scalar_lea.sflag [#allocation4], 1
    %14 = vsyncpa %s13, 0
    loop: start=0, step=1, limit=14
    $region2: #{model_forward.1} parent=1 // loop_pre_header
      _
    $region3: #{model_forward.1} parent=1 // loop_header
      %s16 = sphi 0, %s20
      %p17 = scmp.ge.s32.totalorder %s16, 14
      %s23 = sphi 0, %s35
      %s24 = sphi 0, %s31
      %s25 = sphi 0, %s23
      %s26 = sphi 0, %s24
      %s27 = sphi 0, %s25
      %s28 = sphi 0, %s26
      %s36 = sphi 0, %s36
      %s38 = sphi 0, %s36
      %s39 = sphi 0, %s38
      %s53 = sphi 0, %s39
      %s61 = sphi 0, %s63
      %s64 = sphi 0, %s61
      %s65 = sphi 0, %s64
      %s81 = sphi 0, %s65
      %s87 = sphi 0, %s89
      %s90 = sphi 0, %s87
      %s91 = sphi 0, %s90
      %s107 = sphi 0, %s91
      %s113 = sphi 0, %s115
      %s116 = sphi 0, %s113
      %s117 = sphi 0, %s116
      %s133 = sphi 0, %s117
      %s139 = sphi 0, %s141
      %s142 = sphi 0, %s139
      %s143 = sphi 0, %s142
      %s159 = sphi 0, %s143
      %s165 = sphi 0, %s167
      %s168 = sphi 0, %s165
      %s169 = sphi 0, %s168
      %s185 = sphi 0, %s169
      %s191 = sphi 0, %s193
      %s194 = sphi 0, %s191
      %s195 = sphi 0, %s194
      %s211 = sphi 0, %s195
      %s217 = sphi 0, %s219
      %s220 = sphi 0, %s217
      %s221 = sphi 0, %s220
      %s237 = sphi 0, %s221
    $region4: #{model_forward.1} parent=1 // loop_header_branch
      %19 = sbr.rel (%p17) target = $region8
    $region5: #{model_forward.1} parent=1 // loop_body
      %s21 = ssub.s32 %s16, 1
      %s22 = ssub.s32 %s16, 2
      %s29 = sadd.s32 1, %s24
      %p30 = scmp.ge.s32.totalorder %s29, 4
      %s31 = scalar_select %p30, 0, %s29
      %s32 = sadd.s32 1, %s23
      %s33 = scalar_select %p30, %s32, %s23
      %p34 = scmp.ge.s32.totalorder %s33, 3
      %s35 = scalar_select %p34, 0, %s33
      %s37 = sadd.s32 %s36, 1
      %p40 = scmp.eq.s32.totalorder %s16, 11
      %p41 = scmp.ne.s32.totalorder %s36, %s38
      %p42 = scmp.eq.s32.totalorder %s16, 0
      %p43 = por %p41, %p42
      %p44 = scmp.ne.s32.totalorder %s36, %s38
      %p45 = scmp.eq.s32.totalorder %s21, 11
      %p46 = por %p44, %p45
      %p47 = scmp.ne.s32.totalorder %s38, %s39
      %p48 = scmp.eq.s32.totalorder %s21, 0
      %p49 = por %p47, %p48
      %p50 = scmp.ne.s32.totalorder %s38, %s39
      %p51 = scmp.eq.s32.totalorder %s22, 11
      %p52 = por %p50, %p51
      %p54 = scmp.ne.s32.totalorder %s39, %s53
      %p55 = scmp.eq.s32.totalorder %s22, 0
      %p56 = por %p54, %p55
      %s57 = ssub.s32 %s24, %s31
      %s58 = ssub.s32 %s23, %s35
      %s59 = sor.u32 %s57, %s58
      %p60 = scmp.eq.s32.totalorder %s59, 0
      %s62 = sadd.s32 %s61, 1
      %s63 = scalar_select %p60, %s61, %s62
      %p66 = pneg %p60
      %p67 = scmp.eq.s32.totalorder %s16, 11
      %p68 = por %p66, %p67
      %p69 = scmp.ne.s32.totalorder %s61, %s64
      %p70 = scmp.eq.s32.totalorder %s16, 0
      %p71 = por %p69, %p70
      %p72 = scmp.ne.s32.totalorder %s61, %s64
      %p73 = scmp.eq.s32.totalorder %s21, 11
      %p74 = por %p72, %p73
      %p75 = scmp.ne.s32.totalorder %s64, %s65
      %p76 = scmp.eq.s32.totalorder %s21, 0
      %p77 = por %p75, %p76
      %p78 = scmp.ne.s32.totalorder %s64, %s65
      %p79 = scmp.eq.s32.totalorder %s22, 11
      %p80 = por %p78, %p79
      %p82 = scmp.ne.s32.totalorder %s65, %s81
      %p83 = scmp.eq.s32.totalorder %s22, 0
      %p84 = por %p82, %p83
      %s85 = ssub.s32 %s23, %s35
      %p86 = scmp.eq.s32.totalorder %s85, 0
      %s88 = sadd.s32 %s87, 1
      %s89 = scalar_select %p86, %s87, %s88
      %p92 = pneg %p86
      %p93 = scmp.eq.s32.totalorder %s16, 11
      %p94 = por %p92, %p93
      %p95 = scmp.ne.s32.totalorder %s87, %s90
      %p96 = scmp.eq.s32.totalorder %s16, 0
      %p97 = por %p95, %p96
      %p98 = scmp.ne.s32.totalorder %s87, %s90
      %p99 = scmp.eq.s32.totalorder %s21, 11
      %p100 = por %p98, %p99
      %p101 = scmp.ne.s32.totalorder %s90, %s91
      %p102 = scmp.eq.s32.totalorder %s21, 0
      %p103 = por %p101, %p102
      %p104 = scmp.ne.s32.totalorder %s90, %s91
      %p105 = scmp.eq.s32.totalorder %s22, 11
      %p106 = por %p104, %p105
      %p108 = scmp.ne.s32.totalorder %s91, %s107
      %p109 = scmp.eq.s32.totalorder %s22, 0
      %p110 = por %p108, %p109
      %s111 = ssub.s32 %s23, %s35
      %p112 = scmp.eq.s32.totalorder %s111, 0
      %s114 = sadd.s32 %s113, 1
      %s115 = scalar_select %p112, %s113, %s114
      %p118 = pneg %p112
      %p119 = scmp.eq.s32.totalorder %s16, 11
      %p120 = por %p118, %p119
      %p121 = scmp.ne.s32.totalorder %s113, %s116
      %p122 = scmp.eq.s32.totalorder %s16, 0
      %p123 = por %p121, %p122
      %p124 = scmp.ne.s32.totalorder %s113, %s116
      %p125 = scmp.eq.s32.totalorder %s21, 11
      %p126 = por %p124, %p125
      %p127 = scmp.ne.s32.totalorder %s116, %s117
      %p128 = scmp.eq.s32.totalorder %s21, 0
      %p129 = por %p127, %p128
      %p130 = scmp.ne.s32.totalorder %s116, %s117
      %p131 = scmp.eq.s32.totalorder %s22, 11
      %p132 = por %p130, %p131
      %p134 = scmp.ne.s32.totalorder %s117, %s133
      %p135 = scmp.eq.s32.totalorder %s22, 0
      %p136 = por %p134, %p135
      %s137 = ssub.s32 %s23, %s35
      %p138 = scmp.eq.s32.totalorder %s137, 0
      %s140 = sadd.s32 %s139, 1
      %s141 = scalar_select %p138, %s139, %s140
      %p144 = pneg %p138
      %p145 = scmp.eq.s32.totalorder %s16, 11
      %p146 = por %p144, %p145
      %p147 = scmp.ne.s32.totalorder %s139, %s142
      %p148 = scmp.eq.s32.totalorder %s16, 0
      %p149 = por %p147, %p148
      %p150 = scmp.ne.s32.totalorder %s139, %s142
      %p151 = scmp.eq.s32.totalorder %s21, 11
      %p152 = por %p150, %p151
      %p153 = scmp.ne.s32.totalorder %s142, %s143
      %p154 = scmp.eq.s32.totalorder %s21, 0
      %p155 = por %p153, %p154
      %p156 = scmp.ne.s32.totalorder %s142, %s143
      %p157 = scmp.eq.s32.totalorder %s22, 11
      %p158 = por %p156, %p157
      %p160 = scmp.ne.s32.totalorder %s143, %s159
      %p161 = scmp.eq.s32.totalorder %s22, 0
      %p162 = por %p160, %p161
      %s163 = ssub.s32 %s23, %s35
      %p164 = scmp.eq.s32.totalorder %s163, 0
      %s166 = sadd.s32 %s165, 1
      %s167 = scalar_select %p164, %s165, %s166
      %p170 = pneg %p164
      %p171 = scmp.eq.s32.totalorder %s16, 11
      %p172 = por %p170, %p171
      %p173 = scmp.ne.s32.totalorder %s165, %s168
      %p174 = scmp.eq.s32.totalorder %s16, 0
      %p175 = por %p173, %p174
      %p176 = scmp.ne.s32.totalorder %s165, %s168
      %p177 = scmp.eq.s32.totalorder %s21, 11
      %p178 = por %p176, %p177
      %p179 = scmp.ne.s32.totalorder %s168, %s169
      %p180 = scmp.eq.s32.totalorder %s21, 0
      %p181 = por %p179, %p180
      %p182 = scmp.ne.s32.totalorder %s168, %s169
      %p183 = scmp.eq.s32.totalorder %s22, 11
      %p184 = por %p182, %p183
      %p186 = scmp.ne.s32.totalorder %s169, %s185
      %p187 = scmp.eq.s32.totalorder %s22, 0
      %p188 = por %p186, %p187
      %s189 = ssub.s32 %s23, %s35
      %p190 = scmp.eq.s32.totalorder %s189, 0
      %s192 = sadd.s32 %s191, 1
      %s193 = scalar_select %p190, %s191, %s192
      %p196 = pneg %p190
      %p197 = scmp.eq.s32.totalorder %s16, 11
      %p198 = por %p196, %p197
      %p199 = scmp.ne.s32.totalorder %s191, %s194
      %p200 = scmp.eq.s32.totalorder %s16, 0
      %p201 = por %p199, %p200
      %p202 = scmp.ne.s32.totalorder %s191, %s194
      %p203 = scmp.eq.s32.totalorder %s21, 11
      %p204 = por %p202, %p203
      %p205 = scmp.ne.s32.totalorder %s194, %s195
      %p206 = scmp.eq.s32.totalorder %s21, 0
      %p207 = por %p205, %p206
      %p208 = scmp.ne.s32.totalorder %s194, %s195
      %p209 = scmp.eq.s32.totalorder %s22, 11
      %p210 = por %p208, %p209
      %p212 = scmp.ne.s32.totalorder %s195, %s211
      %p213 = scmp.eq.s32.totalorder %s22, 0
      %p214 = por %p212, %p213
      %s215 = ssub.s32 %s23, %s35
      %p216 = scmp.eq.s32.totalorder %s215, 0
      %s218 = sadd.s32 %s217, 1
      %s219 = scalar_select %p216, %s217, %s218
      %p222 = pneg %p216
      %p223 = scmp.eq.s32.totalorder %s16, 11
      %p224 = por %p222, %p223
      %p225 = scmp.ne.s32.totalorder %s217, %s220
      %p226 = scmp.eq.s32.totalorder %s16, 0
      %p227 = por %p225, %p226
      %p228 = scmp.ne.s32.totalorder %s217, %s220
      %p229 = scmp.eq.s32.totalorder %s21, 11
      %p230 = por %p228, %p229
      %p231 = scmp.ne.s32.totalorder %s220, %s221
      %p232 = scmp.eq.s32.totalorder %s21, 0
      %p233 = por %p231, %p232
      %p234 = scmp.ne.s32.totalorder %s220, %s221
      %p235 = scmp.eq.s32.totalorder %s22, 11
      %p236 = por %p234, %p235
      %p238 = scmp.ne.s32.totalorder %s221, %s237
      %p239 = scmp.eq.s32.totalorder %s22, 0
      %p240 = por %p238, %p239
      %p241 = scmp.le.s32.totalorder 1, %s16
      %p242 = scmp.lt.s32.totalorder %s16, 13
      %p243 = pnand %p241, %p242
      %p244 = pneg %p243
      // Predicated region
      $region9: #{model_forward.1} parent=5 // pred_check
        _
      $region10: #{model_forward.1} parent=5 // pred_check_branch
        %246 = sbr.rel (%p243) target = $region12
      $region11: #{model_forward.1} parent=5 // pred_region
        %s247 = ssub.s32 %s16, 1
        // Predicated region
        $region13: #{model_forward.1} parent=11 // pred_check
          %p248 = pneg %p49
        $region14: #{model_forward.1} parent=11 // pred_check_branch
          %250 = sbr.rel (%p248) target = $region16
        $region15: #{model_forward.1} parent=11 // pred_region
          _
        $region16: #{model_forward.1} parent=11 // pred_fallthru
          _
      $region12: #{model_forward.1} parent=5 // pred_fallthru
        _
      %p251 = scmp.lt.s32.totalorder %s16, 12
      // Predicated region
      $region17: #{model_forward.1} parent=5 // pred_check
        %p252 = pneg %p251
      $region18: #{model_forward.1} parent=5 // pred_check_branch
        %254 = sbr.rel (%p252) target = $region20
      $region19: #{model_forward.1} parent=5 // pred_region
        // Predicated region
        $region21: #{model_forward.1} parent=19 // pred_check
          %p255 = pneg %p71
        $region22: #{model_forward.1} parent=19 // pred_check_branch
          %257 = sbr.rel (%p255) target = $region24
        $region23: #{model_forward.1} parent=19 // pred_region
          %s258 = sand.u32 %s61, 1
          %s259 = scalar_lea.sflag [#allocation4], %s258
          %s260 = sand.u32 %s61, 1
          %s261 = smul.addr %s260, 12544
          %s262 = scalar_lea.vmem [#allocation3], %s261
          %s263 = smul.u32 784, %s24
          %s264 = smul.u32 4, %s23
          %s266 = ssub.s32 200704, 200704
          %267 = vsyncadd %s259, %s266
          %s268 = smul.addr %s263, 12
          %s269 = sadd.s32 %s264, %s268
          %s270 = smul.addr %s269, 64
          %s271 = scalar_lea.hbm %s1, %s270
          %s272 = sshll.u32 %s262, 4
          %s273 = int_to_ptr.vmem [resolvable:$true] %s272
          %278 = dma.hbm_to_vmem [thread:$0]  %s271, 200704, %s273, %s259, 768, 256, 16
        $region24: #{model_forward.1} parent=19 // pred_fallthru
          _
        // Predicated region
        $region25: #{model_forward.1} parent=19 // pred_check
          %p279 = pneg %p97
        $region26: #{model_forward.1} parent=19 // pred_check_branch
          %281 = sbr.rel (%p279) target = $region28
        $region27: #{model_forward.1} parent=19 // pred_region
          %s282 = smul.u32 4, %s23
          %p283 = scmp.lt.s32.totalorder %s282, 11
          %s284 = scalar_select %p283, %s282, 11
          %s285 = scalar_lea.vmem %s2, %s284
          %s286 = smul.u32 4, %s23
        $region28: #{model_forward.1} parent=19 // pred_fallthru
          _
        // Predicated region
        $region29: #{model_forward.1} parent=19 // pred_check
          %p287 = pneg %p123
        $region30: #{model_forward.1} parent=19 // pred_check_branch
          %289 = sbr.rel (%p287) target = $region32
        $region31: #{model_forward.1} parent=19 // pred_region
          %p290 = scmp.lt.s32.totalorder %s23, 2
          %s291 = scalar_select %p290, %s23, 2
          %s292 = smul.addr %s291, 256
          %s293 = smul.addr %s292, 8
          %s294 = scalar_lea.vmem %s3, %s293
        $region32: #{model_forward.1} parent=19 // pred_fallthru
          _
        // Predicated region
        $region33: #{model_forward.1} parent=19 // pred_check
          %p295 = pneg %p149
        $region34: #{model_forward.1} parent=19 // pred_check_branch
          %297 = sbr.rel (%p295) target = $region36
        $region35: #{model_forward.1} parent=19 // pred_region
          %p298 = scmp.lt.s32.totalorder %s23, 2
          %s299 = scalar_select %p298, %s23, 2
          %s300 = smul.addr %s299, 4
          %s301 = scalar_lea.vmem %s4, %s300
        $region36: #{model_forward.1} parent=19 // pred_fallthru
          _
        // Predicated region
        $region37: #{model_forward.1} parent=19 // pred_check
          %p302 = pneg %p175
        $region38: #{model_forward.1} parent=19 // pred_check_branch
          %304 = sbr.rel (%p302) target = $region40
        $region39: #{model_forward.1} parent=19 // pred_region
          %p305 = scmp.lt.s32.totalorder %s23, 2
          %s306 = scalar_select %p305, %s23, 2
          %s307 = smul.addr %s306, 64
          %s308 = smul.addr %s307, 8
          %s309 = scalar_lea.vmem %s5, %s308
        $region40: #{model_forward.1} parent=19 // pred_fallthru
          _
        // Predicated region
        $region41: #{model_forward.1} parent=19 // pred_check
          %p310 = pneg %p201
        $region42: #{model_forward.1} parent=19 // pred_check_branch
          %312 = sbr.rel (%p310) target = $region44
        $region43: #{model_forward.1} parent=19 // pred_region
          %p313 = scmp.lt.s32.totalorder %s23, 2
          %s314 = scalar_select %p313, %s23, 2
          %s315 = scalar_lea.vmem %s6, %s314
        $region44: #{model_forward.1} parent=19 // pred_fallthru
          _
      $region20: #{model_forward.1} parent=5 // pred_fallthru
        _
      %p316 = scmp.le.s32.totalorder 1, %s16
      %p317 = scmp.lt.s32.totalorder %s16, 13
      %p318 = pnand %p316, %p317
      %p319 = pneg %p318
      // Predicated region
      $region45: #{model_forward.1} parent=5 // pred_check
        _
      $region46: #{model_forward.1} parent=5 // pred_check_branch
        %321 = sbr.rel (%p318) target = $region48
      $region47: #{model_forward.1} parent=5 // pred_region
        %s322 = ssub.s32 %s16, 1
        %s323 = sand.u32 %s64, 1
        %s324 = scalar_lea.sflag [#allocation4], %s323
        %s325 = sand.u32 %s64, 1
        %s326 = smul.addr %s325, 12544
        %s327 = scalar_lea.vmem [#allocation3], %s326
        // Predicated region
        $region49: #{model_forward.1} parent=47 // pred_check
          %p328 = pneg %p77
        $region50: #{model_forward.1} parent=47 // pred_check_branch
          %330 = sbr.rel (%p328) target = $region52
        $region51: #{model_forward.1} parent=47 // pred_region
          %331 = dma.done %s324, 200704
        $region52: #{model_forward.1} parent=47 // pred_fallthru
          _
        %p332 = pneg %p49
        %p333 = pneg %p46
        %s334 = sand.u32 %s64, 1
        %s335 = scalar_lea.sflag [#allocation4], %s334
        %s336 = sand.u32 %s64, 1
        %s337 = smul.addr %s336, 12544
        %s338 = scalar_lea.vmem [#allocation3], %s337
        %p339 = pneg %p77
        %p340 = pneg %p74
        %s341 = smul.u32 4, %s25
        %p342 = scmp.lt.s32.totalorder %s341, 11
        %s343 = scalar_select %p342, %s341, 11
        %s344 = scalar_lea.vmem %s2, %s343
        %p345 = pneg %p103
        %p346 = pneg %p100
        %p347 = scmp.lt.s32.totalorder %s25, 2
        %s348 = scalar_select %p347, %s25, 2
        %s349 = smul.addr %s348, 256
        %s350 = smul.addr %s349, 8
        %s351 = scalar_lea.vmem %s3, %s350
        %p352 = pneg %p129
        %p353 = pneg %p126
        %p354 = scmp.lt.s32.totalorder %s25, 2
        %s355 = scalar_select %p354, %s25, 2
        %s356 = smul.addr %s355, 4
        %s357 = scalar_lea.vmem %s4, %s356
        %p358 = pneg %p155
        %p359 = pneg %p152
        %p360 = scmp.lt.s32.totalorder %s25, 2
        %s361 = scalar_select %p360, %s25, 2
        %s362 = smul.addr %s361, 64
        %s363 = smul.addr %s362, 8
        %s364 = scalar_lea.vmem %s5, %s363
        %p365 = pneg %p181
        %p366 = pneg %p178
        %p367 = scmp.lt.s32.totalorder %s25, 2
        %s368 = scalar_select %p367, %s25, 2
        %s369 = scalar_lea.vmem %s6, %s368
        %p370 = pneg %p207
        %p371 = pneg %p204
        %p372 = pneg %p233
        %p373 = pneg %p230
        %p374 = scmp.lt.s32.totalorder %s25, 2
        %s375 = scalar_select %p374, %s25, 2
        %s376 = smul.addr %s375, 2
        %s377 = scalar_lea.vmem %s7, %s376
        %s378 = smul.u32 784, %s26
        %s379 = smul.u32 4, %s25
        %s380 = smul.u32 4, %s25
        %p381 = scmp.lt.s32.totalorder %s380, 11
        %s382 = scalar_select %p381, %s380, 11
        %s383 = scalar_lea.vmem %s2, %s382
        %s384 = smul.u32 4, %s25
        %p385 = scmp.lt.s32.totalorder %s25, 2
        %s386 = scalar_select %p385, %s25, 2
        %s387 = smul.addr %s386, 256
        %s388 = smul.addr %s387, 8
        %s389 = scalar_lea.vmem %s3, %s388
        %p390 = scmp.lt.s32.totalorder %s25, 2
        %s391 = scalar_select %p390, %s25, 2
        %s392 = smul.addr %s391, 4
        %s393 = scalar_lea.vmem %s4, %s392
        %p394 = scmp.lt.s32.totalorder %s25, 2
        %s395 = scalar_select %p394, %s25, 2
        %s396 = smul.addr %s395, 64
        %s397 = smul.addr %s396, 8
        %s398 = scalar_lea.vmem %s5, %s397
        %p399 = scmp.lt.s32.totalorder %s25, 2
        %s400 = scalar_select %p399, %s25, 2
        %s401 = scalar_lea.vmem %s6, %s400
        %p402 = scmp.lt.s32.totalorder %s25, 2
        %s403 = scalar_select %p402, %s25, 2
        %s404 = smul.addr %s403, 2
        %s405 = scalar_lea.vmem %s7, %s404
        %p407 = scmp.eq.s32.totalorder %s26, 0
        // Predicated region
        $region53: #{model_forward.1} parent=47 // pred_check
          %p408 = pneg %p407
        $region54: #{model_forward.1} parent=47 // pred_check_branch
          %410 = sbr.rel (%p408) target = $region56
        $region55: #{model_forward.1} parent=47 // pred_region
          %v411 = vld [vmem:[%s383] sm:$0xf]
          %v413 = vlaneseq
          %v414 = vshrl.u32 %v413, 7
          %v415 = vsub.s32 0, %v414
          %v416 = vrot.slane %v411, %v415
          %v417 = vlaneseq
          %v418 = vshrl.u32 %v417, 7
          %v419 = vsub.s32 1, %v418
          %v420 = vrot.slane %v411, %v419
          %v421 = vlaneseq
          %v422 = vshrl.u32 %v421, 7
          %v423 = vsub.s32 2, %v422
          %v424 = vrot.slane %v411, %v423
          %v425 = vlaneseq
          %v426 = vshrl.u32 %v425, 7
          %v427 = vsub.s32 3, %v426
          %v428 = vrot.slane %v411, %v427
          %v429 = vcombine.low %v416, %v420
          %v430 = vcombine.low %v424, %v428
          %v432 = vunpack.c.l.s4 1983009808
          %v433 = vunpack.c.0.s8 %v432
          %v434 = vlaneseq
          %v435 = vshrl.u32 %v434, 7
          %v436 = vsub.s32 %v433, %v435
          %v437 = vrot.slane %v429, %v436
          %v439 = vunpack.c.l.s4 1983009808
          %v440 = vunpack.c.0.s8 %v439
          %v441 = vlaneseq
          %v442 = vshrl.u32 %v441, 7
          %v443 = vsub.s32 %v440, %v442
          %v444 = vrot.slane %v430, %v443
          %v445 = vcombine.low %v437, %v444
          %447 = vst [vmem:[#allocation2] sm:$0xff] %v445
        $region56: #{model_forward.1} parent=47 // pred_fallthru
          _
        %s448 = smul.u32 %s26, 6272
        %s449 = sshra.s32 %s448, 7
        %s450 = sand.u32 %s448, 127
        %s451 = smul.addr %s449, 2
        %s452 = scalar_lea.vmem %s0, %s451
        %v453 = vld [vmem:[%s452] sm:$0xff]
        %v454 = vld [vmem:[%s452 + $0x8] sm:$0xff]
        %v455 = vld [vmem:[%s452 + $0x10] sm:$0xff]
        %v456 = vld [vmem:[%s452 + $0x18] sm:$0xff]
        %v457 = vld [vmem:[%s452 + $0x20] sm:$0xff]
        %v458 = vld [vmem:[%s452 + $0x28] sm:$0xff]
        %v459 = vld [vmem:[%s452 + $0x30] sm:$0xff]
        %v460 = vld [vmem:[%s452 + $0x38] sm:$0xff]
        %v461 = vld [vmem:[%s452 + $0x40] sm:$0xff]
        %v462 = vld [vmem:[%s452 + $0x48] sm:$0xff]
        %v463 = vld [vmem:[%s452 + $0x50] sm:$0xff]
        %v464 = vld [vmem:[%s452 + $0x58] sm:$0xff]
        %v465 = vld [vmem:[%s452 + $0x60] sm:$0x3]
        %v479 = vcombine.high %v453, %v453
        %v481 = vunpack.c.l.s4 1983009808
        %v482 = vunpack.c.0.s8 %v481
        %v483 = vlaneseq
        %v484 = vshrl.u32 %v483, 7
        %v485 = vsub.s32 %v482, %v484
        %v486 = vrot.slane %v453, %v485
        %v488 = vunpack.c.l.s4 1983009808
        %v489 = vunpack.c.0.s8 %v488
        %v490 = vlaneseq
        %v491 = vshrl.u32 %v490, 7
        %v492 = vsub.s32 %v489, %v491
        %v493 = vrot.slane %v479, %v492
        %v494 = vcombine.high %v486, %v486
        %v495 = vcombine.high %v493, %v493
        %v496 = vcombine.high %v454, %v454
        %v498 = vunpack.c.l.s4 1983009808
        %v499 = vunpack.c.0.s8 %v498
        %v500 = vlaneseq
        %v501 = vshrl.u32 %v500, 7
        %v502 = vsub.s32 %v499, %v501
        %v503 = vrot.slane %v454, %v502
        %v505 = vunpack.c.l.s4 1983009808
        %v506 = vunpack.c.0.s8 %v505
        %v507 = vlaneseq
        %v508 = vshrl.u32 %v507, 7
        %v509 = vsub.s32 %v506, %v508
        %v510 = vrot.slane %v496, %v509
        %v511 = vcombine.high %v503, %v503
        %v512 = vcombine.high %v510, %v510
        %v513 = vcombine.high %v455, %v455
        %v515 = vunpack.c.l.s4 1983009808
        %v516 = vunpack.c.0.s8 %v515
        %v517 = vlaneseq
        %v518 = vshrl.u32 %v517, 7
        %v519 = vsub.s32 %v516, %v518
        %v520 = vrot.slane %v455, %v519
        %v522 = vunpack.c.l.s4 1983009808
        %v523 = vunpack.c.0.s8 %v522
        %v524 = vlaneseq
        %v525 = vshrl.u32 %v524, 7
        %v526 = vsub.s32 %v523, %v525
        %v527 = vrot.slane %v513, %v526
        %v528 = vcombine.high %v520, %v520
        %v529 = vcombine.high %v527, %v527
        %v530 = vcombine.high %v456, %v456
        %v532 = vunpack.c.l.s4 1983009808
        %v533 = vunpack.c.0.s8 %v532
        %v534 = vlaneseq
        %v535 = vshrl.u32 %v534, 7
        %v536 = vsub.s32 %v533, %v535
        %v537 = vrot.slane %v456, %v536
        %v539 = vunpack.c.l.s4 1983009808
        %v540 = vunpack.c.0.s8 %v539
        %v541 = vlaneseq
        %v542 = vshrl.u32 %v541, 7
        %v543 = vsub.s32 %v540, %v542
        %v544 = vrot.slane %v530, %v543
        %v545 = vcombine.high %v537, %v537
        %v546 = vcombine.high %v544, %v544
        %v547 = vcombine.high %v457, %v457
        %v549 = vunpack.c.l.s4 1983009808
        %v550 = vunpack.c.0.s8 %v549
        %v551 = vlaneseq
        %v552 = vshrl.u32 %v551, 7
        %v553 = vsub.s32 %v550, %v552
        %v554 = vrot.slane %v457, %v553
        %v556 = vunpack.c.l.s4 1983009808
        %v557 = vunpack.c.0.s8 %v556
        %v558 = vlaneseq
        %v559 = vshrl.u32 %v558, 7
        %v560 = vsub.s32 %v557, %v559
        %v561 = vrot.slane %v547, %v560
        %v562 = vcombine.high %v554, %v554
        %v563 = vcombine.high %v561, %v561
        %v564 = vcombine.high %v458, %v458
        %v566 = vunpack.c.l.s4 1983009808
        %v567 = vunpack.c.0.s8 %v566
        %v568 = vlaneseq
        %v569 = vshrl.u32 %v568, 7
        %v570 = vsub.s32 %v567, %v569
        %v571 = vrot.slane %v458, %v570
        %v573 = vunpack.c.l.s4 1983009808
        %v574 = vunpack.c.0.s8 %v573
        %v575 = vlaneseq
        %v576 = vshrl.u32 %v575, 7
        %v577 = vsub.s32 %v574, %v576
        %v578 = vrot.slane %v564, %v577
        %v579 = vcombine.high %v571, %v571
        %v580 = vcombine.high %v578, %v578
        %v581 = vcombine.high %v459, %v459
        %v583 = vunpack.c.l.s4 1983009808
        %v584 = vunpack.c.0.s8 %v583
        %v585 = vlaneseq
        %v586 = vshrl.u32 %v585, 7
        %v587 = vsub.s32 %v584, %v586
        %v588 = vrot.slane %v459, %v587
        %v590 = vunpack.c.l.s4 1983009808
        %v591 = vunpack.c.0.s8 %v590
        %v592 = vlaneseq
        %v593 = vshrl.u32 %v592, 7
        %v594 = vsub.s32 %v591, %v593
        %v595 = vrot.slane %v581, %v594
        %v596 = vcombine.high %v588, %v588
        %v597 = vcombine.high %v595, %v595
        %v598 = vcombine.high %v460, %v460
        %v600 = vunpack.c.l.s4 1983009808
        %v601 = vunpack.c.0.s8 %v600
        %v602 = vlaneseq
        %v603 = vshrl.u32 %v602, 7
        %v604 = vsub.s32 %v601, %v603
        %v605 = vrot.slane %v460, %v604
        %v607 = vunpack.c.l.s4 1983009808
        %v608 = vunpack.c.0.s8 %v607
        %v609 = vlaneseq
        %v610 = vshrl.u32 %v609, 7
        %v611 = vsub.s32 %v608, %v610
        %v612 = vrot.slane %v598, %v611
        %v613 = vcombine.high %v605, %v605
        %v614 = vcombine.high %v612, %v612
        %v615 = vcombine.high %v461, %v461
        %v617 = vunpack.c.l.s4 1983009808
        %v618 = vunpack.c.0.s8 %v617
        %v619 = vlaneseq
        %v620 = vshrl.u32 %v619, 7
        %v621 = vsub.s32 %v618, %v620
        %v622 = vrot.slane %v461, %v621
        %v624 = vunpack.c.l.s4 1983009808
        %v625 = vunpack.c.0.s8 %v624
        %v626 = vlaneseq
        %v627 = vshrl.u32 %v626, 7
        %v628 = vsub.s32 %v625, %v627
        %v629 = vrot.slane %v615, %v628
        %v630 = vcombine.high %v622, %v622
        %v631 = vcombine.high %v629, %v629
        %v632 = vcombine.high %v462, %v462
        %v634 = vunpack.c.l.s4 1983009808
        %v635 = vunpack.c.0.s8 %v634
        %v636 = vlaneseq
        %v637 = vshrl.u32 %v636, 7
        %v638 = vsub.s32 %v635, %v637
        %v639 = vrot.slane %v462, %v638
        %v641 = vunpack.c.l.s4 1983009808
        %v642 = vunpack.c.0.s8 %v641
        %v643 = vlaneseq
        %v644 = vshrl.u32 %v643, 7
        %v645 = vsub.s32 %v642, %v644
        %v646 = vrot.slane %v632, %v645
        %v647 = vcombine.high %v639, %v639
        %v648 = vcombine.high %v646, %v646
        %v649 = vcombine.high %v463, %v463
        %v651 = vunpack.c.l.s4 1983009808
        %v652 = vunpack.c.0.s8 %v651
        %v653 = vlaneseq
        %v654 = vshrl.u32 %v653, 7
        %v655 = vsub.s32 %v652, %v654
        %v656 = vrot.slane %v463, %v655
        %v658 = vunpack.c.l.s4 1983009808
        %v659 = vunpack.c.0.s8 %v658
        %v660 = vlaneseq
        %v661 = vshrl.u32 %v660, 7
        %v662 = vsub.s32 %v659, %v661
        %v663 = vrot.slane %v649, %v662
        %v664 = vcombine.high %v656, %v656
        %v665 = vcombine.high %v663, %v663
        %v666 = vcombine.high %v464, %v464
        %v668 = vunpack.c.l.s4 1983009808
        %v669 = vunpack.c.0.s8 %v668
        %v670 = vlaneseq
        %v671 = vshrl.u32 %v670, 7
        %v672 = vsub.s32 %v669, %v671
        %v673 = vrot.slane %v464, %v672
        %v675 = vunpack.c.l.s4 1983009808
        %v676 = vunpack.c.0.s8 %v675
        %v677 = vlaneseq
        %v678 = vshrl.u32 %v677, 7
        %v679 = vsub.s32 %v676, %v678
        %v680 = vrot.slane %v666, %v679
        %v681 = vcombine.high %v673, %v673
        %v682 = vcombine.high %v680, %v680
        %v684 = vunpack.c.l.s4 1983009808
        %v685 = vunpack.c.0.s8 %v684
        %v686 = vlaneseq
        %v687 = vshrl.u32 %v686, 7
        %v688 = vsub.s32 %v685, %v687
        %v689 = vrot.slane %v465, %v688
        %v739 = vpack.c.bf16 %v486, %v486
        %v740 = vpack.c.bf16 %v494, %v494
        %v741 = vpack.c.bf16 %v493, %v493
        %v742 = vpack.c.bf16 %v495, %v495
        %v743 = vpack.c.bf16 %v503, %v503
        %v744 = vpack.c.bf16 %v511, %v511
        %v745 = vpack.c.bf16 %v510, %v510
        %v746 = vpack.c.bf16 %v512, %v512
        %v747 = vpack.c.bf16 %v520, %v520
        %v748 = vpack.c.bf16 %v528, %v528
        %v749 = vpack.c.bf16 %v527, %v527
        %v750 = vpack.c.bf16 %v529, %v529
        %v751 = vpack.c.bf16 %v537, %v537
        %v752 = vpack.c.bf16 %v545, %v545
        %v753 = vpack.c.bf16 %v544, %v544
        %v754 = vpack.c.bf16 %v546, %v546
        %v755 = vpack.c.bf16 %v554, %v554
        %v756 = vpack.c.bf16 %v562, %v562
        %v757 = vpack.c.bf16 %v561, %v561
        %v758 = vpack.c.bf16 %v563, %v563
        %v759 = vpack.c.bf16 %v571, %v571
        %v760 = vpack.c.bf16 %v579, %v579
        %v761 = vpack.c.bf16 %v578, %v578
        %v762 = vpack.c.bf16 %v580, %v580
        %v763 = vpack.c.bf16 %v588, %v588
        %v764 = vpack.c.bf16 %v596, %v596
        %v765 = vpack.c.bf16 %v595, %v595
        %v766 = vpack.c.bf16 %v597, %v597
        %v767 = vpack.c.bf16 %v605, %v605
        %v768 = vpack.c.bf16 %v613, %v613
        %v769 = vpack.c.bf16 %v612, %v612
        %v770 = vpack.c.bf16 %v614, %v614
        %v771 = vpack.c.bf16 %v622, %v622
        %v772 = vpack.c.bf16 %v630, %v630
        %v773 = vpack.c.bf16 %v629, %v629
        %v774 = vpack.c.bf16 %v631, %v631
        %v775 = vpack.c.bf16 %v639, %v639
        %v776 = vpack.c.bf16 %v647, %v647
        %v777 = vpack.c.bf16 %v646, %v646
        %v778 = vpack.c.bf16 %v648, %v648
        %v779 = vpack.c.bf16 %v656, %v656
        %v780 = vpack.c.bf16 %v664, %v664
        %v781 = vpack.c.bf16 %v663, %v663
        %v782 = vpack.c.bf16 %v665, %v665
        %v783 = vpack.c.bf16 %v673, %v673
        %v784 = vpack.c.bf16 %v681, %v681
        %v785 = vpack.c.bf16 %v680, %v680
        %v786 = vpack.c.bf16 %v682, %v682
        %v787 = vpack.c.bf16 %v689, %v689
        %v788 = vld [vmem:[#allocation2] sm:$0xff]
        %v789 = vld [vmem:[%s327] sm:$0xff]
        %v790 = vld [vmem:[%s327 + $0x8] sm:$0xff]
        %v791 = vld [vmem:[%s327 + $0x10] sm:$0xff]
        %v792 = vld [vmem:[%s327 + $0x18] sm:$0xff]
        %v793 = vld [vmem:[%s327 + $0x20] sm:$0xff]
        %v794 = vld [vmem:[%s327 + $0x28] sm:$0xff]
        %v795 = vld [vmem:[%s327 + $0x30] sm:$0xff]
        %v796 = vld [vmem:[%s327 + $0x38] sm:$0xff]
        %v797 = vld [vmem:[%s327 + $0x40] sm:$0xff]
        %v798 = vld [vmem:[%s327 + $0x48] sm:$0xff]
        %v799 = vld [vmem:[%s327 + $0x50] sm:$0xff]
        %v800 = vld [vmem:[%s327 + $0x58] sm:$0xff]
        %v801 = vld [vmem:[%s327 + $0x60] sm:$0xff]
        %v802 = vld [vmem:[%s327 + $0x68] sm:$0xff]
        %v803 = vld [vmem:[%s327 + $0x70] sm:$0xff]
        %v804 = vld [vmem:[%s327 + $0x78] sm:$0xff]
        %v805 = vld [vmem:[%s327 + $0x80] sm:$0xff]
        %v806 = vld [vmem:[%s327 + $0x88] sm:$0xff]
        %v807 = vld [vmem:[%s327 + $0x90] sm:$0xff]
        %v808 = vld [vmem:[%s327 + $0x98] sm:$0xff]
        %v809 = vld [vmem:[%s327 + $0xa0] sm:$0xff]
        %v810 = vld [vmem:[%s327 + $0xa8] sm:$0xff]
        %v811 = vld [vmem:[%s327 + $0xb0] sm:$0xff]
        %v812 = vld [vmem:[%s327 + $0xb8] sm:$0xff]
        %v813 = vld [vmem:[%s327 + $0xc0] sm:$0xff]
        %v814 = vld [vmem:[%s327 + $0xc8] sm:$0xff]
        %v815 = vld [vmem:[%s327 + $0xd0] sm:$0xff]
        %v816 = vld [vmem:[%s327 + $0xd8] sm:$0xff]
        %v817 = vld [vmem:[%s327 + $0xe0] sm:$0xff]
        %v818 = vld [vmem:[%s327 + $0xe8] sm:$0xff]
        %v819 = vld [vmem:[%s327 + $0xf0] sm:$0xff]
        %v820 = vld [vmem:[%s327 + $0xf8] sm:$0xff]
        %v821 = vld [vmem:[%s327 + $0x100] sm:$0xff]
        %v822 = vld [vmem:[%s327 + $0x108] sm:$0xff]
        %v823 = vld [vmem:[%s327 + $0x110] sm:$0xff]
        %v824 = vld [vmem:[%s327 + $0x118] sm:$0xff]
        %v825 = vld [vmem:[%s327 + $0x120] sm:$0xff]
        %v826 = vld [vmem:[%s327 + $0x128] sm:$0xff]
        %v827 = vld [vmem:[%s327 + $0x130] sm:$0xff]
        %v828 = vld [vmem:[%s327 + $0x138] sm:$0xff]
        %v829 = vld [vmem:[%s327 + $0x140] sm:$0xff]
        %v830 = vld [vmem:[%s327 + $0x148] sm:$0xff]
        %v831 = vld [vmem:[%s327 + $0x150] sm:$0xff]
        %v832 = vld [vmem:[%s327 + $0x158] sm:$0xff]
        %v833 = vld [vmem:[%s327 + $0x160] sm:$0xff]
        %v834 = vld [vmem:[%s327 + $0x168] sm:$0xff]
        %v835 = vld [vmem:[%s327 + $0x170] sm:$0xff]
        %v836 = vld [vmem:[%s327 + $0x178] sm:$0xff]
        %v837 = vld [vmem:[%s327 + $0x180] sm:$0xff]
        %v838 = vld [vmem:[%s327 + $0x188] sm:$0xff]
        %v839 = vld [vmem:[%s327 + $0x190] sm:$0xff]
        %v840 = vld [vmem:[%s327 + $0x198] sm:$0xff]
        %v841 = vld [vmem:[%s327 + $0x1a0] sm:$0xff]
        %v842 = vld [vmem:[%s327 + $0x1a8] sm:$0xff]
        %v843 = vld [vmem:[%s327 + $0x1b0] sm:$0xff]
        %v844 = vld [vmem:[%s327 + $0x1b8] sm:$0xff]
        %v845 = vld [vmem:[%s327 + $0x1c0] sm:$0xff]
        %v846 = vld [vmem:[%s327 + $0x1c8] sm:$0xff]
        %v847 = vld [vmem:[%s327 + $0x1d0] sm:$0xff]
        %v848 = vld [vmem:[%s327 + $0x1d8] sm:$0xff]
        %v849 = vld [vmem:[%s327 + $0x1e0] sm:$0xff]
        %v850 = vld [vmem:[%s327 + $0x1e8] sm:$0xff]
        %v851 = vld [vmem:[%s327 + $0x1f0] sm:$0xff]
        %v852 = vld [vmem:[%s327 + $0x1f8] sm:$0xff]
        %v853 = vld [vmem:[%s327 + $0x200] sm:$0xff]
        %v854 = vld [vmem:[%s327 + $0x208] sm:$0xff]
        %v855 = vld [vmem:[%s327 + $0x210] sm:$0xff]
        %v856 = vld [vmem:[%s327 + $0x218] sm:$0xff]
        %v857 = vld [vmem:[%s327 + $0x220] sm:$0xff]
        %v858 = vld [vmem:[%s327 + $0x228] sm:$0xff]
        %v859 = vld [vmem:[%s327 + $0x230] sm:$0xff]
        %v860 = vld [vmem:[%s327 + $0x238] sm:$0xff]
        %v861 = vld [vmem:[%s327 + $0x240] sm:$0xff]
        %v862 = vld [vmem:[%s327 + $0x248] sm:$0xff]
        %v863 = vld [vmem:[%s327 + $0x250] sm:$0xff]
        %v864 = vld [vmem:[%s327 + $0x258] sm:$0xff]
        %v865 = vld [vmem:[%s327 + $0x260] sm:$0xff]
        %v866 = vld [vmem:[%s327 + $0x268] sm:$0xff]
        %v867 = vld [vmem:[%s327 + $0x270] sm:$0xff]
        %v868 = vld [vmem:[%s327 + $0x278] sm:$0xff]
        %v869 = vld [vmem:[%s327 + $0x280] sm:$0xff]
        %v870 = vld [vmem:[%s327 + $0x288] sm:$0xff]
        %v871 = vld [vmem:[%s327 + $0x290] sm:$0xff]
        %v872 = vld [vmem:[%s327 + $0x298] sm:$0xff]
        %v873 = vld [vmem:[%s327 + $0x2a0] sm:$0xff]
        %v874 = vld [vmem:[%s327 + $0x2a8] sm:$0xff]
        %v875 = vld [vmem:[%s327 + $0x2b0] sm:$0xff]
        %v876 = vld [vmem:[%s327 + $0x2b8] sm:$0xff]
        %v877 = vld [vmem:[%s327 + $0x2c0] sm:$0xff]
        %v878 = vld [vmem:[%s327 + $0x2c8] sm:$0xff]
        %v879 = vld [vmem:[%s327 + $0x2d0] sm:$0xff]
        %v880 = vld [vmem:[%s327 + $0x2d8] sm:$0xff]
        %v881 = vld [vmem:[%s327 + $0x2e0] sm:$0xff]
        %v882 = vld [vmem:[%s327 + $0x2e8] sm:$0xff]
        %v883 = vld [vmem:[%s327 + $0x2f0] sm:$0xff]
        %v884 = vld [vmem:[%s327 + $0x2f8] sm:$0xff]
        %v885 = vld [vmem:[%s327 + $0x300] sm:$0xff]
        %v886 = vld [vmem:[%s327 + $0x308] sm:$0xff]
        %v887 = vld [vmem:[%s327 + $0x310] sm:$0xff]
        %v888 = vld [vmem:[%s327 + $0x318] sm:$0xff]
        %v889 = vld [vmem:[%s327 + $0x320] sm:$0xff]
        %v890 = vld [vmem:[%s327 + $0x328] sm:$0xff]
        %v891 = vld [vmem:[%s327 + $0x330] sm:$0xff]
        %v892 = vld [vmem:[%s327 + $0x338] sm:$0xff]
        %v893 = vld [vmem:[%s327 + $0x340] sm:$0xff]
        %v894 = vld [vmem:[%s327 + $0x348] sm:$0xff]
        %v895 = vld [vmem:[%s327 + $0x350] sm:$0xff]
        %v896 = vld [vmem:[%s327 + $0x358] sm:$0xff]
        %v897 = vld [vmem:[%s327 + $0x360] sm:$0xff]
        %v898 = vld [vmem:[%s327 + $0x368] sm:$0xff]
        %v899 = vld [vmem:[%s327 + $0x370] sm:$0xff]
        %v900 = vld [vmem:[%s327 + $0x378] sm:$0xff]
        %v901 = vld [vmem:[%s327 + $0x380] sm:$0xff]
        %v902 = vld [vmem:[%s327 + $0x388] sm:$0xff]
        %v903 = vld [vmem:[%s327 + $0x390] sm:$0xff]
        %v904 = vld [vmem:[%s327 + $0x398] sm:$0xff]
        %v905 = vld [vmem:[%s327 + $0x3a0] sm:$0xff]
        %v906 = vld [vmem:[%s327 + $0x3a8] sm:$0xff]
        %v907 = vld [vmem:[%s327 + $0x3b0] sm:$0xff]
        %v908 = vld [vmem:[%s327 + $0x3b8] sm:$0xff]
        %v909 = vld [vmem:[%s327 + $0x3c0] sm:$0xff]
        %v910 = vld [vmem:[%s327 + $0x3c8] sm:$0xff]
        %v911 = vld [vmem:[%s327 + $0x3d0] sm:$0xff]
        %v912 = vld [vmem:[%s327 + $0x3d8] sm:$0xff]
        %v913 = vld [vmem:[%s327 + $0x3e0] sm:$0xff]
        %v914 = vld [vmem:[%s327 + $0x3e8] sm:$0xff]
        %v915 = vld [vmem:[%s327 + $0x3f0] sm:$0xff]
        %v916 = vld [vmem:[%s327 + $0x3f8] sm:$0xff]
        %v917 = vld [vmem:[%s327 + $0x400] sm:$0xff]
        %v918 = vld [vmem:[%s327 + $0x408] sm:$0xff]
        %v919 = vld [vmem:[%s327 + $0x410] sm:$0xff]
        %v920 = vld [vmem:[%s327 + $0x418] sm:$0xff]
        %v921 = vld [vmem:[%s327 + $0x420] sm:$0xff]
        %v922 = vld [vmem:[%s327 + $0x428] sm:$0xff]
        %v923 = vld [vmem:[%s327 + $0x430] sm:$0xff]
        %v924 = vld [vmem:[%s327 + $0x438] sm:$0xff]
        %v925 = vld [vmem:[%s327 + $0x440] sm:$0xff]
        %v926 = vld [vmem:[%s327 + $0x448] sm:$0xff]
        %v927 = vld [vmem:[%s327 + $0x450] sm:$0xff]
        %v928 = vld [vmem:[%s327 + $0x458] sm:$0xff]
        %v929 = vld [vmem:[%s327 + $0x460] sm:$0xff]
        %v930 = vld [vmem:[%s327 + $0x468] sm:$0xff]
        %v931 = vld [vmem:[%s327 + $0x470] sm:$0xff]
        %v932 = vld [vmem:[%s327 + $0x478] sm:$0xff]
        %v933 = vld [vmem:[%s327 + $0x480] sm:$0xff]
        %v934 = vld [vmem:[%s327 + $0x488] sm:$0xff]
        %v935 = vld [vmem:[%s327 + $0x490] sm:$0xff]
        %v936 = vld [vmem:[%s327 + $0x498] sm:$0xff]
        %v937 = vld [vmem:[%s327 + $0x4a0] sm:$0xff]
        %v938 = vld [vmem:[%s327 + $0x4a8] sm:$0xff]
        %v939 = vld [vmem:[%s327 + $0x4b0] sm:$0xff]
        %v940 = vld [vmem:[%s327 + $0x4b8] sm:$0xff]
        %v941 = vld [vmem:[%s327 + $0x4c0] sm:$0xff]
        %v942 = vld [vmem:[%s327 + $0x4c8] sm:$0xff]
        %v943 = vld [vmem:[%s327 + $0x4d0] sm:$0xff]
        %v944 = vld [vmem:[%s327 + $0x4d8] sm:$0xff]
        %v945 = vld [vmem:[%s327 + $0x4e0] sm:$0xff]
        %v946 = vld [vmem:[%s327 + $0x4e8] sm:$0xff]
        %v947 = vld [vmem:[%s327 + $0x4f0] sm:$0xff]
        %v948 = vld [vmem:[%s327 + $0x4f8] sm:$0xff]
        %v949 = vld [vmem:[%s327 + $0x500] sm:$0xff]
        %v950 = vld [vmem:[%s327 + $0x508] sm:$0xff]
        %v951 = vld [vmem:[%s327 + $0x510] sm:$0xff]
        %v952 = vld [vmem:[%s327 + $0x518] sm:$0xff]
        %v953 = vld [vmem:[%s327 + $0x520] sm:$0xff]
        %v954 = vld [vmem:[%s327 + $0x528] sm:$0xff]
        %v955 = vld [vmem:[%s327 + $0x530] sm:$0xff]
        %v956 = vld [vmem:[%s327 + $0x538] sm:$0xff]
        %v957 = vld [vmem:[%s327 + $0x540] sm:$0xff]
        %v958 = vld [vmem:[%s327 + $0x548] sm:$0xff]
        %v959 = vld [vmem:[%s327 + $0x550] sm:$0xff]
        %v960 = vld [vmem:[%s327 + $0x558] sm:$0xff]
        %v961 = vld [vmem:[%s327 + $0x560] sm:$0xff]
        %v962 = vld [vmem:[%s327 + $0x568] sm:$0xff]
        %v963 = vld [vmem:[%s327 + $0x570] sm:$0xff]
        %v964 = vld [vmem:[%s327 + $0x578] sm:$0xff]
        %v965 = vld [vmem:[%s327 + $0x580] sm:$0xff]
        %v966 = vld [vmem:[%s327 + $0x588] sm:$0xff]
        %v967 = vld [vmem:[%s327 + $0x590] sm:$0xff]
        %v968 = vld [vmem:[%s327 + $0x598] sm:$0xff]
        %v969 = vld [vmem:[%s327 + $0x5a0] sm:$0xff]
        %v970 = vld [vmem:[%s327 + $0x5a8] sm:$0xff]
        %v971 = vld [vmem:[%s327 + $0x5b0] sm:$0xff]
        %v972 = vld [vmem:[%s327 + $0x5b8] sm:$0xff]
        %v973 = vld [vmem:[%s327 + $0x5c0] sm:$0xff]
        %v974 = vld [vmem:[%s327 + $0x5c8] sm:$0xff]
        %v975 = vld [vmem:[%s327 + $0x5d0] sm:$0xff]
        %v976 = vld [vmem:[%s327 + $0x5d8] sm:$0xff]
        %v977 = vld [vmem:[%s327 + $0x5e0] sm:$0xff]
        %v978 = vld [vmem:[%s327 + $0x5e8] sm:$0xff]
        %v979 = vld [vmem:[%s327 + $0x5f0] sm:$0xff]
        %v980 = vld [vmem:[%s327 + $0x5f8] sm:$0xff]
        %v981 = vld [vmem:[%s327 + $0x600] sm:$0xff]
        %v982 = vld [vmem:[%s327 + $0x608] sm:$0xff]
        %v983 = vld [vmem:[%s327 + $0x610] sm:$0xff]
        %v984 = vld [vmem:[%s327 + $0x618] sm:$0xff]
        %v985 = vld [vmem:[%s327 + $0x620] sm:$0xff]
        %v986 = vld [vmem:[%s327 + $0x628] sm:$0xff]
        %v987 = vld [vmem:[%s327 + $0x630] sm:$0xff]
        %v988 = vld [vmem:[%s327 + $0x638] sm:$0xff]
        %v989 = vld [vmem:[%s327 + $0x640] sm:$0xff]
        %v990 = vld [vmem:[%s327 + $0x648] sm:$0xff]
        %v991 = vld [vmem:[%s327 + $0x650] sm:$0xff]
        %v992 = vld [vmem:[%s327 + $0x658] sm:$0xff]
        %v993 = vld [vmem:[%s327 + $0x660] sm:$0xff]
        %v994 = vld [vmem:[%s327 + $0x668] sm:$0xff]
        %v995 = vld [vmem:[%s327 + $0x670] sm:$0xff]
        %v996 = vld [vmem:[%s327 + $0x678] sm:$0xff]
        %v997 = vld [vmem:[%s327 + $0x680] sm:$0xff]
        %v998 = vld [vmem:[%s327 + $0x688] sm:$0xff]
        %v999 = vld [vmem:[%s327 + $0x690] sm:$0xff]
        %v1000 = vld [vmem:[%s327 + $0x698] sm:$0xff]
        %v1001 = vld [vmem:[%s327 + $0x6a0] sm:$0xff]
        %v1002 = vld [vmem:[%s327 + $0x6a8] sm:$0xff]
        %v1003 = vld [vmem:[%s327 + $0x6b0] sm:$0xff]
        %v1004 = vld [vmem:[%s327 + $0x6b8] sm:$0xff]
        %v1005 = vld [vmem:[%s327 + $0x6c0] sm:$0xff]
        %v1006 = vld [vmem:[%s327 + $0x6c8] sm:$0xff]
        %v1007 = vld [vmem:[%s327 + $0x6d0] sm:$0xff]
        %v1008 = vld [vmem:[%s327 + $0x6d8] sm:$0xff]
        %v1009 = vld [vmem:[%s327 + $0x6e0] sm:$0xff]
        %v1010 = vld [vmem:[%s327 + $0x6e8] sm:$0xff]
        %v1011 = vld [vmem:[%s327 + $0x6f0] sm:$0xff]
        %v1012 = vld [vmem:[%s327 + $0x6f8] sm:$0xff]
        %v1013 = vld [vmem:[%s327 + $0x700] sm:$0xff]
        %v1014 = vld [vmem:[%s327 + $0x708] sm:$0xff]
        %v1015 = vld [vmem:[%s327 + $0x710] sm:$0xff]
        %v1016 = vld [vmem:[%s327 + $0x718] sm:$0xff]
        %v1017 = vld [vmem:[%s327 + $0x720] sm:$0xff]
        %v1018 = vld [vmem:[%s327 + $0x728] sm:$0xff]
        %v1019 = vld [vmem:[%s327 + $0x730] sm:$0xff]
        %v1020 = vld [vmem:[%s327 + $0x738] sm:$0xff]
        %v1021 = vld [vmem:[%s327 + $0x740] sm:$0xff]
        %v1022 = vld [vmem:[%s327 + $0x748] sm:$0xff]
        %v1023 = vld [vmem:[%s327 + $0x750] sm:$0xff]
        %v1024 = vld [vmem:[%s327 + $0x758] sm:$0xff]
        %v1025 = vld [vmem:[%s327 + $0x760] sm:$0xff]
        %v1026 = vld [vmem:[%s327 + $0x768] sm:$0xff]
        %v1027 = vld [vmem:[%s327 + $0x770] sm:$0xff]
        %v1028 = vld [vmem:[%s327 + $0x778] sm:$0xff]
        %v1029 = vld [vmem:[%s327 + $0x780] sm:$0xff]
        %v1030 = vld [vmem:[%s327 + $0x788] sm:$0xff]
        %v1031 = vld [vmem:[%s327 + $0x790] sm:$0xff]
        %v1032 = vld [vmem:[%s327 + $0x798] sm:$0xff]
        %v1033 = vld [vmem:[%s327 + $0x7a0] sm:$0xff]
        %v1034 = vld [vmem:[%s327 + $0x7a8] sm:$0xff]
        %v1035 = vld [vmem:[%s327 + $0x7b0] sm:$0xff]
        %v1036 = vld [vmem:[%s327 + $0x7b8] sm:$0xff]
        %v1037 = vld [vmem:[%s327 + $0x7c0] sm:$0xff]
        %v1038 = vld [vmem:[%s327 + $0x7c8] sm:$0xff]
        %v1039 = vld [vmem:[%s327 + $0x7d0] sm:$0xff]
        %v1040 = vld [vmem:[%s327 + $0x7d8] sm:$0xff]
        %v1041 = vld [vmem:[%s327 + $0x7e0] sm:$0xff]
        %v1042 = vld [vmem:[%s327 + $0x7e8] sm:$0xff]
        %v1043 = vld [vmem:[%s327 + $0x7f0] sm:$0xff]
        %v1044 = vld [vmem:[%s327 + $0x7f8] sm:$0xff]
        %v1045 = vld [vmem:[%s327 + $0x800] sm:$0xff]
        %v1046 = vld [vmem:[%s327 + $0x808] sm:$0xff]
        %v1047 = vld [vmem:[%s327 + $0x810] sm:$0xff]
        %v1048 = vld [vmem:[%s327 + $0x818] sm:$0xff]
        %v1049 = vld [vmem:[%s327 + $0x820] sm:$0xff]
        %v1050 = vld [vmem:[%s327 + $0x828] sm:$0xff]
        %v1051 = vld [vmem:[%s327 + $0x830] sm:$0xff]
        %v1052 = vld [vmem:[%s327 + $0x838] sm:$0xff]
        %v1053 = vld [vmem:[%s327 + $0x840] sm:$0xff]
        %v1054 = vld [vmem:[%s327 + $0x848] sm:$0xff]
        %v1055 = vld [vmem:[%s327 + $0x850] sm:$0xff]
        %v1056 = vld [vmem:[%s327 + $0x858] sm:$0xff]
        %v1057 = vld [vmem:[%s327 + $0x860] sm:$0xff]
        %v1058 = vld [vmem:[%s327 + $0x868] sm:$0xff]
        %v1059 = vld [vmem:[%s327 + $0x870] sm:$0xff]
        %v1060 = vld [vmem:[%s327 + $0x878] sm:$0xff]
        %v1061 = vld [vmem:[%s327 + $0x880] sm:$0xff]
        %v1062 = vld [vmem:[%s327 + $0x888] sm:$0xff]
        %v1063 = vld [vmem:[%s327 + $0x890] sm:$0xff]
        %v1064 = vld [vmem:[%s327 + $0x898] sm:$0xff]
        %v1065 = vld [vmem:[%s327 + $0x8a0] sm:$0xff]
        %v1066 = vld [vmem:[%s327 + $0x8a8] sm:$0xff]
        %v1067 = vld [vmem:[%s327 + $0x8b0] sm:$0xff]
        %v1068 = vld [vmem:[%s327 + $0x8b8] sm:$0xff]
        %v1069 = vld [vmem:[%s327 + $0x8c0] sm:$0xff]
        %v1070 = vld [vmem:[%s327 + $0x8c8] sm:$0xff]
        %v1071 = vld [vmem:[%s327 + $0x8d0] sm:$0xff]
        %v1072 = vld [vmem:[%s327 + $0x8d8] sm:$0xff]
        %v1073 = vld [vmem:[%s327 + $0x8e0] sm:$0xff]
        %v1074 = vld [vmem:[%s327 + $0x8e8] sm:$0xff]
        %v1075 = vld [vmem:[%s327 + $0x8f0] sm:$0xff]
        %v1076 = vld [vmem:[%s327 + $0x8f8] sm:$0xff]
        %v1077 = vld [vmem:[%s327 + $0x900] sm:$0xff]
        %v1078 = vld [vmem:[%s327 + $0x908] sm:$0xff]
        %v1079 = vld [vmem:[%s327 + $0x910] sm:$0xff]
        %v1080 = vld [vmem:[%s327 + $0x918] sm:$0xff]
        %v1081 = vld [vmem:[%s327 + $0x920] sm:$0xff]
        %v1082 = vld [vmem:[%s327 + $0x928] sm:$0xff]
        %v1083 = vld [vmem:[%s327 + $0x930] sm:$0xff]
        %v1084 = vld [vmem:[%s327 + $0x938] sm:$0xff]
        %v1085 = vld [vmem:[%s327 + $0x940] sm:$0xff]
        %v1086 = vld [vmem:[%s327 + $0x948] sm:$0xff]
        %v1087 = vld [vmem:[%s327 + $0x950] sm:$0xff]
        %v1088 = vld [vmem:[%s327 + $0x958] sm:$0xff]
        %v1089 = vld [vmem:[%s327 + $0x960] sm:$0xff]
        %v1090 = vld [vmem:[%s327 + $0x968] sm:$0xff]
        %v1091 = vld [vmem:[%s327 + $0x970] sm:$0xff]
        %v1092 = vld [vmem:[%s327 + $0x978] sm:$0xff]
        %v1093 = vld [vmem:[%s327 + $0x980] sm:$0xff]
        %v1094 = vld [vmem:[%s327 + $0x988] sm:$0xff]
        %v1095 = vld [vmem:[%s327 + $0x990] sm:$0xff]
        %v1096 = vld [vmem:[%s327 + $0x998] sm:$0xff]
        %v1097 = vld [vmem:[%s327 + $0x9a0] sm:$0xff]
        %v1098 = vld [vmem:[%s327 + $0x9a8] sm:$0xff]
        %v1099 = vld [vmem:[%s327 + $0x9b0] sm:$0xff]
        %v1100 = vld [vmem:[%s327 + $0x9b8] sm:$0xff]
        %v1101 = vld [vmem:[%s327 + $0x9c0] sm:$0xff]
        %v1102 = vld [vmem:[%s327 + $0x9c8] sm:$0xff]
        %v1103 = vld [vmem:[%s327 + $0x9d0] sm:$0xff]
        %v1104 = vld [vmem:[%s327 + $0x9d8] sm:$0xff]
        %v1105 = vld [vmem:[%s327 + $0x9e0] sm:$0xff]
        %v1106 = vld [vmem:[%s327 + $0x9e8] sm:$0xff]
        %v1107 = vld [vmem:[%s327 + $0x9f0] sm:$0xff]
        %v1108 = vld [vmem:[%s327 + $0x9f8] sm:$0xff]
        %v1109 = vld [vmem:[%s327 + $0xa00] sm:$0xff]
        %v1110 = vld [vmem:[%s327 + $0xa08] sm:$0xff]
        %v1111 = vld [vmem:[%s327 + $0xa10] sm:$0xff]
        %v1112 = vld [vmem:[%s327 + $0xa18] sm:$0xff]
        %v1113 = vld [vmem:[%s327 + $0xa20] sm:$0xff]
        %v1114 = vld [vmem:[%s327 + $0xa28] sm:$0xff]
        %v1115 = vld [vmem:[%s327 + $0xa30] sm:$0xff]
        %v1116 = vld [vmem:[%s327 + $0xa38] sm:$0xff]
        %v1117 = vld [vmem:[%s327 + $0xa40] sm:$0xff]
        %v1118 = vld [vmem:[%s327 + $0xa48] sm:$0xff]
        %v1119 = vld [vmem:[%s327 + $0xa50] sm:$0xff]
        %v1120 = vld [vmem:[%s327 + $0xa58] sm:$0xff]
        %v1121 = vld [vmem:[%s327 + $0xa60] sm:$0xff]
        %v1122 = vld [vmem:[%s327 + $0xa68] sm:$0xff]
        %v1123 = vld [vmem:[%s327 + $0xa70] sm:$0xff]
        %v1124 = vld [vmem:[%s327 + $0xa78] sm:$0xff]
        %v1125 = vld [vmem:[%s327 + $0xa80] sm:$0xff]
        %v1126 = vld [vmem:[%s327 + $0xa88] sm:$0xff]
        %v1127 = vld [vmem:[%s327 + $0xa90] sm:$0xff]
        %v1128 = vld [vmem:[%s327 + $0xa98] sm:$0xff]
        %v1129 = vld [vmem:[%s327 + $0xaa0] sm:$0xff]
        %v1130 = vld [vmem:[%s327 + $0xaa8] sm:$0xff]
        %v1131 = vld [vmem:[%s327 + $0xab0] sm:$0xff]
        %v1132 = vld [vmem:[%s327 + $0xab8] sm:$0xff]
        %v1133 = vld [vmem:[%s327 + $0xac0] sm:$0xff]
        %v1134 = vld [vmem:[%s327 + $0xac8] sm:$0xff]
        %v1135 = vld [vmem:[%s327 + $0xad0] sm:$0xff]
        %v1136 = vld [vmem:[%s327 + $0xad8] sm:$0xff]
        %v1137 = vld [vmem:[%s327 + $0xae0] sm:$0xff]
        %v1138 = vld [vmem:[%s327 + $0xae8] sm:$0xff]
        %v1139 = vld [vmem:[%s327 + $0xaf0] sm:$0xff]
        %v1140 = vld [vmem:[%s327 + $0xaf8] sm:$0xff]
        %v1141 = vld [vmem:[%s327 + $0xb00] sm:$0xff]
        %v1142 = vld [vmem:[%s327 + $0xb08] sm:$0xff]
        %v1143 = vld [vmem:[%s327 + $0xb10] sm:$0xff]
        %v1144 = vld [vmem:[%s327 + $0xb18] sm:$0xff]
        %v1145 = vld [vmem:[%s327 + $0xb20] sm:$0xff]
        %v1146 = vld [vmem:[%s327 + $0xb28] sm:$0xff]
        %v1147 = vld [vmem:[%s327 + $0xb30] sm:$0xff]
        %v1148 = vld [vmem:[%s327 + $0xb38] sm:$0xff]
        %v1149 = vld [vmem:[%s327 + $0xb40] sm:$0xff]
        %v1150 = vld [vmem:[%s327 + $0xb48] sm:$0xff]
        %v1151 = vld [vmem:[%s327 + $0xb50] sm:$0xff]
        %v1152 = vld [vmem:[%s327 + $0xb58] sm:$0xff]
        %v1153 = vld [vmem:[%s327 + $0xb60] sm:$0xff]
        %v1154 = vld [vmem:[%s327 + $0xb68] sm:$0xff]
        %v1155 = vld [vmem:[%s327 + $0xb70] sm:$0xff]
        %v1156 = vld [vmem:[%s327 + $0xb78] sm:$0xff]
        %v1157 = vld [vmem:[%s327 + $0xb80] sm:$0xff]
        %v1158 = vld [vmem:[%s327 + $0xb88] sm:$0xff]
        %v1159 = vld [vmem:[%s327 + $0xb90] sm:$0xff]
        %v1160 = vld [vmem:[%s327 + $0xb98] sm:$0xff]
        %v1161 = vld [vmem:[%s327 + $0xba0] sm:$0xff]
        %v1162 = vld [vmem:[%s327 + $0xba8] sm:$0xff]
        %v1163 = vld [vmem:[%s327 + $0xbb0] sm:$0xff]
        %v1164 = vld [vmem:[%s327 + $0xbb8] sm:$0xff]
        %v1165 = vld [vmem:[%s327 + $0xbc0] sm:$0xff]
        %v1166 = vld [vmem:[%s327 + $0xbc8] sm:$0xff]
        %v1167 = vld [vmem:[%s327 + $0xbd0] sm:$0xff]
        %v1168 = vld [vmem:[%s327 + $0xbd8] sm:$0xff]
        %v1169 = vld [vmem:[%s327 + $0xbe0] sm:$0xff]
        %v1170 = vld [vmem:[%s327 + $0xbe8] sm:$0xff]
        %v1171 = vld [vmem:[%s327 + $0xbf0] sm:$0xff]
        %v1172 = vld [vmem:[%s327 + $0xbf8] sm:$0xff]
        %v1173 = vld [vmem:[%s327 + $0xc00] sm:$0xff]
        %v1174 = vld [vmem:[%s327 + $0xc08] sm:$0xff]
        %v1175 = vld [vmem:[%s327 + $0xc10] sm:$0xff]
        %v1176 = vld [vmem:[%s327 + $0xc18] sm:$0xff]
        %v1177 = vld [vmem:[%s327 + $0xc20] sm:$0xff]
        %v1178 = vld [vmem:[%s327 + $0xc28] sm:$0xff]
        %v1179 = vld [vmem:[%s327 + $0xc30] sm:$0xff]
        %v1180 = vld [vmem:[%s327 + $0xc38] sm:$0xff]
        %v1181 = vld [vmem:[%s327 + $0xc40] sm:$0xff]
        %v1182 = vld [vmem:[%s327 + $0xc48] sm:$0xff]
        %v1183 = vld [vmem:[%s327 + $0xc50] sm:$0xff]
        %v1184 = vld [vmem:[%s327 + $0xc58] sm:$0xff]
        %v1185 = vld [vmem:[%s327 + $0xc60] sm:$0xff]
        %v1186 = vld [vmem:[%s327 + $0xc68] sm:$0xff]
        %v1187 = vld [vmem:[%s327 + $0xc70] sm:$0xff]
        %v1188 = vld [vmem:[%s327 + $0xc78] sm:$0xff]
        %v1189 = vld [vmem:[%s327 + $0xc80] sm:$0xff]
        %v1190 = vld [vmem:[%s327 + $0xc88] sm:$0xff]
        %v1191 = vld [vmem:[%s327 + $0xc90] sm:$0xff]
        %v1192 = vld [vmem:[%s327 + $0xc98] sm:$0xff]
        %v1193 = vld [vmem:[%s327 + $0xca0] sm:$0xff]
        %v1194 = vld [vmem:[%s327 + $0xca8] sm:$0xff]
        %v1195 = vld [vmem:[%s327 + $0xcb0] sm:$0xff]
        %v1196 = vld [vmem:[%s327 + $0xcb8] sm:$0xff]
        %v1197 = vld [vmem:[%s327 + $0xcc0] sm:$0xff]
        %v1198 = vld [vmem:[%s327 + $0xcc8] sm:$0xff]
        %v1199 = vld [vmem:[%s327 + $0xcd0] sm:$0xff]
        %v1200 = vld [vmem:[%s327 + $0xcd8] sm:$0xff]
        %v1201 = vld [vmem:[%s327 + $0xce0] sm:$0xff]
        %v1202 = vld [vmem:[%s327 + $0xce8] sm:$0xff]
        %v1203 = vld [vmem:[%s327 + $0xcf0] sm:$0xff]
        %v1204 = vld [vmem:[%s327 + $0xcf8] sm:$0xff]
        %v1205 = vld [vmem:[%s327 + $0xd00] sm:$0xff]
        %v1206 = vld [vmem:[%s327 + $0xd08] sm:$0xff]
        %v1207 = vld [vmem:[%s327 + $0xd10] sm:$0xff]
        %v1208 = vld [vmem:[%s327 + $0xd18] sm:$0xff]
        %v1209 = vld [vmem:[%s327 + $0xd20] sm:$0xff]
        %v1210 = vld [vmem:[%s327 + $0xd28] sm:$0xff]
        %v1211 = vld [vmem:[%s327 + $0xd30] sm:$0xff]
        %v1212 = vld [vmem:[%s327 + $0xd38] sm:$0xff]
        %v1213 = vld [vmem:[%s327 + $0xd40] sm:$0xff]
        %v1214 = vld [vmem:[%s327 + $0xd48] sm:$0xff]
        %v1215 = vld [vmem:[%s327 + $0xd50] sm:$0xff]
        %v1216 = vld [vmem:[%s327 + $0xd58] sm:$0xff]
        %v1217 = vld [vmem:[%s327 + $0xd60] sm:$0xff]
        %v1218 = vld [vmem:[%s327 + $0xd68] sm:$0xff]
        %v1219 = vld [vmem:[%s327 + $0xd70] sm:$0xff]
        %v1220 = vld [vmem:[%s327 + $0xd78] sm:$0xff]
        %v1221 = vld [vmem:[%s327 + $0xd80] sm:$0xff]
        %v1222 = vld [vmem:[%s327 + $0xd88] sm:$0xff]
        %v1223 = vld [vmem:[%s327 + $0xd90] sm:$0xff]
        %v1224 = vld [vmem:[%s327 + $0xd98] sm:$0xff]
        %v1225 = vld [vmem:[%s327 + $0xda0] sm:$0xff]
        %v1226 = vld [vmem:[%s327 + $0xda8] sm:$0xff]
        %v1227 = vld [vmem:[%s327 + $0xdb0] sm:$0xff]
        %v1228 = vld [vmem:[%s327 + $0xdb8] sm:$0xff]
        %v1229 = vld [vmem:[%s327 + $0xdc0] sm:$0xff]
        %v1230 = vld [vmem:[%s327 + $0xdc8] sm:$0xff]
        %v1231 = vld [vmem:[%s327 + $0xdd0] sm:$0xff]
        %v1232 = vld [vmem:[%s327 + $0xdd8] sm:$0xff]
        %v1233 = vld [vmem:[%s327 + $0xde0] sm:$0xff]
        %v1234 = vld [vmem:[%s327 + $0xde8] sm:$0xff]
        %v1235 = vld [vmem:[%s327 + $0xdf0] sm:$0xff]
        %v1236 = vld [vmem:[%s327 + $0xdf8] sm:$0xff]
        %v1237 = vld [vmem:[%s327 + $0xe00] sm:$0xff]
        %v1238 = vld [vmem:[%s327 + $0xe08] sm:$0xff]
        %v1239 = vld [vmem:[%s327 + $0xe10] sm:$0xff]
        %v1240 = vld [vmem:[%s327 + $0xe18] sm:$0xff]
        %v1241 = vld [vmem:[%s327 + $0xe20] sm:$0xff]
        %v1242 = vld [vmem:[%s327 + $0xe28] sm:$0xff]
        %v1243 = vld [vmem:[%s327 + $0xe30] sm:$0xff]
        %v1244 = vld [vmem:[%s327 + $0xe38] sm:$0xff]
        %v1245 = vld [vmem:[%s327 + $0xe40] sm:$0xff]
        %v1246 = vld [vmem:[%s327 + $0xe48] sm:$0xff]
        %v1247 = vld [vmem:[%s327 + $0xe50] sm:$0xff]
        %v1248 = vld [vmem:[%s327 + $0xe58] sm:$0xff]
        %v1249 = vld [vmem:[%s327 + $0xe60] sm:$0xff]
        %v1250 = vld [vmem:[%s327 + $0xe68] sm:$0xff]
        %v1251 = vld [vmem:[%s327 + $0xe70] sm:$0xff]
        %v1252 = vld [vmem:[%s327 + $0xe78] sm:$0xff]
        %v1253 = vld [vmem:[%s327 + $0xe80] sm:$0xff]
        %v1254 = vld [vmem:[%s327 + $0xe88] sm:$0xff]
        %v1255 = vld [vmem:[%s327 + $0xe90] sm:$0xff]
        %v1256 = vld [vmem:[%s327 + $0xe98] sm:$0xff]
        %v1257 = vld [vmem:[%s327 + $0xea0] sm:$0xff]
        %v1258 = vld [vmem:[%s327 + $0xea8] sm:$0xff]
        %v1259 = vld [vmem:[%s327 + $0xeb0] sm:$0xff]
        %v1260 = vld [vmem:[%s327 + $0xeb8] sm:$0xff]
        %v1261 = vld [vmem:[%s327 + $0xec0] sm:$0xff]
        %v1262 = vld [vmem:[%s327 + $0xec8] sm:$0xff]
        %v1263 = vld [vmem:[%s327 + $0xed0] sm:$0xff]
        %v1264 = vld [vmem:[%s327 + $0xed8] sm:$0xff]
        %v1265 = vld [vmem:[%s327 + $0xee0] sm:$0xff]
        %v1266 = vld [vmem:[%s327 + $0xee8] sm:$0xff]
        %v1267 = vld [vmem:[%s327 + $0xef0] sm:$0xff]
        %v1268 = vld [vmem:[%s327 + $0xef8] sm:$0xff]
        %v1269 = vld [vmem:[%s327 + $0xf00] sm:$0xff]
        %v1270 = vld [vmem:[%s327 + $0xf08] sm:$0xff]
        %v1271 = vld [vmem:[%s327 + $0xf10] sm:$0xff]
        %v1272 = vld [vmem:[%s327 + $0xf18] sm:$0xff]
        %v1273 = vld [vmem:[%s327 + $0xf20] sm:$0xff]
        %v1274 = vld [vmem:[%s327 + $0xf28] sm:$0xff]
        %v1275 = vld [vmem:[%s327 + $0xf30] sm:$0xff]
        %v1276 = vld [vmem:[%s327 + $0xf38] sm:$0xff]
        %v1277 = vld [vmem:[%s327 + $0xf40] sm:$0xff]
        %v1278 = vld [vmem:[%s327 + $0xf48] sm:$0xff]
        %v1279 = vld [vmem:[%s327 + $0xf50] sm:$0xff]
        %v1280 = vld [vmem:[%s327 + $0xf58] sm:$0xff]
        %v1281 = vld [vmem:[%s327 + $0xf60] sm:$0xff]
        %v1282 = vld [vmem:[%s327 + $0xf68] sm:$0xff]
        %v1283 = vld [vmem:[%s327 + $0xf70] sm:$0xff]
        %v1284 = vld [vmem:[%s327 + $0xf78] sm:$0xff]
        %v1285 = vld [vmem:[%s327 + $0xf80] sm:$0xff]
        %v1286 = vld [vmem:[%s327 + $0xf88] sm:$0xff]
        %v1287 = vld [vmem:[%s327 + $0xf90] sm:$0xff]
        %v1288 = vld [vmem:[%s327 + $0xf98] sm:$0xff]
        %v1289 = vld [vmem:[%s327 + $0xfa0] sm:$0xff]
        %v1290 = vld [vmem:[%s327 + $0xfa8] sm:$0xff]
        %v1291 = vld [vmem:[%s327 + $0xfb0] sm:$0xff]
        %v1292 = vld [vmem:[%s327 + $0xfb8] sm:$0xff]
        %v1293 = vld [vmem:[%s327 + $0xfc0] sm:$0xff]
        %v1294 = vld [vmem:[%s327 + $0xfc8] sm:$0xff]
        %v1295 = vld [vmem:[%s327 + $0xfd0] sm:$0xff]
        %v1296 = vld [vmem:[%s327 + $0xfd8] sm:$0xff]
        %v1297 = vld [vmem:[%s327 + $0xfe0] sm:$0xff]
        %v1298 = vld [vmem:[%s327 + $0xfe8] sm:$0xff]
        %v1299 = vld [vmem:[%s327 + $0xff0] sm:$0xff]
        %v1300 = vld [vmem:[%s327 + $0xff8] sm:$0xff]
        %v1301 = vld [vmem:[%s327 + $0x1000] sm:$0xff]
        %v1302 = vld [vmem:[%s327 + $0x1008] sm:$0xff]
        %v1303 = vld [vmem:[%s327 + $0x1010] sm:$0xff]
        %v1304 = vld [vmem:[%s327 + $0x1018] sm:$0xff]
        %v1305 = vld [vmem:[%s327 + $0x1020] sm:$0xff]
        %v1306 = vld [vmem:[%s327 + $0x1028] sm:$0xff]
        %v1307 = vld [vmem:[%s327 + $0x1030] sm:$0xff]
        %v1308 = vld [vmem:[%s327 + $0x1038] sm:$0xff]
        %v1309 = vld [vmem:[%s327 + $0x1040] sm:$0xff]
        %v1310 = vld [vmem:[%s327 + $0x1048] sm:$0xff]
        %v1311 = vld [vmem:[%s327 + $0x1050] sm:$0xff]
        %v1312 = vld [vmem:[%s327 + $0x1058] sm:$0xff]
        %v1313 = vld [vmem:[%s327 + $0x1060] sm:$0xff]
        %v1314 = vld [vmem:[%s327 + $0x1068] sm:$0xff]
        %v1315 = vld [vmem:[%s327 + $0x1070] sm:$0xff]
        %v1316 = vld [vmem:[%s327 + $0x1078] sm:$0xff]
        %v1317 = vld [vmem:[%s327 + $0x1080] sm:$0xff]
        %v1318 = vld [vmem:[%s327 + $0x1088] sm:$0xff]
        %v1319 = vld [vmem:[%s327 + $0x1090] sm:$0xff]
        %v1320 = vld [vmem:[%s327 + $0x1098] sm:$0xff]
        %v1321 = vld [vmem:[%s327 + $0x10a0] sm:$0xff]
        %v1322 = vld [vmem:[%s327 + $0x10a8] sm:$0xff]
        %v1323 = vld [vmem:[%s327 + $0x10b0] sm:$0xff]
        %v1324 = vld [vmem:[%s327 + $0x10b8] sm:$0xff]
        %v1325 = vld [vmem:[%s327 + $0x10c0] sm:$0xff]
        %v1326 = vld [vmem:[%s327 + $0x10c8] sm:$0xff]
        %v1327 = vld [vmem:[%s327 + $0x10d0] sm:$0xff]
        %v1328 = vld [vmem:[%s327 + $0x10d8] sm:$0xff]
        %v1329 = vld [vmem:[%s327 + $0x10e0] sm:$0xff]
        %v1330 = vld [vmem:[%s327 + $0x10e8] sm:$0xff]
        %v1331 = vld [vmem:[%s327 + $0x10f0] sm:$0xff]
        %v1332 = vld [vmem:[%s327 + $0x10f8] sm:$0xff]
        %v1333 = vld [vmem:[%s327 + $0x1100] sm:$0xff]
        %v1334 = vld [vmem:[%s327 + $0x1108] sm:$0xff]
        %v1335 = vld [vmem:[%s327 + $0x1110] sm:$0xff]
        %v1336 = vld [vmem:[%s327 + $0x1118] sm:$0xff]
        %v1337 = vld [vmem:[%s327 + $0x1120] sm:$0xff]
        %v1338 = vld [vmem:[%s327 + $0x1128] sm:$0xff]
        %v1339 = vld [vmem:[%s327 + $0x1130] sm:$0xff]
        %v1340 = vld [vmem:[%s327 + $0x1138] sm:$0xff]
        %v1341 = vld [vmem:[%s327 + $0x1140] sm:$0xff]
        %v1342 = vld [vmem:[%s327 + $0x1148] sm:$0xff]
        %v1343 = vld [vmem:[%s327 + $0x1150] sm:$0xff]
        %v1344 = vld [vmem:[%s327 + $0x1158] sm:$0xff]
        %v1345 = vld [vmem:[%s327 + $0x1160] sm:$0xff]
        %v1346 = vld [vmem:[%s327 + $0x1168] sm:$0xff]
        %v1347 = vld [vmem:[%s327 + $0x1170] sm:$0xff]
        %v1348 = vld [vmem:[%s327 + $0x1178] sm:$0xff]
        %v1349 = vld [vmem:[%s327 + $0x1180] sm:$0xff]
        %v1350 = vld [vmem:[%s327 + $0x1188] sm:$0xff]
        %v1351 = vld [vmem:[%s327 + $0x1190] sm:$0xff]
        %v1352 = vld [vmem:[%s327 + $0x1198] sm:$0xff]
        %v1353 = vld [vmem:[%s327 + $0x11a0] sm:$0xff]
        %v1354 = vld [vmem:[%s327 + $0x11a8] sm:$0xff]
        %v1355 = vld [vmem:[%s327 + $0x11b0] sm:$0xff]
        %v1356 = vld [vmem:[%s327 + $0x11b8] sm:$0xff]
        %v1357 = vld [vmem:[%s327 + $0x11c0] sm:$0xff]
        %v1358 = vld [vmem:[%s327 + $0x11c8] sm:$0xff]
        %v1359 = vld [vmem:[%s327 + $0x11d0] sm:$0xff]
        %v1360 = vld [vmem:[%s327 + $0x11d8] sm:$0xff]
        %v1361 = vld [vmem:[%s327 + $0x11e0] sm:$0xff]
        %v1362 = vld [vmem:[%s327 + $0x11e8] sm:$0xff]
        %v1363 = vld [vmem:[%s327 + $0x11f0] sm:$0xff]
        %v1364 = vld [vmem:[%s327 + $0x11f8] sm:$0xff]
        %v1365 = vld [vmem:[%s327 + $0x1200] sm:$0xff]
        %v1366 = vld [vmem:[%s327 + $0x1208] sm:$0xff]
        %v1367 = vld [vmem:[%s327 + $0x1210] sm:$0xff]
        %v1368 = vld [vmem:[%s327 + $0x1218] sm:$0xff]
        %v1369 = vld [vmem:[%s327 + $0x1220] sm:$0xff]
        %v1370 = vld [vmem:[%s327 + $0x1228] sm:$0xff]
        %v1371 = vld [vmem:[%s327 + $0x1230] sm:$0xff]
        %v1372 = vld [vmem:[%s327 + $0x1238] sm:$0xff]
        %v1373 = vld [vmem:[%s327 + $0x1240] sm:$0xff]
        %v1374 = vld [vmem:[%s327 + $0x1248] sm:$0xff]
        %v1375 = vld [vmem:[%s327 + $0x1250] sm:$0xff]
        %v1376 = vld [vmem:[%s327 + $0x1258] sm:$0xff]
        %v1377 = vld [vmem:[%s327 + $0x1260] sm:$0xff]
        %v1378 = vld [vmem:[%s327 + $0x1268] sm:$0xff]
        %v1379 = vld [vmem:[%s327 + $0x1270] sm:$0xff]
        %v1380 = vld [vmem:[%s327 + $0x1278] sm:$0xff]
        %v1381 = vld [vmem:[%s327 + $0x1280] sm:$0xff]
        %v1382 = vld [vmem:[%s327 + $0x1288] sm:$0xff]
        %v1383 = vld [vmem:[%s327 + $0x1290] sm:$0xff]
        %v1384 = vld [vmem:[%s327 + $0x1298] sm:$0xff]
        %v1385 = vld [vmem:[%s327 + $0x12a0] sm:$0xff]
        %v1386 = vld [vmem:[%s327 + $0x12a8] sm:$0xff]
        %v1387 = vld [vmem:[%s327 + $0x12b0] sm:$0xff]
        %v1388 = vld [vmem:[%s327 + $0x12b8] sm:$0xff]
        %v1389 = vld [vmem:[%s327 + $0x12c0] sm:$0xff]
        %v1390 = vld [vmem:[%s327 + $0x12c8] sm:$0xff]
        %v1391 = vld [vmem:[%s327 + $0x12d0] sm:$0xff]
        %v1392 = vld [vmem:[%s327 + $0x12d8] sm:$0xff]
        %v1393 = vld [vmem:[%s327 + $0x12e0] sm:$0xff]
        %v1394 = vld [vmem:[%s327 + $0x12e8] sm:$0xff]
        %v1395 = vld [vmem:[%s327 + $0x12f0] sm:$0xff]
        %v1396 = vld [vmem:[%s327 + $0x12f8] sm:$0xff]
        %v1397 = vld [vmem:[%s327 + $0x1300] sm:$0xff]
        %v1398 = vld [vmem:[%s327 + $0x1308] sm:$0xff]
        %v1399 = vld [vmem:[%s327 + $0x1310] sm:$0xff]
        %v1400 = vld [vmem:[%s327 + $0x1318] sm:$0xff]
        %v1401 = vld [vmem:[%s327 + $0x1320] sm:$0xff]
        %v1402 = vld [vmem:[%s327 + $0x1328] sm:$0xff]
        %v1403 = vld [vmem:[%s327 + $0x1330] sm:$0xff]
        %v1404 = vld [vmem:[%s327 + $0x1338] sm:$0xff]
        %v1405 = vld [vmem:[%s327 + $0x1340] sm:$0xff]
        %v1406 = vld [vmem:[%s327 + $0x1348] sm:$0xff]
        %v1407 = vld [vmem:[%s327 + $0x1350] sm:$0xff]
        %v1408 = vld [vmem:[%s327 + $0x1358] sm:$0xff]
        %v1409 = vld [vmem:[%s327 + $0x1360] sm:$0xff]
        %v1410 = vld [vmem:[%s327 + $0x1368] sm:$0xff]
        %v1411 = vld [vmem:[%s327 + $0x1370] sm:$0xff]
        %v1412 = vld [vmem:[%s327 + $0x1378] sm:$0xff]
        %v1413 = vld [vmem:[%s327 + $0x1380] sm:$0xff]
        %v1414 = vld [vmem:[%s327 + $0x1388] sm:$0xff]
        %v1415 = vld [vmem:[%s327 + $0x1390] sm:$0xff]
        %v1416 = vld [vmem:[%s327 + $0x1398] sm:$0xff]
        %v1417 = vld [vmem:[%s327 + $0x13a0] sm:$0xff]
        %v1418 = vld [vmem:[%s327 + $0x13a8] sm:$0xff]
        %v1419 = vld [vmem:[%s327 + $0x13b0] sm:$0xff]
        %v1420 = vld [vmem:[%s327 + $0x13b8] sm:$0xff]
        %v1421 = vld [vmem:[%s327 + $0x13c0] sm:$0xff]
        %v1422 = vld [vmem:[%s327 + $0x13c8] sm:$0xff]
        %v1423 = vld [vmem:[%s327 + $0x13d0] sm:$0xff]
        %v1424 = vld [vmem:[%s327 + $0x13d8] sm:$0xff]
        %v1425 = vld [vmem:[%s327 + $0x13e0] sm:$0xff]
        %v1426 = vld [vmem:[%s327 + $0x13e8] sm:$0xff]
        %v1427 = vld [vmem:[%s327 + $0x13f0] sm:$0xff]
        %v1428 = vld [vmem:[%s327 + $0x13f8] sm:$0xff]
        %v1429 = vld [vmem:[%s327 + $0x1400] sm:$0xff]
        %v1430 = vld [vmem:[%s327 + $0x1408] sm:$0xff]
        %v1431 = vld [vmem:[%s327 + $0x1410] sm:$0xff]
        %v1432 = vld [vmem:[%s327 + $0x1418] sm:$0xff]
        %v1433 = vld [vmem:[%s327 + $0x1420] sm:$0xff]
        %v1434 = vld [vmem:[%s327 + $0x1428] sm:$0xff]
        %v1435 = vld [vmem:[%s327 + $0x1430] sm:$0xff]
        %v1436 = vld [vmem:[%s327 + $0x1438] sm:$0xff]
        %v1437 = vld [vmem:[%s327 + $0x1440] sm:$0xff]
        %v1438 = vld [vmem:[%s327 + $0x1448] sm:$0xff]
        %v1439 = vld [vmem:[%s327 + $0x1450] sm:$0xff]
        %v1440 = vld [vmem:[%s327 + $0x1458] sm:$0xff]
        %v1441 = vld [vmem:[%s327 + $0x1460] sm:$0xff]
        %v1442 = vld [vmem:[%s327 + $0x1468] sm:$0xff]
        %v1443 = vld [vmem:[%s327 + $0x1470] sm:$0xff]
        %v1444 = vld [vmem:[%s327 + $0x1478] sm:$0xff]
        %v1445 = vld [vmem:[%s327 + $0x1480] sm:$0xff]
        %v1446 = vld [vmem:[%s327 + $0x1488] sm:$0xff]
        %v1447 = vld [vmem:[%s327 + $0x1490] sm:$0xff]
        %v1448 = vld [vmem:[%s327 + $0x1498] sm:$0xff]
        %v1449 = vld [vmem:[%s327 + $0x14a0] sm:$0xff]
        %v1450 = vld [vmem:[%s327 + $0x14a8] sm:$0xff]
        %v1451 = vld [vmem:[%s327 + $0x14b0] sm:$0xff]
        %v1452 = vld [vmem:[%s327 + $0x14b8] sm:$0xff]
        %v1453 = vld [vmem:[%s327 + $0x14c0] sm:$0xff]
        %v1454 = vld [vmem:[%s327 + $0x14c8] sm:$0xff]
        %v1455 = vld [vmem:[%s327 + $0x14d0] sm:$0xff]
        %v1456 = vld [vmem:[%s327 + $0x14d8] sm:$0xff]
        %v1457 = vld [vmem:[%s327 + $0x14e0] sm:$0xff]
        %v1458 = vld [vmem:[%s327 + $0x14e8] sm:$0xff]
        %v1459 = vld [vmem:[%s327 + $0x14f0] sm:$0xff]
        %v1460 = vld [vmem:[%s327 + $0x14f8] sm:$0xff]
        %v1461 = vld [vmem:[%s327 + $0x1500] sm:$0xff]
        %v1462 = vld [vmem:[%s327 + $0x1508] sm:$0xff]
        %v1463 = vld [vmem:[%s327 + $0x1510] sm:$0xff]
        %v1464 = vld [vmem:[%s327 + $0x1518] sm:$0xff]
        %v1465 = vld [vmem:[%s327 + $0x1520] sm:$0xff]
        %v1466 = vld [vmem:[%s327 + $0x1528] sm:$0xff]
        %v1467 = vld [vmem:[%s327 + $0x1530] sm:$0xff]
        %v1468 = vld [vmem:[%s327 + $0x1538] sm:$0xff]
        %v1469 = vld [vmem:[%s327 + $0x1540] sm:$0xff]
        %v1470 = vld [vmem:[%s327 + $0x1548] sm:$0xff]
        %v1471 = vld [vmem:[%s327 + $0x1550] sm:$0xff]
        %v1472 = vld [vmem:[%s327 + $0x1558] sm:$0xff]
        %v1473 = vld [vmem:[%s327 + $0x1560] sm:$0xff]
        %v1474 = vld [vmem:[%s327 + $0x1568] sm:$0xff]
        %v1475 = vld [vmem:[%s327 + $0x1570] sm:$0xff]
        %v1476 = vld [vmem:[%s327 + $0x1578] sm:$0xff]
        %v1477 = vld [vmem:[%s327 + $0x1580] sm:$0xff]
        %v1478 = vld [vmem:[%s327 + $0x1588] sm:$0xff]
        %v1479 = vld [vmem:[%s327 + $0x1590] sm:$0xff]
        %v1480 = vld [vmem:[%s327 + $0x1598] sm:$0xff]
        %v1481 = vld [vmem:[%s327 + $0x15a0] sm:$0xff]
        %v1482 = vld [vmem:[%s327 + $0x15a8] sm:$0xff]
        %v1483 = vld [vmem:[%s327 + $0x15b0] sm:$0xff]
        %v1484 = vld [vmem:[%s327 + $0x15b8] sm:$0xff]
        %v1485 = vld [vmem:[%s327 + $0x15c0] sm:$0xff]
        %v1486 = vld [vmem:[%s327 + $0x15c8] sm:$0xff]
        %v1487 = vld [vmem:[%s327 + $0x15d0] sm:$0xff]
        %v1488 = vld [vmem:[%s327 + $0x15d8] sm:$0xff]
        %v1489 = vld [vmem:[%s327 + $0x15e0] sm:$0xff]
        %v1490 = vld [vmem:[%s327 + $0x15e8] sm:$0xff]
        %v1491 = vld [vmem:[%s327 + $0x15f0] sm:$0xff]
        %v1492 = vld [vmem:[%s327 + $0x15f8] sm:$0xff]
        %v1493 = vld [vmem:[%s327 + $0x1600] sm:$0xff]
        %v1494 = vld [vmem:[%s327 + $0x1608] sm:$0xff]
        %v1495 = vld [vmem:[%s327 + $0x1610] sm:$0xff]
        %v1496 = vld [vmem:[%s327 + $0x1618] sm:$0xff]
        %v1497 = vld [vmem:[%s327 + $0x1620] sm:$0xff]
        %v1498 = vld [vmem:[%s327 + $0x1628] sm:$0xff]
        %v1499 = vld [vmem:[%s327 + $0x1630] sm:$0xff]
        %v1500 = vld [vmem:[%s327 + $0x1638] sm:$0xff]
        %v1501 = vld [vmem:[%s327 + $0x1640] sm:$0xff]
        %v1502 = vld [vmem:[%s327 + $0x1648] sm:$0xff]
        %v1503 = vld [vmem:[%s327 + $0x1650] sm:$0xff]
        %v1504 = vld [vmem:[%s327 + $0x1658] sm:$0xff]
        %v1505 = vld [vmem:[%s327 + $0x1660] sm:$0xff]
        %v1506 = vld [vmem:[%s327 + $0x1668] sm:$0xff]
        %v1507 = vld [vmem:[%s327 + $0x1670] sm:$0xff]
        %v1508 = vld [vmem:[%s327 + $0x1678] sm:$0xff]
        %v1509 = vld [vmem:[%s327 + $0x1680] sm:$0xff]
        %v1510 = vld [vmem:[%s327 + $0x1688] sm:$0xff]
        %v1511 = vld [vmem:[%s327 + $0x1690] sm:$0xff]
        %v1512 = vld [vmem:[%s327 + $0x1698] sm:$0xff]
        %v1513 = vld [vmem:[%s327 + $0x16a0] sm:$0xff]
        %v1514 = vld [vmem:[%s327 + $0x16a8] sm:$0xff]
        %v1515 = vld [vmem:[%s327 + $0x16b0] sm:$0xff]
        %v1516 = vld [vmem:[%s327 + $0x16b8] sm:$0xff]
        %v1517 = vld [vmem:[%s327 + $0x16c0] sm:$0xff]
        %v1518 = vld [vmem:[%s327 + $0x16c8] sm:$0xff]
        %v1519 = vld [vmem:[%s327 + $0x16d0] sm:$0xff]
        %v1520 = vld [vmem:[%s327 + $0x16d8] sm:$0xff]
        %v1521 = vld [vmem:[%s327 + $0x16e0] sm:$0xff]
        %v1522 = vld [vmem:[%s327 + $0x16e8] sm:$0xff]
        %v1523 = vld [vmem:[%s327 + $0x16f0] sm:$0xff]
        %v1524 = vld [vmem:[%s327 + $0x16f8] sm:$0xff]
        %v1525 = vld [vmem:[%s327 + $0x1700] sm:$0xff]
        %v1526 = vld [vmem:[%s327 + $0x1708] sm:$0xff]
        %v1527 = vld [vmem:[%s327 + $0x1710] sm:$0xff]
        %v1528 = vld [vmem:[%s327 + $0x1718] sm:$0xff]
        %v1529 = vld [vmem:[%s327 + $0x1720] sm:$0xff]
        %v1530 = vld [vmem:[%s327 + $0x1728] sm:$0xff]
        %v1531 = vld [vmem:[%s327 + $0x1730] sm:$0xff]
        %v1532 = vld [vmem:[%s327 + $0x1738] sm:$0xff]
        %v1533 = vld [vmem:[%s327 + $0x1740] sm:$0xff]
        %v1534 = vld [vmem:[%s327 + $0x1748] sm:$0xff]
        %v1535 = vld [vmem:[%s327 + $0x1750] sm:$0xff]
        %v1536 = vld [vmem:[%s327 + $0x1758] sm:$0xff]
        %v1537 = vld [vmem:[%s327 + $0x1760] sm:$0xff]
        %v1538 = vld [vmem:[%s327 + $0x1768] sm:$0xff]
        %v1539 = vld [vmem:[%s327 + $0x1770] sm:$0xff]
        %v1540 = vld [vmem:[%s327 + $0x1778] sm:$0xff]
        %v1541 = vld [vmem:[%s327 + $0x1780] sm:$0xff]
        %v1542 = vld [vmem:[%s327 + $0x1788] sm:$0xff]
        %v1543 = vld [vmem:[%s327 + $0x1790] sm:$0xff]
        %v1544 = vld [vmem:[%s327 + $0x1798] sm:$0xff]
        %v1545 = vld [vmem:[%s327 + $0x17a0] sm:$0xff]
        %v1546 = vld [vmem:[%s327 + $0x17a8] sm:$0xff]
        %v1547 = vld [vmem:[%s327 + $0x17b0] sm:$0xff]
        %v1548 = vld [vmem:[%s327 + $0x17b8] sm:$0xff]
        %v1549 = vld [vmem:[%s327 + $0x17c0] sm:$0xff]
        %v1550 = vld [vmem:[%s327 + $0x17c8] sm:$0xff]
        %v1551 = vld [vmem:[%s327 + $0x17d0] sm:$0xff]
        %v1552 = vld [vmem:[%s327 + $0x17d8] sm:$0xff]
        %v1553 = vld [vmem:[%s327 + $0x17e0] sm:$0xff]
        %v1554 = vld [vmem:[%s327 + $0x17e8] sm:$0xff]
        %v1555 = vld [vmem:[%s327 + $0x17f0] sm:$0xff]
        %v1556 = vld [vmem:[%s327 + $0x17f8] sm:$0xff]
        %v1557 = vld [vmem:[%s327 + $0x1800] sm:$0xff]
        %v1558 = vld [vmem:[%s327 + $0x1808] sm:$0xff]
        %v1559 = vld [vmem:[%s327 + $0x1810] sm:$0xff]
        %v1560 = vld [vmem:[%s327 + $0x1818] sm:$0xff]
        %v1561 = vld [vmem:[%s327 + $0x1820] sm:$0xff]
        %v1562 = vld [vmem:[%s327 + $0x1828] sm:$0xff]
        %v1563 = vld [vmem:[%s327 + $0x1830] sm:$0xff]
        %v1564 = vld [vmem:[%s327 + $0x1838] sm:$0xff]
        %v1565 = vld [vmem:[%s327 + $0x1840] sm:$0xff]
        %v1566 = vld [vmem:[%s327 + $0x1848] sm:$0xff]
        %v1567 = vld [vmem:[%s327 + $0x1850] sm:$0xff]
        %v1568 = vld [vmem:[%s327 + $0x1858] sm:$0xff]
        %v1569 = vld [vmem:[%s327 + $0x1860] sm:$0xff]
        %v1570 = vld [vmem:[%s327 + $0x1868] sm:$0xff]
        %v1571 = vld [vmem:[%s327 + $0x1870] sm:$0xff]
        %v1572 = vld [vmem:[%s327 + $0x1878] sm:$0xff]
        %v1573 = vld [vmem:[%s327 + $0x1880] sm:$0xff]
        %v1574 = vld [vmem:[%s327 + $0x1888] sm:$0xff]
        %v1575 = vld [vmem:[%s327 + $0x1890] sm:$0xff]
        %v1576 = vld [vmem:[%s327 + $0x1898] sm:$0xff]
        %v1577 = vld [vmem:[%s327 + $0x18a0] sm:$0xff]
        %v1578 = vld [vmem:[%s327 + $0x18a8] sm:$0xff]
        %v1579 = vld [vmem:[%s327 + $0x18b0] sm:$0xff]
        %v1580 = vld [vmem:[%s327 + $0x18b8] sm:$0xff]
        %v1581 = vld [vmem:[%s327 + $0x18c0] sm:$0xff]
        %v1582 = vld [vmem:[%s327 + $0x18c8] sm:$0xff]
        %v1583 = vld [vmem:[%s327 + $0x18d0] sm:$0xff]
        %v1584 = vld [vmem:[%s327 + $0x18d8] sm:$0xff]
        %v1585 = vld [vmem:[%s327 + $0x18e0] sm:$0xff]
        %v1586 = vld [vmem:[%s327 + $0x18e8] sm:$0xff]
        %v1587 = vld [vmem:[%s327 + $0x18f0] sm:$0xff]
        %v1588 = vld [vmem:[%s327 + $0x18f8] sm:$0xff]
        %v1589 = vld [vmem:[%s327 + $0x1900] sm:$0xff]
        %v1590 = vld [vmem:[%s327 + $0x1908] sm:$0xff]
        %v1591 = vld [vmem:[%s327 + $0x1910] sm:$0xff]
        %v1592 = vld [vmem:[%s327 + $0x1918] sm:$0xff]
        %v1593 = vld [vmem:[%s327 + $0x1920] sm:$0xff]
        %v1594 = vld [vmem:[%s327 + $0x1928] sm:$0xff]
        %v1595 = vld [vmem:[%s327 + $0x1930] sm:$0xff]
        %v1596 = vld [vmem:[%s327 + $0x1938] sm:$0xff]
        %v1597 = vld [vmem:[%s327 + $0x1940] sm:$0xff]
        %v1598 = vld [vmem:[%s327 + $0x1948] sm:$0xff]
        %v1599 = vld [vmem:[%s327 + $0x1950] sm:$0xff]
        %v1600 = vld [vmem:[%s327 + $0x1958] sm:$0xff]
        %v1601 = vld [vmem:[%s327 + $0x1960] sm:$0xff]
        %v1602 = vld [vmem:[%s327 + $0x1968] sm:$0xff]
        %v1603 = vld [vmem:[%s327 + $0x1970] sm:$0xff]
        %v1604 = vld [vmem:[%s327 + $0x1978] sm:$0xff]
        %v1605 = vld [vmem:[%s327 + $0x1980] sm:$0xff]
        %v1606 = vld [vmem:[%s327 + $0x1988] sm:$0xff]
        %v1607 = vld [vmem:[%s327 + $0x1990] sm:$0xff]
        %v1608 = vld [vmem:[%s327 + $0x1998] sm:$0xff]
        %v1609 = vld [vmem:[%s327 + $0x19a0] sm:$0xff]
        %v1610 = vld [vmem:[%s327 + $0x19a8] sm:$0xff]
        %v1611 = vld [vmem:[%s327 + $0x19b0] sm:$0xff]
        %v1612 = vld [vmem:[%s327 + $0x19b8] sm:$0xff]
        %v1613 = vld [vmem:[%s327 + $0x19c0] sm:$0xff]
        %v1614 = vld [vmem:[%s327 + $0x19c8] sm:$0xff]
        %v1615 = vld [vmem:[%s327 + $0x19d0] sm:$0xff]
        %v1616 = vld [vmem:[%s327 + $0x19d8] sm:$0xff]
        %v1617 = vld [vmem:[%s327 + $0x19e0] sm:$0xff]
        %v1618 = vld [vmem:[%s327 + $0x19e8] sm:$0xff]
        %v1619 = vld [vmem:[%s327 + $0x19f0] sm:$0xff]
        %v1620 = vld [vmem:[%s327 + $0x19f8] sm:$0xff]
        %v1621 = vld [vmem:[%s327 + $0x1a00] sm:$0xff]
        %v1622 = vld [vmem:[%s327 + $0x1a08] sm:$0xff]
        %v1623 = vld [vmem:[%s327 + $0x1a10] sm:$0xff]
        %v1624 = vld [vmem:[%s327 + $0x1a18] sm:$0xff]
        %v1625 = vld [vmem:[%s327 + $0x1a20] sm:$0xff]
        %v1626 = vld [vmem:[%s327 + $0x1a28] sm:$0xff]
        %v1627 = vld [vmem:[%s327 + $0x1a30] sm:$0xff]
        %v1628 = vld [vmem:[%s327 + $0x1a38] sm:$0xff]
        %v1629 = vld [vmem:[%s327 + $0x1a40] sm:$0xff]
        %v1630 = vld [vmem:[%s327 + $0x1a48] sm:$0xff]
        %v1631 = vld [vmem:[%s327 + $0x1a50] sm:$0xff]
        %v1632 = vld [vmem:[%s327 + $0x1a58] sm:$0xff]
        %v1633 = vld [vmem:[%s327 + $0x1a60] sm:$0xff]
        %v1634 = vld [vmem:[%s327 + $0x1a68] sm:$0xff]
        %v1635 = vld [vmem:[%s327 + $0x1a70] sm:$0xff]
        %v1636 = vld [vmem:[%s327 + $0x1a78] sm:$0xff]
        %v1637 = vld [vmem:[%s327 + $0x1a80] sm:$0xff]
        %v1638 = vld [vmem:[%s327 + $0x1a88] sm:$0xff]
        %v1639 = vld [vmem:[%s327 + $0x1a90] sm:$0xff]
        %v1640 = vld [vmem:[%s327 + $0x1a98] sm:$0xff]
        %v1641 = vld [vmem:[%s327 + $0x1aa0] sm:$0xff]
        %v1642 = vld [vmem:[%s327 + $0x1aa8] sm:$0xff]
        %v1643 = vld [vmem:[%s327 + $0x1ab0] sm:$0xff]
        %v1644 = vld [vmem:[%s327 + $0x1ab8] sm:$0xff]
        %v1645 = vld [vmem:[%s327 + $0x1ac0] sm:$0xff]
        %v1646 = vld [vmem:[%s327 + $0x1ac8] sm:$0xff]
        %v1647 = vld [vmem:[%s327 + $0x1ad0] sm:$0xff]
        %v1648 = vld [vmem:[%s327 + $0x1ad8] sm:$0xff]
        %v1649 = vld [vmem:[%s327 + $0x1ae0] sm:$0xff]
        %v1650 = vld [vmem:[%s327 + $0x1ae8] sm:$0xff]
        %v1651 = vld [vmem:[%s327 + $0x1af0] sm:$0xff]
        %v1652 = vld [vmem:[%s327 + $0x1af8] sm:$0xff]
        %v1653 = vld [vmem:[%s327 + $0x1b00] sm:$0xff]
        %v1654 = vld [vmem:[%s327 + $0x1b08] sm:$0xff]
        %v1655 = vld [vmem:[%s327 + $0x1b10] sm:$0xff]
        %v1656 = vld [vmem:[%s327 + $0x1b18] sm:$0xff]
        %v1657 = vld [vmem:[%s327 + $0x1b20] sm:$0xff]
        %v1658 = vld [vmem:[%s327 + $0x1b28] sm:$0xff]
        %v1659 = vld [vmem:[%s327 + $0x1b30] sm:$0xff]
        %v1660 = vld [vmem:[%s327 + $0x1b38] sm:$0xff]
        %v1661 = vld [vmem:[%s327 + $0x1b40] sm:$0xff]
        %v1662 = vld [vmem:[%s327 + $0x1b48] sm:$0xff]
        %v1663 = vld [vmem:[%s327 + $0x1b50] sm:$0xff]
        %v1664 = vld [vmem:[%s327 + $0x1b58] sm:$0xff]
        %v1665 = vld [vmem:[%s327 + $0x1b60] sm:$0xff]
        %v1666 = vld [vmem:[%s327 + $0x1b68] sm:$0xff]
        %v1667 = vld [vmem:[%s327 + $0x1b70] sm:$0xff]
        %v1668 = vld [vmem:[%s327 + $0x1b78] sm:$0xff]
        %v1669 = vld [vmem:[%s327 + $0x1b80] sm:$0xff]
        %v1670 = vld [vmem:[%s327 + $0x1b88] sm:$0xff]
        %v1671 = vld [vmem:[%s327 + $0x1b90] sm:$0xff]
        %v1672 = vld [vmem:[%s327 + $0x1b98] sm:$0xff]
        %v1673 = vld [vmem:[%s327 + $0x1ba0] sm:$0xff]
        %v1674 = vld [vmem:[%s327 + $0x1ba8] sm:$0xff]
        %v1675 = vld [vmem:[%s327 + $0x1bb0] sm:$0xff]
        %v1676 = vld [vmem:[%s327 + $0x1bb8] sm:$0xff]
        %v1677 = vld [vmem:[%s327 + $0x1bc0] sm:$0xff]
        %v1678 = vld [vmem:[%s327 + $0x1bc8] sm:$0xff]
        %v1679 = vld [vmem:[%s327 + $0x1bd0] sm:$0xff]
        %v1680 = vld [vmem:[%s327 + $0x1bd8] sm:$0xff]
        %v1681 = vld [vmem:[%s327 + $0x1be0] sm:$0xff]
        %v1682 = vld [vmem:[%s327 + $0x1be8] sm:$0xff]
        %v1683 = vld [vmem:[%s327 + $0x1bf0] sm:$0xff]
        %v1684 = vld [vmem:[%s327 + $0x1bf8] sm:$0xff]
        %v1685 = vld [vmem:[%s327 + $0x1c00] sm:$0xff]
        %v1686 = vld [vmem:[%s327 + $0x1c08] sm:$0xff]
        %v1687 = vld [vmem:[%s327 + $0x1c10] sm:$0xff]
        %v1688 = vld [vmem:[%s327 + $0x1c18] sm:$0xff]
        %v1689 = vld [vmem:[%s327 + $0x1c20] sm:$0xff]
        %v1690 = vld [vmem:[%s327 + $0x1c28] sm:$0xff]
        %v1691 = vld [vmem:[%s327 + $0x1c30] sm:$0xff]
        %v1692 = vld [vmem:[%s327 + $0x1c38] sm:$0xff]
        %v1693 = vld [vmem:[%s327 + $0x1c40] sm:$0xff]
        %v1694 = vld [vmem:[%s327 + $0x1c48] sm:$0xff]
        %v1695 = vld [vmem:[%s327 + $0x1c50] sm:$0xff]
        %v1696 = vld [vmem:[%s327 + $0x1c58] sm:$0xff]
        %v1697 = vld [vmem:[%s327 + $0x1c60] sm:$0xff]
        %v1698 = vld [vmem:[%s327 + $0x1c68] sm:$0xff]
        %v1699 = vld [vmem:[%s327 + $0x1c70] sm:$0xff]
        %v1700 = vld [vmem:[%s327 + $0x1c78] sm:$0xff]
        %v1701 = vld [vmem:[%s327 + $0x1c80] sm:$0xff]
        %v1702 = vld [vmem:[%s327 + $0x1c88] sm:$0xff]
        %v1703 = vld [vmem:[%s327 + $0x1c90] sm:$0xff]
        %v1704 = vld [vmem:[%s327 + $0x1c98] sm:$0xff]
        %v1705 = vld [vmem:[%s327 + $0x1ca0] sm:$0xff]
        %v1706 = vld [vmem:[%s327 + $0x1ca8] sm:$0xff]
        %v1707 = vld [vmem:[%s327 + $0x1cb0] sm:$0xff]
        %v1708 = vld [vmem:[%s327 + $0x1cb8] sm:$0xff]
        %v1709 = vld [vmem:[%s327 + $0x1cc0] sm:$0xff]
        %v1710 = vld [vmem:[%s327 + $0x1cc8] sm:$0xff]
        %v1711 = vld [vmem:[%s327 + $0x1cd0] sm:$0xff]
        %v1712 = vld [vmem:[%s327 + $0x1cd8] sm:$0xff]
        %v1713 = vld [vmem:[%s327 + $0x1ce0] sm:$0xff]
        %v1714 = vld [vmem:[%s327 + $0x1ce8] sm:$0xff]
        %v1715 = vld [vmem:[%s327 + $0x1cf0] sm:$0xff]
        %v1716 = vld [vmem:[%s327 + $0x1cf8] sm:$0xff]
        %v1717 = vld [vmem:[%s327 + $0x1d00] sm:$0xff]
        %v1718 = vld [vmem:[%s327 + $0x1d08] sm:$0xff]
        %v1719 = vld [vmem:[%s327 + $0x1d10] sm:$0xff]
        %v1720 = vld [vmem:[%s327 + $0x1d18] sm:$0xff]
        %v1721 = vld [vmem:[%s327 + $0x1d20] sm:$0xff]
        %v1722 = vld [vmem:[%s327 + $0x1d28] sm:$0xff]
        %v1723 = vld [vmem:[%s327 + $0x1d30] sm:$0xff]
        %v1724 = vld [vmem:[%s327 + $0x1d38] sm:$0xff]
        %v1725 = vld [vmem:[%s327 + $0x1d40] sm:$0xff]
        %v1726 = vld [vmem:[%s327 + $0x1d48] sm:$0xff]
        %v1727 = vld [vmem:[%s327 + $0x1d50] sm:$0xff]
        %v1728 = vld [vmem:[%s327 + $0x1d58] sm:$0xff]
        %v1729 = vld [vmem:[%s327 + $0x1d60] sm:$0xff]
        %v1730 = vld [vmem:[%s327 + $0x1d68] sm:$0xff]
        %v1731 = vld [vmem:[%s327 + $0x1d70] sm:$0xff]
        %v1732 = vld [vmem:[%s327 + $0x1d78] sm:$0xff]
        %v1733 = vld [vmem:[%s327 + $0x1d80] sm:$0xff]
        %v1734 = vld [vmem:[%s327 + $0x1d88] sm:$0xff]
        %v1735 = vld [vmem:[%s327 + $0x1d90] sm:$0xff]
        %v1736 = vld [vmem:[%s327 + $0x1d98] sm:$0xff]
        %v1737 = vld [vmem:[%s327 + $0x1da0] sm:$0xff]
        %v1738 = vld [vmem:[%s327 + $0x1da8] sm:$0xff]
        %v1739 = vld [vmem:[%s327 + $0x1db0] sm:$0xff]
        %v1740 = vld [vmem:[%s327 + $0x1db8] sm:$0xff]
        %v1741 = vld [vmem:[%s327 + $0x1dc0] sm:$0xff]
        %v1742 = vld [vmem:[%s327 + $0x1dc8] sm:$0xff]
        %v1743 = vld [vmem:[%s327 + $0x1dd0] sm:$0xff]
        %v1744 = vld [vmem:[%s327 + $0x1dd8] sm:$0xff]
        %v1745 = vld [vmem:[%s327 + $0x1de0] sm:$0xff]
        %v1746 = vld [vmem:[%s327 + $0x1de8] sm:$0xff]
        %v1747 = vld [vmem:[%s327 + $0x1df0] sm:$0xff]
        %v1748 = vld [vmem:[%s327 + $0x1df8] sm:$0xff]
        %v1749 = vld [vmem:[%s327 + $0x1e00] sm:$0xff]
        %v1750 = vld [vmem:[%s327 + $0x1e08] sm:$0xff]
        %v1751 = vld [vmem:[%s327 + $0x1e10] sm:$0xff]
        %v1752 = vld [vmem:[%s327 + $0x1e18] sm:$0xff]
        %v1753 = vld [vmem:[%s327 + $0x1e20] sm:$0xff]
        %v1754 = vld [vmem:[%s327 + $0x1e28] sm:$0xff]
        %v1755 = vld [vmem:[%s327 + $0x1e30] sm:$0xff]
        %v1756 = vld [vmem:[%s327 + $0x1e38] sm:$0xff]
        %v1757 = vld [vmem:[%s327 + $0x1e40] sm:$0xff]
        %v1758 = vld [vmem:[%s327 + $0x1e48] sm:$0xff]
        %v1759 = vld [vmem:[%s327 + $0x1e50] sm:$0xff]
        %v1760 = vld [vmem:[%s327 + $0x1e58] sm:$0xff]
        %v1761 = vld [vmem:[%s327 + $0x1e60] sm:$0xff]
        %v1762 = vld [vmem:[%s327 + $0x1e68] sm:$0xff]
        %v1763 = vld [vmem:[%s327 + $0x1e70] sm:$0xff]
        %v1764 = vld [vmem:[%s327 + $0x1e78] sm:$0xff]
        %v1765 = vld [vmem:[%s327 + $0x1e80] sm:$0xff]
        %v1766 = vld [vmem:[%s327 + $0x1e88] sm:$0xff]
        %v1767 = vld [vmem:[%s327 + $0x1e90] sm:$0xff]
        %v1768 = vld [vmem:[%s327 + $0x1e98] sm:$0xff]
        %v1769 = vld [vmem:[%s327 + $0x1ea0] sm:$0xff]
        %v1770 = vld [vmem:[%s327 + $0x1ea8] sm:$0xff]
        %v1771 = vld [vmem:[%s327 + $0x1eb0] sm:$0xff]
        %v1772 = vld [vmem:[%s327 + $0x1eb8] sm:$0xff]
        %v1773 = vld [vmem:[%s327 + $0x1ec0] sm:$0xff]
        %v1774 = vld [vmem:[%s327 + $0x1ec8] sm:$0xff]
        %v1775 = vld [vmem:[%s327 + $0x1ed0] sm:$0xff]
        %v1776 = vld [vmem:[%s327 + $0x1ed8] sm:$0xff]
        %v1777 = vld [vmem:[%s327 + $0x1ee0] sm:$0xff]
        %v1778 = vld [vmem:[%s327 + $0x1ee8] sm:$0xff]
        %v1779 = vld [vmem:[%s327 + $0x1ef0] sm:$0xff]
        %v1780 = vld [vmem:[%s327 + $0x1ef8] sm:$0xff]
        %v1781 = vld [vmem:[%s327 + $0x1f00] sm:$0xff]
        %v1782 = vld [vmem:[%s327 + $0x1f08] sm:$0xff]
        %v1783 = vld [vmem:[%s327 + $0x1f10] sm:$0xff]
        %v1784 = vld [vmem:[%s327 + $0x1f18] sm:$0xff]
        %v1785 = vld [vmem:[%s327 + $0x1f20] sm:$0xff]
        %v1786 = vld [vmem:[%s327 + $0x1f28] sm:$0xff]
        %v1787 = vld [vmem:[%s327 + $0x1f30] sm:$0xff]
        %v1788 = vld [vmem:[%s327 + $0x1f38] sm:$0xff]
        %v1789 = vld [vmem:[%s327 + $0x1f40] sm:$0xff]
        %v1790 = vld [vmem:[%s327 + $0x1f48] sm:$0xff]
        %v1791 = vld [vmem:[%s327 + $0x1f50] sm:$0xff]
        %v1792 = vld [vmem:[%s327 + $0x1f58] sm:$0xff]
        %v1793 = vld [vmem:[%s327 + $0x1f60] sm:$0xff]
        %v1794 = vld [vmem:[%s327 + $0x1f68] sm:$0xff]
        %v1795 = vld [vmem:[%s327 + $0x1f70] sm:$0xff]
        %v1796 = vld [vmem:[%s327 + $0x1f78] sm:$0xff]
        %v1797 = vld [vmem:[%s327 + $0x1f80] sm:$0xff]
        %v1798 = vld [vmem:[%s327 + $0x1f88] sm:$0xff]
        %v1799 = vld [vmem:[%s327 + $0x1f90] sm:$0xff]
        %v1800 = vld [vmem:[%s327 + $0x1f98] sm:$0xff]
        %v1801 = vld [vmem:[%s327 + $0x1fa0] sm:$0xff]
        %v1802 = vld [vmem:[%s327 + $0x1fa8] sm:$0xff]
        %v1803 = vld [vmem:[%s327 + $0x1fb0] sm:$0xff]
        %v1804 = vld [vmem:[%s327 + $0x1fb8] sm:$0xff]
        %v1805 = vld [vmem:[%s327 + $0x1fc0] sm:$0xff]
        %v1806 = vld [vmem:[%s327 + $0x1fc8] sm:$0xff]
        %v1807 = vld [vmem:[%s327 + $0x1fd0] sm:$0xff]
        %v1808 = vld [vmem:[%s327 + $0x1fd8] sm:$0xff]
        %v1809 = vld [vmem:[%s327 + $0x1fe0] sm:$0xff]
        %v1810 = vld [vmem:[%s327 + $0x1fe8] sm:$0xff]
        %v1811 = vld [vmem:[%s327 + $0x1ff0] sm:$0xff]
        %v1812 = vld [vmem:[%s327 + $0x1ff8] sm:$0xff]
        %v1813 = vld [vmem:[%s327 + $0x2000] sm:$0xff]
        %v1814 = vld [vmem:[%s327 + $0x2008] sm:$0xff]
        %v1815 = vld [vmem:[%s327 + $0x2010] sm:$0xff]
        %v1816 = vld [vmem:[%s327 + $0x2018] sm:$0xff]
        %v1817 = vld [vmem:[%s327 + $0x2020] sm:$0xff]
        %v1818 = vld [vmem:[%s327 + $0x2028] sm:$0xff]
        %v1819 = vld [vmem:[%s327 + $0x2030] sm:$0xff]
        %v1820 = vld [vmem:[%s327 + $0x2038] sm:$0xff]
        %v1821 = vld [vmem:[%s327 + $0x2040] sm:$0xff]
        %v1822 = vld [vmem:[%s327 + $0x2048] sm:$0xff]
        %v1823 = vld [vmem:[%s327 + $0x2050] sm:$0xff]
        %v1824 = vld [vmem:[%s327 + $0x2058] sm:$0xff]
        %v1825 = vld [vmem:[%s327 + $0x2060] sm:$0xff]
        %v1826 = vld [vmem:[%s327 + $0x2068] sm:$0xff]
        %v1827 = vld [vmem:[%s327 + $0x2070] sm:$0xff]
        %v1828 = vld [vmem:[%s327 + $0x2078] sm:$0xff]
        %v1829 = vld [vmem:[%s327 + $0x2080] sm:$0xff]
        %v1830 = vld [vmem:[%s327 + $0x2088] sm:$0xff]
        %v1831 = vld [vmem:[%s327 + $0x2090] sm:$0xff]
        %v1832 = vld [vmem:[%s327 + $0x2098] sm:$0xff]
        %v1833 = vld [vmem:[%s327 + $0x20a0] sm:$0xff]
        %v1834 = vld [vmem:[%s327 + $0x20a8] sm:$0xff]
        %v1835 = vld [vmem:[%s327 + $0x20b0] sm:$0xff]
        %v1836 = vld [vmem:[%s327 + $0x20b8] sm:$0xff]
        %v1837 = vld [vmem:[%s327 + $0x20c0] sm:$0xff]
        %v1838 = vld [vmem:[%s327 + $0x20c8] sm:$0xff]
        %v1839 = vld [vmem:[%s327 + $0x20d0] sm:$0xff]
        %v1840 = vld [vmem:[%s327 + $0x20d8] sm:$0xff]
        %v1841 = vld [vmem:[%s327 + $0x20e0] sm:$0xff]
        %v1842 = vld [vmem:[%s327 + $0x20e8] sm:$0xff]
        %v1843 = vld [vmem:[%s327 + $0x20f0] sm:$0xff]
        %v1844 = vld [vmem:[%s327 + $0x20f8] sm:$0xff]
        %v1845 = vld [vmem:[%s327 + $0x2100] sm:$0xff]
        %v1846 = vld [vmem:[%s327 + $0x2108] sm:$0xff]
        %v1847 = vld [vmem:[%s327 + $0x2110] sm:$0xff]
        %v1848 = vld [vmem:[%s327 + $0x2118] sm:$0xff]
        %v1849 = vld [vmem:[%s327 + $0x2120] sm:$0xff]
        %v1850 = vld [vmem:[%s327 + $0x2128] sm:$0xff]
        %v1851 = vld [vmem:[%s327 + $0x2130] sm:$0xff]
        %v1852 = vld [vmem:[%s327 + $0x2138] sm:$0xff]
        %v1853 = vld [vmem:[%s327 + $0x2140] sm:$0xff]
        %v1854 = vld [vmem:[%s327 + $0x2148] sm:$0xff]
        %v1855 = vld [vmem:[%s327 + $0x2150] sm:$0xff]
        %v1856 = vld [vmem:[%s327 + $0x2158] sm:$0xff]
        %v1857 = vld [vmem:[%s327 + $0x2160] sm:$0xff]
        %v1858 = vld [vmem:[%s327 + $0x2168] sm:$0xff]
        %v1859 = vld [vmem:[%s327 + $0x2170] sm:$0xff]
        %v1860 = vld [vmem:[%s327 + $0x2178] sm:$0xff]
        %v1861 = vld [vmem:[%s327 + $0x2180] sm:$0xff]
        %v1862 = vld [vmem:[%s327 + $0x2188] sm:$0xff]
        %v1863 = vld [vmem:[%s327 + $0x2190] sm:$0xff]
        %v1864 = vld [vmem:[%s327 + $0x2198] sm:$0xff]
        %v1865 = vld [vmem:[%s327 + $0x21a0] sm:$0xff]
        %v1866 = vld [vmem:[%s327 + $0x21a8] sm:$0xff]
        %v1867 = vld [vmem:[%s327 + $0x21b0] sm:$0xff]
        %v1868 = vld [vmem:[%s327 + $0x21b8] sm:$0xff]
        %v1869 = vld [vmem:[%s327 + $0x21c0] sm:$0xff]
        %v1870 = vld [vmem:[%s327 + $0x21c8] sm:$0xff]
        %v1871 = vld [vmem:[%s327 + $0x21d0] sm:$0xff]
        %v1872 = vld [vmem:[%s327 + $0x21d8] sm:$0xff]
        %v1873 = vld [vmem:[%s327 + $0x21e0] sm:$0xff]
        %v1874 = vld [vmem:[%s327 + $0x21e8] sm:$0xff]
        %v1875 = vld [vmem:[%s327 + $0x21f0] sm:$0xff]
        %v1876 = vld [vmem:[%s327 + $0x21f8] sm:$0xff]
        %v1877 = vld [vmem:[%s327 + $0x2200] sm:$0xff]
        %v1878 = vld [vmem:[%s327 + $0x2208] sm:$0xff]
        %v1879 = vld [vmem:[%s327 + $0x2210] sm:$0xff]
        %v1880 = vld [vmem:[%s327 + $0x2218] sm:$0xff]
        %v1881 = vld [vmem:[%s327 + $0x2220] sm:$0xff]
        %v1882 = vld [vmem:[%s327 + $0x2228] sm:$0xff]
        %v1883 = vld [vmem:[%s327 + $0x2230] sm:$0xff]
        %v1884 = vld [vmem:[%s327 + $0x2238] sm:$0xff]
        %v1885 = vld [vmem:[%s327 + $0x2240] sm:$0xff]
        %v1886 = vld [vmem:[%s327 + $0x2248] sm:$0xff]
        %v1887 = vld [vmem:[%s327 + $0x2250] sm:$0xff]
        %v1888 = vld [vmem:[%s327 + $0x2258] sm:$0xff]
        %v1889 = vld [vmem:[%s327 + $0x2260] sm:$0xff]
        %v1890 = vld [vmem:[%s327 + $0x2268] sm:$0xff]
        %v1891 = vld [vmem:[%s327 + $0x2270] sm:$0xff]
        %v1892 = vld [vmem:[%s327 + $0x2278] sm:$0xff]
        %v1893 = vld [vmem:[%s327 + $0x2280] sm:$0xff]
        %v1894 = vld [vmem:[%s327 + $0x2288] sm:$0xff]
        %v1895 = vld [vmem:[%s327 + $0x2290] sm:$0xff]
        %v1896 = vld [vmem:[%s327 + $0x2298] sm:$0xff]
        %v1897 = vld [vmem:[%s327 + $0x22a0] sm:$0xff]
        %v1898 = vld [vmem:[%s327 + $0x22a8] sm:$0xff]
        %v1899 = vld [vmem:[%s327 + $0x22b0] sm:$0xff]
        %v1900 = vld [vmem:[%s327 + $0x22b8] sm:$0xff]
        %v1901 = vld [vmem:[%s327 + $0x22c0] sm:$0xff]
        %v1902 = vld [vmem:[%s327 + $0x22c8] sm:$0xff]
        %v1903 = vld [vmem:[%s327 + $0x22d0] sm:$0xff]
        %v1904 = vld [vmem:[%s327 + $0x22d8] sm:$0xff]
        %v1905 = vld [vmem:[%s327 + $0x22e0] sm:$0xff]
        %v1906 = vld [vmem:[%s327 + $0x22e8] sm:$0xff]
        %v1907 = vld [vmem:[%s327 + $0x22f0] sm:$0xff]
        %v1908 = vld [vmem:[%s327 + $0x22f8] sm:$0xff]
        %v1909 = vld [vmem:[%s327 + $0x2300] sm:$0xff]
        %v1910 = vld [vmem:[%s327 + $0x2308] sm:$0xff]
        %v1911 = vld [vmem:[%s327 + $0x2310] sm:$0xff]
        %v1912 = vld [vmem:[%s327 + $0x2318] sm:$0xff]
        %v1913 = vld [vmem:[%s327 + $0x2320] sm:$0xff]
        %v1914 = vld [vmem:[%s327 + $0x2328] sm:$0xff]
        %v1915 = vld [vmem:[%s327 + $0x2330] sm:$0xff]
        %v1916 = vld [vmem:[%s327 + $0x2338] sm:$0xff]
        %v1917 = vld [vmem:[%s327 + $0x2340] sm:$0xff]
        %v1918 = vld [vmem:[%s327 + $0x2348] sm:$0xff]
        %v1919 = vld [vmem:[%s327 + $0x2350] sm:$0xff]
        %v1920 = vld [vmem:[%s327 + $0x2358] sm:$0xff]
        %v1921 = vld [vmem:[%s327 + $0x2360] sm:$0xff]
        %v1922 = vld [vmem:[%s327 + $0x2368] sm:$0xff]
        %v1923 = vld [vmem:[%s327 + $0x2370] sm:$0xff]
        %v1924 = vld [vmem:[%s327 + $0x2378] sm:$0xff]
        %v1925 = vld [vmem:[%s327 + $0x2380] sm:$0xff]
        %v1926 = vld [vmem:[%s327 + $0x2388] sm:$0xff]
        %v1927 = vld [vmem:[%s327 + $0x2390] sm:$0xff]
        %v1928 = vld [vmem:[%s327 + $0x2398] sm:$0xff]
        %v1929 = vld [vmem:[%s327 + $0x23a0] sm:$0xff]
        %v1930 = vld [vmem:[%s327 + $0x23a8] sm:$0xff]
        %v1931 = vld [vmem:[%s327 + $0x23b0] sm:$0xff]
        %v1932 = vld [vmem:[%s327 + $0x23b8] sm:$0xff]
        %v1933 = vld [vmem:[%s327 + $0x23c0] sm:$0xff]
        %v1934 = vld [vmem:[%s327 + $0x23c8] sm:$0xff]
        %v1935 = vld [vmem:[%s327 + $0x23d0] sm:$0xff]
        %v1936 = vld [vmem:[%s327 + $0x23d8] sm:$0xff]
        %v1937 = vld [vmem:[%s327 + $0x23e0] sm:$0xff]
        %v1938 = vld [vmem:[%s327 + $0x23e8] sm:$0xff]
        %v1939 = vld [vmem:[%s327 + $0x23f0] sm:$0xff]
        %v1940 = vld [vmem:[%s327 + $0x23f8] sm:$0xff]
        %v1941 = vld [vmem:[%s327 + $0x2400] sm:$0xff]
        %v1942 = vld [vmem:[%s327 + $0x2408] sm:$0xff]
        %v1943 = vld [vmem:[%s327 + $0x2410] sm:$0xff]
        %v1944 = vld [vmem:[%s327 + $0x2418] sm:$0xff]
        %v1945 = vld [vmem:[%s327 + $0x2420] sm:$0xff]
        %v1946 = vld [vmem:[%s327 + $0x2428] sm:$0xff]
        %v1947 = vld [vmem:[%s327 + $0x2430] sm:$0xff]
        %v1948 = vld [vmem:[%s327 + $0x2438] sm:$0xff]
        %v1949 = vld [vmem:[%s327 + $0x2440] sm:$0xff]
        %v1950 = vld [vmem:[%s327 + $0x2448] sm:$0xff]
        %v1951 = vld [vmem:[%s327 + $0x2450] sm:$0xff]
        %v1952 = vld [vmem:[%s327 + $0x2458] sm:$0xff]
        %v1953 = vld [vmem:[%s327 + $0x2460] sm:$0xff]
        %v1954 = vld [vmem:[%s327 + $0x2468] sm:$0xff]
        %v1955 = vld [vmem:[%s327 + $0x2470] sm:$0xff]
        %v1956 = vld [vmem:[%s327 + $0x2478] sm:$0xff]
        %v1957 = vld [vmem:[%s327 + $0x2480] sm:$0xff]
        %v1958 = vld [vmem:[%s327 + $0x2488] sm:$0xff]
        %v1959 = vld [vmem:[%s327 + $0x2490] sm:$0xff]
        %v1960 = vld [vmem:[%s327 + $0x2498] sm:$0xff]
        %v1961 = vld [vmem:[%s327 + $0x24a0] sm:$0xff]
        %v1962 = vld [vmem:[%s327 + $0x24a8] sm:$0xff]
        %v1963 = vld [vmem:[%s327 + $0x24b0] sm:$0xff]
        %v1964 = vld [vmem:[%s327 + $0x24b8] sm:$0xff]
        %v1965 = vld [vmem:[%s327 + $0x24c0] sm:$0xff]
        %v1966 = vld [vmem:[%s327 + $0x24c8] sm:$0xff]
        %v1967 = vld [vmem:[%s327 + $0x24d0] sm:$0xff]
        %v1968 = vld [vmem:[%s327 + $0x24d8] sm:$0xff]
        %v1969 = vld [vmem:[%s327 + $0x24e0] sm:$0xff]
        %v1970 = vld [vmem:[%s327 + $0x24e8] sm:$0xff]
        %v1971 = vld [vmem:[%s327 + $0x24f0] sm:$0xff]
        %v1972 = vld [vmem:[%s327 + $0x24f8] sm:$0xff]
        %v1973 = vld [vmem:[%s327 + $0x2500] sm:$0xff]
        %v1974 = vld [vmem:[%s327 + $0x2508] sm:$0xff]
        %v1975 = vld [vmem:[%s327 + $0x2510] sm:$0xff]
        %v1976 = vld [vmem:[%s327 + $0x2518] sm:$0xff]
        %v1977 = vld [vmem:[%s327 + $0x2520] sm:$0xff]
        %v1978 = vld [vmem:[%s327 + $0x2528] sm:$0xff]
        %v1979 = vld [vmem:[%s327 + $0x2530] sm:$0xff]
        %v1980 = vld [vmem:[%s327 + $0x2538] sm:$0xff]
        %v1981 = vld [vmem:[%s327 + $0x2540] sm:$0xff]
        %v1982 = vld [vmem:[%s327 + $0x2548] sm:$0xff]
        %v1983 = vld [vmem:[%s327 + $0x2550] sm:$0xff]
        %v1984 = vld [vmem:[%s327 + $0x2558] sm:$0xff]
        %v1985 = vld [vmem:[%s327 + $0x2560] sm:$0xff]
        %v1986 = vld [vmem:[%s327 + $0x2568] sm:$0xff]
        %v1987 = vld [vmem:[%s327 + $0x2570] sm:$0xff]
        %v1988 = vld [vmem:[%s327 + $0x2578] sm:$0xff]
        %v1989 = vld [vmem:[%s327 + $0x2580] sm:$0xff]
        %v1990 = vld [vmem:[%s327 + $0x2588] sm:$0xff]
        %v1991 = vld [vmem:[%s327 + $0x2590] sm:$0xff]
        %v1992 = vld [vmem:[%s327 + $0x2598] sm:$0xff]
        %v1993 = vld [vmem:[%s327 + $0x25a0] sm:$0xff]
        %v1994 = vld [vmem:[%s327 + $0x25a8] sm:$0xff]
        %v1995 = vld [vmem:[%s327 + $0x25b0] sm:$0xff]
        %v1996 = vld [vmem:[%s327 + $0x25b8] sm:$0xff]
        %v1997 = vld [vmem:[%s327 + $0x25c0] sm:$0xff]
        %v1998 = vld [vmem:[%s327 + $0x25c8] sm:$0xff]
        %v1999 = vld [vmem:[%s327 + $0x25d0] sm:$0xff]
        %v2000 = vld [vmem:[%s327 + $0x25d8] sm:$0xff]
        %v2001 = vld [vmem:[%s327 + $0x25e0] sm:$0xff]
        %v2002 = vld [vmem:[%s327 + $0x25e8] sm:$0xff]
        %v2003 = vld [vmem:[%s327 + $0x25f0] sm:$0xff]
        %v2004 = vld [vmem:[%s327 + $0x25f8] sm:$0xff]
        %v2005 = vld [vmem:[%s327 + $0x2600] sm:$0xff]
        %v2006 = vld [vmem:[%s327 + $0x2608] sm:$0xff]
        %v2007 = vld [vmem:[%s327 + $0x2610] sm:$0xff]
        %v2008 = vld [vmem:[%s327 + $0x2618] sm:$0xff]
        %v2009 = vld [vmem:[%s327 + $0x2620] sm:$0xff]
        %v2010 = vld [vmem:[%s327 + $0x2628] sm:$0xff]
        %v2011 = vld [vmem:[%s327 + $0x2630] sm:$0xff]
        %v2012 = vld [vmem:[%s327 + $0x2638] sm:$0xff]
        %v2013 = vld [vmem:[%s327 + $0x2640] sm:$0xff]
        %v2014 = vld [vmem:[%s327 + $0x2648] sm:$0xff]
        %v2015 = vld [vmem:[%s327 + $0x2650] sm:$0xff]
        %v2016 = vld [vmem:[%s327 + $0x2658] sm:$0xff]
        %v2017 = vld [vmem:[%s327 + $0x2660] sm:$0xff]
        %v2018 = vld [vmem:[%s327 + $0x2668] sm:$0xff]
        %v2019 = vld [vmem:[%s327 + $0x2670] sm:$0xff]
        %v2020 = vld [vmem:[%s327 + $0x2678] sm:$0xff]
        %v2021 = vld [vmem:[%s327 + $0x2680] sm:$0xff]
        %v2022 = vld [vmem:[%s327 + $0x2688] sm:$0xff]
        %v2023 = vld [vmem:[%s327 + $0x2690] sm:$0xff]
        %v2024 = vld [vmem:[%s327 + $0x2698] sm:$0xff]
        %v2025 = vld [vmem:[%s327 + $0x26a0] sm:$0xff]
        %v2026 = vld [vmem:[%s327 + $0x26a8] sm:$0xff]
        %v2027 = vld [vmem:[%s327 + $0x26b0] sm:$0xff]
        %v2028 = vld [vmem:[%s327 + $0x26b8] sm:$0xff]
        %v2029 = vld [vmem:[%s327 + $0x26c0] sm:$0xff]
        %v2030 = vld [vmem:[%s327 + $0x26c8] sm:$0xff]
        %v2031 = vld [vmem:[%s327 + $0x26d0] sm:$0xff]
        %v2032 = vld [vmem:[%s327 + $0x26d8] sm:$0xff]
        %v2033 = vld [vmem:[%s327 + $0x26e0] sm:$0xff]
        %v2034 = vld [vmem:[%s327 + $0x26e8] sm:$0xff]
        %v2035 = vld [vmem:[%s327 + $0x26f0] sm:$0xff]
        %v2036 = vld [vmem:[%s327 + $0x26f8] sm:$0xff]
        %v2037 = vld [vmem:[%s327 + $0x2700] sm:$0xff]
        %v2038 = vld [vmem:[%s327 + $0x2708] sm:$0xff]
        %v2039 = vld [vmem:[%s327 + $0x2710] sm:$0xff]
        %v2040 = vld [vmem:[%s327 + $0x2718] sm:$0xff]
        %v2041 = vld [vmem:[%s327 + $0x2720] sm:$0xff]
        %v2042 = vld [vmem:[%s327 + $0x2728] sm:$0xff]
        %v2043 = vld [vmem:[%s327 + $0x2730] sm:$0xff]
        %v2044 = vld [vmem:[%s327 + $0x2738] sm:$0xff]
        %v2045 = vld [vmem:[%s327 + $0x2740] sm:$0xff]
        %v2046 = vld [vmem:[%s327 + $0x2748] sm:$0xff]
        %v2047 = vld [vmem:[%s327 + $0x2750] sm:$0xff]
        %v2048 = vld [vmem:[%s327 + $0x2758] sm:$0xff]
        %v2049 = vld [vmem:[%s327 + $0x2760] sm:$0xff]
        %v2050 = vld [vmem:[%s327 + $0x2768] sm:$0xff]
        %v2051 = vld [vmem:[%s327 + $0x2770] sm:$0xff]
        %v2052 = vld [vmem:[%s327 + $0x2778] sm:$0xff]
        %v2053 = vld [vmem:[%s327 + $0x2780] sm:$0xff]
        %v2054 = vld [vmem:[%s327 + $0x2788] sm:$0xff]
        %v2055 = vld [vmem:[%s327 + $0x2790] sm:$0xff]
        %v2056 = vld [vmem:[%s327 + $0x2798] sm:$0xff]
        %v2057 = vld [vmem:[%s327 + $0x27a0] sm:$0xff]
        %v2058 = vld [vmem:[%s327 + $0x27a8] sm:$0xff]
        %v2059 = vld [vmem:[%s327 + $0x27b0] sm:$0xff]
        %v2060 = vld [vmem:[%s327 + $0x27b8] sm:$0xff]
        %v2061 = vld [vmem:[%s327 + $0x27c0] sm:$0xff]
        %v2062 = vld [vmem:[%s327 + $0x27c8] sm:$0xff]
        %v2063 = vld [vmem:[%s327 + $0x27d0] sm:$0xff]
        %v2064 = vld [vmem:[%s327 + $0x27d8] sm:$0xff]
        %v2065 = vld [vmem:[%s327 + $0x27e0] sm:$0xff]
        %v2066 = vld [vmem:[%s327 + $0x27e8] sm:$0xff]
        %v2067 = vld [vmem:[%s327 + $0x27f0] sm:$0xff]
        %v2068 = vld [vmem:[%s327 + $0x27f8] sm:$0xff]
        %v2069 = vld [vmem:[%s327 + $0x2800] sm:$0xff]
        %v2070 = vld [vmem:[%s327 + $0x2808] sm:$0xff]
        %v2071 = vld [vmem:[%s327 + $0x2810] sm:$0xff]
        %v2072 = vld [vmem:[%s327 + $0x2818] sm:$0xff]
        %v2073 = vld [vmem:[%s327 + $0x2820] sm:$0xff]
        %v2074 = vld [vmem:[%s327 + $0x2828] sm:$0xff]
        %v2075 = vld [vmem:[%s327 + $0x2830] sm:$0xff]
        %v2076 = vld [vmem:[%s327 + $0x2838] sm:$0xff]
        %v2077 = vld [vmem:[%s327 + $0x2840] sm:$0xff]
        %v2078 = vld [vmem:[%s327 + $0x2848] sm:$0xff]
        %v2079 = vld [vmem:[%s327 + $0x2850] sm:$0xff]
        %v2080 = vld [vmem:[%s327 + $0x2858] sm:$0xff]
        %v2081 = vld [vmem:[%s327 + $0x2860] sm:$0xff]
        %v2082 = vld [vmem:[%s327 + $0x2868] sm:$0xff]
        %v2083 = vld [vmem:[%s327 + $0x2870] sm:$0xff]
        %v2084 = vld [vmem:[%s327 + $0x2878] sm:$0xff]
        %v2085 = vld [vmem:[%s327 + $0x2880] sm:$0xff]
        %v2086 = vld [vmem:[%s327 + $0x2888] sm:$0xff]
        %v2087 = vld [vmem:[%s327 + $0x2890] sm:$0xff]
        %v2088 = vld [vmem:[%s327 + $0x2898] sm:$0xff]
        %v2089 = vld [vmem:[%s327 + $0x28a0] sm:$0xff]
        %v2090 = vld [vmem:[%s327 + $0x28a8] sm:$0xff]
        %v2091 = vld [vmem:[%s327 + $0x28b0] sm:$0xff]
        %v2092 = vld [vmem:[%s327 + $0x28b8] sm:$0xff]
        %v2093 = vld [vmem:[%s327 + $0x28c0] sm:$0xff]
        %v2094 = vld [vmem:[%s327 + $0x28c8] sm:$0xff]
        %v2095 = vld [vmem:[%s327 + $0x28d0] sm:$0xff]
        %v2096 = vld [vmem:[%s327 + $0x28d8] sm:$0xff]
        %v2097 = vld [vmem:[%s327 + $0x28e0] sm:$0xff]
        %v2098 = vld [vmem:[%s327 + $0x28e8] sm:$0xff]
        %v2099 = vld [vmem:[%s327 + $0x28f0] sm:$0xff]
        %v2100 = vld [vmem:[%s327 + $0x28f8] sm:$0xff]
        %v2101 = vld [vmem:[%s327 + $0x2900] sm:$0xff]
        %v2102 = vld [vmem:[%s327 + $0x2908] sm:$0xff]
        %v2103 = vld [vmem:[%s327 + $0x2910] sm:$0xff]
        %v2104 = vld [vmem:[%s327 + $0x2918] sm:$0xff]
        %v2105 = vld [vmem:[%s327 + $0x2920] sm:$0xff]
        %v2106 = vld [vmem:[%s327 + $0x2928] sm:$0xff]
        %v2107 = vld [vmem:[%s327 + $0x2930] sm:$0xff]
        %v2108 = vld [vmem:[%s327 + $0x2938] sm:$0xff]
        %v2109 = vld [vmem:[%s327 + $0x2940] sm:$0xff]
        %v2110 = vld [vmem:[%s327 + $0x2948] sm:$0xff]
        %v2111 = vld [vmem:[%s327 + $0x2950] sm:$0xff]
        %v2112 = vld [vmem:[%s327 + $0x2958] sm:$0xff]
        %v2113 = vld [vmem:[%s327 + $0x2960] sm:$0xff]
        %v2114 = vld [vmem:[%s327 + $0x2968] sm:$0xff]
        %v2115 = vld [vmem:[%s327 + $0x2970] sm:$0xff]
        %v2116 = vld [vmem:[%s327 + $0x2978] sm:$0xff]
        %v2117 = vld [vmem:[%s327 + $0x2980] sm:$0xff]
        %v2118 = vld [vmem:[%s327 + $0x2988] sm:$0xff]
        %v2119 = vld [vmem:[%s327 + $0x2990] sm:$0xff]
        %v2120 = vld [vmem:[%s327 + $0x2998] sm:$0xff]
        %v2121 = vld [vmem:[%s327 + $0x29a0] sm:$0xff]
        %v2122 = vld [vmem:[%s327 + $0x29a8] sm:$0xff]
        %v2123 = vld [vmem:[%s327 + $0x29b0] sm:$0xff]
        %v2124 = vld [vmem:[%s327 + $0x29b8] sm:$0xff]
        %v2125 = vld [vmem:[%s327 + $0x29c0] sm:$0xff]
        %v2126 = vld [vmem:[%s327 + $0x29c8] sm:$0xff]
        %v2127 = vld [vmem:[%s327 + $0x29d0] sm:$0xff]
        %v2128 = vld [vmem:[%s327 + $0x29d8] sm:$0xff]
        %v2129 = vld [vmem:[%s327 + $0x29e0] sm:$0xff]
        %v2130 = vld [vmem:[%s327 + $0x29e8] sm:$0xff]
        %v2131 = vld [vmem:[%s327 + $0x29f0] sm:$0xff]
        %v2132 = vld [vmem:[%s327 + $0x29f8] sm:$0xff]
        %v2133 = vld [vmem:[%s327 + $0x2a00] sm:$0xff]
        %v2134 = vld [vmem:[%s327 + $0x2a08] sm:$0xff]
        %v2135 = vld [vmem:[%s327 + $0x2a10] sm:$0xff]
        %v2136 = vld [vmem:[%s327 + $0x2a18] sm:$0xff]
        %v2137 = vld [vmem:[%s327 + $0x2a20] sm:$0xff]
        %v2138 = vld [vmem:[%s327 + $0x2a28] sm:$0xff]
        %v2139 = vld [vmem:[%s327 + $0x2a30] sm:$0xff]
        %v2140 = vld [vmem:[%s327 + $0x2a38] sm:$0xff]
        %v2141 = vld [vmem:[%s327 + $0x2a40] sm:$0xff]
        %v2142 = vld [vmem:[%s327 + $0x2a48] sm:$0xff]
        %v2143 = vld [vmem:[%s327 + $0x2a50] sm:$0xff]
        %v2144 = vld [vmem:[%s327 + $0x2a58] sm:$0xff]
        %v2145 = vld [vmem:[%s327 + $0x2a60] sm:$0xff]
        %v2146 = vld [vmem:[%s327 + $0x2a68] sm:$0xff]
        %v2147 = vld [vmem:[%s327 + $0x2a70] sm:$0xff]
        %v2148 = vld [vmem:[%s327 + $0x2a78] sm:$0xff]
        %v2149 = vld [vmem:[%s327 + $0x2a80] sm:$0xff]
        %v2150 = vld [vmem:[%s327 + $0x2a88] sm:$0xff]
        %v2151 = vld [vmem:[%s327 + $0x2a90] sm:$0xff]
        %v2152 = vld [vmem:[%s327 + $0x2a98] sm:$0xff]
        %v2153 = vld [vmem:[%s327 + $0x2aa0] sm:$0xff]
        %v2154 = vld [vmem:[%s327 + $0x2aa8] sm:$0xff]
        %v2155 = vld [vmem:[%s327 + $0x2ab0] sm:$0xff]
        %v2156 = vld [vmem:[%s327 + $0x2ab8] sm:$0xff]
        %v2157 = vld [vmem:[%s327 + $0x2ac0] sm:$0xff]
        %v2158 = vld [vmem:[%s327 + $0x2ac8] sm:$0xff]
        %v2159 = vld [vmem:[%s327 + $0x2ad0] sm:$0xff]
        %v2160 = vld [vmem:[%s327 + $0x2ad8] sm:$0xff]
        %v2161 = vld [vmem:[%s327 + $0x2ae0] sm:$0xff]
        %v2162 = vld [vmem:[%s327 + $0x2ae8] sm:$0xff]
        %v2163 = vld [vmem:[%s327 + $0x2af0] sm:$0xff]
        %v2164 = vld [vmem:[%s327 + $0x2af8] sm:$0xff]
        %v2165 = vld [vmem:[%s327 + $0x2b00] sm:$0xff]
        %v2166 = vld [vmem:[%s327 + $0x2b08] sm:$0xff]
        %v2167 = vld [vmem:[%s327 + $0x2b10] sm:$0xff]
        %v2168 = vld [vmem:[%s327 + $0x2b18] sm:$0xff]
        %v2169 = vld [vmem:[%s327 + $0x2b20] sm:$0xff]
        %v2170 = vld [vmem:[%s327 + $0x2b28] sm:$0xff]
        %v2171 = vld [vmem:[%s327 + $0x2b30] sm:$0xff]
        %v2172 = vld [vmem:[%s327 + $0x2b38] sm:$0xff]
        %v2173 = vld [vmem:[%s327 + $0x2b40] sm:$0xff]
        %v2174 = vld [vmem:[%s327 + $0x2b48] sm:$0xff]
        %v2175 = vld [vmem:[%s327 + $0x2b50] sm:$0xff]
        %v2176 = vld [vmem:[%s327 + $0x2b58] sm:$0xff]
        %v2177 = vld [vmem:[%s327 + $0x2b60] sm:$0xff]
        %v2178 = vld [vmem:[%s327 + $0x2b68] sm:$0xff]
        %v2179 = vld [vmem:[%s327 + $0x2b70] sm:$0xff]
        %v2180 = vld [vmem:[%s327 + $0x2b78] sm:$0xff]
        %v2181 = vld [vmem:[%s327 + $0x2b80] sm:$0xff]
        %v2182 = vld [vmem:[%s327 + $0x2b88] sm:$0xff]
        %v2183 = vld [vmem:[%s327 + $0x2b90] sm:$0xff]
        %v2184 = vld [vmem:[%s327 + $0x2b98] sm:$0xff]
        %v2185 = vld [vmem:[%s327 + $0x2ba0] sm:$0xff]
        %v2186 = vld [vmem:[%s327 + $0x2ba8] sm:$0xff]
        %v2187 = vld [vmem:[%s327 + $0x2bb0] sm:$0xff]
        %v2188 = vld [vmem:[%s327 + $0x2bb8] sm:$0xff]
        %v2189 = vld [vmem:[%s327 + $0x2bc0] sm:$0xff]
        %v2190 = vld [vmem:[%s327 + $0x2bc8] sm:$0xff]
        %v2191 = vld [vmem:[%s327 + $0x2bd0] sm:$0xff]
        %v2192 = vld [vmem:[%s327 + $0x2bd8] sm:$0xff]
        %v2193 = vld [vmem:[%s327 + $0x2be0] sm:$0xff]
        %v2194 = vld [vmem:[%s327 + $0x2be8] sm:$0xff]
        %v2195 = vld [vmem:[%s327 + $0x2bf0] sm:$0xff]
        %v2196 = vld [vmem:[%s327 + $0x2bf8] sm:$0xff]
        %v2197 = vld [vmem:[%s327 + $0x2c00] sm:$0xff]
        %v2198 = vld [vmem:[%s327 + $0x2c08] sm:$0xff]
        %v2199 = vld [vmem:[%s327 + $0x2c10] sm:$0xff]
        %v2200 = vld [vmem:[%s327 + $0x2c18] sm:$0xff]
        %v2201 = vld [vmem:[%s327 + $0x2c20] sm:$0xff]
        %v2202 = vld [vmem:[%s327 + $0x2c28] sm:$0xff]
        %v2203 = vld [vmem:[%s327 + $0x2c30] sm:$0xff]
        %v2204 = vld [vmem:[%s327 + $0x2c38] sm:$0xff]
        %v2205 = vld [vmem:[%s327 + $0x2c40] sm:$0xff]
        %v2206 = vld [vmem:[%s327 + $0x2c48] sm:$0xff]
        %v2207 = vld [vmem:[%s327 + $0x2c50] sm:$0xff]
        %v2208 = vld [vmem:[%s327 + $0x2c58] sm:$0xff]
        %v2209 = vld [vmem:[%s327 + $0x2c60] sm:$0xff]
        %v2210 = vld [vmem:[%s327 + $0x2c68] sm:$0xff]
        %v2211 = vld [vmem:[%s327 + $0x2c70] sm:$0xff]
        %v2212 = vld [vmem:[%s327 + $0x2c78] sm:$0xff]
        %v2213 = vld [vmem:[%s327 + $0x2c80] sm:$0xff]
        %v2214 = vld [vmem:[%s327 + $0x2c88] sm:$0xff]
        %v2215 = vld [vmem:[%s327 + $0x2c90] sm:$0xff]
        %v2216 = vld [vmem:[%s327 + $0x2c98] sm:$0xff]
        %v2217 = vld [vmem:[%s327 + $0x2ca0] sm:$0xff]
        %v2218 = vld [vmem:[%s327 + $0x2ca8] sm:$0xff]
        %v2219 = vld [vmem:[%s327 + $0x2cb0] sm:$0xff]
        %v2220 = vld [vmem:[%s327 + $0x2cb8] sm:$0xff]
        %v2221 = vld [vmem:[%s327 + $0x2cc0] sm:$0xff]
        %v2222 = vld [vmem:[%s327 + $0x2cc8] sm:$0xff]
        %v2223 = vld [vmem:[%s327 + $0x2cd0] sm:$0xff]
        %v2224 = vld [vmem:[%s327 + $0x2cd8] sm:$0xff]
        %v2225 = vld [vmem:[%s327 + $0x2ce0] sm:$0xff]
        %v2226 = vld [vmem:[%s327 + $0x2ce8] sm:$0xff]
        %v2227 = vld [vmem:[%s327 + $0x2cf0] sm:$0xff]
        %v2228 = vld [vmem:[%s327 + $0x2cf8] sm:$0xff]
        %v2229 = vld [vmem:[%s327 + $0x2d00] sm:$0xff]
        %v2230 = vld [vmem:[%s327 + $0x2d08] sm:$0xff]
        %v2231 = vld [vmem:[%s327 + $0x2d10] sm:$0xff]
        %v2232 = vld [vmem:[%s327 + $0x2d18] sm:$0xff]
        %v2233 = vld [vmem:[%s327 + $0x2d20] sm:$0xff]
        %v2234 = vld [vmem:[%s327 + $0x2d28] sm:$0xff]
        %v2235 = vld [vmem:[%s327 + $0x2d30] sm:$0xff]
        %v2236 = vld [vmem:[%s327 + $0x2d38] sm:$0xff]
        %v2237 = vld [vmem:[%s327 + $0x2d40] sm:$0xff]
        %v2238 = vld [vmem:[%s327 + $0x2d48] sm:$0xff]
        %v2239 = vld [vmem:[%s327 + $0x2d50] sm:$0xff]
        %v2240 = vld [vmem:[%s327 + $0x2d58] sm:$0xff]
        %v2241 = vld [vmem:[%s327 + $0x2d60] sm:$0xff]
        %v2242 = vld [vmem:[%s327 + $0x2d68] sm:$0xff]
        %v2243 = vld [vmem:[%s327 + $0x2d70] sm:$0xff]
        %v2244 = vld [vmem:[%s327 + $0x2d78] sm:$0xff]
        %v2245 = vld [vmem:[%s327 + $0x2d80] sm:$0xff]
        %v2246 = vld [vmem:[%s327 + $0x2d88] sm:$0xff]
        %v2247 = vld [vmem:[%s327 + $0x2d90] sm:$0xff]
        %v2248 = vld [vmem:[%s327 + $0x2d98] sm:$0xff]
        %v2249 = vld [vmem:[%s327 + $0x2da0] sm:$0xff]
        %v2250 = vld [vmem:[%s327 + $0x2da8] sm:$0xff]
        %v2251 = vld [vmem:[%s327 + $0x2db0] sm:$0xff]
        %v2252 = vld [vmem:[%s327 + $0x2db8] sm:$0xff]
        %v2253 = vld [vmem:[%s327 + $0x2dc0] sm:$0xff]
        %v2254 = vld [vmem:[%s327 + $0x2dc8] sm:$0xff]
        %v2255 = vld [vmem:[%s327 + $0x2dd0] sm:$0xff]
        %v2256 = vld [vmem:[%s327 + $0x2dd8] sm:$0xff]
        %v2257 = vld [vmem:[%s327 + $0x2de0] sm:$0xff]
        %v2258 = vld [vmem:[%s327 + $0x2de8] sm:$0xff]
        %v2259 = vld [vmem:[%s327 + $0x2df0] sm:$0xff]
        %v2260 = vld [vmem:[%s327 + $0x2df8] sm:$0xff]
        %v2261 = vld [vmem:[%s327 + $0x2e00] sm:$0xff]
        %v2262 = vld [vmem:[%s327 + $0x2e08] sm:$0xff]
        %v2263 = vld [vmem:[%s327 + $0x2e10] sm:$0xff]
        %v2264 = vld [vmem:[%s327 + $0x2e18] sm:$0xff]
        %v2265 = vld [vmem:[%s327 + $0x2e20] sm:$0xff]
        %v2266 = vld [vmem:[%s327 + $0x2e28] sm:$0xff]
        %v2267 = vld [vmem:[%s327 + $0x2e30] sm:$0xff]
        %v2268 = vld [vmem:[%s327 + $0x2e38] sm:$0xff]
        %v2269 = vld [vmem:[%s327 + $0x2e40] sm:$0xff]
        %v2270 = vld [vmem:[%s327 + $0x2e48] sm:$0xff]
        %v2271 = vld [vmem:[%s327 + $0x2e50] sm:$0xff]
        %v2272 = vld [vmem:[%s327 + $0x2e58] sm:$0xff]
        %v2273 = vld [vmem:[%s327 + $0x2e60] sm:$0xff]
        %v2274 = vld [vmem:[%s327 + $0x2e68] sm:$0xff]
        %v2275 = vld [vmem:[%s327 + $0x2e70] sm:$0xff]
        %v2276 = vld [vmem:[%s327 + $0x2e78] sm:$0xff]
        %v2277 = vld [vmem:[%s327 + $0x2e80] sm:$0xff]
        %v2278 = vld [vmem:[%s327 + $0x2e88] sm:$0xff]
        %v2279 = vld [vmem:[%s327 + $0x2e90] sm:$0xff]
        %v2280 = vld [vmem:[%s327 + $0x2e98] sm:$0xff]
        %v2281 = vld [vmem:[%s327 + $0x2ea0] sm:$0xff]
        %v2282 = vld [vmem:[%s327 + $0x2ea8] sm:$0xff]
        %v2283 = vld [vmem:[%s327 + $0x2eb0] sm:$0xff]
        %v2284 = vld [vmem:[%s327 + $0x2eb8] sm:$0xff]
        %v2285 = vld [vmem:[%s327 + $0x2ec0] sm:$0xff]
        %v2286 = vld [vmem:[%s327 + $0x2ec8] sm:$0xff]
        %v2287 = vld [vmem:[%s327 + $0x2ed0] sm:$0xff]
        %v2288 = vld [vmem:[%s327 + $0x2ed8] sm:$0xff]
        %v2289 = vld [vmem:[%s327 + $0x2ee0] sm:$0xff]
        %v2290 = vld [vmem:[%s327 + $0x2ee8] sm:$0xff]
        %v2291 = vld [vmem:[%s327 + $0x2ef0] sm:$0xff]
        %v2292 = vld [vmem:[%s327 + $0x2ef8] sm:$0xff]
        %v2293 = vld [vmem:[%s327 + $0x2f00] sm:$0xff]
        %v2294 = vld [vmem:[%s327 + $0x2f08] sm:$0xff]
        %v2295 = vld [vmem:[%s327 + $0x2f10] sm:$0xff]
        %v2296 = vld [vmem:[%s327 + $0x2f18] sm:$0xff]
        %v2297 = vld [vmem:[%s327 + $0x2f20] sm:$0xff]
        %v2298 = vld [vmem:[%s327 + $0x2f28] sm:$0xff]
        %v2299 = vld [vmem:[%s327 + $0x2f30] sm:$0xff]
        %v2300 = vld [vmem:[%s327 + $0x2f38] sm:$0xff]
        %v2301 = vld [vmem:[%s327 + $0x2f40] sm:$0xff]
        %v2302 = vld [vmem:[%s327 + $0x2f48] sm:$0xff]
        %v2303 = vld [vmem:[%s327 + $0x2f50] sm:$0xff]
        %v2304 = vld [vmem:[%s327 + $0x2f58] sm:$0xff]
        %v2305 = vld [vmem:[%s327 + $0x2f60] sm:$0xff]
        %v2306 = vld [vmem:[%s327 + $0x2f68] sm:$0xff]
        %v2307 = vld [vmem:[%s327 + $0x2f70] sm:$0xff]
        %v2308 = vld [vmem:[%s327 + $0x2f78] sm:$0xff]
        %v2309 = vld [vmem:[%s327 + $0x2f80] sm:$0xff]
        %v2310 = vld [vmem:[%s327 + $0x2f88] sm:$0xff]
        %v2311 = vld [vmem:[%s327 + $0x2f90] sm:$0xff]
        %v2312 = vld [vmem:[%s327 + $0x2f98] sm:$0xff]
        %v2313 = vld [vmem:[%s327 + $0x2fa0] sm:$0xff]
        %v2314 = vld [vmem:[%s327 + $0x2fa8] sm:$0xff]
        %v2315 = vld [vmem:[%s327 + $0x2fb0] sm:$0xff]
        %v2316 = vld [vmem:[%s327 + $0x2fb8] sm:$0xff]
        %v2317 = vld [vmem:[%s327 + $0x2fc0] sm:$0xff]
        %v2318 = vld [vmem:[%s327 + $0x2fc8] sm:$0xff]
        %v2319 = vld [vmem:[%s327 + $0x2fd0] sm:$0xff]
        %v2320 = vld [vmem:[%s327 + $0x2fd8] sm:$0xff]
        %v2321 = vld [vmem:[%s327 + $0x2fe0] sm:$0xff]
        %v2322 = vld [vmem:[%s327 + $0x2fe8] sm:$0xff]
        %v2323 = vld [vmem:[%s327 + $0x2ff0] sm:$0xff]
        %v2324 = vld [vmem:[%s327 + $0x2ff8] sm:$0xff]
        %v2325 = vld [vmem:[%s327 + $0x3000] sm:$0xff]
        %v2326 = vld [vmem:[%s327 + $0x3008] sm:$0xff]
        %v2327 = vld [vmem:[%s327 + $0x3010] sm:$0xff]
        %v2328 = vld [vmem:[%s327 + $0x3018] sm:$0xff]
        %v2329 = vld [vmem:[%s327 + $0x3020] sm:$0xff]
        %v2330 = vld [vmem:[%s327 + $0x3028] sm:$0xff]
        %v2331 = vld [vmem:[%s327 + $0x3030] sm:$0xff]
        %v2332 = vld [vmem:[%s327 + $0x3038] sm:$0xff]
        %v2333 = vld [vmem:[%s327 + $0x3040] sm:$0xff]
        %v2334 = vld [vmem:[%s327 + $0x3048] sm:$0xff]
        %v2335 = vld [vmem:[%s327 + $0x3050] sm:$0xff]
        %v2336 = vld [vmem:[%s327 + $0x3058] sm:$0xff]
        %v2337 = vld [vmem:[%s327 + $0x3060] sm:$0xff]
        %v2338 = vld [vmem:[%s327 + $0x3068] sm:$0xff]
        %v2339 = vld [vmem:[%s327 + $0x3070] sm:$0xff]
        %v2340 = vld [vmem:[%s327 + $0x3078] sm:$0xff]
        %v2341 = vld [vmem:[%s327 + $0x3080] sm:$0xff]
        %v2342 = vld [vmem:[%s327 + $0x3088] sm:$0xff]
        %v2343 = vld [vmem:[%s327 + $0x3090] sm:$0xff]
        %v2344 = vld [vmem:[%s327 + $0x3098] sm:$0xff]
        %v2345 = vld [vmem:[%s327 + $0x30a0] sm:$0xff]
        %v2346 = vld [vmem:[%s327 + $0x30a8] sm:$0xff]
        %v2347 = vld [vmem:[%s327 + $0x30b0] sm:$0xff]
        %v2348 = vld [vmem:[%s327 + $0x30b8] sm:$0xff]
        %v2349 = vld [vmem:[%s327 + $0x30c0] sm:$0xff]
        %v2350 = vld [vmem:[%s327 + $0x30c8] sm:$0xff]
        %v2351 = vld [vmem:[%s327 + $0x30d0] sm:$0xff]
        %v2352 = vld [vmem:[%s327 + $0x30d8] sm:$0xff]
        %v2353 = vld [vmem:[%s327 + $0x30e0] sm:$0xff]
        %v2354 = vld [vmem:[%s327 + $0x30e8] sm:$0xff]
        %v2355 = vld [vmem:[%s327 + $0x30f0] sm:$0xff]
        %v2356 = vld [vmem:[%s327 + $0x30f8] sm:$0xff]
        %v3925 = vunpack.c.l.b16 %v789
        %v3926 = vunpack.c.h.b16 %v789
        %v3927 = vunpack.c.l.b16 %v790
        %v3928 = vunpack.c.h.b16 %v790
        %v3929 = vunpack.c.l.b16 %v791
        %v3930 = vunpack.c.h.b16 %v791
        %v3931 = vunpack.c.l.b16 %v792
        %v3932 = vunpack.c.h.b16 %v792
        %v3933 = vunpack.c.l.b16 %v793
        %v3934 = vunpack.c.h.b16 %v793
        %v3935 = vunpack.c.l.b16 %v794
        %v3936 = vunpack.c.h.b16 %v794
        %v3937 = vunpack.c.l.b16 %v795
        %v3938 = vunpack.c.h.b16 %v795
        %v3939 = vunpack.c.l.b16 %v796
        %v3940 = vunpack.c.h.b16 %v796
        %v3941 = vunpack.c.l.b16 %v797
        %v3942 = vunpack.c.h.b16 %v797
        %v3943 = vunpack.c.l.b16 %v798
        %v3944 = vunpack.c.h.b16 %v798
        %v3945 = vunpack.c.l.b16 %v799
        %v3946 = vunpack.c.h.b16 %v799
        %v3947 = vunpack.c.l.b16 %v800
        %v3948 = vunpack.c.h.b16 %v800
        %v3949 = vunpack.c.l.b16 %v801
        %v3950 = vunpack.c.h.b16 %v801
        %v3951 = vunpack.c.l.b16 %v802
        %v3952 = vunpack.c.h.b16 %v802
        %v3953 = vunpack.c.l.b16 %v803
        %v3954 = vunpack.c.h.b16 %v803
        %v3955 = vunpack.c.l.b16 %v804
        %v3956 = vunpack.c.h.b16 %v804
        %v3957 = vunpack.c.l.b16 %v805
        %v3958 = vunpack.c.h.b16 %v805
        %v3959 = vunpack.c.l.b16 %v806
        %v3960 = vunpack.c.h.b16 %v806
        %v3961 = vunpack.c.l.b16 %v807
        %v3962 = vunpack.c.h.b16 %v807
        %v3963 = vunpack.c.l.b16 %v808
        %v3964 = vunpack.c.h.b16 %v808
        %v3965 = vunpack.c.l.b16 %v809
        %v3966 = vunpack.c.h.b16 %v809
        %v3967 = vunpack.c.l.b16 %v810
        %v3968 = vunpack.c.h.b16 %v810
        %v3969 = vunpack.c.l.b16 %v811
        %v3970 = vunpack.c.h.b16 %v811
        %v3971 = vunpack.c.l.b16 %v812
        %v3972 = vunpack.c.h.b16 %v812
        %v3973 = vunpack.c.l.b16 %v813
        %v3974 = vunpack.c.h.b16 %v813
        %v3975 = vunpack.c.l.b16 %v814
        %v3976 = vunpack.c.h.b16 %v814
        %v3977 = vunpack.c.l.b16 %v815
        %v3978 = vunpack.c.h.b16 %v815
        %v3979 = vunpack.c.l.b16 %v816
        %v3980 = vunpack.c.h.b16 %v816
        %v3981 = vunpack.c.l.b16 %v817
        %v3982 = vunpack.c.h.b16 %v817
        %v3983 = vunpack.c.l.b16 %v818
        %v3984 = vunpack.c.h.b16 %v818
        %v3985 = vunpack.c.l.b16 %v819
        %v3986 = vunpack.c.h.b16 %v819
        %v3987 = vunpack.c.l.b16 %v820
        %v3988 = vunpack.c.h.b16 %v820
        %v3989 = vunpack.c.l.b16 %v821
        %v3990 = vunpack.c.h.b16 %v821
        %v3991 = vunpack.c.l.b16 %v822
        %v3992 = vunpack.c.h.b16 %v822
        %v3993 = vunpack.c.l.b16 %v823
        %v3994 = vunpack.c.h.b16 %v823
        %v3995 = vunpack.c.l.b16 %v824
        %v3996 = vunpack.c.h.b16 %v824
        %v3997 = vunpack.c.l.b16 %v825
        %v3998 = vunpack.c.h.b16 %v825
        %v3999 = vunpack.c.l.b16 %v826
        %v4000 = vunpack.c.h.b16 %v826
        %v4001 = vunpack.c.l.b16 %v827
        %v4002 = vunpack.c.h.b16 %v827
        %v4003 = vunpack.c.l.b16 %v828
        %v4004 = vunpack.c.h.b16 %v828
        %v4005 = vunpack.c.l.b16 %v829
        %v4006 = vunpack.c.h.b16 %v829
        %v4007 = vunpack.c.l.b16 %v830
        %v4008 = vunpack.c.h.b16 %v830
        %v4009 = vunpack.c.l.b16 %v831
        %v4010 = vunpack.c.h.b16 %v831
        %v4011 = vunpack.c.l.b16 %v832
        %v4012 = vunpack.c.h.b16 %v832
        %v4013 = vunpack.c.l.b16 %v833
        %v4014 = vunpack.c.h.b16 %v833
        %v4015 = vunpack.c.l.b16 %v834
        %v4016 = vunpack.c.h.b16 %v834
        %v4017 = vunpack.c.l.b16 %v835
        %v4018 = vunpack.c.h.b16 %v835
        %v4019 = vunpack.c.l.b16 %v836
        %v4020 = vunpack.c.h.b16 %v836
        %v4021 = vunpack.c.l.b16 %v837
        %v4022 = vunpack.c.h.b16 %v837
        %v4023 = vunpack.c.l.b16 %v838
        %v4024 = vunpack.c.h.b16 %v838
        %v4025 = vunpack.c.l.b16 %v839
        %v4026 = vunpack.c.h.b16 %v839
        %v4027 = vunpack.c.l.b16 %v840
        %v4028 = vunpack.c.h.b16 %v840
        %v4029 = vunpack.c.l.b16 %v841
        %v4030 = vunpack.c.h.b16 %v841
        %v4031 = vunpack.c.l.b16 %v842
        %v4032 = vunpack.c.h.b16 %v842
        %v4033 = vunpack.c.l.b16 %v843
        %v4034 = vunpack.c.h.b16 %v843
        %v4035 = vunpack.c.l.b16 %v844
        %v4036 = vunpack.c.h.b16 %v844
        %v4037 = vunpack.c.l.b16 %v845
        %v4038 = vunpack.c.h.b16 %v845
        %v4039 = vunpack.c.l.b16 %v846
        %v4040 = vunpack.c.h.b16 %v846
        %v4041 = vunpack.c.l.b16 %v847
        %v4042 = vunpack.c.h.b16 %v847
        %v4043 = vunpack.c.l.b16 %v848
        %v4044 = vunpack.c.h.b16 %v848
        %v4045 = vunpack.c.l.b16 %v849
        %v4046 = vunpack.c.h.b16 %v849
        %v4047 = vunpack.c.l.b16 %v850
        %v4048 = vunpack.c.h.b16 %v850
        %v4049 = vunpack.c.l.b16 %v851
        %v4050 = vunpack.c.h.b16 %v851
        %v4051 = vunpack.c.l.b16 %v852
        %v4052 = vunpack.c.h.b16 %v852
        %v4053 = vunpack.c.l.b16 %v853
        %v4054 = vunpack.c.h.b16 %v853
        %v4055 = vunpack.c.l.b16 %v854
        %v4056 = vunpack.c.h.b16 %v854
        %v4057 = vunpack.c.l.b16 %v855
        %v4058 = vunpack.c.h.b16 %v855
        %v4059 = vunpack.c.l.b16 %v856
        %v4060 = vunpack.c.h.b16 %v856
        %v4061 = vunpack.c.l.b16 %v857
        %v4062 = vunpack.c.h.b16 %v857
        %v4063 = vunpack.c.l.b16 %v858
        %v4064 = vunpack.c.h.b16 %v858
        %v4065 = vunpack.c.l.b16 %v859
        %v4066 = vunpack.c.h.b16 %v859
        %v4067 = vunpack.c.l.b16 %v860
        %v4068 = vunpack.c.h.b16 %v860
        %v4069 = vunpack.c.l.b16 %v861
        %v4070 = vunpack.c.h.b16 %v861
        %v4071 = vunpack.c.l.b16 %v862
        %v4072 = vunpack.c.h.b16 %v862
        %v4073 = vunpack.c.l.b16 %v863
        %v4074 = vunpack.c.h.b16 %v863
        %v4075 = vunpack.c.l.b16 %v864
        %v4076 = vunpack.c.h.b16 %v864
        %v4077 = vunpack.c.l.b16 %v865
        %v4078 = vunpack.c.h.b16 %v865
        %v4079 = vunpack.c.l.b16 %v866
        %v4080 = vunpack.c.h.b16 %v866
        %v4081 = vunpack.c.l.b16 %v867
        %v4082 = vunpack.c.h.b16 %v867
        %v4083 = vunpack.c.l.b16 %v868
        %v4084 = vunpack.c.h.b16 %v868
        %v4085 = vunpack.c.l.b16 %v869
        %v4086 = vunpack.c.h.b16 %v869
        %v4087 = vunpack.c.l.b16 %v870
        %v4088 = vunpack.c.h.b16 %v870
        %v4089 = vunpack.c.l.b16 %v871
        %v4090 = vunpack.c.h.b16 %v871
        %v4091 = vunpack.c.l.b16 %v872
        %v4092 = vunpack.c.h.b16 %v872
        %v4093 = vunpack.c.l.b16 %v873
        %v4094 = vunpack.c.h.b16 %v873
        %v4095 = vunpack.c.l.b16 %v874
        %v4096 = vunpack.c.h.b16 %v874
        %v4097 = vunpack.c.l.b16 %v875
        %v4098 = vunpack.c.h.b16 %v875
        %v4099 = vunpack.c.l.b16 %v876
        %v4100 = vunpack.c.h.b16 %v876
        %v4101 = vunpack.c.l.b16 %v877
        %v4102 = vunpack.c.h.b16 %v877
        %v4103 = vunpack.c.l.b16 %v878
        %v4104 = vunpack.c.h.b16 %v878
        %v4105 = vunpack.c.l.b16 %v879
        %v4106 = vunpack.c.h.b16 %v879
        %v4107 = vunpack.c.l.b16 %v880
        %v4108 = vunpack.c.h.b16 %v880
        %v4109 = vunpack.c.l.b16 %v881
        %v4110 = vunpack.c.h.b16 %v881
        %v4111 = vunpack.c.l.b16 %v882
        %v4112 = vunpack.c.h.b16 %v882
        %v4113 = vunpack.c.l.b16 %v883
        %v4114 = vunpack.c.h.b16 %v883
        %v4115 = vunpack.c.l.b16 %v884
        %v4116 = vunpack.c.h.b16 %v884
        %v4117 = vunpack.c.l.b16 %v885
        %v4118 = vunpack.c.h.b16 %v885
        %v4119 = vunpack.c.l.b16 %v886
        %v4120 = vunpack.c.h.b16 %v886
        %v4121 = vunpack.c.l.b16 %v887
        %v4122 = vunpack.c.h.b16 %v887
        %v4123 = vunpack.c.l.b16 %v888
        %v4124 = vunpack.c.h.b16 %v888
        %v4125 = vunpack.c.l.b16 %v889
        %v4126 = vunpack.c.h.b16 %v889
        %v4127 = vunpack.c.l.b16 %v890
        %v4128 = vunpack.c.h.b16 %v890
        %v4129 = vunpack.c.l.b16 %v891
        %v4130 = vunpack.c.h.b16 %v891
        %v4131 = vunpack.c.l.b16 %v892
        %v4132 = vunpack.c.h.b16 %v892
        %v4133 = vunpack.c.l.b16 %v893
        %v4134 = vunpack.c.h.b16 %v893
        %v4135 = vunpack.c.l.b16 %v894
        %v4136 = vunpack.c.h.b16 %v894
        %v4137 = vunpack.c.l.b16 %v895
        %v4138 = vunpack.c.h.b16 %v895
        %v4139 = vunpack.c.l.b16 %v896
        %v4140 = vunpack.c.h.b16 %v896
        %v4141 = vunpack.c.l.b16 %v897
        %v4142 = vunpack.c.h.b16 %v897
        %v4143 = vunpack.c.l.b16 %v898
        %v4144 = vunpack.c.h.b16 %v898
        %v4145 = vunpack.c.l.b16 %v899
        %v4146 = vunpack.c.h.b16 %v899
        %v4147 = vunpack.c.l.b16 %v900
        %v4148 = vunpack.c.h.b16 %v900
        %v4149 = vunpack.c.l.b16 %v901
        %v4150 = vunpack.c.h.b16 %v901
        %v4151 = vunpack.c.l.b16 %v902
        %v4152 = vunpack.c.h.b16 %v902
        %v4153 = vunpack.c.l.b16 %v903
        %v4154 = vunpack.c.h.b16 %v903
        %v4155 = vunpack.c.l.b16 %v904
        %v4156 = vunpack.c.h.b16 %v904
        %v4157 = vunpack.c.l.b16 %v905
        %v4158 = vunpack.c.h.b16 %v905
        %v4159 = vunpack.c.l.b16 %v906
        %v4160 = vunpack.c.h.b16 %v906
        %v4161 = vunpack.c.l.b16 %v907
        %v4162 = vunpack.c.h.b16 %v907
        %v4163 = vunpack.c.l.b16 %v908
        %v4164 = vunpack.c.h.b16 %v908
        %v4165 = vunpack.c.l.b16 %v909
        %v4166 = vunpack.c.h.b16 %v909
        %v4167 = vunpack.c.l.b16 %v910
        %v4168 = vunpack.c.h.b16 %v910
        %v4169 = vunpack.c.l.b16 %v911
        %v4170 = vunpack.c.h.b16 %v911
        %v4171 = vunpack.c.l.b16 %v912
        %v4172 = vunpack.c.h.b16 %v912
        %v4173 = vunpack.c.l.b16 %v913
        %v4174 = vunpack.c.h.b16 %v913
        %v4175 = vunpack.c.l.b16 %v914
        %v4176 = vunpack.c.h.b16 %v914
        %v4177 = vunpack.c.l.b16 %v915
        %v4178 = vunpack.c.h.b16 %v915
        %v4179 = vunpack.c.l.b16 %v916
        %v4180 = vunpack.c.h.b16 %v916
        %v4181 = vunpack.c.l.b16 %v917
        %v4182 = vunpack.c.h.b16 %v917
        %v4183 = vunpack.c.l.b16 %v918
        %v4184 = vunpack.c.h.b16 %v918
        %v4185 = vunpack.c.l.b16 %v919
        %v4186 = vunpack.c.h.b16 %v919
        %v4187 = vunpack.c.l.b16 %v920
        %v4188 = vunpack.c.h.b16 %v920
        %v4189 = vunpack.c.l.b16 %v921
        %v4190 = vunpack.c.h.b16 %v921
        %v4191 = vunpack.c.l.b16 %v922
        %v4192 = vunpack.c.h.b16 %v922
        %v4193 = vunpack.c.l.b16 %v923
        %v4194 = vunpack.c.h.b16 %v923
        %v4195 = vunpack.c.l.b16 %v924
        %v4196 = vunpack.c.h.b16 %v924
        %v4197 = vunpack.c.l.b16 %v925
        %v4198 = vunpack.c.h.b16 %v925
        %v4199 = vunpack.c.l.b16 %v926
        %v4200 = vunpack.c.h.b16 %v926
        %v4201 = vunpack.c.l.b16 %v927
        %v4202 = vunpack.c.h.b16 %v927
        %v4203 = vunpack.c.l.b16 %v928
        %v4204 = vunpack.c.h.b16 %v928
        %v4205 = vunpack.c.l.b16 %v929
        %v4206 = vunpack.c.h.b16 %v929
        %v4207 = vunpack.c.l.b16 %v930
        %v4208 = vunpack.c.h.b16 %v930
        %v4209 = vunpack.c.l.b16 %v931
        %v4210 = vunpack.c.h.b16 %v931
        %v4211 = vunpack.c.l.b16 %v932
        %v4212 = vunpack.c.h.b16 %v932
        %v4213 = vunpack.c.l.b16 %v933
        %v4214 = vunpack.c.h.b16 %v933
        %v4215 = vunpack.c.l.b16 %v934
        %v4216 = vunpack.c.h.b16 %v934
        %v4217 = vunpack.c.l.b16 %v935
        %v4218 = vunpack.c.h.b16 %v935
        %v4219 = vunpack.c.l.b16 %v936
        %v4220 = vunpack.c.h.b16 %v936
        %v4221 = vunpack.c.l.b16 %v937
        %v4222 = vunpack.c.h.b16 %v937
        %v4223 = vunpack.c.l.b16 %v938
        %v4224 = vunpack.c.h.b16 %v938
        %v4225 = vunpack.c.l.b16 %v939
        %v4226 = vunpack.c.h.b16 %v939
        %v4227 = vunpack.c.l.b16 %v940
        %v4228 = vunpack.c.h.b16 %v940
        %v4229 = vunpack.c.l.b16 %v941
        %v4230 = vunpack.c.h.b16 %v941
        %v4231 = vunpack.c.l.b16 %v942
        %v4232 = vunpack.c.h.b16 %v942
        %v4233 = vunpack.c.l.b16 %v943
        %v4234 = vunpack.c.h.b16 %v943
        %v4235 = vunpack.c.l.b16 %v944
        %v4236 = vunpack.c.h.b16 %v944
        %v4237 = vunpack.c.l.b16 %v945
        %v4238 = vunpack.c.h.b16 %v945
        %v4239 = vunpack.c.l.b16 %v946
        %v4240 = vunpack.c.h.b16 %v946
        %v4241 = vunpack.c.l.b16 %v947
        %v4242 = vunpack.c.h.b16 %v947
        %v4243 = vunpack.c.l.b16 %v948
        %v4244 = vunpack.c.h.b16 %v948
        %v4245 = vunpack.c.l.b16 %v949
        %v4246 = vunpack.c.h.b16 %v949
        %v4247 = vunpack.c.l.b16 %v950
        %v4248 = vunpack.c.h.b16 %v950
        %v4249 = vunpack.c.l.b16 %v951
        %v4250 = vunpack.c.h.b16 %v951
        %v4251 = vunpack.c.l.b16 %v952
        %v4252 = vunpack.c.h.b16 %v952
        %v4253 = vunpack.c.l.b16 %v953
        %v4254 = vunpack.c.h.b16 %v953
        %v4255 = vunpack.c.l.b16 %v954
        %v4256 = vunpack.c.h.b16 %v954
        %v4257 = vunpack.c.l.b16 %v955
        %v4258 = vunpack.c.h.b16 %v955
        %v4259 = vunpack.c.l.b16 %v956
        %v4260 = vunpack.c.h.b16 %v956
        %v4261 = vunpack.c.l.b16 %v957
        %v4262 = vunpack.c.h.b16 %v957
        %v4263 = vunpack.c.l.b16 %v958
        %v4264 = vunpack.c.h.b16 %v958
        %v4265 = vunpack.c.l.b16 %v959
        %v4266 = vunpack.c.h.b16 %v959
        %v4267 = vunpack.c.l.b16 %v960
        %v4268 = vunpack.c.h.b16 %v960
        %v4269 = vunpack.c.l.b16 %v961
        %v4270 = vunpack.c.h.b16 %v961
        %v4271 = vunpack.c.l.b16 %v962
        %v4272 = vunpack.c.h.b16 %v962
        %v4273 = vunpack.c.l.b16 %v963
        %v4274 = vunpack.c.h.b16 %v963
        %v4275 = vunpack.c.l.b16 %v964
        %v4276 = vunpack.c.h.b16 %v964
        %v4277 = vunpack.c.l.b16 %v965
        %v4278 = vunpack.c.h.b16 %v965
        %v4279 = vunpack.c.l.b16 %v966
        %v4280 = vunpack.c.h.b16 %v966
        %v4281 = vunpack.c.l.b16 %v967
        %v4282 = vunpack.c.h.b16 %v967
        %v4283 = vunpack.c.l.b16 %v968
        %v4284 = vunpack.c.h.b16 %v968
        %v4285 = vunpack.c.l.b16 %v969
        %v4286 = vunpack.c.h.b16 %v969
        %v4287 = vunpack.c.l.b16 %v970
        %v4288 = vunpack.c.h.b16 %v970
        %v4289 = vunpack.c.l.b16 %v971
        %v4290 = vunpack.c.h.b16 %v971
        %v4291 = vunpack.c.l.b16 %v972
        %v4292 = vunpack.c.h.b16 %v972
        %v4293 = vunpack.c.l.b16 %v973
        %v4294 = vunpack.c.h.b16 %v973
        %v4295 = vunpack.c.l.b16 %v974
        %v4296 = vunpack.c.h.b16 %v974
        %v4297 = vunpack.c.l.b16 %v975
        %v4298 = vunpack.c.h.b16 %v975
        %v4299 = vunpack.c.l.b16 %v976
        %v4300 = vunpack.c.h.b16 %v976
        %v4301 = vunpack.c.l.b16 %v977
        %v4302 = vunpack.c.h.b16 %v977
        %v4303 = vunpack.c.l.b16 %v978
        %v4304 = vunpack.c.h.b16 %v978
        %v4305 = vunpack.c.l.b16 %v979
        %v4306 = vunpack.c.h.b16 %v979
        %v4307 = vunpack.c.l.b16 %v980
        %v4308 = vunpack.c.h.b16 %v980
        %v4309 = vunpack.c.l.b16 %v981
        %v4310 = vunpack.c.h.b16 %v981
        %v4311 = vunpack.c.l.b16 %v982
        %v4312 = vunpack.c.h.b16 %v982
        %v4313 = vunpack.c.l.b16 %v983
        %v4314 = vunpack.c.h.b16 %v983
        %v4315 = vunpack.c.l.b16 %v984
        %v4316 = vunpack.c.h.b16 %v984
        %v4317 = vunpack.c.l.b16 %v985
        %v4318 = vunpack.c.h.b16 %v985
        %v4319 = vunpack.c.l.b16 %v986
        %v4320 = vunpack.c.h.b16 %v986
        %v4321 = vunpack.c.l.b16 %v987
        %v4322 = vunpack.c.h.b16 %v987
        %v4323 = vunpack.c.l.b16 %v988
        %v4324 = vunpack.c.h.b16 %v988
        %v4325 = vunpack.c.l.b16 %v989
        %v4326 = vunpack.c.h.b16 %v989
        %v4327 = vunpack.c.l.b16 %v990
        %v4328 = vunpack.c.h.b16 %v990
        %v4329 = vunpack.c.l.b16 %v991
        %v4330 = vunpack.c.h.b16 %v991
        %v4331 = vunpack.c.l.b16 %v992
        %v4332 = vunpack.c.h.b16 %v992
        %v4333 = vunpack.c.l.b16 %v993
        %v4334 = vunpack.c.h.b16 %v993
        %v4335 = vunpack.c.l.b16 %v994
        %v4336 = vunpack.c.h.b16 %v994
        %v4337 = vunpack.c.l.b16 %v995
        %v4338 = vunpack.c.h.b16 %v995
        %v4339 = vunpack.c.l.b16 %v996
        %v4340 = vunpack.c.h.b16 %v996
        %v4341 = vunpack.c.l.b16 %v997
        %v4342 = vunpack.c.h.b16 %v997
        %v4343 = vunpack.c.l.b16 %v998
        %v4344 = vunpack.c.h.b16 %v998
        %v4345 = vunpack.c.l.b16 %v999
        %v4346 = vunpack.c.h.b16 %v999
        %v4347 = vunpack.c.l.b16 %v1000
        %v4348 = vunpack.c.h.b16 %v1000
        %v4349 = vunpack.c.l.b16 %v1001
        %v4350 = vunpack.c.h.b16 %v1001
        %v4351 = vunpack.c.l.b16 %v1002
        %v4352 = vunpack.c.h.b16 %v1002
        %v4353 = vunpack.c.l.b16 %v1003
        %v4354 = vunpack.c.h.b16 %v1003
        %v4355 = vunpack.c.l.b16 %v1004
        %v4356 = vunpack.c.h.b16 %v1004
        %v4357 = vunpack.c.l.b16 %v1005
        %v4358 = vunpack.c.h.b16 %v1005
        %v4359 = vunpack.c.l.b16 %v1006
        %v4360 = vunpack.c.h.b16 %v1006
        %v4361 = vunpack.c.l.b16 %v1007
        %v4362 = vunpack.c.h.b16 %v1007
        %v4363 = vunpack.c.l.b16 %v1008
        %v4364 = vunpack.c.h.b16 %v1008
        %v4365 = vunpack.c.l.b16 %v1009
        %v4366 = vunpack.c.h.b16 %v1009
        %v4367 = vunpack.c.l.b16 %v1010
        %v4368 = vunpack.c.h.b16 %v1010
        %v4369 = vunpack.c.l.b16 %v1011
        %v4370 = vunpack.c.h.b16 %v1011
        %v4371 = vunpack.c.l.b16 %v1012
        %v4372 = vunpack.c.h.b16 %v1012
        %v4373 = vunpack.c.l.b16 %v1013
        %v4374 = vunpack.c.h.b16 %v1013
        %v4375 = vunpack.c.l.b16 %v1014
        %v4376 = vunpack.c.h.b16 %v1014
        %v4377 = vunpack.c.l.b16 %v1015
        %v4378 = vunpack.c.h.b16 %v1015
        %v4379 = vunpack.c.l.b16 %v1016
        %v4380 = vunpack.c.h.b16 %v1016
        %v4381 = vunpack.c.l.b16 %v1017
        %v4382 = vunpack.c.h.b16 %v1017
        %v4383 = vunpack.c.l.b16 %v1018
        %v4384 = vunpack.c.h.b16 %v1018
        %v4385 = vunpack.c.l.b16 %v1019
        %v4386 = vunpack.c.h.b16 %v1019
        %v4387 = vunpack.c.l.b16 %v1020
        %v4388 = vunpack.c.h.b16 %v1020
        %v4389 = vunpack.c.l.b16 %v1021
        %v4390 = vunpack.c.h.b16 %v1021
        %v4391 = vunpack.c.l.b16 %v1022
        %v4392 = vunpack.c.h.b16 %v1022
        %v4393 = vunpack.c.l.b16 %v1023
        %v4394 = vunpack.c.h.b16 %v1023
        %v4395 = vunpack.c.l.b16 %v1024
        %v4396 = vunpack.c.h.b16 %v1024
        %v4397 = vunpack.c.l.b16 %v1025
        %v4398 = vunpack.c.h.b16 %v1025
        %v4399 = vunpack.c.l.b16 %v1026
        %v4400 = vunpack.c.h.b16 %v1026
        %v4401 = vunpack.c.l.b16 %v1027
        %v4402 = vunpack.c.h.b16 %v1027
        %v4403 = vunpack.c.l.b16 %v1028
        %v4404 = vunpack.c.h.b16 %v1028
        %v4405 = vunpack.c.l.b16 %v1029
        %v4406 = vunpack.c.h.b16 %v1029
        %v4407 = vunpack.c.l.b16 %v1030
        %v4408 = vunpack.c.h.b16 %v1030
        %v4409 = vunpack.c.l.b16 %v1031
        %v4410 = vunpack.c.h.b16 %v1031
        %v4411 = vunpack.c.l.b16 %v1032
        %v4412 = vunpack.c.h.b16 %v1032
        %v4413 = vunpack.c.l.b16 %v1033
        %v4414 = vunpack.c.h.b16 %v1033
        %v4415 = vunpack.c.l.b16 %v1034
        %v4416 = vunpack.c.h.b16 %v1034
        %v4417 = vunpack.c.l.b16 %v1035
        %v4418 = vunpack.c.h.b16 %v1035
        %v4419 = vunpack.c.l.b16 %v1036
        %v4420 = vunpack.c.h.b16 %v1036
        %v4421 = vunpack.c.l.b16 %v1037
        %v4422 = vunpack.c.h.b16 %v1037
        %v4423 = vunpack.c.l.b16 %v1038
        %v4424 = vunpack.c.h.b16 %v1038
        %v4425 = vunpack.c.l.b16 %v1039
        %v4426 = vunpack.c.h.b16 %v1039
        %v4427 = vunpack.c.l.b16 %v1040
        %v4428 = vunpack.c.h.b16 %v1040
        %v4429 = vunpack.c.l.b16 %v1041
        %v4430 = vunpack.c.h.b16 %v1041
        %v4431 = vunpack.c.l.b16 %v1042
        %v4432 = vunpack.c.h.b16 %v1042
        %v4433 = vunpack.c.l.b16 %v1043
        %v4434 = vunpack.c.h.b16 %v1043
        %v4435 = vunpack.c.l.b16 %v1044
        %v4436 = vunpack.c.h.b16 %v1044
        %v4437 = vunpack.c.l.b16 %v1045
        %v4438 = vunpack.c.h.b16 %v1045
        %v4439 = vunpack.c.l.b16 %v1046
        %v4440 = vunpack.c.h.b16 %v1046
        %v4441 = vunpack.c.l.b16 %v1047
        %v4442 = vunpack.c.h.b16 %v1047
        %v4443 = vunpack.c.l.b16 %v1048
        %v4444 = vunpack.c.h.b16 %v1048
        %v4445 = vunpack.c.l.b16 %v1049
        %v4446 = vunpack.c.h.b16 %v1049
        %v4447 = vunpack.c.l.b16 %v1050
        %v4448 = vunpack.c.h.b16 %v1050
        %v4449 = vunpack.c.l.b16 %v1051
        %v4450 = vunpack.c.h.b16 %v1051
        %v4451 = vunpack.c.l.b16 %v1052
        %v4452 = vunpack.c.h.b16 %v1052
        %v4453 = vunpack.c.l.b16 %v1053
        %v4454 = vunpack.c.h.b16 %v1053
        %v4455 = vunpack.c.l.b16 %v1054
        %v4456 = vunpack.c.h.b16 %v1054
        %v4457 = vunpack.c.l.b16 %v1055
        %v4458 = vunpack.c.h.b16 %v1055
        %v4459 = vunpack.c.l.b16 %v1056
        %v4460 = vunpack.c.h.b16 %v1056
        %v4461 = vunpack.c.l.b16 %v1057
        %v4462 = vunpack.c.h.b16 %v1057
        %v4463 = vunpack.c.l.b16 %v1058
        %v4464 = vunpack.c.h.b16 %v1058
        %v4465 = vunpack.c.l.b16 %v1059
        %v4466 = vunpack.c.h.b16 %v1059
        %v4467 = vunpack.c.l.b16 %v1060
        %v4468 = vunpack.c.h.b16 %v1060
        %v4469 = vunpack.c.l.b16 %v1061
        %v4470 = vunpack.c.h.b16 %v1061
        %v4471 = vunpack.c.l.b16 %v1062
        %v4472 = vunpack.c.h.b16 %v1062
        %v4473 = vunpack.c.l.b16 %v1063
        %v4474 = vunpack.c.h.b16 %v1063
        %v4475 = vunpack.c.l.b16 %v1064
        %v4476 = vunpack.c.h.b16 %v1064
        %v4477 = vunpack.c.l.b16 %v1065
        %v4478 = vunpack.c.h.b16 %v1065
        %v4479 = vunpack.c.l.b16 %v1066
        %v4480 = vunpack.c.h.b16 %v1066
        %v4481 = vunpack.c.l.b16 %v1067
        %v4482 = vunpack.c.h.b16 %v1067
        %v4483 = vunpack.c.l.b16 %v1068
        %v4484 = vunpack.c.h.b16 %v1068
        %v4485 = vunpack.c.l.b16 %v1069
        %v4486 = vunpack.c.h.b16 %v1069
        %v4487 = vunpack.c.l.b16 %v1070
        %v4488 = vunpack.c.h.b16 %v1070
        %v4489 = vunpack.c.l.b16 %v1071
        %v4490 = vunpack.c.h.b16 %v1071
        %v4491 = vunpack.c.l.b16 %v1072
        %v4492 = vunpack.c.h.b16 %v1072
        %v4493 = vunpack.c.l.b16 %v1073
        %v4494 = vunpack.c.h.b16 %v1073
        %v4495 = vunpack.c.l.b16 %v1074
        %v4496 = vunpack.c.h.b16 %v1074
        %v4497 = vunpack.c.l.b16 %v1075
        %v4498 = vunpack.c.h.b16 %v1075
        %v4499 = vunpack.c.l.b16 %v1076
        %v4500 = vunpack.c.h.b16 %v1076
        %v4501 = vunpack.c.l.b16 %v1077
        %v4502 = vunpack.c.h.b16 %v1077
        %v4503 = vunpack.c.l.b16 %v1078
        %v4504 = vunpack.c.h.b16 %v1078
        %v4505 = vunpack.c.l.b16 %v1079
        %v4506 = vunpack.c.h.b16 %v1079
        %v4507 = vunpack.c.l.b16 %v1080
        %v4508 = vunpack.c.h.b16 %v1080
        %v4509 = vunpack.c.l.b16 %v1081
        %v4510 = vunpack.c.h.b16 %v1081
        %v4511 = vunpack.c.l.b16 %v1082
        %v4512 = vunpack.c.h.b16 %v1082
        %v4513 = vunpack.c.l.b16 %v1083
        %v4514 = vunpack.c.h.b16 %v1083
        %v4515 = vunpack.c.l.b16 %v1084
        %v4516 = vunpack.c.h.b16 %v1084
        %v4517 = vunpack.c.l.b16 %v1085
        %v4518 = vunpack.c.h.b16 %v1085
        %v4519 = vunpack.c.l.b16 %v1086
        %v4520 = vunpack.c.h.b16 %v1086
        %v4521 = vunpack.c.l.b16 %v1087
        %v4522 = vunpack.c.h.b16 %v1087
        %v4523 = vunpack.c.l.b16 %v1088
        %v4524 = vunpack.c.h.b16 %v1088
        %v4525 = vunpack.c.l.b16 %v1089
        %v4526 = vunpack.c.h.b16 %v1089
        %v4527 = vunpack.c.l.b16 %v1090
        %v4528 = vunpack.c.h.b16 %v1090
        %v4529 = vunpack.c.l.b16 %v1091
        %v4530 = vunpack.c.h.b16 %v1091
        %v4531 = vunpack.c.l.b16 %v1092
        %v4532 = vunpack.c.h.b16 %v1092
        %v4533 = vunpack.c.l.b16 %v1093
        %v4534 = vunpack.c.h.b16 %v1093
        %v4535 = vunpack.c.l.b16 %v1094
        %v4536 = vunpack.c.h.b16 %v1094
        %v4537 = vunpack.c.l.b16 %v1095
        %v4538 = vunpack.c.h.b16 %v1095
        %v4539 = vunpack.c.l.b16 %v1096
        %v4540 = vunpack.c.h.b16 %v1096
        %v4541 = vunpack.c.l.b16 %v1097
        %v4542 = vunpack.c.h.b16 %v1097
        %v4543 = vunpack.c.l.b16 %v1098
        %v4544 = vunpack.c.h.b16 %v1098
        %v4545 = vunpack.c.l.b16 %v1099
        %v4546 = vunpack.c.h.b16 %v1099
        %v4547 = vunpack.c.l.b16 %v1100
        %v4548 = vunpack.c.h.b16 %v1100
        %v4549 = vunpack.c.l.b16 %v1101
        %v4550 = vunpack.c.h.b16 %v1101
        %v4551 = vunpack.c.l.b16 %v1102
        %v4552 = vunpack.c.h.b16 %v1102
        %v4553 = vunpack.c.l.b16 %v1103
        %v4554 = vunpack.c.h.b16 %v1103
        %v4555 = vunpack.c.l.b16 %v1104
        %v4556 = vunpack.c.h.b16 %v1104
        %v4557 = vunpack.c.l.b16 %v1105
        %v4558 = vunpack.c.h.b16 %v1105
        %v4559 = vunpack.c.l.b16 %v1106
        %v4560 = vunpack.c.h.b16 %v1106
        %v4561 = vunpack.c.l.b16 %v1107
        %v4562 = vunpack.c.h.b16 %v1107
        %v4563 = vunpack.c.l.b16 %v1108
        %v4564 = vunpack.c.h.b16 %v1108
        %v4565 = vunpack.c.l.b16 %v1109
        %v4566 = vunpack.c.h.b16 %v1109
        %v4567 = vunpack.c.l.b16 %v1110
        %v4568 = vunpack.c.h.b16 %v1110
        %v4569 = vunpack.c.l.b16 %v1111
        %v4570 = vunpack.c.h.b16 %v1111
        %v4571 = vunpack.c.l.b16 %v1112
        %v4572 = vunpack.c.h.b16 %v1112
        %v4573 = vunpack.c.l.b16 %v1113
        %v4574 = vunpack.c.h.b16 %v1113
        %v4575 = vunpack.c.l.b16 %v1114
        %v4576 = vunpack.c.h.b16 %v1114
        %v4577 = vunpack.c.l.b16 %v1115
        %v4578 = vunpack.c.h.b16 %v1115
        %v4579 = vunpack.c.l.b16 %v1116
        %v4580 = vunpack.c.h.b16 %v1116
        %v4581 = vunpack.c.l.b16 %v1117
        %v4582 = vunpack.c.h.b16 %v1117
        %v4583 = vunpack.c.l.b16 %v1118
        %v4584 = vunpack.c.h.b16 %v1118
        %v4585 = vunpack.c.l.b16 %v1119
        %v4586 = vunpack.c.h.b16 %v1119
        %v4587 = vunpack.c.l.b16 %v1120
        %v4588 = vunpack.c.h.b16 %v1120
        %v4589 = vunpack.c.l.b16 %v1121
        %v4590 = vunpack.c.h.b16 %v1121
        %v4591 = vunpack.c.l.b16 %v1122
        %v4592 = vunpack.c.h.b16 %v1122
        %v4593 = vunpack.c.l.b16 %v1123
        %v4594 = vunpack.c.h.b16 %v1123
        %v4595 = vunpack.c.l.b16 %v1124
        %v4596 = vunpack.c.h.b16 %v1124
        %v4597 = vunpack.c.l.b16 %v1125
        %v4598 = vunpack.c.h.b16 %v1125
        %v4599 = vunpack.c.l.b16 %v1126
        %v4600 = vunpack.c.h.b16 %v1126
        %v4601 = vunpack.c.l.b16 %v1127
        %v4602 = vunpack.c.h.b16 %v1127
        %v4603 = vunpack.c.l.b16 %v1128
        %v4604 = vunpack.c.h.b16 %v1128
        %v4605 = vunpack.c.l.b16 %v1129
        %v4606 = vunpack.c.h.b16 %v1129
        %v4607 = vunpack.c.l.b16 %v1130
        %v4608 = vunpack.c.h.b16 %v1130
        %v4609 = vunpack.c.l.b16 %v1131
        %v4610 = vunpack.c.h.b16 %v1131
        %v4611 = vunpack.c.l.b16 %v1132
        %v4612 = vunpack.c.h.b16 %v1132
        %v4613 = vunpack.c.l.b16 %v1133
        %v4614 = vunpack.c.h.b16 %v1133
        %v4615 = vunpack.c.l.b16 %v1134
        %v4616 = vunpack.c.h.b16 %v1134
        %v4617 = vunpack.c.l.b16 %v1135
        %v4618 = vunpack.c.h.b16 %v1135
        %v4619 = vunpack.c.l.b16 %v1136
        %v4620 = vunpack.c.h.b16 %v1136
        %v4621 = vunpack.c.l.b16 %v1137
        %v4622 = vunpack.c.h.b16 %v1137
        %v4623 = vunpack.c.l.b16 %v1138
        %v4624 = vunpack.c.h.b16 %v1138
        %v4625 = vunpack.c.l.b16 %v1139
        %v4626 = vunpack.c.h.b16 %v1139
        %v4627 = vunpack.c.l.b16 %v1140
        %v4628 = vunpack.c.h.b16 %v1140
        %v4629 = vunpack.c.l.b16 %v1141
        %v4630 = vunpack.c.h.b16 %v1141
        %v4631 = vunpack.c.l.b16 %v1142
        %v4632 = vunpack.c.h.b16 %v1142
        %v4633 = vunpack.c.l.b16 %v1143
        %v4634 = vunpack.c.h.b16 %v1143
        %v4635 = vunpack.c.l.b16 %v1144
        %v4636 = vunpack.c.h.b16 %v1144
        %v4637 = vunpack.c.l.b16 %v1145
        %v4638 = vunpack.c.h.b16 %v1145
        %v4639 = vunpack.c.l.b16 %v1146
        %v4640 = vunpack.c.h.b16 %v1146
        %v4641 = vunpack.c.l.b16 %v1147
        %v4642 = vunpack.c.h.b16 %v1147
        %v4643 = vunpack.c.l.b16 %v1148
        %v4644 = vunpack.c.h.b16 %v1148
        %v4645 = vunpack.c.l.b16 %v1149
        %v4646 = vunpack.c.h.b16 %v1149
        %v4647 = vunpack.c.l.b16 %v1150
        %v4648 = vunpack.c.h.b16 %v1150
        %v4649 = vunpack.c.l.b16 %v1151
        %v4650 = vunpack.c.h.b16 %v1151
        %v4651 = vunpack.c.l.b16 %v1152
        %v4652 = vunpack.c.h.b16 %v1152
        %v4653 = vunpack.c.l.b16 %v1153
        %v4654 = vunpack.c.h.b16 %v1153
        %v4655 = vunpack.c.l.b16 %v1154
        %v4656 = vunpack.c.h.b16 %v1154
        %v4657 = vunpack.c.l.b16 %v1155
        %v4658 = vunpack.c.h.b16 %v1155
        %v4659 = vunpack.c.l.b16 %v1156
        %v4660 = vunpack.c.h.b16 %v1156
        %v4661 = vunpack.c.l.b16 %v1157
        %v4662 = vunpack.c.h.b16 %v1157
        %v4663 = vunpack.c.l.b16 %v1158
        %v4664 = vunpack.c.h.b16 %v1158
        %v4665 = vunpack.c.l.b16 %v1159
        %v4666 = vunpack.c.h.b16 %v1159
        %v4667 = vunpack.c.l.b16 %v1160
        %v4668 = vunpack.c.h.b16 %v1160
        %v4669 = vunpack.c.l.b16 %v1161
        %v4670 = vunpack.c.h.b16 %v1161
        %v4671 = vunpack.c.l.b16 %v1162
        %v4672 = vunpack.c.h.b16 %v1162
        %v4673 = vunpack.c.l.b16 %v1163
        %v4674 = vunpack.c.h.b16 %v1163
        %v4675 = vunpack.c.l.b16 %v1164
        %v4676 = vunpack.c.h.b16 %v1164
        %v4677 = vunpack.c.l.b16 %v1165
        %v4678 = vunpack.c.h.b16 %v1165
        %v4679 = vunpack.c.l.b16 %v1166
        %v4680 = vunpack.c.h.b16 %v1166
        %v4681 = vunpack.c.l.b16 %v1167
        %v4682 = vunpack.c.h.b16 %v1167
        %v4683 = vunpack.c.l.b16 %v1168
        %v4684 = vunpack.c.h.b16 %v1168
        %v4685 = vunpack.c.l.b16 %v1169
        %v4686 = vunpack.c.h.b16 %v1169
        %v4687 = vunpack.c.l.b16 %v1170
        %v4688 = vunpack.c.h.b16 %v1170
        %v4689 = vunpack.c.l.b16 %v1171
        %v4690 = vunpack.c.h.b16 %v1171
        %v4691 = vunpack.c.l.b16 %v1172
        %v4692 = vunpack.c.h.b16 %v1172
        %v4693 = vunpack.c.l.b16 %v1173
        %v4694 = vunpack.c.h.b16 %v1173
        %v4695 = vunpack.c.l.b16 %v1174
        %v4696 = vunpack.c.h.b16 %v1174
        %v4697 = vunpack.c.l.b16 %v1175
        %v4698 = vunpack.c.h.b16 %v1175
        %v4699 = vunpack.c.l.b16 %v1176
        %v4700 = vunpack.c.h.b16 %v1176
        %v4701 = vunpack.c.l.b16 %v1177
        %v4702 = vunpack.c.h.b16 %v1177
        %v4703 = vunpack.c.l.b16 %v1178
        %v4704 = vunpack.c.h.b16 %v1178
        %v4705 = vunpack.c.l.b16 %v1179
        %v4706 = vunpack.c.h.b16 %v1179
        %v4707 = vunpack.c.l.b16 %v1180
        %v4708 = vunpack.c.h.b16 %v1180
        %v4709 = vunpack.c.l.b16 %v1181
        %v4710 = vunpack.c.h.b16 %v1181
        %v4711 = vunpack.c.l.b16 %v1182
        %v4712 = vunpack.c.h.b16 %v1182
        %v4713 = vunpack.c.l.b16 %v1183
        %v4714 = vunpack.c.h.b16 %v1183
        %v4715 = vunpack.c.l.b16 %v1184
        %v4716 = vunpack.c.h.b16 %v1184
        %v4717 = vunpack.c.l.b16 %v1185
        %v4718 = vunpack.c.h.b16 %v1185
        %v4719 = vunpack.c.l.b16 %v1186
        %v4720 = vunpack.c.h.b16 %v1186
        %v4721 = vunpack.c.l.b16 %v1187
        %v4722 = vunpack.c.h.b16 %v1187
        %v4723 = vunpack.c.l.b16 %v1188
        %v4724 = vunpack.c.h.b16 %v1188
        %v4725 = vunpack.c.l.b16 %v1189
        %v4726 = vunpack.c.h.b16 %v1189
        %v4727 = vunpack.c.l.b16 %v1190
        %v4728 = vunpack.c.h.b16 %v1190
        %v4729 = vunpack.c.l.b16 %v1191
        %v4730 = vunpack.c.h.b16 %v1191
        %v4731 = vunpack.c.l.b16 %v1192
        %v4732 = vunpack.c.h.b16 %v1192
        %v4733 = vunpack.c.l.b16 %v1193
        %v4734 = vunpack.c.h.b16 %v1193
        %v4735 = vunpack.c.l.b16 %v1194
        %v4736 = vunpack.c.h.b16 %v1194
        %v4737 = vunpack.c.l.b16 %v1195
        %v4738 = vunpack.c.h.b16 %v1195
        %v4739 = vunpack.c.l.b16 %v1196
        %v4740 = vunpack.c.h.b16 %v1196
        %v4741 = vunpack.c.l.b16 %v1197
        %v4742 = vunpack.c.h.b16 %v1197
        %v4743 = vunpack.c.l.b16 %v1198
        %v4744 = vunpack.c.h.b16 %v1198
        %v4745 = vunpack.c.l.b16 %v1199
        %v4746 = vunpack.c.h.b16 %v1199
        %v4747 = vunpack.c.l.b16 %v1200
        %v4748 = vunpack.c.h.b16 %v1200
        %v4749 = vunpack.c.l.b16 %v1201
        %v4750 = vunpack.c.h.b16 %v1201
        %v4751 = vunpack.c.l.b16 %v1202
        %v4752 = vunpack.c.h.b16 %v1202
        %v4753 = vunpack.c.l.b16 %v1203
        %v4754 = vunpack.c.h.b16 %v1203
        %v4755 = vunpack.c.l.b16 %v1204
        %v4756 = vunpack.c.h.b16 %v1204
        %v4757 = vunpack.c.l.b16 %v1205
        %v4758 = vunpack.c.h.b16 %v1205
        %v4759 = vunpack.c.l.b16 %v1206
        %v4760 = vunpack.c.h.b16 %v1206
        %v4761 = vunpack.c.l.b16 %v1207
        %v4762 = vunpack.c.h.b16 %v1207
        %v4763 = vunpack.c.l.b16 %v1208
        %v4764 = vunpack.c.h.b16 %v1208
        %v4765 = vunpack.c.l.b16 %v1209
        %v4766 = vunpack.c.h.b16 %v1209
        %v4767 = vunpack.c.l.b16 %v1210
        %v4768 = vunpack.c.h.b16 %v1210
        %v4769 = vunpack.c.l.b16 %v1211
        %v4770 = vunpack.c.h.b16 %v1211
        %v4771 = vunpack.c.l.b16 %v1212
        %v4772 = vunpack.c.h.b16 %v1212
        %v4773 = vunpack.c.l.b16 %v1213
        %v4774 = vunpack.c.h.b16 %v1213
        %v4775 = vunpack.c.l.b16 %v1214
        %v4776 = vunpack.c.h.b16 %v1214
        %v4777 = vunpack.c.l.b16 %v1215
        %v4778 = vunpack.c.h.b16 %v1215
        %v4779 = vunpack.c.l.b16 %v1216
        %v4780 = vunpack.c.h.b16 %v1216
        %v4781 = vunpack.c.l.b16 %v1217
        %v4782 = vunpack.c.h.b16 %v1217
        %v4783 = vunpack.c.l.b16 %v1218
        %v4784 = vunpack.c.h.b16 %v1218
        %v4785 = vunpack.c.l.b16 %v1219
        %v4786 = vunpack.c.h.b16 %v1219
        %v4787 = vunpack.c.l.b16 %v1220
        %v4788 = vunpack.c.h.b16 %v1220
        %v4789 = vunpack.c.l.b16 %v1221
        %v4790 = vunpack.c.h.b16 %v1221
        %v4791 = vunpack.c.l.b16 %v1222
        %v4792 = vunpack.c.h.b16 %v1222
        %v4793 = vunpack.c.l.b16 %v1223
        %v4794 = vunpack.c.h.b16 %v1223
        %v4795 = vunpack.c.l.b16 %v1224
        %v4796 = vunpack.c.h.b16 %v1224
        %v4797 = vunpack.c.l.b16 %v1225
        %v4798 = vunpack.c.h.b16 %v1225
        %v4799 = vunpack.c.l.b16 %v1226
        %v4800 = vunpack.c.h.b16 %v1226
        %v4801 = vunpack.c.l.b16 %v1227
        %v4802 = vunpack.c.h.b16 %v1227
        %v4803 = vunpack.c.l.b16 %v1228
        %v4804 = vunpack.c.h.b16 %v1228
        %v4805 = vunpack.c.l.b16 %v1229
        %v4806 = vunpack.c.h.b16 %v1229
        %v4807 = vunpack.c.l.b16 %v1230
        %v4808 = vunpack.c.h.b16 %v1230
        %v4809 = vunpack.c.l.b16 %v1231
        %v4810 = vunpack.c.h.b16 %v1231
        %v4811 = vunpack.c.l.b16 %v1232
        %v4812 = vunpack.c.h.b16 %v1232
        %v4813 = vunpack.c.l.b16 %v1233
        %v4814 = vunpack.c.h.b16 %v1233
        %v4815 = vunpack.c.l.b16 %v1234
        %v4816 = vunpack.c.h.b16 %v1234
        %v4817 = vunpack.c.l.b16 %v1235
        %v4818 = vunpack.c.h.b16 %v1235
        %v4819 = vunpack.c.l.b16 %v1236
        %v4820 = vunpack.c.h.b16 %v1236
        %v4821 = vunpack.c.l.b16 %v1237
        %v4822 = vunpack.c.h.b16 %v1237
        %v4823 = vunpack.c.l.b16 %v1238
        %v4824 = vunpack.c.h.b16 %v1238
        %v4825 = vunpack.c.l.b16 %v1239
        %v4826 = vunpack.c.h.b16 %v1239
        %v4827 = vunpack.c.l.b16 %v1240
        %v4828 = vunpack.c.h.b16 %v1240
        %v4829 = vunpack.c.l.b16 %v1241
        %v4830 = vunpack.c.h.b16 %v1241
        %v4831 = vunpack.c.l.b16 %v1242
        %v4832 = vunpack.c.h.b16 %v1242
        %v4833 = vunpack.c.l.b16 %v1243
        %v4834 = vunpack.c.h.b16 %v1243
        %v4835 = vunpack.c.l.b16 %v1244
        %v4836 = vunpack.c.h.b16 %v1244
        %v4837 = vunpack.c.l.b16 %v1245
        %v4838 = vunpack.c.h.b16 %v1245
        %v4839 = vunpack.c.l.b16 %v1246
        %v4840 = vunpack.c.h.b16 %v1246
        %v4841 = vunpack.c.l.b16 %v1247
        %v4842 = vunpack.c.h.b16 %v1247
        %v4843 = vunpack.c.l.b16 %v1248
        %v4844 = vunpack.c.h.b16 %v1248
        %v4845 = vunpack.c.l.b16 %v1249
        %v4846 = vunpack.c.h.b16 %v1249
        %v4847 = vunpack.c.l.b16 %v1250
        %v4848 = vunpack.c.h.b16 %v1250
        %v4849 = vunpack.c.l.b16 %v1251
        %v4850 = vunpack.c.h.b16 %v1251
        %v4851 = vunpack.c.l.b16 %v1252
        %v4852 = vunpack.c.h.b16 %v1252
        %v4853 = vunpack.c.l.b16 %v1253
        %v4854 = vunpack.c.h.b16 %v1253
        %v4855 = vunpack.c.l.b16 %v1254
        %v4856 = vunpack.c.h.b16 %v1254
        %v4857 = vunpack.c.l.b16 %v1255
        %v4858 = vunpack.c.h.b16 %v1255
        %v4859 = vunpack.c.l.b16 %v1256
        %v4860 = vunpack.c.h.b16 %v1256
        %v4861 = vunpack.c.l.b16 %v1257
        %v4862 = vunpack.c.h.b16 %v1257
        %v4863 = vunpack.c.l.b16 %v1258
        %v4864 = vunpack.c.h.b16 %v1258
        %v4865 = vunpack.c.l.b16 %v1259
        %v4866 = vunpack.c.h.b16 %v1259
        %v4867 = vunpack.c.l.b16 %v1260
        %v4868 = vunpack.c.h.b16 %v1260
        %v4869 = vunpack.c.l.b16 %v1261
        %v4870 = vunpack.c.h.b16 %v1261
        %v4871 = vunpack.c.l.b16 %v1262
        %v4872 = vunpack.c.h.b16 %v1262
        %v4873 = vunpack.c.l.b16 %v1263
        %v4874 = vunpack.c.h.b16 %v1263
        %v4875 = vunpack.c.l.b16 %v1264
        %v4876 = vunpack.c.h.b16 %v1264
        %v4877 = vunpack.c.l.b16 %v1265
        %v4878 = vunpack.c.h.b16 %v1265
        %v4879 = vunpack.c.l.b16 %v1266
        %v4880 = vunpack.c.h.b16 %v1266
        %v4881 = vunpack.c.l.b16 %v1267
        %v4882 = vunpack.c.h.b16 %v1267
        %v4883 = vunpack.c.l.b16 %v1268
        %v4884 = vunpack.c.h.b16 %v1268
        %v4885 = vunpack.c.l.b16 %v1269
        %v4886 = vunpack.c.h.b16 %v1269
        %v4887 = vunpack.c.l.b16 %v1270
        %v4888 = vunpack.c.h.b16 %v1270
        %v4889 = vunpack.c.l.b16 %v1271
        %v4890 = vunpack.c.h.b16 %v1271
        %v4891 = vunpack.c.l.b16 %v1272
        %v4892 = vunpack.c.h.b16 %v1272
        %v4893 = vunpack.c.l.b16 %v1273
        %v4894 = vunpack.c.h.b16 %v1273
        %v4895 = vunpack.c.l.b16 %v1274
        %v4896 = vunpack.c.h.b16 %v1274
        %v4897 = vunpack.c.l.b16 %v1275
        %v4898 = vunpack.c.h.b16 %v1275
        %v4899 = vunpack.c.l.b16 %v1276
        %v4900 = vunpack.c.h.b16 %v1276
        %v4901 = vunpack.c.l.b16 %v1277
        %v4902 = vunpack.c.h.b16 %v1277
        %v4903 = vunpack.c.l.b16 %v1278
        %v4904 = vunpack.c.h.b16 %v1278
        %v4905 = vunpack.c.l.b16 %v1279
        %v4906 = vunpack.c.h.b16 %v1279
        %v4907 = vunpack.c.l.b16 %v1280
        %v4908 = vunpack.c.h.b16 %v1280
        %v4909 = vunpack.c.l.b16 %v1281
        %v4910 = vunpack.c.h.b16 %v1281
        %v4911 = vunpack.c.l.b16 %v1282
        %v4912 = vunpack.c.h.b16 %v1282
        %v4913 = vunpack.c.l.b16 %v1283
        %v4914 = vunpack.c.h.b16 %v1283
        %v4915 = vunpack.c.l.b16 %v1284
        %v4916 = vunpack.c.h.b16 %v1284
        %v4917 = vunpack.c.l.b16 %v1285
        %v4918 = vunpack.c.h.b16 %v1285
        %v4919 = vunpack.c.l.b16 %v1286
        %v4920 = vunpack.c.h.b16 %v1286
        %v4921 = vunpack.c.l.b16 %v1287
        %v4922 = vunpack.c.h.b16 %v1287
        %v4923 = vunpack.c.l.b16 %v1288
        %v4924 = vunpack.c.h.b16 %v1288
        %v4925 = vunpack.c.l.b16 %v1289
        %v4926 = vunpack.c.h.b16 %v1289
        %v4927 = vunpack.c.l.b16 %v1290
        %v4928 = vunpack.c.h.b16 %v1290
        %v4929 = vunpack.c.l.b16 %v1291
        %v4930 = vunpack.c.h.b16 %v1291
        %v4931 = vunpack.c.l.b16 %v1292
        %v4932 = vunpack.c.h.b16 %v1292
        %v4933 = vunpack.c.l.b16 %v1293
        %v4934 = vunpack.c.h.b16 %v1293
        %v4935 = vunpack.c.l.b16 %v1294
        %v4936 = vunpack.c.h.b16 %v1294
        %v4937 = vunpack.c.l.b16 %v1295
        %v4938 = vunpack.c.h.b16 %v1295
        %v4939 = vunpack.c.l.b16 %v1296
        %v4940 = vunpack.c.h.b16 %v1296
        %v4941 = vunpack.c.l.b16 %v1297
        %v4942 = vunpack.c.h.b16 %v1297
        %v4943 = vunpack.c.l.b16 %v1298
        %v4944 = vunpack.c.h.b16 %v1298
        %v4945 = vunpack.c.l.b16 %v1299
        %v4946 = vunpack.c.h.b16 %v1299
        %v4947 = vunpack.c.l.b16 %v1300
        %v4948 = vunpack.c.h.b16 %v1300
        %v4949 = vunpack.c.l.b16 %v1301
        %v4950 = vunpack.c.h.b16 %v1301
        %v4951 = vunpack.c.l.b16 %v1302
        %v4952 = vunpack.c.h.b16 %v1302
        %v4953 = vunpack.c.l.b16 %v1303
        %v4954 = vunpack.c.h.b16 %v1303
        %v4955 = vunpack.c.l.b16 %v1304
        %v4956 = vunpack.c.h.b16 %v1304
        %v4957 = vunpack.c.l.b16 %v1305
        %v4958 = vunpack.c.h.b16 %v1305
        %v4959 = vunpack.c.l.b16 %v1306
        %v4960 = vunpack.c.h.b16 %v1306
        %v4961 = vunpack.c.l.b16 %v1307
        %v4962 = vunpack.c.h.b16 %v1307
        %v4963 = vunpack.c.l.b16 %v1308
        %v4964 = vunpack.c.h.b16 %v1308
        %v4965 = vunpack.c.l.b16 %v1309
        %v4966 = vunpack.c.h.b16 %v1309
        %v4967 = vunpack.c.l.b16 %v1310
        %v4968 = vunpack.c.h.b16 %v1310
        %v4969 = vunpack.c.l.b16 %v1311
        %v4970 = vunpack.c.h.b16 %v1311
        %v4971 = vunpack.c.l.b16 %v1312
        %v4972 = vunpack.c.h.b16 %v1312
        %v4973 = vunpack.c.l.b16 %v1313
        %v4974 = vunpack.c.h.b16 %v1313
        %v4975 = vunpack.c.l.b16 %v1314
        %v4976 = vunpack.c.h.b16 %v1314
        %v4977 = vunpack.c.l.b16 %v1315
        %v4978 = vunpack.c.h.b16 %v1315
        %v4979 = vunpack.c.l.b16 %v1316
        %v4980 = vunpack.c.h.b16 %v1316
        %v4981 = vunpack.c.l.b16 %v1317
        %v4982 = vunpack.c.h.b16 %v1317
        %v4983 = vunpack.c.l.b16 %v1318
        %v4984 = vunpack.c.h.b16 %v1318
        %v4985 = vunpack.c.l.b16 %v1319
        %v4986 = vunpack.c.h.b16 %v1319
        %v4987 = vunpack.c.l.b16 %v1320
        %v4988 = vunpack.c.h.b16 %v1320
        %v4989 = vunpack.c.l.b16 %v1321
        %v4990 = vunpack.c.h.b16 %v1321
        %v4991 = vunpack.c.l.b16 %v1322
        %v4992 = vunpack.c.h.b16 %v1322
        %v4993 = vunpack.c.l.b16 %v1323
        %v4994 = vunpack.c.h.b16 %v1323
        %v4995 = vunpack.c.l.b16 %v1324
        %v4996 = vunpack.c.h.b16 %v1324
        %v4997 = vunpack.c.l.b16 %v1325
        %v4998 = vunpack.c.h.b16 %v1325
        %v4999 = vunpack.c.l.b16 %v1326
        %v5000 = vunpack.c.h.b16 %v1326
        %v5001 = vunpack.c.l.b16 %v1327
        %v5002 = vunpack.c.h.b16 %v1327
        %v5003 = vunpack.c.l.b16 %v1328
        %v5004 = vunpack.c.h.b16 %v1328
        %v5005 = vunpack.c.l.b16 %v1329
        %v5006 = vunpack.c.h.b16 %v1329
        %v5007 = vunpack.c.l.b16 %v1330
        %v5008 = vunpack.c.h.b16 %v1330
        %v5009 = vunpack.c.l.b16 %v1331
        %v5010 = vunpack.c.h.b16 %v1331
        %v5011 = vunpack.c.l.b16 %v1332
        %v5012 = vunpack.c.h.b16 %v1332
        %v5013 = vunpack.c.l.b16 %v1333
        %v5014 = vunpack.c.h.b16 %v1333
        %v5015 = vunpack.c.l.b16 %v1334
        %v5016 = vunpack.c.h.b16 %v1334
        %v5017 = vunpack.c.l.b16 %v1335
        %v5018 = vunpack.c.h.b16 %v1335
        %v5019 = vunpack.c.l.b16 %v1336
        %v5020 = vunpack.c.h.b16 %v1336
        %v5021 = vunpack.c.l.b16 %v1337
        %v5022 = vunpack.c.h.b16 %v1337
        %v5023 = vunpack.c.l.b16 %v1338
        %v5024 = vunpack.c.h.b16 %v1338
        %v5025 = vunpack.c.l.b16 %v1339
        %v5026 = vunpack.c.h.b16 %v1339
        %v5027 = vunpack.c.l.b16 %v1340
        %v5028 = vunpack.c.h.b16 %v1340
        %v5029 = vunpack.c.l.b16 %v1341
        %v5030 = vunpack.c.h.b16 %v1341
        %v5031 = vunpack.c.l.b16 %v1342
        %v5032 = vunpack.c.h.b16 %v1342
        %v5033 = vunpack.c.l.b16 %v1343
        %v5034 = vunpack.c.h.b16 %v1343
        %v5035 = vunpack.c.l.b16 %v1344
        %v5036 = vunpack.c.h.b16 %v1344
        %v5037 = vunpack.c.l.b16 %v1345
        %v5038 = vunpack.c.h.b16 %v1345
        %v5039 = vunpack.c.l.b16 %v1346
        %v5040 = vunpack.c.h.b16 %v1346
        %v5041 = vunpack.c.l.b16 %v1347
        %v5042 = vunpack.c.h.b16 %v1347
        %v5043 = vunpack.c.l.b16 %v1348
        %v5044 = vunpack.c.h.b16 %v1348
        %v5045 = vunpack.c.l.b16 %v1349
        %v5046 = vunpack.c.h.b16 %v1349
        %v5047 = vunpack.c.l.b16 %v1350
        %v5048 = vunpack.c.h.b16 %v1350
        %v5049 = vunpack.c.l.b16 %v1351
        %v5050 = vunpack.c.h.b16 %v1351
        %v5051 = vunpack.c.l.b16 %v1352
        %v5052 = vunpack.c.h.b16 %v1352
        %v5053 = vunpack.c.l.b16 %v1353
        %v5054 = vunpack.c.h.b16 %v1353
        %v5055 = vunpack.c.l.b16 %v1354
        %v5056 = vunpack.c.h.b16 %v1354
        %v5057 = vunpack.c.l.b16 %v1355
        %v5058 = vunpack.c.h.b16 %v1355
        %v5059 = vunpack.c.l.b16 %v1356
        %v5060 = vunpack.c.h.b16 %v1356
        %v5061 = vunpack.c.l.b16 %v1357
        %v5062 = vunpack.c.h.b16 %v1357
        %v5063 = vunpack.c.l.b16 %v1358
        %v5064 = vunpack.c.h.b16 %v1358
        %v5065 = vunpack.c.l.b16 %v1359
        %v5066 = vunpack.c.h.b16 %v1359
        %v5067 = vunpack.c.l.b16 %v1360
        %v5068 = vunpack.c.h.b16 %v1360
        %v5069 = vunpack.c.l.b16 %v1361
        %v5070 = vunpack.c.h.b16 %v1361
        %v5071 = vunpack.c.l.b16 %v1362
        %v5072 = vunpack.c.h.b16 %v1362
        %v5073 = vunpack.c.l.b16 %v1363
        %v5074 = vunpack.c.h.b16 %v1363
        %v5075 = vunpack.c.l.b16 %v1364
        %v5076 = vunpack.c.h.b16 %v1364
        %v5077 = vunpack.c.l.b16 %v1365
        %v5078 = vunpack.c.h.b16 %v1365
        %v5079 = vunpack.c.l.b16 %v1366
        %v5080 = vunpack.c.h.b16 %v1366
        %v5081 = vunpack.c.l.b16 %v1367
        %v5082 = vunpack.c.h.b16 %v1367
        %v5083 = vunpack.c.l.b16 %v1368
        %v5084 = vunpack.c.h.b16 %v1368
        %v5085 = vunpack.c.l.b16 %v1369
        %v5086 = vunpack.c.h.b16 %v1369
        %v5087 = vunpack.c.l.b16 %v1370
        %v5088 = vunpack.c.h.b16 %v1370
        %v5089 = vunpack.c.l.b16 %v1371
        %v5090 = vunpack.c.h.b16 %v1371
        %v5091 = vunpack.c.l.b16 %v1372
        %v5092 = vunpack.c.h.b16 %v1372
        %v5093 = vunpack.c.l.b16 %v1373
        %v5094 = vunpack.c.h.b16 %v1373
        %v5095 = vunpack.c.l.b16 %v1374
        %v5096 = vunpack.c.h.b16 %v1374
        %v5097 = vunpack.c.l.b16 %v1375
        %v5098 = vunpack.c.h.b16 %v1375
        %v5099 = vunpack.c.l.b16 %v1376
        %v5100 = vunpack.c.h.b16 %v1376
        %v5101 = vunpack.c.l.b16 %v1377
        %v5102 = vunpack.c.h.b16 %v1377
        %v5103 = vunpack.c.l.b16 %v1378
        %v5104 = vunpack.c.h.b16 %v1378
        %v5105 = vunpack.c.l.b16 %v1379
        %v5106 = vunpack.c.h.b16 %v1379
        %v5107 = vunpack.c.l.b16 %v1380
        %v5108 = vunpack.c.h.b16 %v1380
        %v5109 = vunpack.c.l.b16 %v1381
        %v5110 = vunpack.c.h.b16 %v1381
        %v5111 = vunpack.c.l.b16 %v1382
        %v5112 = vunpack.c.h.b16 %v1382
        %v5113 = vunpack.c.l.b16 %v1383
        %v5114 = vunpack.c.h.b16 %v1383
        %v5115 = vunpack.c.l.b16 %v1384
        %v5116 = vunpack.c.h.b16 %v1384
        %v5117 = vunpack.c.l.b16 %v1385
        %v5118 = vunpack.c.h.b16 %v1385
        %v5119 = vunpack.c.l.b16 %v1386
        %v5120 = vunpack.c.h.b16 %v1386
        %v5121 = vunpack.c.l.b16 %v1387
        %v5122 = vunpack.c.h.b16 %v1387
        %v5123 = vunpack.c.l.b16 %v1388
        %v5124 = vunpack.c.h.b16 %v1388
        %v5125 = vunpack.c.l.b16 %v1389
        %v5126 = vunpack.c.h.b16 %v1389
        %v5127 = vunpack.c.l.b16 %v1390
        %v5128 = vunpack.c.h.b16 %v1390
        %v5129 = vunpack.c.l.b16 %v1391
        %v5130 = vunpack.c.h.b16 %v1391
        %v5131 = vunpack.c.l.b16 %v1392
        %v5132 = vunpack.c.h.b16 %v1392
        %v5133 = vunpack.c.l.b16 %v1393
        %v5134 = vunpack.c.h.b16 %v1393
        %v5135 = vunpack.c.l.b16 %v1394
        %v5136 = vunpack.c.h.b16 %v1394
        %v5137 = vunpack.c.l.b16 %v1395
        %v5138 = vunpack.c.h.b16 %v1395
        %v5139 = vunpack.c.l.b16 %v1396
        %v5140 = vunpack.c.h.b16 %v1396
        %v5141 = vunpack.c.l.b16 %v1397
        %v5142 = vunpack.c.h.b16 %v1397
        %v5143 = vunpack.c.l.b16 %v1398
        %v5144 = vunpack.c.h.b16 %v1398
        %v5145 = vunpack.c.l.b16 %v1399
        %v5146 = vunpack.c.h.b16 %v1399
        %v5147 = vunpack.c.l.b16 %v1400
        %v5148 = vunpack.c.h.b16 %v1400
        %v5149 = vunpack.c.l.b16 %v1401
        %v5150 = vunpack.c.h.b16 %v1401
        %v5151 = vunpack.c.l.b16 %v1402
        %v5152 = vunpack.c.h.b16 %v1402
        %v5153 = vunpack.c.l.b16 %v1403
        %v5154 = vunpack.c.h.b16 %v1403
        %v5155 = vunpack.c.l.b16 %v1404
        %v5156 = vunpack.c.h.b16 %v1404
        %v5157 = vunpack.c.l.b16 %v1405
        %v5158 = vunpack.c.h.b16 %v1405
        %v5159 = vunpack.c.l.b16 %v1406
        %v5160 = vunpack.c.h.b16 %v1406
        %v5161 = vunpack.c.l.b16 %v1407
        %v5162 = vunpack.c.h.b16 %v1407
        %v5163 = vunpack.c.l.b16 %v1408
        %v5164 = vunpack.c.h.b16 %v1408
        %v5165 = vunpack.c.l.b16 %v1409
        %v5166 = vunpack.c.h.b16 %v1409
        %v5167 = vunpack.c.l.b16 %v1410
        %v5168 = vunpack.c.h.b16 %v1410
        %v5169 = vunpack.c.l.b16 %v1411
        %v5170 = vunpack.c.h.b16 %v1411
        %v5171 = vunpack.c.l.b16 %v1412
        %v5172 = vunpack.c.h.b16 %v1412
        %v5173 = vunpack.c.l.b16 %v1413
        %v5174 = vunpack.c.h.b16 %v1413
        %v5175 = vunpack.c.l.b16 %v1414
        %v5176 = vunpack.c.h.b16 %v1414
        %v5177 = vunpack.c.l.b16 %v1415
        %v5178 = vunpack.c.h.b16 %v1415
        %v5179 = vunpack.c.l.b16 %v1416
        %v5180 = vunpack.c.h.b16 %v1416
        %v5181 = vunpack.c.l.b16 %v1417
        %v5182 = vunpack.c.h.b16 %v1417
        %v5183 = vunpack.c.l.b16 %v1418
        %v5184 = vunpack.c.h.b16 %v1418
        %v5185 = vunpack.c.l.b16 %v1419
        %v5186 = vunpack.c.h.b16 %v1419
        %v5187 = vunpack.c.l.b16 %v1420
        %v5188 = vunpack.c.h.b16 %v1420
        %v5189 = vunpack.c.l.b16 %v1421
        %v5190 = vunpack.c.h.b16 %v1421
        %v5191 = vunpack.c.l.b16 %v1422
        %v5192 = vunpack.c.h.b16 %v1422
        %v5193 = vunpack.c.l.b16 %v1423
        %v5194 = vunpack.c.h.b16 %v1423
        %v5195 = vunpack.c.l.b16 %v1424
        %v5196 = vunpack.c.h.b16 %v1424
        %v5197 = vunpack.c.l.b16 %v1425
        %v5198 = vunpack.c.h.b16 %v1425
        %v5199 = vunpack.c.l.b16 %v1426
        %v5200 = vunpack.c.h.b16 %v1426
        %v5201 = vunpack.c.l.b16 %v1427
        %v5202 = vunpack.c.h.b16 %v1427
        %v5203 = vunpack.c.l.b16 %v1428
        %v5204 = vunpack.c.h.b16 %v1428
        %v5205 = vunpack.c.l.b16 %v1429
        %v5206 = vunpack.c.h.b16 %v1429
        %v5207 = vunpack.c.l.b16 %v1430
        %v5208 = vunpack.c.h.b16 %v1430
        %v5209 = vunpack.c.l.b16 %v1431
        %v5210 = vunpack.c.h.b16 %v1431
        %v5211 = vunpack.c.l.b16 %v1432
        %v5212 = vunpack.c.h.b16 %v1432
        %v5213 = vunpack.c.l.b16 %v1433
        %v5214 = vunpack.c.h.b16 %v1433
        %v5215 = vunpack.c.l.b16 %v1434
        %v5216 = vunpack.c.h.b16 %v1434
        %v5217 = vunpack.c.l.b16 %v1435
        %v5218 = vunpack.c.h.b16 %v1435
        %v5219 = vunpack.c.l.b16 %v1436
        %v5220 = vunpack.c.h.b16 %v1436
        %v5221 = vunpack.c.l.b16 %v1437
        %v5222 = vunpack.c.h.b16 %v1437
        %v5223 = vunpack.c.l.b16 %v1438
        %v5224 = vunpack.c.h.b16 %v1438
        %v5225 = vunpack.c.l.b16 %v1439
        %v5226 = vunpack.c.h.b16 %v1439
        %v5227 = vunpack.c.l.b16 %v1440
        %v5228 = vunpack.c.h.b16 %v1440
        %v5229 = vunpack.c.l.b16 %v1441
        %v5230 = vunpack.c.h.b16 %v1441
        %v5231 = vunpack.c.l.b16 %v1442
        %v5232 = vunpack.c.h.b16 %v1442
        %v5233 = vunpack.c.l.b16 %v1443
        %v5234 = vunpack.c.h.b16 %v1443
        %v5235 = vunpack.c.l.b16 %v1444
        %v5236 = vunpack.c.h.b16 %v1444
        %v5237 = vunpack.c.l.b16 %v1445
        %v5238 = vunpack.c.h.b16 %v1445
        %v5239 = vunpack.c.l.b16 %v1446
        %v5240 = vunpack.c.h.b16 %v1446
        %v5241 = vunpack.c.l.b16 %v1447
        %v5242 = vunpack.c.h.b16 %v1447
        %v5243 = vunpack.c.l.b16 %v1448
        %v5244 = vunpack.c.h.b16 %v1448
        %v5245 = vunpack.c.l.b16 %v1449
        %v5246 = vunpack.c.h.b16 %v1449
        %v5247 = vunpack.c.l.b16 %v1450
        %v5248 = vunpack.c.h.b16 %v1450
        %v5249 = vunpack.c.l.b16 %v1451
        %v5250 = vunpack.c.h.b16 %v1451
        %v5251 = vunpack.c.l.b16 %v1452
        %v5252 = vunpack.c.h.b16 %v1452
        %v5253 = vunpack.c.l.b16 %v1453
        %v5254 = vunpack.c.h.b16 %v1453
        %v5255 = vunpack.c.l.b16 %v1454
        %v5256 = vunpack.c.h.b16 %v1454
        %v5257 = vunpack.c.l.b16 %v1455
        %v5258 = vunpack.c.h.b16 %v1455
        %v5259 = vunpack.c.l.b16 %v1456
        %v5260 = vunpack.c.h.b16 %v1456
        %v5261 = vunpack.c.l.b16 %v1457
        %v5262 = vunpack.c.h.b16 %v1457
        %v5263 = vunpack.c.l.b16 %v1458
        %v5264 = vunpack.c.h.b16 %v1458
        %v5265 = vunpack.c.l.b16 %v1459
        %v5266 = vunpack.c.h.b16 %v1459
        %v5267 = vunpack.c.l.b16 %v1460
        %v5268 = vunpack.c.h.b16 %v1460
        %v5269 = vunpack.c.l.b16 %v1461
        %v5270 = vunpack.c.h.b16 %v1461
        %v5271 = vunpack.c.l.b16 %v1462
        %v5272 = vunpack.c.h.b16 %v1462
        %v5273 = vunpack.c.l.b16 %v1463
        %v5274 = vunpack.c.h.b16 %v1463
        %v5275 = vunpack.c.l.b16 %v1464
        %v5276 = vunpack.c.h.b16 %v1464
        %v5277 = vunpack.c.l.b16 %v1465
        %v5278 = vunpack.c.h.b16 %v1465
        %v5279 = vunpack.c.l.b16 %v1466
        %v5280 = vunpack.c.h.b16 %v1466
        %v5281 = vunpack.c.l.b16 %v1467
        %v5282 = vunpack.c.h.b16 %v1467
        %v5283 = vunpack.c.l.b16 %v1468
        %v5284 = vunpack.c.h.b16 %v1468
        %v5285 = vunpack.c.l.b16 %v1469
        %v5286 = vunpack.c.h.b16 %v1469
        %v5287 = vunpack.c.l.b16 %v1470
        %v5288 = vunpack.c.h.b16 %v1470
        %v5289 = vunpack.c.l.b16 %v1471
        %v5290 = vunpack.c.h.b16 %v1471
        %v5291 = vunpack.c.l.b16 %v1472
        %v5292 = vunpack.c.h.b16 %v1472
        %v5293 = vunpack.c.l.b16 %v1473
        %v5294 = vunpack.c.h.b16 %v1473
        %v5295 = vunpack.c.l.b16 %v1474
        %v5296 = vunpack.c.h.b16 %v1474
        %v5297 = vunpack.c.l.b16 %v1475
        %v5298 = vunpack.c.h.b16 %v1475
        %v5299 = vunpack.c.l.b16 %v1476
        %v5300 = vunpack.c.h.b16 %v1476
        %v5301 = vunpack.c.l.b16 %v1477
        %v5302 = vunpack.c.h.b16 %v1477
        %v5303 = vunpack.c.l.b16 %v1478
        %v5304 = vunpack.c.h.b16 %v1478
        %v5305 = vunpack.c.l.b16 %v1479
        %v5306 = vunpack.c.h.b16 %v1479
        %v5307 = vunpack.c.l.b16 %v1480
        %v5308 = vunpack.c.h.b16 %v1480
        %v5309 = vunpack.c.l.b16 %v1481
        %v5310 = vunpack.c.h.b16 %v1481
        %v5311 = vunpack.c.l.b16 %v1482
        %v5312 = vunpack.c.h.b16 %v1482
        %v5313 = vunpack.c.l.b16 %v1483
        %v5314 = vunpack.c.h.b16 %v1483
        %v5315 = vunpack.c.l.b16 %v1484
        %v5316 = vunpack.c.h.b16 %v1484
        %v5317 = vunpack.c.l.b16 %v1485
        %v5318 = vunpack.c.h.b16 %v1485
        %v5319 = vunpack.c.l.b16 %v1486
        %v5320 = vunpack.c.h.b16 %v1486
        %v5321 = vunpack.c.l.b16 %v1487
        %v5322 = vunpack.c.h.b16 %v1487
        %v5323 = vunpack.c.l.b16 %v1488
        %v5324 = vunpack.c.h.b16 %v1488
        %v5325 = vunpack.c.l.b16 %v1489
        %v5326 = vunpack.c.h.b16 %v1489
        %v5327 = vunpack.c.l.b16 %v1490
        %v5328 = vunpack.c.h.b16 %v1490
        %v5329 = vunpack.c.l.b16 %v1491
        %v5330 = vunpack.c.h.b16 %v1491
        %v5331 = vunpack.c.l.b16 %v1492
        %v5332 = vunpack.c.h.b16 %v1492
        %v5333 = vunpack.c.l.b16 %v1493
        %v5334 = vunpack.c.h.b16 %v1493
        %v5335 = vunpack.c.l.b16 %v1494
        %v5336 = vunpack.c.h.b16 %v1494
        %v5337 = vunpack.c.l.b16 %v1495
        %v5338 = vunpack.c.h.b16 %v1495
        %v5339 = vunpack.c.l.b16 %v1496
        %v5340 = vunpack.c.h.b16 %v1496
        %v5341 = vunpack.c.l.b16 %v1497
        %v5342 = vunpack.c.h.b16 %v1497
        %v5343 = vunpack.c.l.b16 %v1498
        %v5344 = vunpack.c.h.b16 %v1498
        %v5345 = vunpack.c.l.b16 %v1499
        %v5346 = vunpack.c.h.b16 %v1499
        %v5347 = vunpack.c.l.b16 %v1500
        %v5348 = vunpack.c.h.b16 %v1500
        %v5349 = vunpack.c.l.b16 %v1501
        %v5350 = vunpack.c.h.b16 %v1501
        %v5351 = vunpack.c.l.b16 %v1502
        %v5352 = vunpack.c.h.b16 %v1502
        %v5353 = vunpack.c.l.b16 %v1503
        %v5354 = vunpack.c.h.b16 %v1503
        %v5355 = vunpack.c.l.b16 %v1504
        %v5356 = vunpack.c.h.b16 %v1504
        %v5357 = vunpack.c.l.b16 %v1505
        %v5358 = vunpack.c.h.b16 %v1505
        %v5359 = vunpack.c.l.b16 %v1506
        %v5360 = vunpack.c.h.b16 %v1506
        %v5361 = vunpack.c.l.b16 %v1507
        %v5362 = vunpack.c.h.b16 %v1507
        %v5363 = vunpack.c.l.b16 %v1508
        %v5364 = vunpack.c.h.b16 %v1508
        %v5365 = vunpack.c.l.b16 %v1509
        %v5366 = vunpack.c.h.b16 %v1509
        %v5367 = vunpack.c.l.b16 %v1510
        %v5368 = vunpack.c.h.b16 %v1510
        %v5369 = vunpack.c.l.b16 %v1511
        %v5370 = vunpack.c.h.b16 %v1511
        %v5371 = vunpack.c.l.b16 %v1512
        %v5372 = vunpack.c.h.b16 %v1512
        %v5373 = vunpack.c.l.b16 %v1513
        %v5374 = vunpack.c.h.b16 %v1513
        %v5375 = vunpack.c.l.b16 %v1514
        %v5376 = vunpack.c.h.b16 %v1514
        %v5377 = vunpack.c.l.b16 %v1515
        %v5378 = vunpack.c.h.b16 %v1515
        %v5379 = vunpack.c.l.b16 %v1516
        %v5380 = vunpack.c.h.b16 %v1516
        %v5381 = vunpack.c.l.b16 %v1517
        %v5382 = vunpack.c.h.b16 %v1517
        %v5383 = vunpack.c.l.b16 %v1518
        %v5384 = vunpack.c.h.b16 %v1518
        %v5385 = vunpack.c.l.b16 %v1519
        %v5386 = vunpack.c.h.b16 %v1519
        %v5387 = vunpack.c.l.b16 %v1520
        %v5388 = vunpack.c.h.b16 %v1520
        %v5389 = vunpack.c.l.b16 %v1521
        %v5390 = vunpack.c.h.b16 %v1521
        %v5391 = vunpack.c.l.b16 %v1522
        %v5392 = vunpack.c.h.b16 %v1522
        %v5393 = vunpack.c.l.b16 %v1523
        %v5394 = vunpack.c.h.b16 %v1523
        %v5395 = vunpack.c.l.b16 %v1524
        %v5396 = vunpack.c.h.b16 %v1524
        %v5397 = vunpack.c.l.b16 %v1525
        %v5398 = vunpack.c.h.b16 %v1525
        %v5399 = vunpack.c.l.b16 %v1526
        %v5400 = vunpack.c.h.b16 %v1526
        %v5401 = vunpack.c.l.b16 %v1527
        %v5402 = vunpack.c.h.b16 %v1527
        %v5403 = vunpack.c.l.b16 %v1528
        %v5404 = vunpack.c.h.b16 %v1528
        %v5405 = vunpack.c.l.b16 %v1529
        %v5406 = vunpack.c.h.b16 %v1529
        %v5407 = vunpack.c.l.b16 %v1530
        %v5408 = vunpack.c.h.b16 %v1530
        %v5409 = vunpack.c.l.b16 %v1531
        %v5410 = vunpack.c.h.b16 %v1531
        %v5411 = vunpack.c.l.b16 %v1532
        %v5412 = vunpack.c.h.b16 %v1532
        %v5413 = vunpack.c.l.b16 %v1533
        %v5414 = vunpack.c.h.b16 %v1533
        %v5415 = vunpack.c.l.b16 %v1534
        %v5416 = vunpack.c.h.b16 %v1534
        %v5417 = vunpack.c.l.b16 %v1535
        %v5418 = vunpack.c.h.b16 %v1535
        %v5419 = vunpack.c.l.b16 %v1536
        %v5420 = vunpack.c.h.b16 %v1536
        %v5421 = vunpack.c.l.b16 %v1537
        %v5422 = vunpack.c.h.b16 %v1537
        %v5423 = vunpack.c.l.b16 %v1538
        %v5424 = vunpack.c.h.b16 %v1538
        %v5425 = vunpack.c.l.b16 %v1539
        %v5426 = vunpack.c.h.b16 %v1539
        %v5427 = vunpack.c.l.b16 %v1540
        %v5428 = vunpack.c.h.b16 %v1540
        %v5429 = vunpack.c.l.b16 %v1541
        %v5430 = vunpack.c.h.b16 %v1541
        %v5431 = vunpack.c.l.b16 %v1542
        %v5432 = vunpack.c.h.b16 %v1542
        %v5433 = vunpack.c.l.b16 %v1543
        %v5434 = vunpack.c.h.b16 %v1543
        %v5435 = vunpack.c.l.b16 %v1544
        %v5436 = vunpack.c.h.b16 %v1544
        %v5437 = vunpack.c.l.b16 %v1545
        %v5438 = vunpack.c.h.b16 %v1545
        %v5439 = vunpack.c.l.b16 %v1546
        %v5440 = vunpack.c.h.b16 %v1546
        %v5441 = vunpack.c.l.b16 %v1547
        %v5442 = vunpack.c.h.b16 %v1547
        %v5443 = vunpack.c.l.b16 %v1548
        %v5444 = vunpack.c.h.b16 %v1548
        %v5445 = vunpack.c.l.b16 %v1549
        %v5446 = vunpack.c.h.b16 %v1549
        %v5447 = vunpack.c.l.b16 %v1550
        %v5448 = vunpack.c.h.b16 %v1550
        %v5449 = vunpack.c.l.b16 %v1551
        %v5450 = vunpack.c.h.b16 %v1551
        %v5451 = vunpack.c.l.b16 %v1552
        %v5452 = vunpack.c.h.b16 %v1552
        %v5453 = vunpack.c.l.b16 %v1553
        %v5454 = vunpack.c.h.b16 %v1553
        %v5455 = vunpack.c.l.b16 %v1554
        %v5456 = vunpack.c.h.b16 %v1554
        %v5457 = vunpack.c.l.b16 %v1555
        %v5458 = vunpack.c.h.b16 %v1555
        %v5459 = vunpack.c.l.b16 %v1556
        %v5460 = vunpack.c.h.b16 %v1556
        %v5461 = vunpack.c.l.b16 %v1557
        %v5462 = vunpack.c.h.b16 %v1557
        %v5463 = vunpack.c.l.b16 %v1558
        %v5464 = vunpack.c.h.b16 %v1558
        %v5465 = vunpack.c.l.b16 %v1559
        %v5466 = vunpack.c.h.b16 %v1559
        %v5467 = vunpack.c.l.b16 %v1560
        %v5468 = vunpack.c.h.b16 %v1560
        %v5469 = vunpack.c.l.b16 %v1561
        %v5470 = vunpack.c.h.b16 %v1561
        %v5471 = vunpack.c.l.b16 %v1562
        %v5472 = vunpack.c.h.b16 %v1562
        %v5473 = vunpack.c.l.b16 %v1563
        %v5474 = vunpack.c.h.b16 %v1563
        %v5475 = vunpack.c.l.b16 %v1564
        %v5476 = vunpack.c.h.b16 %v1564
        %v5477 = vunpack.c.l.b16 %v1565
        %v5478 = vunpack.c.h.b16 %v1565
        %v5479 = vunpack.c.l.b16 %v1566
        %v5480 = vunpack.c.h.b16 %v1566
        %v5481 = vunpack.c.l.b16 %v1567
        %v5482 = vunpack.c.h.b16 %v1567
        %v5483 = vunpack.c.l.b16 %v1568
        %v5484 = vunpack.c.h.b16 %v1568
        %v5485 = vunpack.c.l.b16 %v1569
        %v5486 = vunpack.c.h.b16 %v1569
        %v5487 = vunpack.c.l.b16 %v1570
        %v5488 = vunpack.c.h.b16 %v1570
        %v5489 = vunpack.c.l.b16 %v1571
        %v5490 = vunpack.c.h.b16 %v1571
        %v5491 = vunpack.c.l.b16 %v1572
        %v5492 = vunpack.c.h.b16 %v1572
        %v5493 = vunpack.c.l.b16 %v1573
        %v5494 = vunpack.c.h.b16 %v1573
        %v5495 = vunpack.c.l.b16 %v1574
        %v5496 = vunpack.c.h.b16 %v1574
        %v5497 = vunpack.c.l.b16 %v1575
        %v5498 = vunpack.c.h.b16 %v1575
        %v5499 = vunpack.c.l.b16 %v1576
        %v5500 = vunpack.c.h.b16 %v1576
        %v5501 = vunpack.c.l.b16 %v1577
        %v5502 = vunpack.c.h.b16 %v1577
        %v5503 = vunpack.c.l.b16 %v1578
        %v5504 = vunpack.c.h.b16 %v1578
        %v5505 = vunpack.c.l.b16 %v1579
        %v5506 = vunpack.c.h.b16 %v1579
        %v5507 = vunpack.c.l.b16 %v1580
        %v5508 = vunpack.c.h.b16 %v1580
        %v5509 = vunpack.c.l.b16 %v1581
        %v5510 = vunpack.c.h.b16 %v1581
        %v5511 = vunpack.c.l.b16 %v1582
        %v5512 = vunpack.c.h.b16 %v1582
        %v5513 = vunpack.c.l.b16 %v1583
        %v5514 = vunpack.c.h.b16 %v1583
        %v5515 = vunpack.c.l.b16 %v1584
        %v5516 = vunpack.c.h.b16 %v1584
        %v5517 = vunpack.c.l.b16 %v1585
        %v5518 = vunpack.c.h.b16 %v1585
        %v5519 = vunpack.c.l.b16 %v1586
        %v5520 = vunpack.c.h.b16 %v1586
        %v5521 = vunpack.c.l.b16 %v1587
        %v5522 = vunpack.c.h.b16 %v1587
        %v5523 = vunpack.c.l.b16 %v1588
        %v5524 = vunpack.c.h.b16 %v1588
        %v5525 = vunpack.c.l.b16 %v1589
        %v5526 = vunpack.c.h.b16 %v1589
        %v5527 = vunpack.c.l.b16 %v1590
        %v5528 = vunpack.c.h.b16 %v1590
        %v5529 = vunpack.c.l.b16 %v1591
        %v5530 = vunpack.c.h.b16 %v1591
        %v5531 = vunpack.c.l.b16 %v1592
        %v5532 = vunpack.c.h.b16 %v1592
        %v5533 = vunpack.c.l.b16 %v1593
        %v5534 = vunpack.c.h.b16 %v1593
        %v5535 = vunpack.c.l.b16 %v1594
        %v5536 = vunpack.c.h.b16 %v1594
        %v5537 = vunpack.c.l.b16 %v1595
        %v5538 = vunpack.c.h.b16 %v1595
        %v5539 = vunpack.c.l.b16 %v1596
        %v5540 = vunpack.c.h.b16 %v1596
        %v5541 = vunpack.c.l.b16 %v1597
        %v5542 = vunpack.c.h.b16 %v1597
        %v5543 = vunpack.c.l.b16 %v1598
        %v5544 = vunpack.c.h.b16 %v1598
        %v5545 = vunpack.c.l.b16 %v1599
        %v5546 = vunpack.c.h.b16 %v1599
        %v5547 = vunpack.c.l.b16 %v1600
        %v5548 = vunpack.c.h.b16 %v1600
        %v5549 = vunpack.c.l.b16 %v1601
        %v5550 = vunpack.c.h.b16 %v1601
        %v5551 = vunpack.c.l.b16 %v1602
        %v5552 = vunpack.c.h.b16 %v1602
        %v5553 = vunpack.c.l.b16 %v1603
        %v5554 = vunpack.c.h.b16 %v1603
        %v5555 = vunpack.c.l.b16 %v1604
        %v5556 = vunpack.c.h.b16 %v1604
        %v5557 = vunpack.c.l.b16 %v1605
        %v5558 = vunpack.c.h.b16 %v1605
        %v5559 = vunpack.c.l.b16 %v1606
        %v5560 = vunpack.c.h.b16 %v1606
        %v5561 = vunpack.c.l.b16 %v1607
        %v5562 = vunpack.c.h.b16 %v1607
        %v5563 = vunpack.c.l.b16 %v1608
        %v5564 = vunpack.c.h.b16 %v1608
        %v5565 = vunpack.c.l.b16 %v1609
        %v5566 = vunpack.c.h.b16 %v1609
        %v5567 = vunpack.c.l.b16 %v1610
        %v5568 = vunpack.c.h.b16 %v1610
        %v5569 = vunpack.c.l.b16 %v1611
        %v5570 = vunpack.c.h.b16 %v1611
        %v5571 = vunpack.c.l.b16 %v1612
        %v5572 = vunpack.c.h.b16 %v1612
        %v5573 = vunpack.c.l.b16 %v1613
        %v5574 = vunpack.c.h.b16 %v1613
        %v5575 = vunpack.c.l.b16 %v1614
        %v5576 = vunpack.c.h.b16 %v1614
        %v5577 = vunpack.c.l.b16 %v1615
        %v5578 = vunpack.c.h.b16 %v1615
        %v5579 = vunpack.c.l.b16 %v1616
        %v5580 = vunpack.c.h.b16 %v1616
        %v5581 = vunpack.c.l.b16 %v1617
        %v5582 = vunpack.c.h.b16 %v1617
        %v5583 = vunpack.c.l.b16 %v1618
        %v5584 = vunpack.c.h.b16 %v1618
        %v5585 = vunpack.c.l.b16 %v1619
        %v5586 = vunpack.c.h.b16 %v1619
        %v5587 = vunpack.c.l.b16 %v1620
        %v5588 = vunpack.c.h.b16 %v1620
        %v5589 = vunpack.c.l.b16 %v1621
        %v5590 = vunpack.c.h.b16 %v1621
        %v5591 = vunpack.c.l.b16 %v1622
        %v5592 = vunpack.c.h.b16 %v1622
        %v5593 = vunpack.c.l.b16 %v1623
        %v5594 = vunpack.c.h.b16 %v1623
        %v5595 = vunpack.c.l.b16 %v1624
        %v5596 = vunpack.c.h.b16 %v1624
        %v5597 = vunpack.c.l.b16 %v1625
        %v5598 = vunpack.c.h.b16 %v1625
        %v5599 = vunpack.c.l.b16 %v1626
        %v5600 = vunpack.c.h.b16 %v1626
        %v5601 = vunpack.c.l.b16 %v1627
        %v5602 = vunpack.c.h.b16 %v1627
        %v5603 = vunpack.c.l.b16 %v1628
        %v5604 = vunpack.c.h.b16 %v1628
        %v5605 = vunpack.c.l.b16 %v1629
        %v5606 = vunpack.c.h.b16 %v1629
        %v5607 = vunpack.c.l.b16 %v1630
        %v5608 = vunpack.c.h.b16 %v1630
        %v5609 = vunpack.c.l.b16 %v1631
        %v5610 = vunpack.c.h.b16 %v1631
        %v5611 = vunpack.c.l.b16 %v1632
        %v5612 = vunpack.c.h.b16 %v1632
        %v5613 = vunpack.c.l.b16 %v1633
        %v5614 = vunpack.c.h.b16 %v1633
        %v5615 = vunpack.c.l.b16 %v1634
        %v5616 = vunpack.c.h.b16 %v1634
        %v5617 = vunpack.c.l.b16 %v1635
        %v5618 = vunpack.c.h.b16 %v1635
        %v5619 = vunpack.c.l.b16 %v1636
        %v5620 = vunpack.c.h.b16 %v1636
        %v5621 = vunpack.c.l.b16 %v1637
        %v5622 = vunpack.c.h.b16 %v1637
        %v5623 = vunpack.c.l.b16 %v1638
        %v5624 = vunpack.c.h.b16 %v1638
        %v5625 = vunpack.c.l.b16 %v1639
        %v5626 = vunpack.c.h.b16 %v1639
        %v5627 = vunpack.c.l.b16 %v1640
        %v5628 = vunpack.c.h.b16 %v1640
        %v5629 = vunpack.c.l.b16 %v1641
        %v5630 = vunpack.c.h.b16 %v1641
        %v5631 = vunpack.c.l.b16 %v1642
        %v5632 = vunpack.c.h.b16 %v1642
        %v5633 = vunpack.c.l.b16 %v1643
        %v5634 = vunpack.c.h.b16 %v1643
        %v5635 = vunpack.c.l.b16 %v1644
        %v5636 = vunpack.c.h.b16 %v1644
        %v5637 = vunpack.c.l.b16 %v1645
        %v5638 = vunpack.c.h.b16 %v1645
        %v5639 = vunpack.c.l.b16 %v1646
        %v5640 = vunpack.c.h.b16 %v1646
        %v5641 = vunpack.c.l.b16 %v1647
        %v5642 = vunpack.c.h.b16 %v1647
        %v5643 = vunpack.c.l.b16 %v1648
        %v5644 = vunpack.c.h.b16 %v1648
        %v5645 = vunpack.c.l.b16 %v1649
        %v5646 = vunpack.c.h.b16 %v1649
        %v5647 = vunpack.c.l.b16 %v1650
        %v5648 = vunpack.c.h.b16 %v1650
        %v5649 = vunpack.c.l.b16 %v1651
        %v5650 = vunpack.c.h.b16 %v1651
        %v5651 = vunpack.c.l.b16 %v1652
        %v5652 = vunpack.c.h.b16 %v1652
        %v5653 = vunpack.c.l.b16 %v1653
        %v5654 = vunpack.c.h.b16 %v1653
        %v5655 = vunpack.c.l.b16 %v1654
        %v5656 = vunpack.c.h.b16 %v1654
        %v5657 = vunpack.c.l.b16 %v1655
        %v5658 = vunpack.c.h.b16 %v1655
        %v5659 = vunpack.c.l.b16 %v1656
        %v5660 = vunpack.c.h.b16 %v1656
        %v5661 = vunpack.c.l.b16 %v1657
        %v5662 = vunpack.c.h.b16 %v1657
        %v5663 = vunpack.c.l.b16 %v1658
        %v5664 = vunpack.c.h.b16 %v1658
        %v5665 = vunpack.c.l.b16 %v1659
        %v5666 = vunpack.c.h.b16 %v1659
        %v5667 = vunpack.c.l.b16 %v1660
        %v5668 = vunpack.c.h.b16 %v1660
        %v5669 = vunpack.c.l.b16 %v1661
        %v5670 = vunpack.c.h.b16 %v1661
        %v5671 = vunpack.c.l.b16 %v1662
        %v5672 = vunpack.c.h.b16 %v1662
        %v5673 = vunpack.c.l.b16 %v1663
        %v5674 = vunpack.c.h.b16 %v1663
        %v5675 = vunpack.c.l.b16 %v1664
        %v5676 = vunpack.c.h.b16 %v1664
        %v5677 = vunpack.c.l.b16 %v1665
        %v5678 = vunpack.c.h.b16 %v1665
        %v5679 = vunpack.c.l.b16 %v1666
        %v5680 = vunpack.c.h.b16 %v1666
        %v5681 = vunpack.c.l.b16 %v1667
        %v5682 = vunpack.c.h.b16 %v1667
        %v5683 = vunpack.c.l.b16 %v1668
        %v5684 = vunpack.c.h.b16 %v1668
        %v5685 = vunpack.c.l.b16 %v1669
        %v5686 = vunpack.c.h.b16 %v1669
        %v5687 = vunpack.c.l.b16 %v1670
        %v5688 = vunpack.c.h.b16 %v1670
        %v5689 = vunpack.c.l.b16 %v1671
        %v5690 = vunpack.c.h.b16 %v1671
        %v5691 = vunpack.c.l.b16 %v1672
        %v5692 = vunpack.c.h.b16 %v1672
        %v5693 = vunpack.c.l.b16 %v1673
        %v5694 = vunpack.c.h.b16 %v1673
        %v5695 = vunpack.c.l.b16 %v1674
        %v5696 = vunpack.c.h.b16 %v1674
        %v5697 = vunpack.c.l.b16 %v1675
        %v5698 = vunpack.c.h.b16 %v1675
        %v5699 = vunpack.c.l.b16 %v1676
        %v5700 = vunpack.c.h.b16 %v1676
        %v5701 = vunpack.c.l.b16 %v1677
        %v5702 = vunpack.c.h.b16 %v1677
        %v5703 = vunpack.c.l.b16 %v1678
        %v5704 = vunpack.c.h.b16 %v1678
        %v5705 = vunpack.c.l.b16 %v1679
        %v5706 = vunpack.c.h.b16 %v1679
        %v5707 = vunpack.c.l.b16 %v1680
        %v5708 = vunpack.c.h.b16 %v1680
        %v5709 = vunpack.c.l.b16 %v1681
        %v5710 = vunpack.c.h.b16 %v1681
        %v5711 = vunpack.c.l.b16 %v1682
        %v5712 = vunpack.c.h.b16 %v1682
        %v5713 = vunpack.c.l.b16 %v1683
        %v5714 = vunpack.c.h.b16 %v1683
        %v5715 = vunpack.c.l.b16 %v1684
        %v5716 = vunpack.c.h.b16 %v1684
        %v5717 = vunpack.c.l.b16 %v1685
        %v5718 = vunpack.c.h.b16 %v1685
        %v5719 = vunpack.c.l.b16 %v1686
        %v5720 = vunpack.c.h.b16 %v1686
        %v5721 = vunpack.c.l.b16 %v1687
        %v5722 = vunpack.c.h.b16 %v1687
        %v5723 = vunpack.c.l.b16 %v1688
        %v5724 = vunpack.c.h.b16 %v1688
        %v5725 = vunpack.c.l.b16 %v1689
        %v5726 = vunpack.c.h.b16 %v1689
        %v5727 = vunpack.c.l.b16 %v1690
        %v5728 = vunpack.c.h.b16 %v1690
        %v5729 = vunpack.c.l.b16 %v1691
        %v5730 = vunpack.c.h.b16 %v1691
        %v5731 = vunpack.c.l.b16 %v1692
        %v5732 = vunpack.c.h.b16 %v1692
        %v5733 = vunpack.c.l.b16 %v1693
        %v5734 = vunpack.c.h.b16 %v1693
        %v5735 = vunpack.c.l.b16 %v1694
        %v5736 = vunpack.c.h.b16 %v1694
        %v5737 = vunpack.c.l.b16 %v1695
        %v5738 = vunpack.c.h.b16 %v1695
        %v5739 = vunpack.c.l.b16 %v1696
        %v5740 = vunpack.c.h.b16 %v1696
        %v5741 = vunpack.c.l.b16 %v1697
        %v5742 = vunpack.c.h.b16 %v1697
        %v5743 = vunpack.c.l.b16 %v1698
        %v5744 = vunpack.c.h.b16 %v1698
        %v5745 = vunpack.c.l.b16 %v1699
        %v5746 = vunpack.c.h.b16 %v1699
        %v5747 = vunpack.c.l.b16 %v1700
        %v5748 = vunpack.c.h.b16 %v1700
        %v5749 = vunpack.c.l.b16 %v1701
        %v5750 = vunpack.c.h.b16 %v1701
        %v5751 = vunpack.c.l.b16 %v1702
        %v5752 = vunpack.c.h.b16 %v1702
        %v5753 = vunpack.c.l.b16 %v1703
        %v5754 = vunpack.c.h.b16 %v1703
        %v5755 = vunpack.c.l.b16 %v1704
        %v5756 = vunpack.c.h.b16 %v1704
        %v5757 = vunpack.c.l.b16 %v1705
        %v5758 = vunpack.c.h.b16 %v1705
        %v5759 = vunpack.c.l.b16 %v1706
        %v5760 = vunpack.c.h.b16 %v1706
        %v5761 = vunpack.c.l.b16 %v1707
        %v5762 = vunpack.c.h.b16 %v1707
        %v5763 = vunpack.c.l.b16 %v1708
        %v5764 = vunpack.c.h.b16 %v1708
        %v5765 = vunpack.c.l.b16 %v1709
        %v5766 = vunpack.c.h.b16 %v1709
        %v5767 = vunpack.c.l.b16 %v1710
        %v5768 = vunpack.c.h.b16 %v1710
        %v5769 = vunpack.c.l.b16 %v1711
        %v5770 = vunpack.c.h.b16 %v1711
        %v5771 = vunpack.c.l.b16 %v1712
        %v5772 = vunpack.c.h.b16 %v1712
        %v5773 = vunpack.c.l.b16 %v1713
        %v5774 = vunpack.c.h.b16 %v1713
        %v5775 = vunpack.c.l.b16 %v1714
        %v5776 = vunpack.c.h.b16 %v1714
        %v5777 = vunpack.c.l.b16 %v1715
        %v5778 = vunpack.c.h.b16 %v1715
        %v5779 = vunpack.c.l.b16 %v1716
        %v5780 = vunpack.c.h.b16 %v1716
        %v5781 = vunpack.c.l.b16 %v1717
        %v5782 = vunpack.c.h.b16 %v1717
        %v5783 = vunpack.c.l.b16 %v1718
        %v5784 = vunpack.c.h.b16 %v1718
        %v5785 = vunpack.c.l.b16 %v1719
        %v5786 = vunpack.c.h.b16 %v1719
        %v5787 = vunpack.c.l.b16 %v1720
        %v5788 = vunpack.c.h.b16 %v1720
        %v5789 = vunpack.c.l.b16 %v1721
        %v5790 = vunpack.c.h.b16 %v1721
        %v5791 = vunpack.c.l.b16 %v1722
        %v5792 = vunpack.c.h.b16 %v1722
        %v5793 = vunpack.c.l.b16 %v1723
        %v5794 = vunpack.c.h.b16 %v1723
        %v5795 = vunpack.c.l.b16 %v1724
        %v5796 = vunpack.c.h.b16 %v1724
        %v5797 = vunpack.c.l.b16 %v1725
        %v5798 = vunpack.c.h.b16 %v1725
        %v5799 = vunpack.c.l.b16 %v1726
        %v5800 = vunpack.c.h.b16 %v1726
        %v5801 = vunpack.c.l.b16 %v1727
        %v5802 = vunpack.c.h.b16 %v1727
        %v5803 = vunpack.c.l.b16 %v1728
        %v5804 = vunpack.c.h.b16 %v1728
        %v5805 = vunpack.c.l.b16 %v1729
        %v5806 = vunpack.c.h.b16 %v1729
        %v5807 = vunpack.c.l.b16 %v1730
        %v5808 = vunpack.c.h.b16 %v1730
        %v5809 = vunpack.c.l.b16 %v1731
        %v5810 = vunpack.c.h.b16 %v1731
        %v5811 = vunpack.c.l.b16 %v1732
        %v5812 = vunpack.c.h.b16 %v1732
        %v5813 = vunpack.c.l.b16 %v1733
        %v5814 = vunpack.c.h.b16 %v1733
        %v5815 = vunpack.c.l.b16 %v1734
        %v5816 = vunpack.c.h.b16 %v1734
        %v5817 = vunpack.c.l.b16 %v1735
        %v5818 = vunpack.c.h.b16 %v1735
        %v5819 = vunpack.c.l.b16 %v1736
        %v5820 = vunpack.c.h.b16 %v1736
        %v5821 = vunpack.c.l.b16 %v1737
        %v5822 = vunpack.c.h.b16 %v1737
        %v5823 = vunpack.c.l.b16 %v1738
        %v5824 = vunpack.c.h.b16 %v1738
        %v5825 = vunpack.c.l.b16 %v1739
        %v5826 = vunpack.c.h.b16 %v1739
        %v5827 = vunpack.c.l.b16 %v1740
        %v5828 = vunpack.c.h.b16 %v1740
        %v5829 = vunpack.c.l.b16 %v1741
        %v5830 = vunpack.c.h.b16 %v1741
        %v5831 = vunpack.c.l.b16 %v1742
        %v5832 = vunpack.c.h.b16 %v1742
        %v5833 = vunpack.c.l.b16 %v1743
        %v5834 = vunpack.c.h.b16 %v1743
        %v5835 = vunpack.c.l.b16 %v1744
        %v5836 = vunpack.c.h.b16 %v1744
        %v5837 = vunpack.c.l.b16 %v1745
        %v5838 = vunpack.c.h.b16 %v1745
        %v5839 = vunpack.c.l.b16 %v1746
        %v5840 = vunpack.c.h.b16 %v1746
        %v5841 = vunpack.c.l.b16 %v1747
        %v5842 = vunpack.c.h.b16 %v1747
        %v5843 = vunpack.c.l.b16 %v1748
        %v5844 = vunpack.c.h.b16 %v1748
        %v5845 = vunpack.c.l.b16 %v1749
        %v5846 = vunpack.c.h.b16 %v1749
        %v5847 = vunpack.c.l.b16 %v1750
        %v5848 = vunpack.c.h.b16 %v1750
        %v5849 = vunpack.c.l.b16 %v1751
        %v5850 = vunpack.c.h.b16 %v1751
        %v5851 = vunpack.c.l.b16 %v1752
        %v5852 = vunpack.c.h.b16 %v1752
        %v5853 = vunpack.c.l.b16 %v1753
        %v5854 = vunpack.c.h.b16 %v1753
        %v5855 = vunpack.c.l.b16 %v1754
        %v5856 = vunpack.c.h.b16 %v1754
        %v5857 = vunpack.c.l.b16 %v1755
        %v5858 = vunpack.c.h.b16 %v1755
        %v5859 = vunpack.c.l.b16 %v1756
        %v5860 = vunpack.c.h.b16 %v1756
        %v5861 = vunpack.c.l.b16 %v1757
        %v5862 = vunpack.c.h.b16 %v1757
        %v5863 = vunpack.c.l.b16 %v1758
        %v5864 = vunpack.c.h.b16 %v1758
        %v5865 = vunpack.c.l.b16 %v1759
        %v5866 = vunpack.c.h.b16 %v1759
        %v5867 = vunpack.c.l.b16 %v1760
        %v5868 = vunpack.c.h.b16 %v1760
        %v5869 = vunpack.c.l.b16 %v1761
        %v5870 = vunpack.c.h.b16 %v1761
        %v5871 = vunpack.c.l.b16 %v1762
        %v5872 = vunpack.c.h.b16 %v1762
        %v5873 = vunpack.c.l.b16 %v1763
        %v5874 = vunpack.c.h.b16 %v1763
        %v5875 = vunpack.c.l.b16 %v1764
        %v5876 = vunpack.c.h.b16 %v1764
        %v5877 = vunpack.c.l.b16 %v1765
        %v5878 = vunpack.c.h.b16 %v1765
        %v5879 = vunpack.c.l.b16 %v1766
        %v5880 = vunpack.c.h.b16 %v1766
        %v5881 = vunpack.c.l.b16 %v1767
        %v5882 = vunpack.c.h.b16 %v1767
        %v5883 = vunpack.c.l.b16 %v1768
        %v5884 = vunpack.c.h.b16 %v1768
        %v5885 = vunpack.c.l.b16 %v1769
        %v5886 = vunpack.c.h.b16 %v1769
        %v5887 = vunpack.c.l.b16 %v1770
        %v5888 = vunpack.c.h.b16 %v1770
        %v5889 = vunpack.c.l.b16 %v1771
        %v5890 = vunpack.c.h.b16 %v1771
        %v5891 = vunpack.c.l.b16 %v1772
        %v5892 = vunpack.c.h.b16 %v1772
        %v5893 = vunpack.c.l.b16 %v1773
        %v5894 = vunpack.c.h.b16 %v1773
        %v5895 = vunpack.c.l.b16 %v1774
        %v5896 = vunpack.c.h.b16 %v1774
        %v5897 = vunpack.c.l.b16 %v1775
        %v5898 = vunpack.c.h.b16 %v1775
        %v5899 = vunpack.c.l.b16 %v1776
        %v5900 = vunpack.c.h.b16 %v1776
        %v5901 = vunpack.c.l.b16 %v1777
        %v5902 = vunpack.c.h.b16 %v1777
        %v5903 = vunpack.c.l.b16 %v1778
        %v5904 = vunpack.c.h.b16 %v1778
        %v5905 = vunpack.c.l.b16 %v1779
        %v5906 = vunpack.c.h.b16 %v1779
        %v5907 = vunpack.c.l.b16 %v1780
        %v5908 = vunpack.c.h.b16 %v1780
        %v5909 = vunpack.c.l.b16 %v1781
        %v5910 = vunpack.c.h.b16 %v1781
        %v5911 = vunpack.c.l.b16 %v1782
        %v5912 = vunpack.c.h.b16 %v1782
        %v5913 = vunpack.c.l.b16 %v1783
        %v5914 = vunpack.c.h.b16 %v1783
        %v5915 = vunpack.c.l.b16 %v1784
        %v5916 = vunpack.c.h.b16 %v1784
        %v5917 = vunpack.c.l.b16 %v1785
        %v5918 = vunpack.c.h.b16 %v1785
        %v5919 = vunpack.c.l.b16 %v1786
        %v5920 = vunpack.c.h.b16 %v1786
        %v5921 = vunpack.c.l.b16 %v1787
        %v5922 = vunpack.c.h.b16 %v1787
        %v5923 = vunpack.c.l.b16 %v1788
        %v5924 = vunpack.c.h.b16 %v1788
        %v5925 = vunpack.c.l.b16 %v1789
        %v5926 = vunpack.c.h.b16 %v1789
        %v5927 = vunpack.c.l.b16 %v1790
        %v5928 = vunpack.c.h.b16 %v1790
        %v5929 = vunpack.c.l.b16 %v1791
        %v5930 = vunpack.c.h.b16 %v1791
        %v5931 = vunpack.c.l.b16 %v1792
        %v5932 = vunpack.c.h.b16 %v1792
        %v5933 = vunpack.c.l.b16 %v1793
        %v5934 = vunpack.c.h.b16 %v1793
        %v5935 = vunpack.c.l.b16 %v1794
        %v5936 = vunpack.c.h.b16 %v1794
        %v5937 = vunpack.c.l.b16 %v1795
        %v5938 = vunpack.c.h.b16 %v1795
        %v5939 = vunpack.c.l.b16 %v1796
        %v5940 = vunpack.c.h.b16 %v1796
        %v5941 = vunpack.c.l.b16 %v1797
        %v5942 = vunpack.c.h.b16 %v1797
        %v5943 = vunpack.c.l.b16 %v1798
        %v5944 = vunpack.c.h.b16 %v1798
        %v5945 = vunpack.c.l.b16 %v1799
        %v5946 = vunpack.c.h.b16 %v1799
        %v5947 = vunpack.c.l.b16 %v1800
        %v5948 = vunpack.c.h.b16 %v1800
        %v5949 = vunpack.c.l.b16 %v1801
        %v5950 = vunpack.c.h.b16 %v1801
        %v5951 = vunpack.c.l.b16 %v1802
        %v5952 = vunpack.c.h.b16 %v1802
        %v5953 = vunpack.c.l.b16 %v1803
        %v5954 = vunpack.c.h.b16 %v1803
        %v5955 = vunpack.c.l.b16 %v1804
        %v5956 = vunpack.c.h.b16 %v1804
        %v5957 = vunpack.c.l.b16 %v1805
        %v5958 = vunpack.c.h.b16 %v1805
        %v5959 = vunpack.c.l.b16 %v1806
        %v5960 = vunpack.c.h.b16 %v1806
        %v5961 = vunpack.c.l.b16 %v1807
        %v5962 = vunpack.c.h.b16 %v1807
        %v5963 = vunpack.c.l.b16 %v1808
        %v5964 = vunpack.c.h.b16 %v1808
        %v5965 = vunpack.c.l.b16 %v1809
        %v5966 = vunpack.c.h.b16 %v1809
        %v5967 = vunpack.c.l.b16 %v1810
        %v5968 = vunpack.c.h.b16 %v1810
        %v5969 = vunpack.c.l.b16 %v1811
        %v5970 = vunpack.c.h.b16 %v1811
        %v5971 = vunpack.c.l.b16 %v1812
        %v5972 = vunpack.c.h.b16 %v1812
        %v5973 = vunpack.c.l.b16 %v1813
        %v5974 = vunpack.c.h.b16 %v1813
        %v5975 = vunpack.c.l.b16 %v1814
        %v5976 = vunpack.c.h.b16 %v1814
        %v5977 = vunpack.c.l.b16 %v1815
        %v5978 = vunpack.c.h.b16 %v1815
        %v5979 = vunpack.c.l.b16 %v1816
        %v5980 = vunpack.c.h.b16 %v1816
        %v5981 = vunpack.c.l.b16 %v1817
        %v5982 = vunpack.c.h.b16 %v1817
        %v5983 = vunpack.c.l.b16 %v1818
        %v5984 = vunpack.c.h.b16 %v1818
        %v5985 = vunpack.c.l.b16 %v1819
        %v5986 = vunpack.c.h.b16 %v1819
        %v5987 = vunpack.c.l.b16 %v1820
        %v5988 = vunpack.c.h.b16 %v1820
        %v5989 = vunpack.c.l.b16 %v1821
        %v5990 = vunpack.c.h.b16 %v1821
        %v5991 = vunpack.c.l.b16 %v1822
        %v5992 = vunpack.c.h.b16 %v1822
        %v5993 = vunpack.c.l.b16 %v1823
        %v5994 = vunpack.c.h.b16 %v1823
        %v5995 = vunpack.c.l.b16 %v1824
        %v5996 = vunpack.c.h.b16 %v1824
        %v5997 = vunpack.c.l.b16 %v1825
        %v5998 = vunpack.c.h.b16 %v1825
        %v5999 = vunpack.c.l.b16 %v1826
        %v6000 = vunpack.c.h.b16 %v1826
        %v6001 = vunpack.c.l.b16 %v1827
        %v6002 = vunpack.c.h.b16 %v1827
        %v6003 = vunpack.c.l.b16 %v1828
        %v6004 = vunpack.c.h.b16 %v1828
        %v6005 = vunpack.c.l.b16 %v1829
        %v6006 = vunpack.c.h.b16 %v1829
        %v6007 = vunpack.c.l.b16 %v1830
        %v6008 = vunpack.c.h.b16 %v1830
        %v6009 = vunpack.c.l.b16 %v1831
        %v6010 = vunpack.c.h.b16 %v1831
        %v6011 = vunpack.c.l.b16 %v1832
        %v6012 = vunpack.c.h.b16 %v1832
        %v6013 = vunpack.c.l.b16 %v1833
        %v6014 = vunpack.c.h.b16 %v1833
        %v6015 = vunpack.c.l.b16 %v1834
        %v6016 = vunpack.c.h.b16 %v1834
        %v6017 = vunpack.c.l.b16 %v1835
        %v6018 = vunpack.c.h.b16 %v1835
        %v6019 = vunpack.c.l.b16 %v1836
        %v6020 = vunpack.c.h.b16 %v1836
        %v6021 = vunpack.c.l.b16 %v1837
        %v6022 = vunpack.c.h.b16 %v1837
        %v6023 = vunpack.c.l.b16 %v1838
        %v6024 = vunpack.c.h.b16 %v1838
        %v6025 = vunpack.c.l.b16 %v1839
        %v6026 = vunpack.c.h.b16 %v1839
        %v6027 = vunpack.c.l.b16 %v1840
        %v6028 = vunpack.c.h.b16 %v1840
        %v6029 = vunpack.c.l.b16 %v1841
        %v6030 = vunpack.c.h.b16 %v1841
        %v6031 = vunpack.c.l.b16 %v1842
        %v6032 = vunpack.c.h.b16 %v1842
        %v6033 = vunpack.c.l.b16 %v1843
        %v6034 = vunpack.c.h.b16 %v1843
        %v6035 = vunpack.c.l.b16 %v1844
        %v6036 = vunpack.c.h.b16 %v1844
        %v6037 = vunpack.c.l.b16 %v1845
        %v6038 = vunpack.c.h.b16 %v1845
        %v6039 = vunpack.c.l.b16 %v1846
        %v6040 = vunpack.c.h.b16 %v1846
        %v6041 = vunpack.c.l.b16 %v1847
        %v6042 = vunpack.c.h.b16 %v1847
        %v6043 = vunpack.c.l.b16 %v1848
        %v6044 = vunpack.c.h.b16 %v1848
        %v6045 = vunpack.c.l.b16 %v1849
        %v6046 = vunpack.c.h.b16 %v1849
        %v6047 = vunpack.c.l.b16 %v1850
        %v6048 = vunpack.c.h.b16 %v1850
        %v6049 = vunpack.c.l.b16 %v1851
        %v6050 = vunpack.c.h.b16 %v1851
        %v6051 = vunpack.c.l.b16 %v1852
        %v6052 = vunpack.c.h.b16 %v1852
        %v6053 = vunpack.c.l.b16 %v1853
        %v6054 = vunpack.c.h.b16 %v1853
        %v6055 = vunpack.c.l.b16 %v1854
        %v6056 = vunpack.c.h.b16 %v1854
        %v6057 = vunpack.c.l.b16 %v1855
        %v6058 = vunpack.c.h.b16 %v1855
        %v6059 = vunpack.c.l.b16 %v1856
        %v6060 = vunpack.c.h.b16 %v1856
        %v6061 = vunpack.c.l.b16 %v1857
        %v6062 = vunpack.c.h.b16 %v1857
        %v6063 = vunpack.c.l.b16 %v1858
        %v6064 = vunpack.c.h.b16 %v1858
        %v6065 = vunpack.c.l.b16 %v1859
        %v6066 = vunpack.c.h.b16 %v1859
        %v6067 = vunpack.c.l.b16 %v1860
        %v6068 = vunpack.c.h.b16 %v1860
        %v6069 = vunpack.c.l.b16 %v1861
        %v6070 = vunpack.c.h.b16 %v1861
        %v6071 = vunpack.c.l.b16 %v1862
        %v6072 = vunpack.c.h.b16 %v1862
        %v6073 = vunpack.c.l.b16 %v1863
        %v6074 = vunpack.c.h.b16 %v1863
        %v6075 = vunpack.c.l.b16 %v1864
        %v6076 = vunpack.c.h.b16 %v1864
        %v6077 = vunpack.c.l.b16 %v1865
        %v6078 = vunpack.c.h.b16 %v1865
        %v6079 = vunpack.c.l.b16 %v1866
        %v6080 = vunpack.c.h.b16 %v1866
        %v6081 = vunpack.c.l.b16 %v1867
        %v6082 = vunpack.c.h.b16 %v1867
        %v6083 = vunpack.c.l.b16 %v1868
        %v6084 = vunpack.c.h.b16 %v1868
        %v6085 = vunpack.c.l.b16 %v1869
        %v6086 = vunpack.c.h.b16 %v1869
        %v6087 = vunpack.c.l.b16 %v1870
        %v6088 = vunpack.c.h.b16 %v1870
        %v6089 = vunpack.c.l.b16 %v1871
        %v6090 = vunpack.c.h.b16 %v1871
        %v6091 = vunpack.c.l.b16 %v1872
        %v6092 = vunpack.c.h.b16 %v1872
        %v6093 = vunpack.c.l.b16 %v1873
        %v6094 = vunpack.c.h.b16 %v1873
        %v6095 = vunpack.c.l.b16 %v1874
        %v6096 = vunpack.c.h.b16 %v1874
        %v6097 = vunpack.c.l.b16 %v1875
        %v6098 = vunpack.c.h.b16 %v1875
        %v6099 = vunpack.c.l.b16 %v1876
        %v6100 = vunpack.c.h.b16 %v1876
        %v6101 = vunpack.c.l.b16 %v1877
        %v6102 = vunpack.c.h.b16 %v1877
        %v6103 = vunpack.c.l.b16 %v1878
        %v6104 = vunpack.c.h.b16 %v1878
        %v6105 = vunpack.c.l.b16 %v1879
        %v6106 = vunpack.c.h.b16 %v1879
        %v6107 = vunpack.c.l.b16 %v1880
        %v6108 = vunpack.c.h.b16 %v1880
        %v6109 = vunpack.c.l.b16 %v1881
        %v6110 = vunpack.c.h.b16 %v1881
        %v6111 = vunpack.c.l.b16 %v1882
        %v6112 = vunpack.c.h.b16 %v1882
        %v6113 = vunpack.c.l.b16 %v1883
        %v6114 = vunpack.c.h.b16 %v1883
        %v6115 = vunpack.c.l.b16 %v1884
        %v6116 = vunpack.c.h.b16 %v1884
        %v6117 = vunpack.c.l.b16 %v1885
        %v6118 = vunpack.c.h.b16 %v1885
        %v6119 = vunpack.c.l.b16 %v1886
        %v6120 = vunpack.c.h.b16 %v1886
        %v6121 = vunpack.c.l.b16 %v1887
        %v6122 = vunpack.c.h.b16 %v1887
        %v6123 = vunpack.c.l.b16 %v1888
        %v6124 = vunpack.c.h.b16 %v1888
        %v6125 = vunpack.c.l.b16 %v1889
        %v6126 = vunpack.c.h.b16 %v1889
        %v6127 = vunpack.c.l.b16 %v1890
        %v6128 = vunpack.c.h.b16 %v1890
        %v6129 = vunpack.c.l.b16 %v1891
        %v6130 = vunpack.c.h.b16 %v1891
        %v6131 = vunpack.c.l.b16 %v1892
        %v6132 = vunpack.c.h.b16 %v1892
        %v6133 = vunpack.c.l.b16 %v1893
        %v6134 = vunpack.c.h.b16 %v1893
        %v6135 = vunpack.c.l.b16 %v1894
        %v6136 = vunpack.c.h.b16 %v1894
        %v6137 = vunpack.c.l.b16 %v1895
        %v6138 = vunpack.c.h.b16 %v1895
        %v6139 = vunpack.c.l.b16 %v1896
        %v6140 = vunpack.c.h.b16 %v1896
        %v6141 = vunpack.c.l.b16 %v1897
        %v6142 = vunpack.c.h.b16 %v1897
        %v6143 = vunpack.c.l.b16 %v1898
        %v6144 = vunpack.c.h.b16 %v1898
        %v6145 = vunpack.c.l.b16 %v1899
        %v6146 = vunpack.c.h.b16 %v1899
        %v6147 = vunpack.c.l.b16 %v1900
        %v6148 = vunpack.c.h.b16 %v1900
        %v6149 = vunpack.c.l.b16 %v1901
        %v6150 = vunpack.c.h.b16 %v1901
        %v6151 = vunpack.c.l.b16 %v1902
        %v6152 = vunpack.c.h.b16 %v1902
        %v6153 = vunpack.c.l.b16 %v1903
        %v6154 = vunpack.c.h.b16 %v1903
        %v6155 = vunpack.c.l.b16 %v1904
        %v6156 = vunpack.c.h.b16 %v1904
        %v6157 = vunpack.c.l.b16 %v1905
        %v6158 = vunpack.c.h.b16 %v1905
        %v6159 = vunpack.c.l.b16 %v1906
        %v6160 = vunpack.c.h.b16 %v1906
        %v6161 = vunpack.c.l.b16 %v1907
        %v6162 = vunpack.c.h.b16 %v1907
        %v6163 = vunpack.c.l.b16 %v1908
        %v6164 = vunpack.c.h.b16 %v1908
        %v6165 = vunpack.c.l.b16 %v1909
        %v6166 = vunpack.c.h.b16 %v1909
        %v6167 = vunpack.c.l.b16 %v1910
        %v6168 = vunpack.c.h.b16 %v1910
        %v6169 = vunpack.c.l.b16 %v1911
        %v6170 = vunpack.c.h.b16 %v1911
        %v6171 = vunpack.c.l.b16 %v1912
        %v6172 = vunpack.c.h.b16 %v1912
        %v6173 = vunpack.c.l.b16 %v1913
        %v6174 = vunpack.c.h.b16 %v1913
        %v6175 = vunpack.c.l.b16 %v1914
        %v6176 = vunpack.c.h.b16 %v1914
        %v6177 = vunpack.c.l.b16 %v1915
        %v6178 = vunpack.c.h.b16 %v1915
        %v6179 = vunpack.c.l.b16 %v1916
        %v6180 = vunpack.c.h.b16 %v1916
        %v6181 = vunpack.c.l.b16 %v1917
        %v6182 = vunpack.c.h.b16 %v1917
        %v6183 = vunpack.c.l.b16 %v1918
        %v6184 = vunpack.c.h.b16 %v1918
        %v6185 = vunpack.c.l.b16 %v1919
        %v6186 = vunpack.c.h.b16 %v1919
        %v6187 = vunpack.c.l.b16 %v1920
        %v6188 = vunpack.c.h.b16 %v1920
        %v6189 = vunpack.c.l.b16 %v1921
        %v6190 = vunpack.c.h.b16 %v1921
        %v6191 = vunpack.c.l.b16 %v1922
        %v6192 = vunpack.c.h.b16 %v1922
        %v6193 = vunpack.c.l.b16 %v1923
        %v6194 = vunpack.c.h.b16 %v1923
        %v6195 = vunpack.c.l.b16 %v1924
        %v6196 = vunpack.c.h.b16 %v1924
        %v6197 = vunpack.c.l.b16 %v1925
        %v6198 = vunpack.c.h.b16 %v1925
        %v6199 = vunpack.c.l.b16 %v1926
        %v6200 = vunpack.c.h.b16 %v1926
        %v6201 = vunpack.c.l.b16 %v1927
        %v6202 = vunpack.c.h.b16 %v1927
        %v6203 = vunpack.c.l.b16 %v1928
        %v6204 = vunpack.c.h.b16 %v1928
        %v6205 = vunpack.c.l.b16 %v1929
        %v6206 = vunpack.c.h.b16 %v1929
        %v6207 = vunpack.c.l.b16 %v1930
        %v6208 = vunpack.c.h.b16 %v1930
        %v6209 = vunpack.c.l.b16 %v1931
        %v6210 = vunpack.c.h.b16 %v1931
        %v6211 = vunpack.c.l.b16 %v1932
        %v6212 = vunpack.c.h.b16 %v1932
        %v6213 = vunpack.c.l.b16 %v1933
        %v6214 = vunpack.c.h.b16 %v1933
        %v6215 = vunpack.c.l.b16 %v1934
        %v6216 = vunpack.c.h.b16 %v1934
        %v6217 = vunpack.c.l.b16 %v1935
        %v6218 = vunpack.c.h.b16 %v1935
        %v6219 = vunpack.c.l.b16 %v1936
        %v6220 = vunpack.c.h.b16 %v1936
        %v6221 = vunpack.c.l.b16 %v1937
        %v6222 = vunpack.c.h.b16 %v1937
        %v6223 = vunpack.c.l.b16 %v1938
        %v6224 = vunpack.c.h.b16 %v1938
        %v6225 = vunpack.c.l.b16 %v1939
        %v6226 = vunpack.c.h.b16 %v1939
        %v6227 = vunpack.c.l.b16 %v1940
        %v6228 = vunpack.c.h.b16 %v1940
        %v6229 = vunpack.c.l.b16 %v1941
        %v6230 = vunpack.c.h.b16 %v1941
        %v6231 = vunpack.c.l.b16 %v1942
        %v6232 = vunpack.c.h.b16 %v1942
        %v6233 = vunpack.c.l.b16 %v1943
        %v6234 = vunpack.c.h.b16 %v1943
        %v6235 = vunpack.c.l.b16 %v1944
        %v6236 = vunpack.c.h.b16 %v1944
        %v6237 = vunpack.c.l.b16 %v1945
        %v6238 = vunpack.c.h.b16 %v1945
        %v6239 = vunpack.c.l.b16 %v1946
        %v6240 = vunpack.c.h.b16 %v1946
        %v6241 = vunpack.c.l.b16 %v1947
        %v6242 = vunpack.c.h.b16 %v1947
        %v6243 = vunpack.c.l.b16 %v1948
        %v6244 = vunpack.c.h.b16 %v1948
        %v6245 = vunpack.c.l.b16 %v1949
        %v6246 = vunpack.c.h.b16 %v1949
        %v6247 = vunpack.c.l.b16 %v1950
        %v6248 = vunpack.c.h.b16 %v1950
        %v6249 = vunpack.c.l.b16 %v1951
        %v6250 = vunpack.c.h.b16 %v1951
        %v6251 = vunpack.c.l.b16 %v1952
        %v6252 = vunpack.c.h.b16 %v1952
        %v6253 = vunpack.c.l.b16 %v1953
        %v6254 = vunpack.c.h.b16 %v1953
        %v6255 = vunpack.c.l.b16 %v1954
        %v6256 = vunpack.c.h.b16 %v1954
        %v6257 = vunpack.c.l.b16 %v1955
        %v6258 = vunpack.c.h.b16 %v1955
        %v6259 = vunpack.c.l.b16 %v1956
        %v6260 = vunpack.c.h.b16 %v1956
        %v6261 = vunpack.c.l.b16 %v1957
        %v6262 = vunpack.c.h.b16 %v1957
        %v6263 = vunpack.c.l.b16 %v1958
        %v6264 = vunpack.c.h.b16 %v1958
        %v6265 = vunpack.c.l.b16 %v1959
        %v6266 = vunpack.c.h.b16 %v1959
        %v6267 = vunpack.c.l.b16 %v1960
        %v6268 = vunpack.c.h.b16 %v1960
        %v6269 = vunpack.c.l.b16 %v1961
        %v6270 = vunpack.c.h.b16 %v1961
        %v6271 = vunpack.c.l.b16 %v1962
        %v6272 = vunpack.c.h.b16 %v1962
        %v6273 = vunpack.c.l.b16 %v1963
        %v6274 = vunpack.c.h.b16 %v1963
        %v6275 = vunpack.c.l.b16 %v1964
        %v6276 = vunpack.c.h.b16 %v1964
        %v6277 = vunpack.c.l.b16 %v1965
        %v6278 = vunpack.c.h.b16 %v1965
        %v6279 = vunpack.c.l.b16 %v1966
        %v6280 = vunpack.c.h.b16 %v1966
        %v6281 = vunpack.c.l.b16 %v1967
        %v6282 = vunpack.c.h.b16 %v1967
        %v6283 = vunpack.c.l.b16 %v1968
        %v6284 = vunpack.c.h.b16 %v1968
        %v6285 = vunpack.c.l.b16 %v1969
        %v6286 = vunpack.c.h.b16 %v1969
        %v6287 = vunpack.c.l.b16 %v1970
        %v6288 = vunpack.c.h.b16 %v1970
        %v6289 = vunpack.c.l.b16 %v1971
        %v6290 = vunpack.c.h.b16 %v1971
        %v6291 = vunpack.c.l.b16 %v1972
        %v6292 = vunpack.c.h.b16 %v1972
        %v6293 = vunpack.c.l.b16 %v1973
        %v6294 = vunpack.c.h.b16 %v1973
        %v6295 = vunpack.c.l.b16 %v1974
        %v6296 = vunpack.c.h.b16 %v1974
        %v6297 = vunpack.c.l.b16 %v1975
        %v6298 = vunpack.c.h.b16 %v1975
        %v6299 = vunpack.c.l.b16 %v1976
        %v6300 = vunpack.c.h.b16 %v1976
        %v6301 = vunpack.c.l.b16 %v1977
        %v6302 = vunpack.c.h.b16 %v1977
        %v6303 = vunpack.c.l.b16 %v1978
        %v6304 = vunpack.c.h.b16 %v1978
        %v6305 = vunpack.c.l.b16 %v1979
        %v6306 = vunpack.c.h.b16 %v1979
        %v6307 = vunpack.c.l.b16 %v1980
        %v6308 = vunpack.c.h.b16 %v1980
        %v6309 = vunpack.c.l.b16 %v1981
        %v6310 = vunpack.c.h.b16 %v1981
        %v6311 = vunpack.c.l.b16 %v1982
        %v6312 = vunpack.c.h.b16 %v1982
        %v6313 = vunpack.c.l.b16 %v1983
        %v6314 = vunpack.c.h.b16 %v1983
        %v6315 = vunpack.c.l.b16 %v1984
        %v6316 = vunpack.c.h.b16 %v1984
        %v6317 = vunpack.c.l.b16 %v1985
        %v6318 = vunpack.c.h.b16 %v1985
        %v6319 = vunpack.c.l.b16 %v1986
        %v6320 = vunpack.c.h.b16 %v1986
        %v6321 = vunpack.c.l.b16 %v1987
        %v6322 = vunpack.c.h.b16 %v1987
        %v6323 = vunpack.c.l.b16 %v1988
        %v6324 = vunpack.c.h.b16 %v1988
        %v6325 = vunpack.c.l.b16 %v1989
        %v6326 = vunpack.c.h.b16 %v1989
        %v6327 = vunpack.c.l.b16 %v1990
        %v6328 = vunpack.c.h.b16 %v1990
        %v6329 = vunpack.c.l.b16 %v1991
        %v6330 = vunpack.c.h.b16 %v1991
        %v6331 = vunpack.c.l.b16 %v1992
        %v6332 = vunpack.c.h.b16 %v1992
        %v6333 = vunpack.c.l.b16 %v1993
        %v6334 = vunpack.c.h.b16 %v1993
        %v6335 = vunpack.c.l.b16 %v1994
        %v6336 = vunpack.c.h.b16 %v1994
        %v6337 = vunpack.c.l.b16 %v1995
        %v6338 = vunpack.c.h.b16 %v1995
        %v6339 = vunpack.c.l.b16 %v1996
        %v6340 = vunpack.c.h.b16 %v1996
        %v6341 = vunpack.c.l.b16 %v1997
        %v6342 = vunpack.c.h.b16 %v1997
        %v6343 = vunpack.c.l.b16 %v1998
        %v6344 = vunpack.c.h.b16 %v1998
        %v6345 = vunpack.c.l.b16 %v1999
        %v6346 = vunpack.c.h.b16 %v1999
        %v6347 = vunpack.c.l.b16 %v2000
        %v6348 = vunpack.c.h.b16 %v2000
        %v6349 = vunpack.c.l.b16 %v2001
        %v6350 = vunpack.c.h.b16 %v2001
        %v6351 = vunpack.c.l.b16 %v2002
        %v6352 = vunpack.c.h.b16 %v2002
        %v6353 = vunpack.c.l.b16 %v2003
        %v6354 = vunpack.c.h.b16 %v2003
        %v6355 = vunpack.c.l.b16 %v2004
        %v6356 = vunpack.c.h.b16 %v2004
        %v6357 = vunpack.c.l.b16 %v2005
        %v6358 = vunpack.c.h.b16 %v2005
        %v6359 = vunpack.c.l.b16 %v2006
        %v6360 = vunpack.c.h.b16 %v2006
        %v6361 = vunpack.c.l.b16 %v2007
        %v6362 = vunpack.c.h.b16 %v2007
        %v6363 = vunpack.c.l.b16 %v2008
        %v6364 = vunpack.c.h.b16 %v2008
        %v6365 = vunpack.c.l.b16 %v2009
        %v6366 = vunpack.c.h.b16 %v2009
        %v6367 = vunpack.c.l.b16 %v2010
        %v6368 = vunpack.c.h.b16 %v2010
        %v6369 = vunpack.c.l.b16 %v2011
        %v6370 = vunpack.c.h.b16 %v2011
        %v6371 = vunpack.c.l.b16 %v2012
        %v6372 = vunpack.c.h.b16 %v2012
        %v6373 = vunpack.c.l.b16 %v2013
        %v6374 = vunpack.c.h.b16 %v2013
        %v6375 = vunpack.c.l.b16 %v2014
        %v6376 = vunpack.c.h.b16 %v2014
        %v6377 = vunpack.c.l.b16 %v2015
        %v6378 = vunpack.c.h.b16 %v2015
        %v6379 = vunpack.c.l.b16 %v2016
        %v6380 = vunpack.c.h.b16 %v2016
        %v6381 = vunpack.c.l.b16 %v2017
        %v6382 = vunpack.c.h.b16 %v2017
        %v6383 = vunpack.c.l.b16 %v2018
        %v6384 = vunpack.c.h.b16 %v2018
        %v6385 = vunpack.c.l.b16 %v2019
        %v6386 = vunpack.c.h.b16 %v2019
        %v6387 = vunpack.c.l.b16 %v2020
        %v6388 = vunpack.c.h.b16 %v2020
        %v6389 = vunpack.c.l.b16 %v2021
        %v6390 = vunpack.c.h.b16 %v2021
        %v6391 = vunpack.c.l.b16 %v2022
        %v6392 = vunpack.c.h.b16 %v2022
        %v6393 = vunpack.c.l.b16 %v2023
        %v6394 = vunpack.c.h.b16 %v2023
        %v6395 = vunpack.c.l.b16 %v2024
        %v6396 = vunpack.c.h.b16 %v2024
        %v6397 = vunpack.c.l.b16 %v2025
        %v6398 = vunpack.c.h.b16 %v2025
        %v6399 = vunpack.c.l.b16 %v2026
        %v6400 = vunpack.c.h.b16 %v2026
        %v6401 = vunpack.c.l.b16 %v2027
        %v6402 = vunpack.c.h.b16 %v2027
        %v6403 = vunpack.c.l.b16 %v2028
        %v6404 = vunpack.c.h.b16 %v2028
        %v6405 = vunpack.c.l.b16 %v2029
        %v6406 = vunpack.c.h.b16 %v2029
        %v6407 = vunpack.c.l.b16 %v2030
        %v6408 = vunpack.c.h.b16 %v2030
        %v6409 = vunpack.c.l.b16 %v2031
        %v6410 = vunpack.c.h.b16 %v2031
        %v6411 = vunpack.c.l.b16 %v2032
        %v6412 = vunpack.c.h.b16 %v2032
        %v6413 = vunpack.c.l.b16 %v2033
        %v6414 = vunpack.c.h.b16 %v2033
        %v6415 = vunpack.c.l.b16 %v2034
        %v6416 = vunpack.c.h.b16 %v2034
        %v6417 = vunpack.c.l.b16 %v2035
        %v6418 = vunpack.c.h.b16 %v2035
        %v6419 = vunpack.c.l.b16 %v2036
        %v6420 = vunpack.c.h.b16 %v2036
        %v6421 = vunpack.c.l.b16 %v2037
        %v6422 = vunpack.c.h.b16 %v2037
        %v6423 = vunpack.c.l.b16 %v2038
        %v6424 = vunpack.c.h.b16 %v2038
        %v6425 = vunpack.c.l.b16 %v2039
        %v6426 = vunpack.c.h.b16 %v2039
        %v6427 = vunpack.c.l.b16 %v2040
        %v6428 = vunpack.c.h.b16 %v2040
        %v6429 = vunpack.c.l.b16 %v2041
        %v6430 = vunpack.c.h.b16 %v2041
        %v6431 = vunpack.c.l.b16 %v2042
        %v6432 = vunpack.c.h.b16 %v2042
        %v6433 = vunpack.c.l.b16 %v2043
        %v6434 = vunpack.c.h.b16 %v2043
        %v6435 = vunpack.c.l.b16 %v2044
        %v6436 = vunpack.c.h.b16 %v2044
        %v6437 = vunpack.c.l.b16 %v2045
        %v6438 = vunpack.c.h.b16 %v2045
        %v6439 = vunpack.c.l.b16 %v2046
        %v6440 = vunpack.c.h.b16 %v2046
        %v6441 = vunpack.c.l.b16 %v2047
        %v6442 = vunpack.c.h.b16 %v2047
        %v6443 = vunpack.c.l.b16 %v2048
        %v6444 = vunpack.c.h.b16 %v2048
        %v6445 = vunpack.c.l.b16 %v2049
        %v6446 = vunpack.c.h.b16 %v2049
        %v6447 = vunpack.c.l.b16 %v2050
        %v6448 = vunpack.c.h.b16 %v2050
        %v6449 = vunpack.c.l.b16 %v2051
        %v6450 = vunpack.c.h.b16 %v2051
        %v6451 = vunpack.c.l.b16 %v2052
        %v6452 = vunpack.c.h.b16 %v2052
        %v6453 = vunpack.c.l.b16 %v2053
        %v6454 = vunpack.c.h.b16 %v2053
        %v6455 = vunpack.c.l.b16 %v2054
        %v6456 = vunpack.c.h.b16 %v2054
        %v6457 = vunpack.c.l.b16 %v2055
        %v6458 = vunpack.c.h.b16 %v2055
        %v6459 = vunpack.c.l.b16 %v2056
        %v6460 = vunpack.c.h.b16 %v2056
        %v6461 = vunpack.c.l.b16 %v2057
        %v6462 = vunpack.c.h.b16 %v2057
        %v6463 = vunpack.c.l.b16 %v2058
        %v6464 = vunpack.c.h.b16 %v2058
        %v6465 = vunpack.c.l.b16 %v2059
        %v6466 = vunpack.c.h.b16 %v2059
        %v6467 = vunpack.c.l.b16 %v2060
        %v6468 = vunpack.c.h.b16 %v2060
        %v6469 = vunpack.c.l.b16 %v2061
        %v6470 = vunpack.c.h.b16 %v2061
        %v6471 = vunpack.c.l.b16 %v2062
        %v6472 = vunpack.c.h.b16 %v2062
        %v6473 = vunpack.c.l.b16 %v2063
        %v6474 = vunpack.c.h.b16 %v2063
        %v6475 = vunpack.c.l.b16 %v2064
        %v6476 = vunpack.c.h.b16 %v2064
        %v6477 = vunpack.c.l.b16 %v2065
        %v6478 = vunpack.c.h.b16 %v2065
        %v6479 = vunpack.c.l.b16 %v2066
        %v6480 = vunpack.c.h.b16 %v2066
        %v6481 = vunpack.c.l.b16 %v2067
        %v6482 = vunpack.c.h.b16 %v2067
        %v6483 = vunpack.c.l.b16 %v2068
        %v6484 = vunpack.c.h.b16 %v2068
        %v6485 = vunpack.c.l.b16 %v2069
        %v6486 = vunpack.c.h.b16 %v2069
        %v6487 = vunpack.c.l.b16 %v2070
        %v6488 = vunpack.c.h.b16 %v2070
        %v6489 = vunpack.c.l.b16 %v2071
        %v6490 = vunpack.c.h.b16 %v2071
        %v6491 = vunpack.c.l.b16 %v2072
        %v6492 = vunpack.c.h.b16 %v2072
        %v6493 = vunpack.c.l.b16 %v2073
        %v6494 = vunpack.c.h.b16 %v2073
        %v6495 = vunpack.c.l.b16 %v2074
        %v6496 = vunpack.c.h.b16 %v2074
        %v6497 = vunpack.c.l.b16 %v2075
        %v6498 = vunpack.c.h.b16 %v2075
        %v6499 = vunpack.c.l.b16 %v2076
        %v6500 = vunpack.c.h.b16 %v2076
        %v6501 = vunpack.c.l.b16 %v2077
        %v6502 = vunpack.c.h.b16 %v2077
        %v6503 = vunpack.c.l.b16 %v2078
        %v6504 = vunpack.c.h.b16 %v2078
        %v6505 = vunpack.c.l.b16 %v2079
        %v6506 = vunpack.c.h.b16 %v2079
        %v6507 = vunpack.c.l.b16 %v2080
        %v6508 = vunpack.c.h.b16 %v2080
        %v6509 = vunpack.c.l.b16 %v2081
        %v6510 = vunpack.c.h.b16 %v2081
        %v6511 = vunpack.c.l.b16 %v2082
        %v6512 = vunpack.c.h.b16 %v2082
        %v6513 = vunpack.c.l.b16 %v2083
        %v6514 = vunpack.c.h.b16 %v2083
        %v6515 = vunpack.c.l.b16 %v2084
        %v6516 = vunpack.c.h.b16 %v2084
        %v6517 = vunpack.c.l.b16 %v2085
        %v6518 = vunpack.c.h.b16 %v2085
        %v6519 = vunpack.c.l.b16 %v2086
        %v6520 = vunpack.c.h.b16 %v2086
        %v6521 = vunpack.c.l.b16 %v2087
        %v6522 = vunpack.c.h.b16 %v2087
        %v6523 = vunpack.c.l.b16 %v2088
        %v6524 = vunpack.c.h.b16 %v2088
        %v6525 = vunpack.c.l.b16 %v2089
        %v6526 = vunpack.c.h.b16 %v2089
        %v6527 = vunpack.c.l.b16 %v2090
        %v6528 = vunpack.c.h.b16 %v2090
        %v6529 = vunpack.c.l.b16 %v2091
        %v6530 = vunpack.c.h.b16 %v2091
        %v6531 = vunpack.c.l.b16 %v2092
        %v6532 = vunpack.c.h.b16 %v2092
        %v6533 = vunpack.c.l.b16 %v2093
        %v6534 = vunpack.c.h.b16 %v2093
        %v6535 = vunpack.c.l.b16 %v2094
        %v6536 = vunpack.c.h.b16 %v2094
        %v6537 = vunpack.c.l.b16 %v2095
        %v6538 = vunpack.c.h.b16 %v2095
        %v6539 = vunpack.c.l.b16 %v2096
        %v6540 = vunpack.c.h.b16 %v2096
        %v6541 = vunpack.c.l.b16 %v2097
        %v6542 = vunpack.c.h.b16 %v2097
        %v6543 = vunpack.c.l.b16 %v2098
        %v6544 = vunpack.c.h.b16 %v2098
        %v6545 = vunpack.c.l.b16 %v2099
        %v6546 = vunpack.c.h.b16 %v2099
        %v6547 = vunpack.c.l.b16 %v2100
        %v6548 = vunpack.c.h.b16 %v2100
        %v6549 = vunpack.c.l.b16 %v2101
        %v6550 = vunpack.c.h.b16 %v2101
        %v6551 = vunpack.c.l.b16 %v2102
        %v6552 = vunpack.c.h.b16 %v2102
        %v6553 = vunpack.c.l.b16 %v2103
        %v6554 = vunpack.c.h.b16 %v2103
        %v6555 = vunpack.c.l.b16 %v2104
        %v6556 = vunpack.c.h.b16 %v2104
        %v6557 = vunpack.c.l.b16 %v2105
        %v6558 = vunpack.c.h.b16 %v2105
        %v6559 = vunpack.c.l.b16 %v2106
        %v6560 = vunpack.c.h.b16 %v2106
        %v6561 = vunpack.c.l.b16 %v2107
        %v6562 = vunpack.c.h.b16 %v2107
        %v6563 = vunpack.c.l.b16 %v2108
        %v6564 = vunpack.c.h.b16 %v2108
        %v6565 = vunpack.c.l.b16 %v2109
        %v6566 = vunpack.c.h.b16 %v2109
        %v6567 = vunpack.c.l.b16 %v2110
        %v6568 = vunpack.c.h.b16 %v2110
        %v6569 = vunpack.c.l.b16 %v2111
        %v6570 = vunpack.c.h.b16 %v2111
        %v6571 = vunpack.c.l.b16 %v2112
        %v6572 = vunpack.c.h.b16 %v2112
        %v6573 = vunpack.c.l.b16 %v2113
        %v6574 = vunpack.c.h.b16 %v2113
        %v6575 = vunpack.c.l.b16 %v2114
        %v6576 = vunpack.c.h.b16 %v2114
        %v6577 = vunpack.c.l.b16 %v2115
        %v6578 = vunpack.c.h.b16 %v2115
        %v6579 = vunpack.c.l.b16 %v2116
        %v6580 = vunpack.c.h.b16 %v2116
        %v6581 = vunpack.c.l.b16 %v2117
        %v6582 = vunpack.c.h.b16 %v2117
        %v6583 = vunpack.c.l.b16 %v2118
        %v6584 = vunpack.c.h.b16 %v2118
        %v6585 = vunpack.c.l.b16 %v2119
        %v6586 = vunpack.c.h.b16 %v2119
        %v6587 = vunpack.c.l.b16 %v2120
        %v6588 = vunpack.c.h.b16 %v2120
        %v6589 = vunpack.c.l.b16 %v2121
        %v6590 = vunpack.c.h.b16 %v2121
        %v6591 = vunpack.c.l.b16 %v2122
        %v6592 = vunpack.c.h.b16 %v2122
        %v6593 = vunpack.c.l.b16 %v2123
        %v6594 = vunpack.c.h.b16 %v2123
        %v6595 = vunpack.c.l.b16 %v2124
        %v6596 = vunpack.c.h.b16 %v2124
        %v6597 = vunpack.c.l.b16 %v2125
        %v6598 = vunpack.c.h.b16 %v2125
        %v6599 = vunpack.c.l.b16 %v2126
        %v6600 = vunpack.c.h.b16 %v2126
        %v6601 = vunpack.c.l.b16 %v2127
        %v6602 = vunpack.c.h.b16 %v2127
        %v6603 = vunpack.c.l.b16 %v2128
        %v6604 = vunpack.c.h.b16 %v2128
        %v6605 = vunpack.c.l.b16 %v2129
        %v6606 = vunpack.c.h.b16 %v2129
        %v6607 = vunpack.c.l.b16 %v2130
        %v6608 = vunpack.c.h.b16 %v2130
        %v6609 = vunpack.c.l.b16 %v2131
        %v6610 = vunpack.c.h.b16 %v2131
        %v6611 = vunpack.c.l.b16 %v2132
        %v6612 = vunpack.c.h.b16 %v2132
        %v6613 = vunpack.c.l.b16 %v2133
        %v6614 = vunpack.c.h.b16 %v2133
        %v6615 = vunpack.c.l.b16 %v2134
        %v6616 = vunpack.c.h.b16 %v2134
        %v6617 = vunpack.c.l.b16 %v2135
        %v6618 = vunpack.c.h.b16 %v2135
        %v6619 = vunpack.c.l.b16 %v2136
        %v6620 = vunpack.c.h.b16 %v2136
        %v6621 = vunpack.c.l.b16 %v2137
        %v6622 = vunpack.c.h.b16 %v2137
        %v6623 = vunpack.c.l.b16 %v2138
        %v6624 = vunpack.c.h.b16 %v2138
        %v6625 = vunpack.c.l.b16 %v2139
        %v6626 = vunpack.c.h.b16 %v2139
        %v6627 = vunpack.c.l.b16 %v2140
        %v6628 = vunpack.c.h.b16 %v2140
        %v6629 = vunpack.c.l.b16 %v2141
        %v6630 = vunpack.c.h.b16 %v2141
        %v6631 = vunpack.c.l.b16 %v2142
        %v6632 = vunpack.c.h.b16 %v2142
        %v6633 = vunpack.c.l.b16 %v2143
        %v6634 = vunpack.c.h.b16 %v2143
        %v6635 = vunpack.c.l.b16 %v2144
        %v6636 = vunpack.c.h.b16 %v2144
        %v6637 = vunpack.c.l.b16 %v2145
        %v6638 = vunpack.c.h.b16 %v2145
        %v6639 = vunpack.c.l.b16 %v2146
        %v6640 = vunpack.c.h.b16 %v2146
        %v6641 = vunpack.c.l.b16 %v2147
        %v6642 = vunpack.c.h.b16 %v2147
        %v6643 = vunpack.c.l.b16 %v2148
        %v6644 = vunpack.c.h.b16 %v2148
        %v6645 = vunpack.c.l.b16 %v2149
        %v6646 = vunpack.c.h.b16 %v2149
        %v6647 = vunpack.c.l.b16 %v2150
        %v6648 = vunpack.c.h.b16 %v2150
        %v6649 = vunpack.c.l.b16 %v2151
        %v6650 = vunpack.c.h.b16 %v2151
        %v6651 = vunpack.c.l.b16 %v2152
        %v6652 = vunpack.c.h.b16 %v2152
        %v6653 = vunpack.c.l.b16 %v2153
        %v6654 = vunpack.c.h.b16 %v2153
        %v6655 = vunpack.c.l.b16 %v2154
        %v6656 = vunpack.c.h.b16 %v2154
        %v6657 = vunpack.c.l.b16 %v2155
        %v6658 = vunpack.c.h.b16 %v2155
        %v6659 = vunpack.c.l.b16 %v2156
        %v6660 = vunpack.c.h.b16 %v2156
        %v6661 = vunpack.c.l.b16 %v2157
        %v6662 = vunpack.c.h.b16 %v2157
        %v6663 = vunpack.c.l.b16 %v2158
        %v6664 = vunpack.c.h.b16 %v2158
        %v6665 = vunpack.c.l.b16 %v2159
        %v6666 = vunpack.c.h.b16 %v2159
        %v6667 = vunpack.c.l.b16 %v2160
        %v6668 = vunpack.c.h.b16 %v2160
        %v6669 = vunpack.c.l.b16 %v2161
        %v6670 = vunpack.c.h.b16 %v2161
        %v6671 = vunpack.c.l.b16 %v2162
        %v6672 = vunpack.c.h.b16 %v2162
        %v6673 = vunpack.c.l.b16 %v2163
        %v6674 = vunpack.c.h.b16 %v2163
        %v6675 = vunpack.c.l.b16 %v2164
        %v6676 = vunpack.c.h.b16 %v2164
        %v6677 = vunpack.c.l.b16 %v2165
        %v6678 = vunpack.c.h.b16 %v2165
        %v6679 = vunpack.c.l.b16 %v2166
        %v6680 = vunpack.c.h.b16 %v2166
        %v6681 = vunpack.c.l.b16 %v2167
        %v6682 = vunpack.c.h.b16 %v2167
        %v6683 = vunpack.c.l.b16 %v2168
        %v6684 = vunpack.c.h.b16 %v2168
        %v6685 = vunpack.c.l.b16 %v2169
        %v6686 = vunpack.c.h.b16 %v2169
        %v6687 = vunpack.c.l.b16 %v2170
        %v6688 = vunpack.c.h.b16 %v2170
        %v6689 = vunpack.c.l.b16 %v2171
        %v6690 = vunpack.c.h.b16 %v2171
        %v6691 = vunpack.c.l.b16 %v2172
        %v6692 = vunpack.c.h.b16 %v2172
        %v6693 = vunpack.c.l.b16 %v2173
        %v6694 = vunpack.c.h.b16 %v2173
        %v6695 = vunpack.c.l.b16 %v2174
        %v6696 = vunpack.c.h.b16 %v2174
        %v6697 = vunpack.c.l.b16 %v2175
        %v6698 = vunpack.c.h.b16 %v2175
        %v6699 = vunpack.c.l.b16 %v2176
        %v6700 = vunpack.c.h.b16 %v2176
        %v6701 = vunpack.c.l.b16 %v2177
        %v6702 = vunpack.c.h.b16 %v2177
        %v6703 = vunpack.c.l.b16 %v2178
        %v6704 = vunpack.c.h.b16 %v2178
        %v6705 = vunpack.c.l.b16 %v2179
        %v6706 = vunpack.c.h.b16 %v2179
        %v6707 = vunpack.c.l.b16 %v2180
        %v6708 = vunpack.c.h.b16 %v2180
        %v6709 = vunpack.c.l.b16 %v2181
        %v6710 = vunpack.c.h.b16 %v2181
        %v6711 = vunpack.c.l.b16 %v2182
        %v6712 = vunpack.c.h.b16 %v2182
        %v6713 = vunpack.c.l.b16 %v2183
        %v6714 = vunpack.c.h.b16 %v2183
        %v6715 = vunpack.c.l.b16 %v2184
        %v6716 = vunpack.c.h.b16 %v2184
        %v6717 = vunpack.c.l.b16 %v2185
        %v6718 = vunpack.c.h.b16 %v2185
        %v6719 = vunpack.c.l.b16 %v2186
        %v6720 = vunpack.c.h.b16 %v2186
        %v6721 = vunpack.c.l.b16 %v2187
        %v6722 = vunpack.c.h.b16 %v2187
        %v6723 = vunpack.c.l.b16 %v2188
        %v6724 = vunpack.c.h.b16 %v2188
        %v6725 = vunpack.c.l.b16 %v2189
        %v6726 = vunpack.c.h.b16 %v2189
        %v6727 = vunpack.c.l.b16 %v2190
        %v6728 = vunpack.c.h.b16 %v2190
        %v6729 = vunpack.c.l.b16 %v2191
        %v6730 = vunpack.c.h.b16 %v2191
        %v6731 = vunpack.c.l.b16 %v2192
        %v6732 = vunpack.c.h.b16 %v2192
        %v6733 = vunpack.c.l.b16 %v2193
        %v6734 = vunpack.c.h.b16 %v2193
        %v6735 = vunpack.c.l.b16 %v2194
        %v6736 = vunpack.c.h.b16 %v2194
        %v6737 = vunpack.c.l.b16 %v2195
        %v6738 = vunpack.c.h.b16 %v2195
        %v6739 = vunpack.c.l.b16 %v2196
        %v6740 = vunpack.c.h.b16 %v2196
        %v6741 = vunpack.c.l.b16 %v2197
        %v6742 = vunpack.c.h.b16 %v2197
        %v6743 = vunpack.c.l.b16 %v2198
        %v6744 = vunpack.c.h.b16 %v2198
        %v6745 = vunpack.c.l.b16 %v2199
        %v6746 = vunpack.c.h.b16 %v2199
        %v6747 = vunpack.c.l.b16 %v2200
        %v6748 = vunpack.c.h.b16 %v2200
        %v6749 = vunpack.c.l.b16 %v2201
        %v6750 = vunpack.c.h.b16 %v2201
        %v6751 = vunpack.c.l.b16 %v2202
        %v6752 = vunpack.c.h.b16 %v2202
        %v6753 = vunpack.c.l.b16 %v2203
        %v6754 = vunpack.c.h.b16 %v2203
        %v6755 = vunpack.c.l.b16 %v2204
        %v6756 = vunpack.c.h.b16 %v2204
        %v6757 = vunpack.c.l.b16 %v2205
        %v6758 = vunpack.c.h.b16 %v2205
        %v6759 = vunpack.c.l.b16 %v2206
        %v6760 = vunpack.c.h.b16 %v2206
        %v6761 = vunpack.c.l.b16 %v2207
        %v6762 = vunpack.c.h.b16 %v2207
        %v6763 = vunpack.c.l.b16 %v2208
        %v6764 = vunpack.c.h.b16 %v2208
        %v6765 = vunpack.c.l.b16 %v2209
        %v6766 = vunpack.c.h.b16 %v2209
        %v6767 = vunpack.c.l.b16 %v2210
        %v6768 = vunpack.c.h.b16 %v2210
        %v6769 = vunpack.c.l.b16 %v2211
        %v6770 = vunpack.c.h.b16 %v2211
        %v6771 = vunpack.c.l.b16 %v2212
        %v6772 = vunpack.c.h.b16 %v2212
        %v6773 = vunpack.c.l.b16 %v2213
        %v6774 = vunpack.c.h.b16 %v2213
        %v6775 = vunpack.c.l.b16 %v2214
        %v6776 = vunpack.c.h.b16 %v2214
        %v6777 = vunpack.c.l.b16 %v2215
        %v6778 = vunpack.c.h.b16 %v2215
        %v6779 = vunpack.c.l.b16 %v2216
        %v6780 = vunpack.c.h.b16 %v2216
        %v6781 = vunpack.c.l.b16 %v2217
        %v6782 = vunpack.c.h.b16 %v2217
        %v6783 = vunpack.c.l.b16 %v2218
        %v6784 = vunpack.c.h.b16 %v2218
        %v6785 = vunpack.c.l.b16 %v2219
        %v6786 = vunpack.c.h.b16 %v2219
        %v6787 = vunpack.c.l.b16 %v2220
        %v6788 = vunpack.c.h.b16 %v2220
        %v6789 = vunpack.c.l.b16 %v2221
        %v6790 = vunpack.c.h.b16 %v2221
        %v6791 = vunpack.c.l.b16 %v2222
        %v6792 = vunpack.c.h.b16 %v2222
        %v6793 = vunpack.c.l.b16 %v2223
        %v6794 = vunpack.c.h.b16 %v2223
        %v6795 = vunpack.c.l.b16 %v2224
        %v6796 = vunpack.c.h.b16 %v2224
        %v6797 = vunpack.c.l.b16 %v2225
        %v6798 = vunpack.c.h.b16 %v2225
        %v6799 = vunpack.c.l.b16 %v2226
        %v6800 = vunpack.c.h.b16 %v2226
        %v6801 = vunpack.c.l.b16 %v2227
        %v6802 = vunpack.c.h.b16 %v2227
        %v6803 = vunpack.c.l.b16 %v2228
        %v6804 = vunpack.c.h.b16 %v2228
        %v6805 = vunpack.c.l.b16 %v2229
        %v6806 = vunpack.c.h.b16 %v2229
        %v6807 = vunpack.c.l.b16 %v2230
        %v6808 = vunpack.c.h.b16 %v2230
        %v6809 = vunpack.c.l.b16 %v2231
        %v6810 = vunpack.c.h.b16 %v2231
        %v6811 = vunpack.c.l.b16 %v2232
        %v6812 = vunpack.c.h.b16 %v2232
        %v6813 = vunpack.c.l.b16 %v2233
        %v6814 = vunpack.c.h.b16 %v2233
        %v6815 = vunpack.c.l.b16 %v2234
        %v6816 = vunpack.c.h.b16 %v2234
        %v6817 = vunpack.c.l.b16 %v2235
        %v6818 = vunpack.c.h.b16 %v2235
        %v6819 = vunpack.c.l.b16 %v2236
        %v6820 = vunpack.c.h.b16 %v2236
        %v6821 = vunpack.c.l.b16 %v2237
        %v6822 = vunpack.c.h.b16 %v2237
        %v6823 = vunpack.c.l.b16 %v2238
        %v6824 = vunpack.c.h.b16 %v2238
        %v6825 = vunpack.c.l.b16 %v2239
        %v6826 = vunpack.c.h.b16 %v2239
        %v6827 = vunpack.c.l.b16 %v2240
        %v6828 = vunpack.c.h.b16 %v2240
        %v6829 = vunpack.c.l.b16 %v2241
        %v6830 = vunpack.c.h.b16 %v2241
        %v6831 = vunpack.c.l.b16 %v2242
        %v6832 = vunpack.c.h.b16 %v2242
        %v6833 = vunpack.c.l.b16 %v2243
        %v6834 = vunpack.c.h.b16 %v2243
        %v6835 = vunpack.c.l.b16 %v2244
        %v6836 = vunpack.c.h.b16 %v2244
        %v6837 = vunpack.c.l.b16 %v2245
        %v6838 = vunpack.c.h.b16 %v2245
        %v6839 = vunpack.c.l.b16 %v2246
        %v6840 = vunpack.c.h.b16 %v2246
        %v6841 = vunpack.c.l.b16 %v2247
        %v6842 = vunpack.c.h.b16 %v2247
        %v6843 = vunpack.c.l.b16 %v2248
        %v6844 = vunpack.c.h.b16 %v2248
        %v6845 = vunpack.c.l.b16 %v2249
        %v6846 = vunpack.c.h.b16 %v2249
        %v6847 = vunpack.c.l.b16 %v2250
        %v6848 = vunpack.c.h.b16 %v2250
        %v6849 = vunpack.c.l.b16 %v2251
        %v6850 = vunpack.c.h.b16 %v2251
        %v6851 = vunpack.c.l.b16 %v2252
        %v6852 = vunpack.c.h.b16 %v2252
        %v6853 = vunpack.c.l.b16 %v2253
        %v6854 = vunpack.c.h.b16 %v2253
        %v6855 = vunpack.c.l.b16 %v2254
        %v6856 = vunpack.c.h.b16 %v2254
        %v6857 = vunpack.c.l.b16 %v2255
        %v6858 = vunpack.c.h.b16 %v2255
        %v6859 = vunpack.c.l.b16 %v2256
        %v6860 = vunpack.c.h.b16 %v2256
        %v6861 = vunpack.c.l.b16 %v2257
        %v6862 = vunpack.c.h.b16 %v2257
        %v6863 = vunpack.c.l.b16 %v2258
        %v6864 = vunpack.c.h.b16 %v2258
        %v6865 = vunpack.c.l.b16 %v2259
        %v6866 = vunpack.c.h.b16 %v2259
        %v6867 = vunpack.c.l.b16 %v2260
        %v6868 = vunpack.c.h.b16 %v2260
        %v6869 = vunpack.c.l.b16 %v2261
        %v6870 = vunpack.c.h.b16 %v2261
        %v6871 = vunpack.c.l.b16 %v2262
        %v6872 = vunpack.c.h.b16 %v2262
        %v6873 = vunpack.c.l.b16 %v2263
        %v6874 = vunpack.c.h.b16 %v2263
        %v6875 = vunpack.c.l.b16 %v2264
        %v6876 = vunpack.c.h.b16 %v2264
        %v6877 = vunpack.c.l.b16 %v2265
        %v6878 = vunpack.c.h.b16 %v2265
        %v6879 = vunpack.c.l.b16 %v2266
        %v6880 = vunpack.c.h.b16 %v2266
        %v6881 = vunpack.c.l.b16 %v2267
        %v6882 = vunpack.c.h.b16 %v2267
        %v6883 = vunpack.c.l.b16 %v2268
        %v6884 = vunpack.c.h.b16 %v2268
        %v6885 = vunpack.c.l.b16 %v2269
        %v6886 = vunpack.c.h.b16 %v2269
        %v6887 = vunpack.c.l.b16 %v2270
        %v6888 = vunpack.c.h.b16 %v2270
        %v6889 = vunpack.c.l.b16 %v2271
        %v6890 = vunpack.c.h.b16 %v2271
        %v6891 = vunpack.c.l.b16 %v2272
        %v6892 = vunpack.c.h.b16 %v2272
        %v6893 = vunpack.c.l.b16 %v2273
        %v6894 = vunpack.c.h.b16 %v2273
        %v6895 = vunpack.c.l.b16 %v2274
        %v6896 = vunpack.c.h.b16 %v2274
        %v6897 = vunpack.c.l.b16 %v2275
        %v6898 = vunpack.c.h.b16 %v2275
        %v6899 = vunpack.c.l.b16 %v2276
        %v6900 = vunpack.c.h.b16 %v2276
        %v6901 = vunpack.c.l.b16 %v2277
        %v6902 = vunpack.c.h.b16 %v2277
        %v6903 = vunpack.c.l.b16 %v2278
        %v6904 = vunpack.c.h.b16 %v2278
        %v6905 = vunpack.c.l.b16 %v2279
        %v6906 = vunpack.c.h.b16 %v2279
        %v6907 = vunpack.c.l.b16 %v2280
        %v6908 = vunpack.c.h.b16 %v2280
        %v6909 = vunpack.c.l.b16 %v2281
        %v6910 = vunpack.c.h.b16 %v2281
        %v6911 = vunpack.c.l.b16 %v2282
        %v6912 = vunpack.c.h.b16 %v2282
        %v6913 = vunpack.c.l.b16 %v2283
        %v6914 = vunpack.c.h.b16 %v2283
        %v6915 = vunpack.c.l.b16 %v2284
        %v6916 = vunpack.c.h.b16 %v2284
        %v6917 = vunpack.c.l.b16 %v2285
        %v6918 = vunpack.c.h.b16 %v2285
        %v6919 = vunpack.c.l.b16 %v2286
        %v6920 = vunpack.c.h.b16 %v2286
        %v6921 = vunpack.c.l.b16 %v2287
        %v6922 = vunpack.c.h.b16 %v2287
        %v6923 = vunpack.c.l.b16 %v2288
        %v6924 = vunpack.c.h.b16 %v2288
        %v6925 = vunpack.c.l.b16 %v2289
        %v6926 = vunpack.c.h.b16 %v2289
        %v6927 = vunpack.c.l.b16 %v2290
        %v6928 = vunpack.c.h.b16 %v2290
        %v6929 = vunpack.c.l.b16 %v2291
        %v6930 = vunpack.c.h.b16 %v2291
        %v6931 = vunpack.c.l.b16 %v2292
        %v6932 = vunpack.c.h.b16 %v2292
        %v6933 = vunpack.c.l.b16 %v2293
        %v6934 = vunpack.c.h.b16 %v2293
        %v6935 = vunpack.c.l.b16 %v2294
        %v6936 = vunpack.c.h.b16 %v2294
        %v6937 = vunpack.c.l.b16 %v2295
        %v6938 = vunpack.c.h.b16 %v2295
        %v6939 = vunpack.c.l.b16 %v2296
        %v6940 = vunpack.c.h.b16 %v2296
        %v6941 = vunpack.c.l.b16 %v2297
        %v6942 = vunpack.c.h.b16 %v2297
        %v6943 = vunpack.c.l.b16 %v2298
        %v6944 = vunpack.c.h.b16 %v2298
        %v6945 = vunpack.c.l.b16 %v2299
        %v6946 = vunpack.c.h.b16 %v2299
        %v6947 = vunpack.c.l.b16 %v2300
        %v6948 = vunpack.c.h.b16 %v2300
        %v6949 = vunpack.c.l.b16 %v2301
        %v6950 = vunpack.c.h.b16 %v2301
        %v6951 = vunpack.c.l.b16 %v2302
        %v6952 = vunpack.c.h.b16 %v2302
        %v6953 = vunpack.c.l.b16 %v2303
        %v6954 = vunpack.c.h.b16 %v2303
        %v6955 = vunpack.c.l.b16 %v2304
        %v6956 = vunpack.c.h.b16 %v2304
        %v6957 = vunpack.c.l.b16 %v2305
        %v6958 = vunpack.c.h.b16 %v2305
        %v6959 = vunpack.c.l.b16 %v2306
        %v6960 = vunpack.c.h.b16 %v2306
        %v6961 = vunpack.c.l.b16 %v2307
        %v6962 = vunpack.c.h.b16 %v2307
        %v6963 = vunpack.c.l.b16 %v2308
        %v6964 = vunpack.c.h.b16 %v2308
        %v6965 = vunpack.c.l.b16 %v2309
        %v6966 = vunpack.c.h.b16 %v2309
        %v6967 = vunpack.c.l.b16 %v2310
        %v6968 = vunpack.c.h.b16 %v2310
        %v6969 = vunpack.c.l.b16 %v2311
        %v6970 = vunpack.c.h.b16 %v2311
        %v6971 = vunpack.c.l.b16 %v2312
        %v6972 = vunpack.c.h.b16 %v2312
        %v6973 = vunpack.c.l.b16 %v2313
        %v6974 = vunpack.c.h.b16 %v2313
        %v6975 = vunpack.c.l.b16 %v2314
        %v6976 = vunpack.c.h.b16 %v2314
        %v6977 = vunpack.c.l.b16 %v2315
        %v6978 = vunpack.c.h.b16 %v2315
        %v6979 = vunpack.c.l.b16 %v2316
        %v6980 = vunpack.c.h.b16 %v2316
        %v6981 = vunpack.c.l.b16 %v2317
        %v6982 = vunpack.c.h.b16 %v2317
        %v6983 = vunpack.c.l.b16 %v2318
        %v6984 = vunpack.c.h.b16 %v2318
        %v6985 = vunpack.c.l.b16 %v2319
        %v6986 = vunpack.c.h.b16 %v2319
        %v6987 = vunpack.c.l.b16 %v2320
        %v6988 = vunpack.c.h.b16 %v2320
        %v6989 = vunpack.c.l.b16 %v2321
        %v6990 = vunpack.c.h.b16 %v2321
        %v6991 = vunpack.c.l.b16 %v2322
        %v6992 = vunpack.c.h.b16 %v2322
        %v6993 = vunpack.c.l.b16 %v2323
        %v6994 = vunpack.c.h.b16 %v2323
        %v6995 = vunpack.c.l.b16 %v2324
        %v6996 = vunpack.c.h.b16 %v2324
        %v6997 = vunpack.c.l.b16 %v2325
        %v6998 = vunpack.c.h.b16 %v2325
        %v6999 = vunpack.c.l.b16 %v2326
        %v7000 = vunpack.c.h.b16 %v2326
        %v7001 = vunpack.c.l.b16 %v2327
        %v7002 = vunpack.c.h.b16 %v2327
        %v7003 = vunpack.c.l.b16 %v2328
        %v7004 = vunpack.c.h.b16 %v2328
        %v7005 = vunpack.c.l.b16 %v2329
        %v7006 = vunpack.c.h.b16 %v2329
        %v7007 = vunpack.c.l.b16 %v2330
        %v7008 = vunpack.c.h.b16 %v2330
        %v7009 = vunpack.c.l.b16 %v2331
        %v7010 = vunpack.c.h.b16 %v2331
        %v7011 = vunpack.c.l.b16 %v2332
        %v7012 = vunpack.c.h.b16 %v2332
        %v7013 = vunpack.c.l.b16 %v2333
        %v7014 = vunpack.c.h.b16 %v2333
        %v7015 = vunpack.c.l.b16 %v2334
        %v7016 = vunpack.c.h.b16 %v2334
        %v7017 = vunpack.c.l.b16 %v2335
        %v7018 = vunpack.c.h.b16 %v2335
        %v7019 = vunpack.c.l.b16 %v2336
        %v7020 = vunpack.c.h.b16 %v2336
        %v7021 = vunpack.c.l.b16 %v2337
        %v7022 = vunpack.c.h.b16 %v2337
        %v7023 = vunpack.c.l.b16 %v2338
        %v7024 = vunpack.c.h.b16 %v2338
        %v7025 = vunpack.c.l.b16 %v2339
        %v7026 = vunpack.c.h.b16 %v2339
        %v7027 = vunpack.c.l.b16 %v2340
        %v7028 = vunpack.c.h.b16 %v2340
        %v7029 = vunpack.c.l.b16 %v2341
        %v7030 = vunpack.c.h.b16 %v2341
        %v7031 = vunpack.c.l.b16 %v2342
        %v7032 = vunpack.c.h.b16 %v2342
        %v7033 = vunpack.c.l.b16 %v2343
        %v7034 = vunpack.c.h.b16 %v2343
        %v7035 = vunpack.c.l.b16 %v2344
        %v7036 = vunpack.c.h.b16 %v2344
        %v7037 = vunpack.c.l.b16 %v2345
        %v7038 = vunpack.c.h.b16 %v2345
        %v7039 = vunpack.c.l.b16 %v2346
        %v7040 = vunpack.c.h.b16 %v2346
        %v7041 = vunpack.c.l.b16 %v2347
        %v7042 = vunpack.c.h.b16 %v2347
        %v7043 = vunpack.c.l.b16 %v2348
        %v7044 = vunpack.c.h.b16 %v2348
        %v7045 = vunpack.c.l.b16 %v2349
        %v7046 = vunpack.c.h.b16 %v2349
        %v7047 = vunpack.c.l.b16 %v2350
        %v7048 = vunpack.c.h.b16 %v2350
        %v7049 = vunpack.c.l.b16 %v2351
        %v7050 = vunpack.c.h.b16 %v2351
        %v7051 = vunpack.c.l.b16 %v2352
        %v7052 = vunpack.c.h.b16 %v2352
        %v7053 = vunpack.c.l.b16 %v2353
        %v7054 = vunpack.c.h.b16 %v2353
        %v7055 = vunpack.c.l.b16 %v2354
        %v7056 = vunpack.c.h.b16 %v2354
        %v7057 = vunpack.c.l.b16 %v2355
        %v7058 = vunpack.c.h.b16 %v2355
        %v7059 = vunpack.c.l.b16 %v2356
        %v7060 = vunpack.c.h.b16 %v2356
        %v7061 = vpack.c.b16 %v3929, %v3925
        %v7062 = vpack.c.b16 %v3930, %v3926
        %v7063 = vpack.c.b16 %v3931, %v3927
        %v7064 = vpack.c.b16 %v3932, %v3928
        %v7065 = vpack.c.b16 %v3937, %v3933
        %v7066 = vpack.c.b16 %v3938, %v3934
        %v7067 = vpack.c.b16 %v3939, %v3935
        %v7068 = vpack.c.b16 %v3940, %v3936
        %v7069 = vpack.c.b16 %v3945, %v3941
        %v7070 = vpack.c.b16 %v3946, %v3942
        %v7071 = vpack.c.b16 %v3947, %v3943
        %v7072 = vpack.c.b16 %v3948, %v3944
        %v7073 = vpack.c.b16 %v3953, %v3949
        %v7074 = vpack.c.b16 %v3954, %v3950
        %v7075 = vpack.c.b16 %v3955, %v3951
        %v7076 = vpack.c.b16 %v3956, %v3952
        %v7077 = vpack.c.b16 %v3961, %v3957
        %v7078 = vpack.c.b16 %v3962, %v3958
        %v7079 = vpack.c.b16 %v3963, %v3959
        %v7080 = vpack.c.b16 %v3964, %v3960
        %v7081 = vpack.c.b16 %v3969, %v3965
        %v7082 = vpack.c.b16 %v3970, %v3966
        %v7083 = vpack.c.b16 %v3971, %v3967
        %v7084 = vpack.c.b16 %v3972, %v3968
        %v7085 = vpack.c.b16 %v3977, %v3973
        %v7086 = vpack.c.b16 %v3978, %v3974
        %v7087 = vpack.c.b16 %v3979, %v3975
        %v7088 = vpack.c.b16 %v3980, %v3976
        %v7089 = vpack.c.b16 %v3985, %v3981
        %v7090 = vpack.c.b16 %v3986, %v3982
        %v7091 = vpack.c.b16 %v3987, %v3983
        %v7092 = vpack.c.b16 %v3988, %v3984
        %v7093 = vpack.c.b16 %v3993, %v3989
        %v7094 = vpack.c.b16 %v3994, %v3990
        %v7095 = vpack.c.b16 %v3995, %v3991
        %v7096 = vpack.c.b16 %v3996, %v3992
        %v7097 = vpack.c.b16 %v4001, %v3997
        %v7098 = vpack.c.b16 %v4002, %v3998
        %v7099 = vpack.c.b16 %v4003, %v3999
        %v7100 = vpack.c.b16 %v4004, %v4000
        %v7101 = vpack.c.b16 %v4009, %v4005
        %v7102 = vpack.c.b16 %v4010, %v4006
        %v7103 = vpack.c.b16 %v4011, %v4007
        %v7104 = vpack.c.b16 %v4012, %v4008
        %v7105 = vpack.c.b16 %v4017, %v4013
        %v7106 = vpack.c.b16 %v4018, %v4014
        %v7107 = vpack.c.b16 %v4019, %v4015
        %v7108 = vpack.c.b16 %v4020, %v4016
        %v7109 = vpack.c.b16 %v4025, %v4021
        %v7110 = vpack.c.b16 %v4026, %v4022
        %v7111 = vpack.c.b16 %v4027, %v4023
        %v7112 = vpack.c.b16 %v4028, %v4024
        %v7113 = vpack.c.b16 %v4033, %v4029
        %v7114 = vpack.c.b16 %v4034, %v4030
        %v7115 = vpack.c.b16 %v4035, %v4031
        %v7116 = vpack.c.b16 %v4036, %v4032
        %v7117 = vpack.c.b16 %v4041, %v4037
        %v7118 = vpack.c.b16 %v4042, %v4038
        %v7119 = vpack.c.b16 %v4043, %v4039
        %v7120 = vpack.c.b16 %v4044, %v4040
        %v7121 = vpack.c.b16 %v4049, %v4045
        %v7122 = vpack.c.b16 %v4050, %v4046
        %v7123 = vpack.c.b16 %v4051, %v4047
        %v7124 = vpack.c.b16 %v4052, %v4048
        %v7125 = vpack.c.b16 %v4057, %v4053
        %v7126 = vpack.c.b16 %v4058, %v4054
        %v7127 = vpack.c.b16 %v4059, %v4055
        %v7128 = vpack.c.b16 %v4060, %v4056
        %v7129 = vpack.c.b16 %v4065, %v4061
        %v7130 = vpack.c.b16 %v4066, %v4062
        %v7131 = vpack.c.b16 %v4067, %v4063
        %v7132 = vpack.c.b16 %v4068, %v4064
        %v7133 = vpack.c.b16 %v4073, %v4069
        %v7134 = vpack.c.b16 %v4074, %v4070
        %v7135 = vpack.c.b16 %v4075, %v4071
        %v7136 = vpack.c.b16 %v4076, %v4072
        %v7137 = vpack.c.b16 %v4081, %v4077
        %v7138 = vpack.c.b16 %v4082, %v4078
        %v7139 = vpack.c.b16 %v4083, %v4079
        %v7140 = vpack.c.b16 %v4084, %v4080
        %v7141 = vpack.c.b16 %v4089, %v4085
        %v7142 = vpack.c.b16 %v4090, %v4086
        %v7143 = vpack.c.b16 %v4091, %v4087
        %v7144 = vpack.c.b16 %v4092, %v4088
        %v7145 = vpack.c.b16 %v4097, %v4093
        %v7146 = vpack.c.b16 %v4098, %v4094
        %v7147 = vpack.c.b16 %v4099, %v4095
        %v7148 = vpack.c.b16 %v4100, %v4096
        %v7149 = vpack.c.b16 %v4105, %v4101
        %v7150 = vpack.c.b16 %v4106, %v4102
        %v7151 = vpack.c.b16 %v4107, %v4103
        %v7152 = vpack.c.b16 %v4108, %v4104
        %v7153 = vpack.c.b16 %v4113, %v4109
        %v7154 = vpack.c.b16 %v4114, %v4110
        %v7155 = vpack.c.b16 %v4115, %v4111
        %v7156 = vpack.c.b16 %v4116, %v4112
        %v7157 = vpack.c.b16 %v4121, %v4117
        %v7158 = vpack.c.b16 %v4122, %v4118
        %v7159 = vpack.c.b16 %v4123, %v4119
        %v7160 = vpack.c.b16 %v4124, %v4120
        %v7161 = vpack.c.b16 %v4129, %v4125
        %v7162 = vpack.c.b16 %v4130, %v4126
        %v7163 = vpack.c.b16 %v4131, %v4127
        %v7164 = vpack.c.b16 %v4132, %v4128
        %v7165 = vpack.c.b16 %v4137, %v4133
        %v7166 = vpack.c.b16 %v4138, %v4134
        %v7167 = vpack.c.b16 %v4139, %v4135
        %v7168 = vpack.c.b16 %v4140, %v4136
        %v7169 = vpack.c.b16 %v4145, %v4141
        %v7170 = vpack.c.b16 %v4146, %v4142
        %v7171 = vpack.c.b16 %v4147, %v4143
        %v7172 = vpack.c.b16 %v4148, %v4144
        %v7173 = vpack.c.b16 %v4153, %v4149
        %v7174 = vpack.c.b16 %v4154, %v4150
        %v7175 = vpack.c.b16 %v4155, %v4151
        %v7176 = vpack.c.b16 %v4156, %v4152
        %v7177 = vpack.c.b16 %v4161, %v4157
        %v7178 = vpack.c.b16 %v4162, %v4158
        %v7179 = vpack.c.b16 %v4163, %v4159
        %v7180 = vpack.c.b16 %v4164, %v4160
        %v7181 = vpack.c.b16 %v4169, %v4165
        %v7182 = vpack.c.b16 %v4170, %v4166
        %v7183 = vpack.c.b16 %v4171, %v4167
        %v7184 = vpack.c.b16 %v4172, %v4168
        %v7185 = vpack.c.b16 %v4177, %v4173
        %v7186 = vpack.c.b16 %v4178, %v4174
        %v7187 = vpack.c.b16 %v4179, %v4175
        %v7188 = vpack.c.b16 %v4180, %v4176
        %v7189 = vpack.c.b16 %v4185, %v4181
        %v7190 = vpack.c.b16 %v4186, %v4182
        %v7191 = vpack.c.b16 %v4187, %v4183
        %v7192 = vpack.c.b16 %v4188, %v4184
        %v7193 = vpack.c.b16 %v4193, %v4189
        %v7194 = vpack.c.b16 %v4194, %v4190
        %v7195 = vpack.c.b16 %v4195, %v4191
        %v7196 = vpack.c.b16 %v4196, %v4192
        %v7197 = vpack.c.b16 %v4201, %v4197
        %v7198 = vpack.c.b16 %v4202, %v4198
        %v7199 = vpack.c.b16 %v4203, %v4199
        %v7200 = vpack.c.b16 %v4204, %v4200
        %v7201 = vpack.c.b16 %v4209, %v4205
        %v7202 = vpack.c.b16 %v4210, %v4206
        %v7203 = vpack.c.b16 %v4211, %v4207
        %v7204 = vpack.c.b16 %v4212, %v4208
        %v7205 = vpack.c.b16 %v4217, %v4213
        %v7206 = vpack.c.b16 %v4218, %v4214
        %v7207 = vpack.c.b16 %v4219, %v4215
        %v7208 = vpack.c.b16 %v4220, %v4216
        %v7209 = vpack.c.b16 %v4225, %v4221
        %v7210 = vpack.c.b16 %v4226, %v4222
        %v7211 = vpack.c.b16 %v4227, %v4223
        %v7212 = vpack.c.b16 %v4228, %v4224
        %v7213 = vpack.c.b16 %v4233, %v4229
        %v7214 = vpack.c.b16 %v4234, %v4230
        %v7215 = vpack.c.b16 %v4235, %v4231
        %v7216 = vpack.c.b16 %v4236, %v4232
        %v7217 = vpack.c.b16 %v4241, %v4237
        %v7218 = vpack.c.b16 %v4242, %v4238
        %v7219 = vpack.c.b16 %v4243, %v4239
        %v7220 = vpack.c.b16 %v4244, %v4240
        %v7221 = vpack.c.b16 %v4249, %v4245
        %v7222 = vpack.c.b16 %v4250, %v4246
        %v7223 = vpack.c.b16 %v4251, %v4247
        %v7224 = vpack.c.b16 %v4252, %v4248
        %v7225 = vpack.c.b16 %v4257, %v4253
        %v7226 = vpack.c.b16 %v4258, %v4254
        %v7227 = vpack.c.b16 %v4259, %v4255
        %v7228 = vpack.c.b16 %v4260, %v4256
        %v7229 = vpack.c.b16 %v4265, %v4261
        %v7230 = vpack.c.b16 %v4266, %v4262
        %v7231 = vpack.c.b16 %v4267, %v4263
        %v7232 = vpack.c.b16 %v4268, %v4264
        %v7233 = vpack.c.b16 %v4273, %v4269
        %v7234 = vpack.c.b16 %v4274, %v4270
        %v7235 = vpack.c.b16 %v4275, %v4271
        %v7236 = vpack.c.b16 %v4276, %v4272
        %v7237 = vpack.c.b16 %v4281, %v4277
        %v7238 = vpack.c.b16 %v4282, %v4278
        %v7239 = vpack.c.b16 %v4283, %v4279
        %v7240 = vpack.c.b16 %v4284, %v4280
        %v7241 = vpack.c.b16 %v4289, %v4285
        %v7242 = vpack.c.b16 %v4290, %v4286
        %v7243 = vpack.c.b16 %v4291, %v4287
        %v7244 = vpack.c.b16 %v4292, %v4288
        %v7245 = vpack.c.b16 %v4297, %v4293
        %v7246 = vpack.c.b16 %v4298, %v4294
        %v7247 = vpack.c.b16 %v4299, %v4295
        %v7248 = vpack.c.b16 %v4300, %v4296
        %v7249 = vpack.c.b16 %v4305, %v4301
        %v7250 = vpack.c.b16 %v4306, %v4302
        %v7251 = vpack.c.b16 %v4307, %v4303
        %v7252 = vpack.c.b16 %v4308, %v4304
        %v7253 = vpack.c.b16 %v4313, %v4309
        %v7254 = vpack.c.b16 %v4314, %v4310
        %v7255 = vpack.c.b16 %v4315, %v4311
        %v7256 = vpack.c.b16 %v4316, %v4312
        %v7257 = vpack.c.b16 %v4321, %v4317
        %v7258 = vpack.c.b16 %v4322, %v4318
        %v7259 = vpack.c.b16 %v4323, %v4319
        %v7260 = vpack.c.b16 %v4324, %v4320
        %v7261 = vpack.c.b16 %v4329, %v4325
        %v7262 = vpack.c.b16 %v4330, %v4326
        %v7263 = vpack.c.b16 %v4331, %v4327
        %v7264 = vpack.c.b16 %v4332, %v4328
        %v7265 = vpack.c.b16 %v4337, %v4333
        %v7266 = vpack.c.b16 %v4338, %v4334
        %v7267 = vpack.c.b16 %v4339, %v4335
        %v7268 = vpack.c.b16 %v4340, %v4336
        %v7269 = vpack.c.b16 %v4345, %v4341
        %v7270 = vpack.c.b16 %v4346, %v4342
        %v7271 = vpack.c.b16 %v4347, %v4343
        %v7272 = vpack.c.b16 %v4348, %v4344
        %v7273 = vpack.c.b16 %v4353, %v4349
        %v7274 = vpack.c.b16 %v4354, %v4350
        %v7275 = vpack.c.b16 %v4355, %v4351
        %v7276 = vpack.c.b16 %v4356, %v4352
        %v7277 = vpack.c.b16 %v4361, %v4357
        %v7278 = vpack.c.b16 %v4362, %v4358
        %v7279 = vpack.c.b16 %v4363, %v4359
        %v7280 = vpack.c.b16 %v4364, %v4360
        %v7281 = vpack.c.b16 %v4369, %v4365
        %v7282 = vpack.c.b16 %v4370, %v4366
        %v7283 = vpack.c.b16 %v4371, %v4367
        %v7284 = vpack.c.b16 %v4372, %v4368
        %v7285 = vpack.c.b16 %v4377, %v4373
        %v7286 = vpack.c.b16 %v4378, %v4374
        %v7287 = vpack.c.b16 %v4379, %v4375
        %v7288 = vpack.c.b16 %v4380, %v4376
        %v7289 = vpack.c.b16 %v4385, %v4381
        %v7290 = vpack.c.b16 %v4386, %v4382
        %v7291 = vpack.c.b16 %v4387, %v4383
        %v7292 = vpack.c.b16 %v4388, %v4384
        %v7293 = vpack.c.b16 %v4393, %v4389
        %v7294 = vpack.c.b16 %v4394, %v4390
        %v7295 = vpack.c.b16 %v4395, %v4391
        %v7296 = vpack.c.b16 %v4396, %v4392
        %v7297 = vpack.c.b16 %v4401, %v4397
        %v7298 = vpack.c.b16 %v4402, %v4398
        %v7299 = vpack.c.b16 %v4403, %v4399
        %v7300 = vpack.c.b16 %v4404, %v4400
        %v7301 = vpack.c.b16 %v4409, %v4405
        %v7302 = vpack.c.b16 %v4410, %v4406
        %v7303 = vpack.c.b16 %v4411, %v4407
        %v7304 = vpack.c.b16 %v4412, %v4408
        %v7305 = vpack.c.b16 %v4417, %v4413
        %v7306 = vpack.c.b16 %v4418, %v4414
        %v7307 = vpack.c.b16 %v4419, %v4415
        %v7308 = vpack.c.b16 %v4420, %v4416
        %v7309 = vpack.c.b16 %v4425, %v4421
        %v7310 = vpack.c.b16 %v4426, %v4422
        %v7311 = vpack.c.b16 %v4427, %v4423
        %v7312 = vpack.c.b16 %v4428, %v4424
        %v7313 = vpack.c.b16 %v4433, %v4429
        %v7314 = vpack.c.b16 %v4434, %v4430
        %v7315 = vpack.c.b16 %v4435, %v4431
        %v7316 = vpack.c.b16 %v4436, %v4432
        %v7317 = vpack.c.b16 %v4441, %v4437
        %v7318 = vpack.c.b16 %v4442, %v4438
        %v7319 = vpack.c.b16 %v4443, %v4439
        %v7320 = vpack.c.b16 %v4444, %v4440
        %v7321 = vpack.c.b16 %v4449, %v4445
        %v7322 = vpack.c.b16 %v4450, %v4446
        %v7323 = vpack.c.b16 %v4451, %v4447
        %v7324 = vpack.c.b16 %v4452, %v4448
        %v7325 = vpack.c.b16 %v4457, %v4453
        %v7326 = vpack.c.b16 %v4458, %v4454
        %v7327 = vpack.c.b16 %v4459, %v4455
        %v7328 = vpack.c.b16 %v4460, %v4456
        %v7329 = vpack.c.b16 %v4465, %v4461
        %v7330 = vpack.c.b16 %v4466, %v4462
        %v7331 = vpack.c.b16 %v4467, %v4463
        %v7332 = vpack.c.b16 %v4468, %v4464
        %v7333 = vpack.c.b16 %v4473, %v4469
        %v7334 = vpack.c.b16 %v4474, %v4470
        %v7335 = vpack.c.b16 %v4475, %v4471
        %v7336 = vpack.c.b16 %v4476, %v4472
        %v7337 = vpack.c.b16 %v4481, %v4477
        %v7338 = vpack.c.b16 %v4482, %v4478
        %v7339 = vpack.c.b16 %v4483, %v4479
        %v7340 = vpack.c.b16 %v4484, %v4480
        %v7341 = vpack.c.b16 %v4489, %v4485
        %v7342 = vpack.c.b16 %v4490, %v4486
        %v7343 = vpack.c.b16 %v4491, %v4487
        %v7344 = vpack.c.b16 %v4492, %v4488
        %v7345 = vpack.c.b16 %v4497, %v4493
        %v7346 = vpack.c.b16 %v4498, %v4494
        %v7347 = vpack.c.b16 %v4499, %v4495
        %v7348 = vpack.c.b16 %v4500, %v4496
        %v7349 = vpack.c.b16 %v4505, %v4501
        %v7350 = vpack.c.b16 %v4506, %v4502
        %v7351 = vpack.c.b16 %v4507, %v4503
        %v7352 = vpack.c.b16 %v4508, %v4504
        %v7353 = vpack.c.b16 %v4513, %v4509
        %v7354 = vpack.c.b16 %v4514, %v4510
        %v7355 = vpack.c.b16 %v4515, %v4511
        %v7356 = vpack.c.b16 %v4516, %v4512
        %v7357 = vpack.c.b16 %v4521, %v4517
        %v7358 = vpack.c.b16 %v4522, %v4518
        %v7359 = vpack.c.b16 %v4523, %v4519
        %v7360 = vpack.c.b16 %v4524, %v4520
        %v7361 = vpack.c.b16 %v4529, %v4525
        %v7362 = vpack.c.b16 %v4530, %v4526
        %v7363 = vpack.c.b16 %v4531, %v4527
        %v7364 = vpack.c.b16 %v4532, %v4528
        %v7365 = vpack.c.b16 %v4537, %v4533
        %v7366 = vpack.c.b16 %v4538, %v4534
        %v7367 = vpack.c.b16 %v4539, %v4535
        %v7368 = vpack.c.b16 %v4540, %v4536
        %v7369 = vpack.c.b16 %v4545, %v4541
        %v7370 = vpack.c.b16 %v4546, %v4542
        %v7371 = vpack.c.b16 %v4547, %v4543
        %v7372 = vpack.c.b16 %v4548, %v4544
        %v7373 = vpack.c.b16 %v4553, %v4549
        %v7374 = vpack.c.b16 %v4554, %v4550
        %v7375 = vpack.c.b16 %v4555, %v4551
        %v7376 = vpack.c.b16 %v4556, %v4552
        %v7377 = vpack.c.b16 %v4561, %v4557
        %v7378 = vpack.c.b16 %v4562, %v4558
        %v7379 = vpack.c.b16 %v4563, %v4559
        %v7380 = vpack.c.b16 %v4564, %v4560
        %v7381 = vpack.c.b16 %v4569, %v4565
        %v7382 = vpack.c.b16 %v4570, %v4566
        %v7383 = vpack.c.b16 %v4571, %v4567
        %v7384 = vpack.c.b16 %v4572, %v4568
        %v7385 = vpack.c.b16 %v4577, %v4573
        %v7386 = vpack.c.b16 %v4578, %v4574
        %v7387 = vpack.c.b16 %v4579, %v4575
        %v7388 = vpack.c.b16 %v4580, %v4576
        %v7389 = vpack.c.b16 %v4585, %v4581
        %v7390 = vpack.c.b16 %v4586, %v4582
        %v7391 = vpack.c.b16 %v4587, %v4583
        %v7392 = vpack.c.b16 %v4588, %v4584
        %v7393 = vpack.c.b16 %v4593, %v4589
        %v7394 = vpack.c.b16 %v4594, %v4590
        %v7395 = vpack.c.b16 %v4595, %v4591
        %v7396 = vpack.c.b16 %v4596, %v4592
        %v7397 = vpack.c.b16 %v4601, %v4597
        %v7398 = vpack.c.b16 %v4602, %v4598
        %v7399 = vpack.c.b16 %v4603, %v4599
        %v7400 = vpack.c.b16 %v4604, %v4600
        %v7401 = vpack.c.b16 %v4609, %v4605
        %v7402 = vpack.c.b16 %v4610, %v4606
        %v7403 = vpack.c.b16 %v4611, %v4607
        %v7404 = vpack.c.b16 %v4612, %v4608
        %v7405 = vpack.c.b16 %v4617, %v4613
        %v7406 = vpack.c.b16 %v4618, %v4614
        %v7407 = vpack.c.b16 %v4619, %v4615
        %v7408 = vpack.c.b16 %v4620, %v4616
        %v7409 = vpack.c.b16 %v4625, %v4621
        %v7410 = vpack.c.b16 %v4626, %v4622
        %v7411 = vpack.c.b16 %v4627, %v4623
        %v7412 = vpack.c.b16 %v4628, %v4624
        %v7413 = vpack.c.b16 %v4633, %v4629
        %v7414 = vpack.c.b16 %v4634, %v4630
        %v7415 = vpack.c.b16 %v4635, %v4631
        %v7416 = vpack.c.b16 %v4636, %v4632
        %v7417 = vpack.c.b16 %v4641, %v4637
        %v7418 = vpack.c.b16 %v4642, %v4638
        %v7419 = vpack.c.b16 %v4643, %v4639
        %v7420 = vpack.c.b16 %v4644, %v4640
        %v7421 = vpack.c.b16 %v4649, %v4645
        %v7422 = vpack.c.b16 %v4650, %v4646
        %v7423 = vpack.c.b16 %v4651, %v4647
        %v7424 = vpack.c.b16 %v4652, %v4648
        %v7425 = vpack.c.b16 %v4657, %v4653
        %v7426 = vpack.c.b16 %v4658, %v4654
        %v7427 = vpack.c.b16 %v4659, %v4655
        %v7428 = vpack.c.b16 %v4660, %v4656
        %v7429 = vpack.c.b16 %v4665, %v4661
        %v7430 = vpack.c.b16 %v4666, %v4662
        %v7431 = vpack.c.b16 %v4667, %v4663
        %v7432 = vpack.c.b16 %v4668, %v4664
        %v7433 = vpack.c.b16 %v4673, %v4669
        %v7434 = vpack.c.b16 %v4674, %v4670
        %v7435 = vpack.c.b16 %v4675, %v4671
        %v7436 = vpack.c.b16 %v4676, %v4672
        %v7437 = vpack.c.b16 %v4681, %v4677
        %v7438 = vpack.c.b16 %v4682, %v4678
        %v7439 = vpack.c.b16 %v4683, %v4679
        %v7440 = vpack.c.b16 %v4684, %v4680
        %v7441 = vpack.c.b16 %v4689, %v4685
        %v7442 = vpack.c.b16 %v4690, %v4686
        %v7443 = vpack.c.b16 %v4691, %v4687
        %v7444 = vpack.c.b16 %v4692, %v4688
        %v7445 = vpack.c.b16 %v4697, %v4693
        %v7446 = vpack.c.b16 %v4698, %v4694
        %v7447 = vpack.c.b16 %v4699, %v4695
        %v7448 = vpack.c.b16 %v4700, %v4696
        %v7449 = vpack.c.b16 %v4705, %v4701
        %v7450 = vpack.c.b16 %v4706, %v4702
        %v7451 = vpack.c.b16 %v4707, %v4703
        %v7452 = vpack.c.b16 %v4708, %v4704
        %v7453 = vpack.c.b16 %v4713, %v4709
        %v7454 = vpack.c.b16 %v4714, %v4710
        %v7455 = vpack.c.b16 %v4715, %v4711
        %v7456 = vpack.c.b16 %v4716, %v4712
        %v7457 = vpack.c.b16 %v4721, %v4717
        %v7458 = vpack.c.b16 %v4722, %v4718
        %v7459 = vpack.c.b16 %v4723, %v4719
        %v7460 = vpack.c.b16 %v4724, %v4720
        %v7461 = vpack.c.b16 %v4729, %v4725
        %v7462 = vpack.c.b16 %v4730, %v4726
        %v7463 = vpack.c.b16 %v4731, %v4727
        %v7464 = vpack.c.b16 %v4732, %v4728
        %v7465 = vpack.c.b16 %v4737, %v4733
        %v7466 = vpack.c.b16 %v4738, %v4734
        %v7467 = vpack.c.b16 %v4739, %v4735
        %v7468 = vpack.c.b16 %v4740, %v4736
        %v7469 = vpack.c.b16 %v4745, %v4741
        %v7470 = vpack.c.b16 %v4746, %v4742
        %v7471 = vpack.c.b16 %v4747, %v4743
        %v7472 = vpack.c.b16 %v4748, %v4744
        %v7473 = vpack.c.b16 %v4753, %v4749
        %v7474 = vpack.c.b16 %v4754, %v4750
        %v7475 = vpack.c.b16 %v4755, %v4751
        %v7476 = vpack.c.b16 %v4756, %v4752
        %v7477 = vpack.c.b16 %v4761, %v4757
        %v7478 = vpack.c.b16 %v4762, %v4758
        %v7479 = vpack.c.b16 %v4763, %v4759
        %v7480 = vpack.c.b16 %v4764, %v4760
        %v7481 = vpack.c.b16 %v4769, %v4765
        %v7482 = vpack.c.b16 %v4770, %v4766
        %v7483 = vpack.c.b16 %v4771, %v4767
        %v7484 = vpack.c.b16 %v4772, %v4768
        %v7485 = vpack.c.b16 %v4777, %v4773
        %v7486 = vpack.c.b16 %v4778, %v4774
        %v7487 = vpack.c.b16 %v4779, %v4775
        %v7488 = vpack.c.b16 %v4780, %v4776
        %v7489 = vpack.c.b16 %v4785, %v4781
        %v7490 = vpack.c.b16 %v4786, %v4782
        %v7491 = vpack.c.b16 %v4787, %v4783
        %v7492 = vpack.c.b16 %v4788, %v4784
        %v7493 = vpack.c.b16 %v4793, %v4789
        %v7494 = vpack.c.b16 %v4794, %v4790
        %v7495 = vpack.c.b16 %v4795, %v4791
        %v7496 = vpack.c.b16 %v4796, %v4792
        %v7497 = vpack.c.b16 %v4801, %v4797
        %v7498 = vpack.c.b16 %v4802, %v4798
        %v7499 = vpack.c.b16 %v4803, %v4799
        %v7500 = vpack.c.b16 %v4804, %v4800
        %v7501 = vpack.c.b16 %v4809, %v4805
        %v7502 = vpack.c.b16 %v4810, %v4806
        %v7503 = vpack.c.b16 %v4811, %v4807
        %v7504 = vpack.c.b16 %v4812, %v4808
        %v7505 = vpack.c.b16 %v4817, %v4813
        %v7506 = vpack.c.b16 %v4818, %v4814
        %v7507 = vpack.c.b16 %v4819, %v4815
        %v7508 = vpack.c.b16 %v4820, %v4816
        %v7509 = vpack.c.b16 %v4825, %v4821
        %v7510 = vpack.c.b16 %v4826, %v4822
        %v7511 = vpack.c.b16 %v4827, %v4823
        %v7512 = vpack.c.b16 %v4828, %v4824
        %v7513 = vpack.c.b16 %v4833, %v4829
        %v7514 = vpack.c.b16 %v4834, %v4830
        %v7515 = vpack.c.b16 %v4835, %v4831
        %v7516 = vpack.c.b16 %v4836, %v4832
        %v7517 = vpack.c.b16 %v4841, %v4837
        %v7518 = vpack.c.b16 %v4842, %v4838
        %v7519 = vpack.c.b16 %v4843, %v4839
        %v7520 = vpack.c.b16 %v4844, %v4840
        %v7521 = vpack.c.b16 %v4849, %v4845
        %v7522 = vpack.c.b16 %v4850, %v4846
        %v7523 = vpack.c.b16 %v4851, %v4847
        %v7524 = vpack.c.b16 %v4852, %v4848
        %v7525 = vpack.c.b16 %v4857, %v4853
        %v7526 = vpack.c.b16 %v4858, %v4854
        %v7527 = vpack.c.b16 %v4859, %v4855
        %v7528 = vpack.c.b16 %v4860, %v4856
        %v7529 = vpack.c.b16 %v4865, %v4861
        %v7530 = vpack.c.b16 %v4866, %v4862
        %v7531 = vpack.c.b16 %v4867, %v4863
        %v7532 = vpack.c.b16 %v4868, %v4864
        %v7533 = vpack.c.b16 %v4873, %v4869
        %v7534 = vpack.c.b16 %v4874, %v4870
        %v7535 = vpack.c.b16 %v4875, %v4871
        %v7536 = vpack.c.b16 %v4876, %v4872
        %v7537 = vpack.c.b16 %v4881, %v4877
        %v7538 = vpack.c.b16 %v4882, %v4878
        %v7539 = vpack.c.b16 %v4883, %v4879
        %v7540 = vpack.c.b16 %v4884, %v4880
        %v7541 = vpack.c.b16 %v4889, %v4885
        %v7542 = vpack.c.b16 %v4890, %v4886
        %v7543 = vpack.c.b16 %v4891, %v4887
        %v7544 = vpack.c.b16 %v4892, %v4888
        %v7545 = vpack.c.b16 %v4897, %v4893
        %v7546 = vpack.c.b16 %v4898, %v4894
        %v7547 = vpack.c.b16 %v4899, %v4895
        %v7548 = vpack.c.b16 %v4900, %v4896
        %v7549 = vpack.c.b16 %v4905, %v4901
        %v7550 = vpack.c.b16 %v4906, %v4902
        %v7551 = vpack.c.b16 %v4907, %v4903
        %v7552 = vpack.c.b16 %v4908, %v4904
        %v7553 = vpack.c.b16 %v4913, %v4909
        %v7554 = vpack.c.b16 %v4914, %v4910
        %v7555 = vpack.c.b16 %v4915, %v4911
        %v7556 = vpack.c.b16 %v4916, %v4912
        %v7557 = vpack.c.b16 %v4921, %v4917
        %v7558 = vpack.c.b16 %v4922, %v4918
        %v7559 = vpack.c.b16 %v4923, %v4919
        %v7560 = vpack.c.b16 %v4924, %v4920
        %v7561 = vpack.c.b16 %v4929, %v4925
        %v7562 = vpack.c.b16 %v4930, %v4926
        %v7563 = vpack.c.b16 %v4931, %v4927
        %v7564 = vpack.c.b16 %v4932, %v4928
        %v7565 = vpack.c.b16 %v4937, %v4933
        %v7566 = vpack.c.b16 %v4938, %v4934
        %v7567 = vpack.c.b16 %v4939, %v4935
        %v7568 = vpack.c.b16 %v4940, %v4936
        %v7569 = vpack.c.b16 %v4945, %v4941
        %v7570 = vpack.c.b16 %v4946, %v4942
        %v7571 = vpack.c.b16 %v4947, %v4943
        %v7572 = vpack.c.b16 %v4948, %v4944
        %v7573 = vpack.c.b16 %v4953, %v4949
        %v7574 = vpack.c.b16 %v4954, %v4950
        %v7575 = vpack.c.b16 %v4955, %v4951
        %v7576 = vpack.c.b16 %v4956, %v4952
        %v7577 = vpack.c.b16 %v4961, %v4957
        %v7578 = vpack.c.b16 %v4962, %v4958
        %v7579 = vpack.c.b16 %v4963, %v4959
        %v7580 = vpack.c.b16 %v4964, %v4960
        %v7581 = vpack.c.b16 %v4969, %v4965
        %v7582 = vpack.c.b16 %v4970, %v4966
        %v7583 = vpack.c.b16 %v4971, %v4967
        %v7584 = vpack.c.b16 %v4972, %v4968
        %v7585 = vpack.c.b16 %v4977, %v4973
        %v7586 = vpack.c.b16 %v4978, %v4974
        %v7587 = vpack.c.b16 %v4979, %v4975
        %v7588 = vpack.c.b16 %v4980, %v4976
        %v7589 = vpack.c.b16 %v4985, %v4981
        %v7590 = vpack.c.b16 %v4986, %v4982
        %v7591 = vpack.c.b16 %v4987, %v4983
        %v7592 = vpack.c.b16 %v4988, %v4984
        %v7593 = vpack.c.b16 %v4993, %v4989
        %v7594 = vpack.c.b16 %v4994, %v4990
        %v7595 = vpack.c.b16 %v4995, %v4991
        %v7596 = vpack.c.b16 %v4996, %v4992
        %v7597 = vpack.c.b16 %v5001, %v4997
        %v7598 = vpack.c.b16 %v5002, %v4998
        %v7599 = vpack.c.b16 %v5003, %v4999
        %v7600 = vpack.c.b16 %v5004, %v5000
        %v7601 = vpack.c.b16 %v5009, %v5005
        %v7602 = vpack.c.b16 %v5010, %v5006
        %v7603 = vpack.c.b16 %v5011, %v5007
        %v7604 = vpack.c.b16 %v5012, %v5008
        %v7605 = vpack.c.b16 %v5017, %v5013
        %v7606 = vpack.c.b16 %v5018, %v5014
        %v7607 = vpack.c.b16 %v5019, %v5015
        %v7608 = vpack.c.b16 %v5020, %v5016
        %v7609 = vpack.c.b16 %v5025, %v5021
        %v7610 = vpack.c.b16 %v5026, %v5022
        %v7611 = vpack.c.b16 %v5027, %v5023
        %v7612 = vpack.c.b16 %v5028, %v5024
        %v7613 = vpack.c.b16 %v5033, %v5029
        %v7614 = vpack.c.b16 %v5034, %v5030
        %v7615 = vpack.c.b16 %v5035, %v5031
        %v7616 = vpack.c.b16 %v5036, %v5032
        %v7617 = vpack.c.b16 %v5041, %v5037
        %v7618 = vpack.c.b16 %v5042, %v5038
        %v7619 = vpack.c.b16 %v5043, %v5039
        %v7620 = vpack.c.b16 %v5044, %v5040
        %v7621 = vpack.c.b16 %v5049, %v5045
        %v7622 = vpack.c.b16 %v5050, %v5046
        %v7623 = vpack.c.b16 %v5051, %v5047
        %v7624 = vpack.c.b16 %v5052, %v5048
        %v7625 = vpack.c.b16 %v5057, %v5053
        %v7626 = vpack.c.b16 %v5058, %v5054
        %v7627 = vpack.c.b16 %v5059, %v5055
        %v7628 = vpack.c.b16 %v5060, %v5056
        %v7629 = vpack.c.b16 %v5065, %v5061
        %v7630 = vpack.c.b16 %v5066, %v5062
        %v7631 = vpack.c.b16 %v5067, %v5063
        %v7632 = vpack.c.b16 %v5068, %v5064
        %v7633 = vpack.c.b16 %v5073, %v5069
        %v7634 = vpack.c.b16 %v5074, %v5070
        %v7635 = vpack.c.b16 %v5075, %v5071
        %v7636 = vpack.c.b16 %v5076, %v5072
        %v7637 = vpack.c.b16 %v5081, %v5077
        %v7638 = vpack.c.b16 %v5082, %v5078
        %v7639 = vpack.c.b16 %v5083, %v5079
        %v7640 = vpack.c.b16 %v5084, %v5080
        %v7641 = vpack.c.b16 %v5089, %v5085
        %v7642 = vpack.c.b16 %v5090, %v5086
        %v7643 = vpack.c.b16 %v5091, %v5087
        %v7644 = vpack.c.b16 %v5092, %v5088
        %v7645 = vpack.c.b16 %v5097, %v5093
        %v7646 = vpack.c.b16 %v5098, %v5094
        %v7647 = vpack.c.b16 %v5099, %v5095
        %v7648 = vpack.c.b16 %v5100, %v5096
        %v7649 = vpack.c.b16 %v5105, %v5101
        %v7650 = vpack.c.b16 %v5106, %v5102
        %v7651 = vpack.c.b16 %v5107, %v5103
        %v7652 = vpack.c.b16 %v5108, %v5104
        %v7653 = vpack.c.b16 %v5113, %v5109
        %v7654 = vpack.c.b16 %v5114, %v5110
        %v7655 = vpack.c.b16 %v5115, %v5111
        %v7656 = vpack.c.b16 %v5116, %v5112
        %v7657 = vpack.c.b16 %v5121, %v5117
        %v7658 = vpack.c.b16 %v5122, %v5118
        %v7659 = vpack.c.b16 %v5123, %v5119
        %v7660 = vpack.c.b16 %v5124, %v5120
        %v7661 = vpack.c.b16 %v5129, %v5125
        %v7662 = vpack.c.b16 %v5130, %v5126
        %v7663 = vpack.c.b16 %v5131, %v5127
        %v7664 = vpack.c.b16 %v5132, %v5128
        %v7665 = vpack.c.b16 %v5137, %v5133
        %v7666 = vpack.c.b16 %v5138, %v5134
        %v7667 = vpack.c.b16 %v5139, %v5135
        %v7668 = vpack.c.b16 %v5140, %v5136
        %v7669 = vpack.c.b16 %v5145, %v5141
        %v7670 = vpack.c.b16 %v5146, %v5142
        %v7671 = vpack.c.b16 %v5147, %v5143
        %v7672 = vpack.c.b16 %v5148, %v5144
        %v7673 = vpack.c.b16 %v5153, %v5149
        %v7674 = vpack.c.b16 %v5154, %v5150
        %v7675 = vpack.c.b16 %v5155, %v5151
        %v7676 = vpack.c.b16 %v5156, %v5152
        %v7677 = vpack.c.b16 %v5161, %v5157
        %v7678 = vpack.c.b16 %v5162, %v5158
        %v7679 = vpack.c.b16 %v5163, %v5159
        %v7680 = vpack.c.b16 %v5164, %v5160
        %v7681 = vpack.c.b16 %v5169, %v5165
        %v7682 = vpack.c.b16 %v5170, %v5166
        %v7683 = vpack.c.b16 %v5171, %v5167
        %v7684 = vpack.c.b16 %v5172, %v5168
        %v7685 = vpack.c.b16 %v5177, %v5173
        %v7686 = vpack.c.b16 %v5178, %v5174
        %v7687 = vpack.c.b16 %v5179, %v5175
        %v7688 = vpack.c.b16 %v5180, %v5176
        %v7689 = vpack.c.b16 %v5185, %v5181
        %v7690 = vpack.c.b16 %v5186, %v5182
        %v7691 = vpack.c.b16 %v5187, %v5183
        %v7692 = vpack.c.b16 %v5188, %v5184
        %v7693 = vpack.c.b16 %v5193, %v5189
        %v7694 = vpack.c.b16 %v5194, %v5190
        %v7695 = vpack.c.b16 %v5195, %v5191
        %v7696 = vpack.c.b16 %v5196, %v5192
        %v7697 = vpack.c.b16 %v5201, %v5197
        %v7698 = vpack.c.b16 %v5202, %v5198
        %v7699 = vpack.c.b16 %v5203, %v5199
        %v7700 = vpack.c.b16 %v5204, %v5200
        %v7701 = vpack.c.b16 %v5209, %v5205
        %v7702 = vpack.c.b16 %v5210, %v5206
        %v7703 = vpack.c.b16 %v5211, %v5207
        %v7704 = vpack.c.b16 %v5212, %v5208
        %v7705 = vpack.c.b16 %v5217, %v5213
        %v7706 = vpack.c.b16 %v5218, %v5214
        %v7707 = vpack.c.b16 %v5219, %v5215
        %v7708 = vpack.c.b16 %v5220, %v5216
        %v7709 = vpack.c.b16 %v5225, %v5221
        %v7710 = vpack.c.b16 %v5226, %v5222
        %v7711 = vpack.c.b16 %v5227, %v5223
        %v7712 = vpack.c.b16 %v5228, %v5224
        %v7713 = vpack.c.b16 %v5233, %v5229
        %v7714 = vpack.c.b16 %v5234, %v5230
        %v7715 = vpack.c.b16 %v5235, %v5231
        %v7716 = vpack.c.b16 %v5236, %v5232
        %v7717 = vpack.c.b16 %v5241, %v5237
        %v7718 = vpack.c.b16 %v5242, %v5238
        %v7719 = vpack.c.b16 %v5243, %v5239
        %v7720 = vpack.c.b16 %v5244, %v5240
        %v7721 = vpack.c.b16 %v5249, %v5245
        %v7722 = vpack.c.b16 %v5250, %v5246
        %v7723 = vpack.c.b16 %v5251, %v5247
        %v7724 = vpack.c.b16 %v5252, %v5248
        %v7725 = vpack.c.b16 %v5257, %v5253
        %v7726 = vpack.c.b16 %v5258, %v5254
        %v7727 = vpack.c.b16 %v5259, %v5255
        %v7728 = vpack.c.b16 %v5260, %v5256
        %v7729 = vpack.c.b16 %v5265, %v5261
        %v7730 = vpack.c.b16 %v5266, %v5262
        %v7731 = vpack.c.b16 %v5267, %v5263
        %v7732 = vpack.c.b16 %v5268, %v5264
        %v7733 = vpack.c.b16 %v5273, %v5269
        %v7734 = vpack.c.b16 %v5274, %v5270
        %v7735 = vpack.c.b16 %v5275, %v5271
        %v7736 = vpack.c.b16 %v5276, %v5272
        %v7737 = vpack.c.b16 %v5281, %v5277
        %v7738 = vpack.c.b16 %v5282, %v5278
        %v7739 = vpack.c.b16 %v5283, %v5279
        %v7740 = vpack.c.b16 %v5284, %v5280
        %v7741 = vpack.c.b16 %v5289, %v5285
        %v7742 = vpack.c.b16 %v5290, %v5286
        %v7743 = vpack.c.b16 %v5291, %v5287
        %v7744 = vpack.c.b16 %v5292, %v5288
        %v7745 = vpack.c.b16 %v5297, %v5293
        %v7746 = vpack.c.b16 %v5298, %v5294
        %v7747 = vpack.c.b16 %v5299, %v5295
        %v7748 = vpack.c.b16 %v5300, %v5296
        %v7749 = vpack.c.b16 %v5305, %v5301
        %v7750 = vpack.c.b16 %v5306, %v5302
        %v7751 = vpack.c.b16 %v5307, %v5303
        %v7752 = vpack.c.b16 %v5308, %v5304
        %v7753 = vpack.c.b16 %v5313, %v5309
        %v7754 = vpack.c.b16 %v5314, %v5310
        %v7755 = vpack.c.b16 %v5315, %v5311
        %v7756 = vpack.c.b16 %v5316, %v5312
        %v7757 = vpack.c.b16 %v5321, %v5317
        %v7758 = vpack.c.b16 %v5322, %v5318
        %v7759 = vpack.c.b16 %v5323, %v5319
        %v7760 = vpack.c.b16 %v5324, %v5320
        %v7761 = vpack.c.b16 %v5329, %v5325
        %v7762 = vpack.c.b16 %v5330, %v5326
        %v7763 = vpack.c.b16 %v5331, %v5327
        %v7764 = vpack.c.b16 %v5332, %v5328
        %v7765 = vpack.c.b16 %v5337, %v5333
        %v7766 = vpack.c.b16 %v5338, %v5334
        %v7767 = vpack.c.b16 %v5339, %v5335
        %v7768 = vpack.c.b16 %v5340, %v5336
        %v7769 = vpack.c.b16 %v5345, %v5341
        %v7770 = vpack.c.b16 %v5346, %v5342
        %v7771 = vpack.c.b16 %v5347, %v5343
        %v7772 = vpack.c.b16 %v5348, %v5344
        %v7773 = vpack.c.b16 %v5353, %v5349
        %v7774 = vpack.c.b16 %v5354, %v5350
        %v7775 = vpack.c.b16 %v5355, %v5351
        %v7776 = vpack.c.b16 %v5356, %v5352
        %v7777 = vpack.c.b16 %v5361, %v5357
        %v7778 = vpack.c.b16 %v5362, %v5358
        %v7779 = vpack.c.b16 %v5363, %v5359
        %v7780 = vpack.c.b16 %v5364, %v5360
        %v7781 = vpack.c.b16 %v5369, %v5365
        %v7782 = vpack.c.b16 %v5370, %v5366
        %v7783 = vpack.c.b16 %v5371, %v5367
        %v7784 = vpack.c.b16 %v5372, %v5368
        %v7785 = vpack.c.b16 %v5377, %v5373
        %v7786 = vpack.c.b16 %v5378, %v5374
        %v7787 = vpack.c.b16 %v5379, %v5375
        %v7788 = vpack.c.b16 %v5380, %v5376
        %v7789 = vpack.c.b16 %v5385, %v5381
        %v7790 = vpack.c.b16 %v5386, %v5382
        %v7791 = vpack.c.b16 %v5387, %v5383
        %v7792 = vpack.c.b16 %v5388, %v5384
        %v7793 = vpack.c.b16 %v5393, %v5389
        %v7794 = vpack.c.b16 %v5394, %v5390
        %v7795 = vpack.c.b16 %v5395, %v5391
        %v7796 = vpack.c.b16 %v5396, %v5392
        %v7797 = vpack.c.b16 %v5401, %v5397
        %v7798 = vpack.c.b16 %v5402, %v5398
        %v7799 = vpack.c.b16 %v5403, %v5399
        %v7800 = vpack.c.b16 %v5404, %v5400
        %v7801 = vpack.c.b16 %v5409, %v5405
        %v7802 = vpack.c.b16 %v5410, %v5406
        %v7803 = vpack.c.b16 %v5411, %v5407
        %v7804 = vpack.c.b16 %v5412, %v5408
        %v7805 = vpack.c.b16 %v5417, %v5413
        %v7806 = vpack.c.b16 %v5418, %v5414
        %v7807 = vpack.c.b16 %v5419, %v5415
        %v7808 = vpack.c.b16 %v5420, %v5416
        %v7809 = vpack.c.b16 %v5425, %v5421
        %v7810 = vpack.c.b16 %v5426, %v5422
        %v7811 = vpack.c.b16 %v5427, %v5423
        %v7812 = vpack.c.b16 %v5428, %v5424
        %v7813 = vpack.c.b16 %v5433, %v5429
        %v7814 = vpack.c.b16 %v5434, %v5430
        %v7815 = vpack.c.b16 %v5435, %v5431
        %v7816 = vpack.c.b16 %v5436, %v5432
        %v7817 = vpack.c.b16 %v5441, %v5437
        %v7818 = vpack.c.b16 %v5442, %v5438
        %v7819 = vpack.c.b16 %v5443, %v5439
        %v7820 = vpack.c.b16 %v5444, %v5440
        %v7821 = vpack.c.b16 %v5449, %v5445
        %v7822 = vpack.c.b16 %v5450, %v5446
        %v7823 = vpack.c.b16 %v5451, %v5447
        %v7824 = vpack.c.b16 %v5452, %v5448
        %v7825 = vpack.c.b16 %v5457, %v5453
        %v7826 = vpack.c.b16 %v5458, %v5454
        %v7827 = vpack.c.b16 %v5459, %v5455
        %v7828 = vpack.c.b16 %v5460, %v5456
        %v7829 = vpack.c.b16 %v5465, %v5461
        %v7830 = vpack.c.b16 %v5466, %v5462
        %v7831 = vpack.c.b16 %v5467, %v5463
        %v7832 = vpack.c.b16 %v5468, %v5464
        %v7833 = vpack.c.b16 %v5473, %v5469
        %v7834 = vpack.c.b16 %v5474, %v5470
        %v7835 = vpack.c.b16 %v5475, %v5471
        %v7836 = vpack.c.b16 %v5476, %v5472
        %v7837 = vpack.c.b16 %v5481, %v5477
        %v7838 = vpack.c.b16 %v5482, %v5478
        %v7839 = vpack.c.b16 %v5483, %v5479
        %v7840 = vpack.c.b16 %v5484, %v5480
        %v7841 = vpack.c.b16 %v5489, %v5485
        %v7842 = vpack.c.b16 %v5490, %v5486
        %v7843 = vpack.c.b16 %v5491, %v5487
        %v7844 = vpack.c.b16 %v5492, %v5488
        %v7845 = vpack.c.b16 %v5497, %v5493
        %v7846 = vpack.c.b16 %v5498, %v5494
        %v7847 = vpack.c.b16 %v5499, %v5495
        %v7848 = vpack.c.b16 %v5500, %v5496
        %v7849 = vpack.c.b16 %v5505, %v5501
        %v7850 = vpack.c.b16 %v5506, %v5502
        %v7851 = vpack.c.b16 %v5507, %v5503
        %v7852 = vpack.c.b16 %v5508, %v5504
        %v7853 = vpack.c.b16 %v5513, %v5509
        %v7854 = vpack.c.b16 %v5514, %v5510
        %v7855 = vpack.c.b16 %v5515, %v5511
        %v7856 = vpack.c.b16 %v5516, %v5512
        %v7857 = vpack.c.b16 %v5521, %v5517
        %v7858 = vpack.c.b16 %v5522, %v5518
        %v7859 = vpack.c.b16 %v5523, %v5519
        %v7860 = vpack.c.b16 %v5524, %v5520
        %v7861 = vpack.c.b16 %v5529, %v5525
        %v7862 = vpack.c.b16 %v5530, %v5526
        %v7863 = vpack.c.b16 %v5531, %v5527
        %v7864 = vpack.c.b16 %v5532, %v5528
        %v7865 = vpack.c.b16 %v5537, %v5533
        %v7866 = vpack.c.b16 %v5538, %v5534
        %v7867 = vpack.c.b16 %v5539, %v5535
        %v7868 = vpack.c.b16 %v5540, %v5536
        %v7869 = vpack.c.b16 %v5545, %v5541
        %v7870 = vpack.c.b16 %v5546, %v5542
        %v7871 = vpack.c.b16 %v5547, %v5543
        %v7872 = vpack.c.b16 %v5548, %v5544
        %v7873 = vpack.c.b16 %v5553, %v5549
        %v7874 = vpack.c.b16 %v5554, %v5550
        %v7875 = vpack.c.b16 %v5555, %v5551
        %v7876 = vpack.c.b16 %v5556, %v5552
        %v7877 = vpack.c.b16 %v5561, %v5557
        %v7878 = vpack.c.b16 %v5562, %v5558
        %v7879 = vpack.c.b16 %v5563, %v5559
        %v7880 = vpack.c.b16 %v5564, %v5560
        %v7881 = vpack.c.b16 %v5569, %v5565
        %v7882 = vpack.c.b16 %v5570, %v5566
        %v7883 = vpack.c.b16 %v5571, %v5567
        %v7884 = vpack.c.b16 %v5572, %v5568
        %v7885 = vpack.c.b16 %v5577, %v5573
        %v7886 = vpack.c.b16 %v5578, %v5574
        %v7887 = vpack.c.b16 %v5579, %v5575
        %v7888 = vpack.c.b16 %v5580, %v5576
        %v7889 = vpack.c.b16 %v5585, %v5581
        %v7890 = vpack.c.b16 %v5586, %v5582
        %v7891 = vpack.c.b16 %v5587, %v5583
        %v7892 = vpack.c.b16 %v5588, %v5584
        %v7893 = vpack.c.b16 %v5593, %v5589
        %v7894 = vpack.c.b16 %v5594, %v5590
        %v7895 = vpack.c.b16 %v5595, %v5591
        %v7896 = vpack.c.b16 %v5596, %v5592
        %v7897 = vpack.c.b16 %v5601, %v5597
        %v7898 = vpack.c.b16 %v5602, %v5598
        %v7899 = vpack.c.b16 %v5603, %v5599
        %v7900 = vpack.c.b16 %v5604, %v5600
        %v7901 = vpack.c.b16 %v5609, %v5605
        %v7902 = vpack.c.b16 %v5610, %v5606
        %v7903 = vpack.c.b16 %v5611, %v5607
        %v7904 = vpack.c.b16 %v5612, %v5608
        %v7905 = vpack.c.b16 %v5617, %v5613
        %v7906 = vpack.c.b16 %v5618, %v5614
        %v7907 = vpack.c.b16 %v5619, %v5615
        %v7908 = vpack.c.b16 %v5620, %v5616
        %v7909 = vpack.c.b16 %v5625, %v5621
        %v7910 = vpack.c.b16 %v5626, %v5622
        %v7911 = vpack.c.b16 %v5627, %v5623
        %v7912 = vpack.c.b16 %v5628, %v5624
        %v7913 = vpack.c.b16 %v5633, %v5629
        %v7914 = vpack.c.b16 %v5634, %v5630
        %v7915 = vpack.c.b16 %v5635, %v5631
        %v7916 = vpack.c.b16 %v5636, %v5632
        %v7917 = vpack.c.b16 %v5641, %v5637
        %v7918 = vpack.c.b16 %v5642, %v5638
        %v7919 = vpack.c.b16 %v5643, %v5639
        %v7920 = vpack.c.b16 %v5644, %v5640
        %v7921 = vpack.c.b16 %v5649, %v5645
        %v7922 = vpack.c.b16 %v5650, %v5646
        %v7923 = vpack.c.b16 %v5651, %v5647
        %v7924 = vpack.c.b16 %v5652, %v5648
        %v7925 = vpack.c.b16 %v5657, %v5653
        %v7926 = vpack.c.b16 %v5658, %v5654
        %v7927 = vpack.c.b16 %v5659, %v5655
        %v7928 = vpack.c.b16 %v5660, %v5656
        %v7929 = vpack.c.b16 %v5665, %v5661
        %v7930 = vpack.c.b16 %v5666, %v5662
        %v7931 = vpack.c.b16 %v5667, %v5663
        %v7932 = vpack.c.b16 %v5668, %v5664
        %v7933 = vpack.c.b16 %v5673, %v5669
        %v7934 = vpack.c.b16 %v5674, %v5670
        %v7935 = vpack.c.b16 %v5675, %v5671
        %v7936 = vpack.c.b16 %v5676, %v5672
        %v7937 = vpack.c.b16 %v5681, %v5677
        %v7938 = vpack.c.b16 %v5682, %v5678
        %v7939 = vpack.c.b16 %v5683, %v5679
        %v7940 = vpack.c.b16 %v5684, %v5680
        %v7941 = vpack.c.b16 %v5689, %v5685
        %v7942 = vpack.c.b16 %v5690, %v5686
        %v7943 = vpack.c.b16 %v5691, %v5687
        %v7944 = vpack.c.b16 %v5692, %v5688
        %v7945 = vpack.c.b16 %v5697, %v5693
        %v7946 = vpack.c.b16 %v5698, %v5694
        %v7947 = vpack.c.b16 %v5699, %v5695
        %v7948 = vpack.c.b16 %v5700, %v5696
        %v7949 = vpack.c.b16 %v5705, %v5701
        %v7950 = vpack.c.b16 %v5706, %v5702
        %v7951 = vpack.c.b16 %v5707, %v5703
        %v7952 = vpack.c.b16 %v5708, %v5704
        %v7953 = vpack.c.b16 %v5713, %v5709
        %v7954 = vpack.c.b16 %v5714, %v5710
        %v7955 = vpack.c.b16 %v5715, %v5711
        %v7956 = vpack.c.b16 %v5716, %v5712
        %v7957 = vpack.c.b16 %v5721, %v5717
        %v7958 = vpack.c.b16 %v5722, %v5718
        %v7959 = vpack.c.b16 %v5723, %v5719
        %v7960 = vpack.c.b16 %v5724, %v5720
        %v7961 = vpack.c.b16 %v5729, %v5725
        %v7962 = vpack.c.b16 %v5730, %v5726
        %v7963 = vpack.c.b16 %v5731, %v5727
        %v7964 = vpack.c.b16 %v5732, %v5728
        %v7965 = vpack.c.b16 %v5737, %v5733
        %v7966 = vpack.c.b16 %v5738, %v5734
        %v7967 = vpack.c.b16 %v5739, %v5735
        %v7968 = vpack.c.b16 %v5740, %v5736
        %v7969 = vpack.c.b16 %v5745, %v5741
        %v7970 = vpack.c.b16 %v5746, %v5742
        %v7971 = vpack.c.b16 %v5747, %v5743
        %v7972 = vpack.c.b16 %v5748, %v5744
        %v7973 = vpack.c.b16 %v5753, %v5749
        %v7974 = vpack.c.b16 %v5754, %v5750
        %v7975 = vpack.c.b16 %v5755, %v5751
        %v7976 = vpack.c.b16 %v5756, %v5752
        %v7977 = vpack.c.b16 %v5761, %v5757
        %v7978 = vpack.c.b16 %v5762, %v5758
        %v7979 = vpack.c.b16 %v5763, %v5759
        %v7980 = vpack.c.b16 %v5764, %v5760
        %v7981 = vpack.c.b16 %v5769, %v5765
        %v7982 = vpack.c.b16 %v5770, %v5766
        %v7983 = vpack.c.b16 %v5771, %v5767
        %v7984 = vpack.c.b16 %v5772, %v5768
        %v7985 = vpack.c.b16 %v5777, %v5773
        %v7986 = vpack.c.b16 %v5778, %v5774
        %v7987 = vpack.c.b16 %v5779, %v5775
        %v7988 = vpack.c.b16 %v5780, %v5776
        %v7989 = vpack.c.b16 %v5785, %v5781
        %v7990 = vpack.c.b16 %v5786, %v5782
        %v7991 = vpack.c.b16 %v5787, %v5783
        %v7992 = vpack.c.b16 %v5788, %v5784
        %v7993 = vpack.c.b16 %v5793, %v5789
        %v7994 = vpack.c.b16 %v5794, %v5790
        %v7995 = vpack.c.b16 %v5795, %v5791
        %v7996 = vpack.c.b16 %v5796, %v5792
        %v7997 = vpack.c.b16 %v5801, %v5797
        %v7998 = vpack.c.b16 %v5802, %v5798
        %v7999 = vpack.c.b16 %v5803, %v5799
        %v8000 = vpack.c.b16 %v5804, %v5800
        %v8001 = vpack.c.b16 %v5809, %v5805
        %v8002 = vpack.c.b16 %v5810, %v5806
        %v8003 = vpack.c.b16 %v5811, %v5807
        %v8004 = vpack.c.b16 %v5812, %v5808
        %v8005 = vpack.c.b16 %v5817, %v5813
        %v8006 = vpack.c.b16 %v5818, %v5814
        %v8007 = vpack.c.b16 %v5819, %v5815
        %v8008 = vpack.c.b16 %v5820, %v5816
        %v8009 = vpack.c.b16 %v5825, %v5821
        %v8010 = vpack.c.b16 %v5826, %v5822
        %v8011 = vpack.c.b16 %v5827, %v5823
        %v8012 = vpack.c.b16 %v5828, %v5824
        %v8013 = vpack.c.b16 %v5833, %v5829
        %v8014 = vpack.c.b16 %v5834, %v5830
        %v8015 = vpack.c.b16 %v5835, %v5831
        %v8016 = vpack.c.b16 %v5836, %v5832
        %v8017 = vpack.c.b16 %v5841, %v5837
        %v8018 = vpack.c.b16 %v5842, %v5838
        %v8019 = vpack.c.b16 %v5843, %v5839
        %v8020 = vpack.c.b16 %v5844, %v5840
        %v8021 = vpack.c.b16 %v5849, %v5845
        %v8022 = vpack.c.b16 %v5850, %v5846
        %v8023 = vpack.c.b16 %v5851, %v5847
        %v8024 = vpack.c.b16 %v5852, %v5848
        %v8025 = vpack.c.b16 %v5857, %v5853
        %v8026 = vpack.c.b16 %v5858, %v5854
        %v8027 = vpack.c.b16 %v5859, %v5855
        %v8028 = vpack.c.b16 %v5860, %v5856
        %v8029 = vpack.c.b16 %v5865, %v5861
        %v8030 = vpack.c.b16 %v5866, %v5862
        %v8031 = vpack.c.b16 %v5867, %v5863
        %v8032 = vpack.c.b16 %v5868, %v5864
        %v8033 = vpack.c.b16 %v5873, %v5869
        %v8034 = vpack.c.b16 %v5874, %v5870
        %v8035 = vpack.c.b16 %v5875, %v5871
        %v8036 = vpack.c.b16 %v5876, %v5872
        %v8037 = vpack.c.b16 %v5881, %v5877
        %v8038 = vpack.c.b16 %v5882, %v5878
        %v8039 = vpack.c.b16 %v5883, %v5879
        %v8040 = vpack.c.b16 %v5884, %v5880
        %v8041 = vpack.c.b16 %v5889, %v5885
        %v8042 = vpack.c.b16 %v5890, %v5886
        %v8043 = vpack.c.b16 %v5891, %v5887
        %v8044 = vpack.c.b16 %v5892, %v5888
        %v8045 = vpack.c.b16 %v5897, %v5893
        %v8046 = vpack.c.b16 %v5898, %v5894
        %v8047 = vpack.c.b16 %v5899, %v5895
        %v8048 = vpack.c.b16 %v5900, %v5896
        %v8049 = vpack.c.b16 %v5905, %v5901
        %v8050 = vpack.c.b16 %v5906, %v5902
        %v8051 = vpack.c.b16 %v5907, %v5903
        %v8052 = vpack.c.b16 %v5908, %v5904
        %v8053 = vpack.c.b16 %v5913, %v5909
        %v8054 = vpack.c.b16 %v5914, %v5910
        %v8055 = vpack.c.b16 %v5915, %v5911
        %v8056 = vpack.c.b16 %v5916, %v5912
        %v8057 = vpack.c.b16 %v5921, %v5917
        %v8058 = vpack.c.b16 %v5922, %v5918
        %v8059 = vpack.c.b16 %v5923, %v5919
        %v8060 = vpack.c.b16 %v5924, %v5920
        %v8061 = vpack.c.b16 %v5929, %v5925
        %v8062 = vpack.c.b16 %v5930, %v5926
        %v8063 = vpack.c.b16 %v5931, %v5927
        %v8064 = vpack.c.b16 %v5932, %v5928
        %v8065 = vpack.c.b16 %v5937, %v5933
        %v8066 = vpack.c.b16 %v5938, %v5934
        %v8067 = vpack.c.b16 %v5939, %v5935
        %v8068 = vpack.c.b16 %v5940, %v5936
        %v8069 = vpack.c.b16 %v5945, %v5941
        %v8070 = vpack.c.b16 %v5946, %v5942
        %v8071 = vpack.c.b16 %v5947, %v5943
        %v8072 = vpack.c.b16 %v5948, %v5944
        %v8073 = vpack.c.b16 %v5953, %v5949
        %v8074 = vpack.c.b16 %v5954, %v5950
        %v8075 = vpack.c.b16 %v5955, %v5951
        %v8076 = vpack.c.b16 %v5956, %v5952
        %v8077 = vpack.c.b16 %v5961, %v5957
        %v8078 = vpack.c.b16 %v5962, %v5958
        %v8079 = vpack.c.b16 %v5963, %v5959
        %v8080 = vpack.c.b16 %v5964, %v5960
        %v8081 = vpack.c.b16 %v5969, %v5965
        %v8082 = vpack.c.b16 %v5970, %v5966
        %v8083 = vpack.c.b16 %v5971, %v5967
        %v8084 = vpack.c.b16 %v5972, %v5968
        %v8085 = vpack.c.b16 %v5977, %v5973
        %v8086 = vpack.c.b16 %v5978, %v5974
        %v8087 = vpack.c.b16 %v5979, %v5975
        %v8088 = vpack.c.b16 %v5980, %v5976
        %v8089 = vpack.c.b16 %v5985, %v5981
        %v8090 = vpack.c.b16 %v5986, %v5982
        %v8091 = vpack.c.b16 %v5987, %v5983
        %v8092 = vpack.c.b16 %v5988, %v5984
        %v8093 = vpack.c.b16 %v5993, %v5989
        %v8094 = vpack.c.b16 %v5994, %v5990
        %v8095 = vpack.c.b16 %v5995, %v5991
        %v8096 = vpack.c.b16 %v5996, %v5992
        %v8097 = vpack.c.b16 %v6001, %v5997
        %v8098 = vpack.c.b16 %v6002, %v5998
        %v8099 = vpack.c.b16 %v6003, %v5999
        %v8100 = vpack.c.b16 %v6004, %v6000
        %v8101 = vpack.c.b16 %v6009, %v6005
        %v8102 = vpack.c.b16 %v6010, %v6006
        %v8103 = vpack.c.b16 %v6011, %v6007
        %v8104 = vpack.c.b16 %v6012, %v6008
        %v8105 = vpack.c.b16 %v6017, %v6013
        %v8106 = vpack.c.b16 %v6018, %v6014
        %v8107 = vpack.c.b16 %v6019, %v6015
        %v8108 = vpack.c.b16 %v6020, %v6016
        %v8109 = vpack.c.b16 %v6025, %v6021
        %v8110 = vpack.c.b16 %v6026, %v6022
        %v8111 = vpack.c.b16 %v6027, %v6023
        %v8112 = vpack.c.b16 %v6028, %v6024
        %v8113 = vpack.c.b16 %v6033, %v6029
        %v8114 = vpack.c.b16 %v6034, %v6030
        %v8115 = vpack.c.b16 %v6035, %v6031
        %v8116 = vpack.c.b16 %v6036, %v6032
        %v8117 = vpack.c.b16 %v6041, %v6037
        %v8118 = vpack.c.b16 %v6042, %v6038
        %v8119 = vpack.c.b16 %v6043, %v6039
        %v8120 = vpack.c.b16 %v6044, %v6040
        %v8121 = vpack.c.b16 %v6049, %v6045
        %v8122 = vpack.c.b16 %v6050, %v6046
        %v8123 = vpack.c.b16 %v6051, %v6047
        %v8124 = vpack.c.b16 %v6052, %v6048
        %v8125 = vpack.c.b16 %v6057, %v6053
        %v8126 = vpack.c.b16 %v6058, %v6054
        %v8127 = vpack.c.b16 %v6059, %v6055
        %v8128 = vpack.c.b16 %v6060, %v6056
        %v8129 = vpack.c.b16 %v6065, %v6061
        %v8130 = vpack.c.b16 %v6066, %v6062
        %v8131 = vpack.c.b16 %v6067, %v6063
        %v8132 = vpack.c.b16 %v6068, %v6064
        %v8133 = vpack.c.b16 %v6073, %v6069
        %v8134 = vpack.c.b16 %v6074, %v6070
        %v8135 = vpack.c.b16 %v6075, %v6071
        %v8136 = vpack.c.b16 %v6076, %v6072
        %v8137 = vpack.c.b16 %v6081, %v6077
        %v8138 = vpack.c.b16 %v6082, %v6078
        %v8139 = vpack.c.b16 %v6083, %v6079
        %v8140 = vpack.c.b16 %v6084, %v6080
        %v8141 = vpack.c.b16 %v6089, %v6085
        %v8142 = vpack.c.b16 %v6090, %v6086
        %v8143 = vpack.c.b16 %v6091, %v6087
        %v8144 = vpack.c.b16 %v6092, %v6088
        %v8145 = vpack.c.b16 %v6097, %v6093
        %v8146 = vpack.c.b16 %v6098, %v6094
        %v8147 = vpack.c.b16 %v6099, %v6095
        %v8148 = vpack.c.b16 %v6100, %v6096
        %v8149 = vpack.c.b16 %v6105, %v6101
        %v8150 = vpack.c.b16 %v6106, %v6102
        %v8151 = vpack.c.b16 %v6107, %v6103
        %v8152 = vpack.c.b16 %v6108, %v6104
        %v8153 = vpack.c.b16 %v6113, %v6109
        %v8154 = vpack.c.b16 %v6114, %v6110
        %v8155 = vpack.c.b16 %v6115, %v6111
        %v8156 = vpack.c.b16 %v6116, %v6112
        %v8157 = vpack.c.b16 %v6121, %v6117
        %v8158 = vpack.c.b16 %v6122, %v6118
        %v8159 = vpack.c.b16 %v6123, %v6119
        %v8160 = vpack.c.b16 %v6124, %v6120
        %v8161 = vpack.c.b16 %v6129, %v6125
        %v8162 = vpack.c.b16 %v6130, %v6126
        %v8163 = vpack.c.b16 %v6131, %v6127
        %v8164 = vpack.c.b16 %v6132, %v6128
        %v8165 = vpack.c.b16 %v6137, %v6133
        %v8166 = vpack.c.b16 %v6138, %v6134
        %v8167 = vpack.c.b16 %v6139, %v6135
        %v8168 = vpack.c.b16 %v6140, %v6136
        %v8169 = vpack.c.b16 %v6145, %v6141
        %v8170 = vpack.c.b16 %v6146, %v6142
        %v8171 = vpack.c.b16 %v6147, %v6143
        %v8172 = vpack.c.b16 %v6148, %v6144
        %v8173 = vpack.c.b16 %v6153, %v6149
        %v8174 = vpack.c.b16 %v6154, %v6150
        %v8175 = vpack.c.b16 %v6155, %v6151
        %v8176 = vpack.c.b16 %v6156, %v6152
        %v8177 = vpack.c.b16 %v6161, %v6157
        %v8178 = vpack.c.b16 %v6162, %v6158
        %v8179 = vpack.c.b16 %v6163, %v6159
        %v8180 = vpack.c.b16 %v6164, %v6160
        %v8181 = vpack.c.b16 %v6169, %v6165
        %v8182 = vpack.c.b16 %v6170, %v6166
        %v8183 = vpack.c.b16 %v6171, %v6167
        %v8184 = vpack.c.b16 %v6172, %v6168
        %v8185 = vpack.c.b16 %v6177, %v6173
        %v8186 = vpack.c.b16 %v6178, %v6174
        %v8187 = vpack.c.b16 %v6179, %v6175
        %v8188 = vpack.c.b16 %v6180, %v6176
        %v8189 = vpack.c.b16 %v6185, %v6181
        %v8190 = vpack.c.b16 %v6186, %v6182
        %v8191 = vpack.c.b16 %v6187, %v6183
        %v8192 = vpack.c.b16 %v6188, %v6184
        %v8193 = vpack.c.b16 %v6193, %v6189
        %v8194 = vpack.c.b16 %v6194, %v6190
        %v8195 = vpack.c.b16 %v6195, %v6191
        %v8196 = vpack.c.b16 %v6196, %v6192
        %v8197 = vpack.c.b16 %v6201, %v6197
        %v8198 = vpack.c.b16 %v6202, %v6198
        %v8199 = vpack.c.b16 %v6203, %v6199
        %v8200 = vpack.c.b16 %v6204, %v6200
        %v8201 = vpack.c.b16 %v6209, %v6205
        %v8202 = vpack.c.b16 %v6210, %v6206
        %v8203 = vpack.c.b16 %v6211, %v6207
        %v8204 = vpack.c.b16 %v6212, %v6208
        %v8205 = vpack.c.b16 %v6217, %v6213
        %v8206 = vpack.c.b16 %v6218, %v6214
        %v8207 = vpack.c.b16 %v6219, %v6215
        %v8208 = vpack.c.b16 %v6220, %v6216
        %v8209 = vpack.c.b16 %v6225, %v6221
        %v8210 = vpack.c.b16 %v6226, %v6222
        %v8211 = vpack.c.b16 %v6227, %v6223
        %v8212 = vpack.c.b16 %v6228, %v6224
        %v8213 = vpack.c.b16 %v6233, %v6229
        %v8214 = vpack.c.b16 %v6234, %v6230
        %v8215 = vpack.c.b16 %v6235, %v6231
        %v8216 = vpack.c.b16 %v6236, %v6232
        %v8217 = vpack.c.b16 %v6241, %v6237
        %v8218 = vpack.c.b16 %v6242, %v6238
        %v8219 = vpack.c.b16 %v6243, %v6239
        %v8220 = vpack.c.b16 %v6244, %v6240
        %v8221 = vpack.c.b16 %v6249, %v6245
        %v8222 = vpack.c.b16 %v6250, %v6246
        %v8223 = vpack.c.b16 %v6251, %v6247
        %v8224 = vpack.c.b16 %v6252, %v6248
        %v8225 = vpack.c.b16 %v6257, %v6253
        %v8226 = vpack.c.b16 %v6258, %v6254
        %v8227 = vpack.c.b16 %v6259, %v6255
        %v8228 = vpack.c.b16 %v6260, %v6256
        %v8229 = vpack.c.b16 %v6265, %v6261
        %v8230 = vpack.c.b16 %v6266, %v6262
        %v8231 = vpack.c.b16 %v6267, %v6263
        %v8232 = vpack.c.b16 %v6268, %v6264
        %v8233 = vpack.c.b16 %v6273, %v6269
        %v8234 = vpack.c.b16 %v6274, %v6270
        %v8235 = vpack.c.b16 %v6275, %v6271
        %v8236 = vpack.c.b16 %v6276, %v6272
        %v8237 = vpack.c.b16 %v6281, %v6277
        %v8238 = vpack.c.b16 %v6282, %v6278
        %v8239 = vpack.c.b16 %v6283, %v6279
        %v8240 = vpack.c.b16 %v6284, %v6280
        %v8241 = vpack.c.b16 %v6289, %v6285
        %v8242 = vpack.c.b16 %v6290, %v6286
        %v8243 = vpack.c.b16 %v6291, %v6287
        %v8244 = vpack.c.b16 %v6292, %v6288
        %v8245 = vpack.c.b16 %v6297, %v6293
        %v8246 = vpack.c.b16 %v6298, %v6294
        %v8247 = vpack.c.b16 %v6299, %v6295
        %v8248 = vpack.c.b16 %v6300, %v6296
        %v8249 = vpack.c.b16 %v6305, %v6301
        %v8250 = vpack.c.b16 %v6306, %v6302
        %v8251 = vpack.c.b16 %v6307, %v6303
        %v8252 = vpack.c.b16 %v6308, %v6304
        %v8253 = vpack.c.b16 %v6313, %v6309
        %v8254 = vpack.c.b16 %v6314, %v6310
        %v8255 = vpack.c.b16 %v6315, %v6311
        %v8256 = vpack.c.b16 %v6316, %v6312
        %v8257 = vpack.c.b16 %v6321, %v6317
        %v8258 = vpack.c.b16 %v6322, %v6318
        %v8259 = vpack.c.b16 %v6323, %v6319
        %v8260 = vpack.c.b16 %v6324, %v6320
        %v8261 = vpack.c.b16 %v6329, %v6325
        %v8262 = vpack.c.b16 %v6330, %v6326
        %v8263 = vpack.c.b16 %v6331, %v6327
        %v8264 = vpack.c.b16 %v6332, %v6328
        %v8265 = vpack.c.b16 %v6337, %v6333
        %v8266 = vpack.c.b16 %v6338, %v6334
        %v8267 = vpack.c.b16 %v6339, %v6335
        %v8268 = vpack.c.b16 %v6340, %v6336
        %v8269 = vpack.c.b16 %v6345, %v6341
        %v8270 = vpack.c.b16 %v6346, %v6342
        %v8271 = vpack.c.b16 %v6347, %v6343
        %v8272 = vpack.c.b16 %v6348, %v6344
        %v8273 = vpack.c.b16 %v6353, %v6349
        %v8274 = vpack.c.b16 %v6354, %v6350
        %v8275 = vpack.c.b16 %v6355, %v6351
        %v8276 = vpack.c.b16 %v6356, %v6352
        %v8277 = vpack.c.b16 %v6361, %v6357
        %v8278 = vpack.c.b16 %v6362, %v6358
        %v8279 = vpack.c.b16 %v6363, %v6359
        %v8280 = vpack.c.b16 %v6364, %v6360
        %v8281 = vpack.c.b16 %v6369, %v6365
        %v8282 = vpack.c.b16 %v6370, %v6366
        %v8283 = vpack.c.b16 %v6371, %v6367
        %v8284 = vpack.c.b16 %v6372, %v6368
        %v8285 = vpack.c.b16 %v6377, %v6373
        %v8286 = vpack.c.b16 %v6378, %v6374
        %v8287 = vpack.c.b16 %v6379, %v6375
        %v8288 = vpack.c.b16 %v6380, %v6376
        %v8289 = vpack.c.b16 %v6385, %v6381
        %v8290 = vpack.c.b16 %v6386, %v6382
        %v8291 = vpack.c.b16 %v6387, %v6383
        %v8292 = vpack.c.b16 %v6388, %v6384
        %v8293 = vpack.c.b16 %v6393, %v6389
        %v8294 = vpack.c.b16 %v6394, %v6390
        %v8295 = vpack.c.b16 %v6395, %v6391
        %v8296 = vpack.c.b16 %v6396, %v6392
        %v8297 = vpack.c.b16 %v6401, %v6397
        %v8298 = vpack.c.b16 %v6402, %v6398
        %v8299 = vpack.c.b16 %v6403, %v6399
        %v8300 = vpack.c.b16 %v6404, %v6400
        %v8301 = vpack.c.b16 %v6409, %v6405
        %v8302 = vpack.c.b16 %v6410, %v6406
        %v8303 = vpack.c.b16 %v6411, %v6407
        %v8304 = vpack.c.b16 %v6412, %v6408
        %v8305 = vpack.c.b16 %v6417, %v6413
        %v8306 = vpack.c.b16 %v6418, %v6414
        %v8307 = vpack.c.b16 %v6419, %v6415
        %v8308 = vpack.c.b16 %v6420, %v6416
        %v8309 = vpack.c.b16 %v6425, %v6421
        %v8310 = vpack.c.b16 %v6426, %v6422
        %v8311 = vpack.c.b16 %v6427, %v6423
        %v8312 = vpack.c.b16 %v6428, %v6424
        %v8313 = vpack.c.b16 %v6433, %v6429
        %v8314 = vpack.c.b16 %v6434, %v6430
        %v8315 = vpack.c.b16 %v6435, %v6431
        %v8316 = vpack.c.b16 %v6436, %v6432
        %v8317 = vpack.c.b16 %v6441, %v6437
        %v8318 = vpack.c.b16 %v6442, %v6438
        %v8319 = vpack.c.b16 %v6443, %v6439
        %v8320 = vpack.c.b16 %v6444, %v6440
        %v8321 = vpack.c.b16 %v6449, %v6445
        %v8322 = vpack.c.b16 %v6450, %v6446
        %v8323 = vpack.c.b16 %v6451, %v6447
        %v8324 = vpack.c.b16 %v6452, %v6448
        %v8325 = vpack.c.b16 %v6457, %v6453
        %v8326 = vpack.c.b16 %v6458, %v6454
        %v8327 = vpack.c.b16 %v6459, %v6455
        %v8328 = vpack.c.b16 %v6460, %v6456
        %v8329 = vpack.c.b16 %v6465, %v6461
        %v8330 = vpack.c.b16 %v6466, %v6462
        %v8331 = vpack.c.b16 %v6467, %v6463
        %v8332 = vpack.c.b16 %v6468, %v6464
        %v8333 = vpack.c.b16 %v6473, %v6469
        %v8334 = vpack.c.b16 %v6474, %v6470
        %v8335 = vpack.c.b16 %v6475, %v6471
        %v8336 = vpack.c.b16 %v6476, %v6472
        %v8337 = vpack.c.b16 %v6481, %v6477
        %v8338 = vpack.c.b16 %v6482, %v6478
        %v8339 = vpack.c.b16 %v6483, %v6479
        %v8340 = vpack.c.b16 %v6484, %v6480
        %v8341 = vpack.c.b16 %v6489, %v6485
        %v8342 = vpack.c.b16 %v6490, %v6486
        %v8343 = vpack.c.b16 %v6491, %v6487
        %v8344 = vpack.c.b16 %v6492, %v6488
        %v8345 = vpack.c.b16 %v6497, %v6493
        %v8346 = vpack.c.b16 %v6498, %v6494
        %v8347 = vpack.c.b16 %v6499, %v6495
        %v8348 = vpack.c.b16 %v6500, %v6496
        %v8349 = vpack.c.b16 %v6505, %v6501
        %v8350 = vpack.c.b16 %v6506, %v6502
        %v8351 = vpack.c.b16 %v6507, %v6503
        %v8352 = vpack.c.b16 %v6508, %v6504
        %v8353 = vpack.c.b16 %v6513, %v6509
        %v8354 = vpack.c.b16 %v6514, %v6510
        %v8355 = vpack.c.b16 %v6515, %v6511
        %v8356 = vpack.c.b16 %v6516, %v6512
        %v8357 = vpack.c.b16 %v6521, %v6517
        %v8358 = vpack.c.b16 %v6522, %v6518
        %v8359 = vpack.c.b16 %v6523, %v6519
        %v8360 = vpack.c.b16 %v6524, %v6520
        %v8361 = vpack.c.b16 %v6529, %v6525
        %v8362 = vpack.c.b16 %v6530, %v6526
        %v8363 = vpack.c.b16 %v6531, %v6527
        %v8364 = vpack.c.b16 %v6532, %v6528
        %v8365 = vpack.c.b16 %v6537, %v6533
        %v8366 = vpack.c.b16 %v6538, %v6534
        %v8367 = vpack.c.b16 %v6539, %v6535
        %v8368 = vpack.c.b16 %v6540, %v6536
        %v8369 = vpack.c.b16 %v6545, %v6541
        %v8370 = vpack.c.b16 %v6546, %v6542
        %v8371 = vpack.c.b16 %v6547, %v6543
        %v8372 = vpack.c.b16 %v6548, %v6544
        %v8373 = vpack.c.b16 %v6553, %v6549
        %v8374 = vpack.c.b16 %v6554, %v6550
        %v8375 = vpack.c.b16 %v6555, %v6551
        %v8376 = vpack.c.b16 %v6556, %v6552
        %v8377 = vpack.c.b16 %v6561, %v6557
        %v8378 = vpack.c.b16 %v6562, %v6558
        %v8379 = vpack.c.b16 %v6563, %v6559
        %v8380 = vpack.c.b16 %v6564, %v6560
        %v8381 = vpack.c.b16 %v6569, %v6565
        %v8382 = vpack.c.b16 %v6570, %v6566
        %v8383 = vpack.c.b16 %v6571, %v6567
        %v8384 = vpack.c.b16 %v6572, %v6568
        %v8385 = vpack.c.b16 %v6577, %v6573
        %v8386 = vpack.c.b16 %v6578, %v6574
        %v8387 = vpack.c.b16 %v6579, %v6575
        %v8388 = vpack.c.b16 %v6580, %v6576
        %v8389 = vpack.c.b16 %v6585, %v6581
        %v8390 = vpack.c.b16 %v6586, %v6582
        %v8391 = vpack.c.b16 %v6587, %v6583
        %v8392 = vpack.c.b16 %v6588, %v6584
        %v8393 = vpack.c.b16 %v6593, %v6589
        %v8394 = vpack.c.b16 %v6594, %v6590
        %v8395 = vpack.c.b16 %v6595, %v6591
        %v8396 = vpack.c.b16 %v6596, %v6592
        %v8397 = vpack.c.b16 %v6601, %v6597
        %v8398 = vpack.c.b16 %v6602, %v6598
        %v8399 = vpack.c.b16 %v6603, %v6599
        %v8400 = vpack.c.b16 %v6604, %v6600
        %v8401 = vpack.c.b16 %v6609, %v6605
        %v8402 = vpack.c.b16 %v6610, %v6606
        %v8403 = vpack.c.b16 %v6611, %v6607
        %v8404 = vpack.c.b16 %v6612, %v6608
        %v8405 = vpack.c.b16 %v6617, %v6613
        %v8406 = vpack.c.b16 %v6618, %v6614
        %v8407 = vpack.c.b16 %v6619, %v6615
        %v8408 = vpack.c.b16 %v6620, %v6616
        %v8409 = vpack.c.b16 %v6625, %v6621
        %v8410 = vpack.c.b16 %v6626, %v6622
        %v8411 = vpack.c.b16 %v6627, %v6623
        %v8412 = vpack.c.b16 %v6628, %v6624
        %v8413 = vpack.c.b16 %v6633, %v6629
        %v8414 = vpack.c.b16 %v6634, %v6630
        %v8415 = vpack.c.b16 %v6635, %v6631
        %v8416 = vpack.c.b16 %v6636, %v6632
        %v8417 = vpack.c.b16 %v6641, %v6637
        %v8418 = vpack.c.b16 %v6642, %v6638
        %v8419 = vpack.c.b16 %v6643, %v6639
        %v8420 = vpack.c.b16 %v6644, %v6640
        %v8421 = vpack.c.b16 %v6649, %v6645
        %v8422 = vpack.c.b16 %v6650, %v6646
        %v8423 = vpack.c.b16 %v6651, %v6647
        %v8424 = vpack.c.b16 %v6652, %v6648
        %v8425 = vpack.c.b16 %v6657, %v6653
        %v8426 = vpack.c.b16 %v6658, %v6654
        %v8427 = vpack.c.b16 %v6659, %v6655
        %v8428 = vpack.c.b16 %v6660, %v6656
        %v8429 = vpack.c.b16 %v6665, %v6661
        %v8430 = vpack.c.b16 %v6666, %v6662
        %v8431 = vpack.c.b16 %v6667, %v6663
        %v8432 = vpack.c.b16 %v6668, %v6664
        %v8433 = vpack.c.b16 %v6673, %v6669
        %v8434 = vpack.c.b16 %v6674, %v6670
        %v8435 = vpack.c.b16 %v6675, %v6671
        %v8436 = vpack.c.b16 %v6676, %v6672
        %v8437 = vpack.c.b16 %v6681, %v6677
        %v8438 = vpack.c.b16 %v6682, %v6678
        %v8439 = vpack.c.b16 %v6683, %v6679
        %v8440 = vpack.c.b16 %v6684, %v6680
        %v8441 = vpack.c.b16 %v6689, %v6685
        %v8442 = vpack.c.b16 %v6690, %v6686
        %v8443 = vpack.c.b16 %v6691, %v6687
        %v8444 = vpack.c.b16 %v6692, %v6688
        %v8445 = vpack.c.b16 %v6697, %v6693
        %v8446 = vpack.c.b16 %v6698, %v6694
        %v8447 = vpack.c.b16 %v6699, %v6695
        %v8448 = vpack.c.b16 %v6700, %v6696
        %v8449 = vpack.c.b16 %v6705, %v6701
        %v8450 = vpack.c.b16 %v6706, %v6702
        %v8451 = vpack.c.b16 %v6707, %v6703
        %v8452 = vpack.c.b16 %v6708, %v6704
        %v8453 = vpack.c.b16 %v6713, %v6709
        %v8454 = vpack.c.b16 %v6714, %v6710
        %v8455 = vpack.c.b16 %v6715, %v6711
        %v8456 = vpack.c.b16 %v6716, %v6712
        %v8457 = vpack.c.b16 %v6721, %v6717
        %v8458 = vpack.c.b16 %v6722, %v6718
        %v8459 = vpack.c.b16 %v6723, %v6719
        %v8460 = vpack.c.b16 %v6724, %v6720
        %v8461 = vpack.c.b16 %v6729, %v6725
        %v8462 = vpack.c.b16 %v6730, %v6726
        %v8463 = vpack.c.b16 %v6731, %v6727
        %v8464 = vpack.c.b16 %v6732, %v6728
        %v8465 = vpack.c.b16 %v6737, %v6733
        %v8466 = vpack.c.b16 %v6738, %v6734
        %v8467 = vpack.c.b16 %v6739, %v6735
        %v8468 = vpack.c.b16 %v6740, %v6736
        %v8469 = vpack.c.b16 %v6745, %v6741
        %v8470 = vpack.c.b16 %v6746, %v6742
        %v8471 = vpack.c.b16 %v6747, %v6743
        %v8472 = vpack.c.b16 %v6748, %v6744
        %v8473 = vpack.c.b16 %v6753, %v6749
        %v8474 = vpack.c.b16 %v6754, %v6750
        %v8475 = vpack.c.b16 %v6755, %v6751
        %v8476 = vpack.c.b16 %v6756, %v6752
        %v8477 = vpack.c.b16 %v6761, %v6757
        %v8478 = vpack.c.b16 %v6762, %v6758
        %v8479 = vpack.c.b16 %v6763, %v6759
        %v8480 = vpack.c.b16 %v6764, %v6760
        %v8481 = vpack.c.b16 %v6769, %v6765
        %v8482 = vpack.c.b16 %v6770, %v6766
        %v8483 = vpack.c.b16 %v6771, %v6767
        %v8484 = vpack.c.b16 %v6772, %v6768
        %v8485 = vpack.c.b16 %v6777, %v6773
        %v8486 = vpack.c.b16 %v6778, %v6774
        %v8487 = vpack.c.b16 %v6779, %v6775
        %v8488 = vpack.c.b16 %v6780, %v6776
        %v8489 = vpack.c.b16 %v6785, %v6781
        %v8490 = vpack.c.b16 %v6786, %v6782
        %v8491 = vpack.c.b16 %v6787, %v6783
        %v8492 = vpack.c.b16 %v6788, %v6784
        %v8493 = vpack.c.b16 %v6793, %v6789
        %v8494 = vpack.c.b16 %v6794, %v6790
        %v8495 = vpack.c.b16 %v6795, %v6791
        %v8496 = vpack.c.b16 %v6796, %v6792
        %v8497 = vpack.c.b16 %v6801, %v6797
        %v8498 = vpack.c.b16 %v6802, %v6798
        %v8499 = vpack.c.b16 %v6803, %v6799
        %v8500 = vpack.c.b16 %v6804, %v6800
        %v8501 = vpack.c.b16 %v6809, %v6805
        %v8502 = vpack.c.b16 %v6810, %v6806
        %v8503 = vpack.c.b16 %v6811, %v6807
        %v8504 = vpack.c.b16 %v6812, %v6808
        %v8505 = vpack.c.b16 %v6817, %v6813
        %v8506 = vpack.c.b16 %v6818, %v6814
        %v8507 = vpack.c.b16 %v6819, %v6815
        %v8508 = vpack.c.b16 %v6820, %v6816
        %v8509 = vpack.c.b16 %v6825, %v6821
        %v8510 = vpack.c.b16 %v6826, %v6822
        %v8511 = vpack.c.b16 %v6827, %v6823
        %v8512 = vpack.c.b16 %v6828, %v6824
        %v8513 = vpack.c.b16 %v6833, %v6829
        %v8514 = vpack.c.b16 %v6834, %v6830
        %v8515 = vpack.c.b16 %v6835, %v6831
        %v8516 = vpack.c.b16 %v6836, %v6832
        %v8517 = vpack.c.b16 %v6841, %v6837
        %v8518 = vpack.c.b16 %v6842, %v6838
        %v8519 = vpack.c.b16 %v6843, %v6839
        %v8520 = vpack.c.b16 %v6844, %v6840
        %v8521 = vpack.c.b16 %v6849, %v6845
        %v8522 = vpack.c.b16 %v6850, %v6846
        %v8523 = vpack.c.b16 %v6851, %v6847
        %v8524 = vpack.c.b16 %v6852, %v6848
        %v8525 = vpack.c.b16 %v6857, %v6853
        %v8526 = vpack.c.b16 %v6858, %v6854
        %v8527 = vpack.c.b16 %v6859, %v6855
        %v8528 = vpack.c.b16 %v6860, %v6856
        %v8529 = vpack.c.b16 %v6865, %v6861
        %v8530 = vpack.c.b16 %v6866, %v6862
        %v8531 = vpack.c.b16 %v6867, %v6863
        %v8532 = vpack.c.b16 %v6868, %v6864
        %v8533 = vpack.c.b16 %v6873, %v6869
        %v8534 = vpack.c.b16 %v6874, %v6870
        %v8535 = vpack.c.b16 %v6875, %v6871
        %v8536 = vpack.c.b16 %v6876, %v6872
        %v8537 = vpack.c.b16 %v6881, %v6877
        %v8538 = vpack.c.b16 %v6882, %v6878
        %v8539 = vpack.c.b16 %v6883, %v6879
        %v8540 = vpack.c.b16 %v6884, %v6880
        %v8541 = vpack.c.b16 %v6889, %v6885
        %v8542 = vpack.c.b16 %v6890, %v6886
        %v8543 = vpack.c.b16 %v6891, %v6887
        %v8544 = vpack.c.b16 %v6892, %v6888
        %v8545 = vpack.c.b16 %v6897, %v6893
        %v8546 = vpack.c.b16 %v6898, %v6894
        %v8547 = vpack.c.b16 %v6899, %v6895
        %v8548 = vpack.c.b16 %v6900, %v6896
        %v8549 = vpack.c.b16 %v6905, %v6901
        %v8550 = vpack.c.b16 %v6906, %v6902
        %v8551 = vpack.c.b16 %v6907, %v6903
        %v8552 = vpack.c.b16 %v6908, %v6904
        %v8553 = vpack.c.b16 %v6913, %v6909
        %v8554 = vpack.c.b16 %v6914, %v6910
        %v8555 = vpack.c.b16 %v6915, %v6911
        %v8556 = vpack.c.b16 %v6916, %v6912
        %v8557 = vpack.c.b16 %v6921, %v6917
        %v8558 = vpack.c.b16 %v6922, %v6918
        %v8559 = vpack.c.b16 %v6923, %v6919
        %v8560 = vpack.c.b16 %v6924, %v6920
        %v8561 = vpack.c.b16 %v6929, %v6925
        %v8562 = vpack.c.b16 %v6930, %v6926
        %v8563 = vpack.c.b16 %v6931, %v6927
        %v8564 = vpack.c.b16 %v6932, %v6928
        %v8565 = vpack.c.b16 %v6937, %v6933
        %v8566 = vpack.c.b16 %v6938, %v6934
        %v8567 = vpack.c.b16 %v6939, %v6935
        %v8568 = vpack.c.b16 %v6940, %v6936
        %v8569 = vpack.c.b16 %v6945, %v6941
        %v8570 = vpack.c.b16 %v6946, %v6942
        %v8571 = vpack.c.b16 %v6947, %v6943
        %v8572 = vpack.c.b16 %v6948, %v6944
        %v8573 = vpack.c.b16 %v6953, %v6949
        %v8574 = vpack.c.b16 %v6954, %v6950
        %v8575 = vpack.c.b16 %v6955, %v6951
        %v8576 = vpack.c.b16 %v6956, %v6952
        %v8577 = vpack.c.b16 %v6961, %v6957
        %v8578 = vpack.c.b16 %v6962, %v6958
        %v8579 = vpack.c.b16 %v6963, %v6959
        %v8580 = vpack.c.b16 %v6964, %v6960
        %v8581 = vpack.c.b16 %v6969, %v6965
        %v8582 = vpack.c.b16 %v6970, %v6966
        %v8583 = vpack.c.b16 %v6971, %v6967
        %v8584 = vpack.c.b16 %v6972, %v6968
        %v8585 = vpack.c.b16 %v6977, %v6973
        %v8586 = vpack.c.b16 %v6978, %v6974
        %v8587 = vpack.c.b16 %v6979, %v6975
        %v8588 = vpack.c.b16 %v6980, %v6976
        %v8589 = vpack.c.b16 %v6985, %v6981
        %v8590 = vpack.c.b16 %v6986, %v6982
        %v8591 = vpack.c.b16 %v6987, %v6983
        %v8592 = vpack.c.b16 %v6988, %v6984
        %v8593 = vpack.c.b16 %v6993, %v6989
        %v8594 = vpack.c.b16 %v6994, %v6990
        %v8595 = vpack.c.b16 %v6995, %v6991
        %v8596 = vpack.c.b16 %v6996, %v6992
        %v8597 = vpack.c.b16 %v7001, %v6997
        %v8598 = vpack.c.b16 %v7002, %v6998
        %v8599 = vpack.c.b16 %v7003, %v6999
        %v8600 = vpack.c.b16 %v7004, %v7000
        %v8601 = vpack.c.b16 %v7009, %v7005
        %v8602 = vpack.c.b16 %v7010, %v7006
        %v8603 = vpack.c.b16 %v7011, %v7007
        %v8604 = vpack.c.b16 %v7012, %v7008
        %v8605 = vpack.c.b16 %v7017, %v7013
        %v8606 = vpack.c.b16 %v7018, %v7014
        %v8607 = vpack.c.b16 %v7019, %v7015
        %v8608 = vpack.c.b16 %v7020, %v7016
        %v8609 = vpack.c.b16 %v7025, %v7021
        %v8610 = vpack.c.b16 %v7026, %v7022
        %v8611 = vpack.c.b16 %v7027, %v7023
        %v8612 = vpack.c.b16 %v7028, %v7024
        %v8613 = vpack.c.b16 %v7033, %v7029
        %v8614 = vpack.c.b16 %v7034, %v7030
        %v8615 = vpack.c.b16 %v7035, %v7031
        %v8616 = vpack.c.b16 %v7036, %v7032
        %v8617 = vpack.c.b16 %v7041, %v7037
        %v8618 = vpack.c.b16 %v7042, %v7038
        %v8619 = vpack.c.b16 %v7043, %v7039
        %v8620 = vpack.c.b16 %v7044, %v7040
        %v8621 = vpack.c.b16 %v7049, %v7045
        %v8622 = vpack.c.b16 %v7050, %v7046
        %v8623 = vpack.c.b16 %v7051, %v7047
        %v8624 = vpack.c.b16 %v7052, %v7048
        %v8625 = vpack.c.b16 %v7057, %v7053
        %v8626 = vpack.c.b16 %v7058, %v7054
        %v8627 = vpack.c.b16 %v7059, %v7055
        %v8628 = vpack.c.b16 %v7060, %v7056
        %10197 = vmatprep.subr.bf16.mxu0 %v7062
        %10198 = vmatpush1.bf16.msra.mxu0 %v7061
        %10199 = vmatprep.subr.bf16.mxu0 %v7066
        %10200 = vmatpush1.bf16.msra.mxu0 %v7065
        %10201 = vmatprep.subr.bf16.mxu0 %v7070
        %10202 = vmatpush1.bf16.msra.mxu0 %v7069
        %10203 = vmatprep.subr.bf16.mxu0 %v7074
        %10204 = vmatpush1.bf16.msra.mxu0 %v7073
        %10205 = vmatprep.subr.bf16.mxu0 %v7078
        %10206 = vmatpush1.bf16.msra.mxu0 %v7077
        %10207 = vmatprep.subr.bf16.mxu0 %v7082
        %10208 = vmatpush1.bf16.msra.mxu0 %v7081
        %10209 = vmatprep.subr.bf16.mxu0 %v7086
        %10210 = vmatpush1.bf16.msra.mxu0 %v7085
        %10211 = vmatprep.subr.bf16.mxu0 %v7090
        %10212 = vmatpush1.bf16.msra.mxu0 %v7089
        %10213 = vmatprep.subr.bf16.mxu0 %v7094
        %10214 = vmatpush1.bf16.msra.mxu0 %v7093
        %10215 = vmatprep.subr.bf16.mxu0 %v7098
        %10216 = vmatpush1.bf16.msra.mxu0 %v7097
        %10217 = vmatprep.subr.bf16.mxu0 %v7102
        %10218 = vmatpush1.bf16.msra.mxu0 %v7101
        %10219 = vmatprep.subr.bf16.mxu0 %v7106
        %10220 = vmatpush1.bf16.msra.mxu0 %v7105
        %10221 = vmatprep.subr.bf16.mxu0 %v7110
        %10222 = vmatpush1.bf16.msra.mxu0 %v7109
        %10223 = vmatprep.subr.bf16.mxu0 %v7114
        %10224 = vmatpush1.bf16.msra.mxu0 %v7113
        %10225 = vmatprep.subr.bf16.mxu0 %v7118
        %10226 = vmatpush1.bf16.msra.mxu0 %v7117
        %10227 = vmatprep.subr.bf16.mxu0 %v7122
        %10228 = vmatpush1.bf16.msra.mxu0 %v7121
        %10229 = vmatprep.mubr.bf16.mxu0 %v740
        %10230 = vmatmul.mubr.bf16.gmra.mrb[0].mxu0 %v739
        %v10231 = vpop.f32.mrb[0].mxu0
        %v10232 = vadd.f32 0.0, %v10231
        %v10233 = vpop.f32.mrb[0].mxu0
        %v10234 = vadd.f32 0.0, %v10233
        %v10235 = vpop.f32.mrb[0].mxu0
        %v10236 = vpop.f32.mrb[0].mxu0
        %10237 = vdwg.mxu0
        %10238 = vmatprep.subr.bf16.mxu0 %v7126
        %10239 = vmatpush1.bf16.msra.mxu0 %v7125
        %10240 = vmatprep.subr.bf16.mxu0 %v7130
        %10241 = vmatpush1.bf16.msra.mxu0 %v7129
        %10242 = vmatprep.subr.bf16.mxu0 %v7134
        %10243 = vmatpush1.bf16.msra.mxu0 %v7133
        %10244 = vmatprep.subr.bf16.mxu0 %v7138
        %10245 = vmatpush1.bf16.msra.mxu0 %v7137
        %10246 = vmatprep.subr.bf16.mxu0 %v7142
        %10247 = vmatpush1.bf16.msra.mxu0 %v7141
        %10248 = vmatprep.subr.bf16.mxu0 %v7146
        %10249 = vmatpush1.bf16.msra.mxu0 %v7145
        %10250 = vmatprep.subr.bf16.mxu0 %v7150
        %10251 = vmatpush1.bf16.msra.mxu0 %v7149
        %10252 = vmatprep.subr.bf16.mxu0 %v7154
        %10253 = vmatpush1.bf16.msra.mxu0 %v7153
        %10254 = vmatprep.subr.bf16.mxu0 %v7158
        %10255 = vmatpush1.bf16.msra.mxu0 %v7157
        %10256 = vmatprep.subr.bf16.mxu0 %v7162
        %10257 = vmatpush1.bf16.msra.mxu0 %v7161
        %10258 = vmatprep.subr.bf16.mxu0 %v7166
        %10259 = vmatpush1.bf16.msra.mxu0 %v7165
        %10260 = vmatprep.subr.bf16.mxu0 %v7170
        %10261 = vmatpush1.bf16.msra.mxu0 %v7169
        %10262 = vmatprep.subr.bf16.mxu0 %v7174
        %10263 = vmatpush1.bf16.msra.mxu0 %v7173
        %10264 = vmatprep.subr.bf16.mxu0 %v7178
        %10265 = vmatpush1.bf16.msra.mxu0 %v7177
        %10266 = vmatprep.subr.bf16.mxu0 %v7182
        %10267 = vmatpush1.bf16.msra.mxu0 %v7181
        %10268 = vmatprep.subr.bf16.mxu0 %v7186
        %10269 = vmatpush1.bf16.msra.mxu0 %v7185
        %10270 = vmatprep.mubr.bf16.mxu0 %v742
        %10271 = vmatmul.mubr.bf16.gmra.mrb[0].mxu0 %v741
        %v10272 = vpop.f32.mrb[0].mxu0
        %v10273 = vadd.f32 %v10232, %v10272
        %v10274 = vpop.f32.mrb[0].mxu0
        %v10275 = vadd.f32 %v10234, %v10274
        %v10276 = vpop.f32.mrb[0].mxu0
        %v10277 = vpop.f32.mrb[0].mxu0
        %10278 = vdwg.mxu0
        %10279 = vmatprep.subr.bf16.mxu0 %v7190
        %10280 = vmatpush1.bf16.msra.mxu0 %v7189
        %10281 = vmatprep.subr.bf16.mxu0 %v7194
        %10282 = vmatpush1.bf16.msra.mxu0 %v7193
        %10283 = vmatprep.subr.bf16.mxu0 %v7198
        %10284 = vmatpush1.bf16.msra.mxu0 %v7197
        %10285 = vmatprep.subr.bf16.mxu0 %v7202
        %10286 = vmatpush1.bf16.msra.mxu0 %v7201
        %10287 = vmatprep.subr.bf16.mxu0 %v7206
        %10288 = vmatpush1.bf16.msra.mxu0 %v7205
        %10289 = vmatprep.subr.bf16.mxu0 %v7210
        %10290 = vmatpush1.bf16.msra.mxu0 %v7209
        %10291 = vmatprep.subr.bf16.mxu0 %v7214
        %10292 = vmatpush1.bf16.msra.mxu0 %v7213
        %10293 = vmatprep.subr.bf16.mxu0 %v7218
        %10294 = vmatpush1.bf16.msra.mxu0 %v7217
        %10295 = vmatprep.subr.bf16.mxu0 %v7222
        %10296 = vmatpush1.bf16.msra.mxu0 %v7221
        %10297 = vmatprep.subr.bf16.mxu0 %v7226
        %10298 = vmatpush1.bf16.msra.mxu0 %v7225
        %10299 = vmatprep.subr.bf16.mxu0 %v7230
        %10300 = vmatpush1.bf16.msra.mxu0 %v7229
        %10301 = vmatprep.subr.bf16.mxu0 %v7234
        %10302 = vmatpush1.bf16.msra.mxu0 %v7233
        %10303 = vmatprep.subr.bf16.mxu0 %v7238
        %10304 = vmatpush1.bf16.msra.mxu0 %v7237
        %10305 = vmatprep.subr.bf16.mxu0 %v7242
        %10306 = vmatpush1.bf16.msra.mxu0 %v7241
        %10307 = vmatprep.subr.bf16.mxu0 %v7246
        %10308 = vmatpush1.bf16.msra.mxu0 %v7245
        %10309 = vmatprep.subr.bf16.mxu0 %v7250
        %10310 = vmatpush1.bf16.msra.mxu0 %v7249
        %10311 = vmatprep.mubr.bf16.mxu0 %v744
        %10312 = vmatmul.mubr.bf16.gmra.mrb[0].mxu0 %v743
        %v10313 = vpop.f32.mrb[0].mxu0
        %v10314 = vadd.f32 %v10273, %v10313
        %v10315 = vpop.f32.mrb[0].mxu0
        %v10316 = vadd.f32 %v10275, %v10315
        %v10317 = vpop.f32.mrb[0].mxu0
        %v10318 = vpop.f32.mrb[0].mxu0
        %10319 = vdwg.mxu0
        %10320 = vmatprep.subr.bf16.mxu0 %v7254
        %10321 = vmatpush1.bf16.msra.mxu0 %v7253
        %10322 = vmatprep.subr.bf16.mxu0 %v7258
        %10323 = vmatpush1.bf16.msra.mxu0 %v7257
        %10324 = vmatprep.subr.bf16.mxu0 %v7262
        %10325 = vmatpush1.bf16.msra.mxu0 %v7261
        %10326 = vmatprep.subr.bf16.mxu0 %v7266
        %10327 = vmatpush1.bf16.msra.mxu0 %v7265
        %10328 = vmatprep.subr.bf16.mxu0 %v7270
        %10329 = vmatpush1.bf16.msra.mxu0 %v7269
        %10330 = vmatprep.subr.bf16.mxu0 %v7274
        %10331 = vmatpush1.bf16.msra.mxu0 %v7273
        %10332 = vmatprep.subr.bf16.mxu0 %v7278
        %10333 = vmatpush1.bf16.msra.mxu0 %v7277
        %10334 = vmatprep.subr.bf16.mxu0 %v7282
        %10335 = vmatpush1.bf16.msra.mxu0 %v7281
        %10336 = vmatprep.subr.bf16.mxu0 %v7286
        %10337 = vmatpush1.bf16.msra.mxu0 %v7285
        %10338 = vmatprep.subr.bf16.mxu0 %v7290
        %10339 = vmatpush1.bf16.msra.mxu0 %v7289
        %10340 = vmatprep.subr.bf16.mxu0 %v7294
        %10341 = vmatpush1.bf16.msra.mxu0 %v7293
        %10342 = vmatprep.subr.bf16.mxu0 %v7298
        %10343 = vmatpush1.bf16.msra.mxu0 %v7297
        %10344 = vmatprep.subr.bf16.mxu0 %v7302
        %10345 = vmatpush1.bf16.msra.mxu0 %v7301
        %10346 = vmatprep.subr.bf16.mxu0 %v7306
        %10347 = vmatpush1.bf16.msra.mxu0 %v7305
        %10348 = vmatprep.subr.bf16.mxu0 %v7310
        %10349 = vmatpush1.bf16.msra.mxu0 %v7309
        %10350 = vmatprep.subr.bf16.mxu0 %v7314
        %10351 = vmatpush1.bf16.msra.mxu0 %v7313
        %10352 = vmatprep.mubr.bf16.mxu0 %v746
        %10353 = vmatmul.mubr.bf16.gmra.mrb[0].mxu0 %v745
        %v10354 = vpop.f32.mrb[0].mxu0
        %v10355 = vadd.f32 %v10314, %v10354
        %v10356 = vpop.f32.mrb[0].mxu0
        %v10357 = vadd.f32 %v10316, %v10356
        %v10358 = vpop.f32.mrb[0].mxu0
        %v10359 = vpop.f32.mrb[0].mxu0
        %10360 = vdwg.mxu0
        %10361 = vmatprep.subr.bf16.mxu0 %v7318
        %10362 = vmatpush1.bf16.msra.mxu0 %v7317
        %10363 = vmatprep.subr.bf16.mxu0 %v7322
        %10364 = vmatpush1.bf16.msra.mxu0 %v7321
        %10365 = vmatprep.subr.bf16.mxu0 %v7326
        %10366 = vmatpush1.bf16.msra.mxu0 %v7325
        %10367 = vmatprep.subr.bf16.mxu0 %v7330
        %10368 = vmatpush1.bf16.msra.mxu0 %v7329
        %10369 = vmatprep.subr.bf16.mxu0 %v7334
        %10370 = vmatpush1.bf16.msra.mxu0 %v7333
        %10371 = vmatprep.subr.bf16.mxu0 %v7338
        %10372 = vmatpush1.bf16.msra.mxu0 %v7337
        %10373 = vmatprep.subr.bf16.mxu0 %v7342
        %10374 = vmatpush1.bf16.msra.mxu0 %v7341
        %10375 = vmatprep.subr.bf16.mxu0 %v7346
        %10376 = vmatpush1.bf16.msra.mxu0 %v7345
        %10377 = vmatprep.subr.bf16.mxu0 %v7350
        %10378 = vmatpush1.bf16.msra.mxu0 %v7349
        %10379 = vmatprep.subr.bf16.mxu0 %v7354
        %10380 = vmatpush1.bf16.msra.mxu0 %v7353
        %10381 = vmatprep.subr.bf16.mxu0 %v7358
        %10382 = vmatpush1.bf16.msra.mxu0 %v7357
        %10383 = vmatprep.subr.bf16.mxu0 %v7362
        %10384 = vmatpush1.bf16.msra.mxu0 %v7361
        %10385 = vmatprep.subr.bf16.mxu0 %v7366
        %10386 = vmatpush1.bf16.msra.mxu0 %v7365
        %10387 = vmatprep.subr.bf16.mxu0 %v7370
        %10388 = vmatpush1.bf16.msra.mxu0 %v7369
        %10389 = vmatprep.subr.bf16.mxu0 %v7374
        %10390 = vmatpush1.bf16.msra.mxu0 %v7373
        %10391 = vmatprep.subr.bf16.mxu0 %v7378
        %10392 = vmatpush1.bf16.msra.mxu0 %v7377
        %10393 = vmatprep.mubr.bf16.mxu0 %v748
        %10394 = vmatmul.mubr.bf16.gmra.mrb[0].mxu0 %v747
        %v10395 = vpop.f32.mrb[0].mxu0
        %v10396 = vadd.f32 %v10355, %v10395
        %v10397 = vpop.f32.mrb[0].mxu0
        %v10398 = vadd.f32 %v10357, %v10397
        %v10399 = vpop.f32.mrb[0].mxu0
        %v10400 = vpop.f32.mrb[0].mxu0
        %10401 = vdwg.mxu0
        %10402 = vmatprep.subr.bf16.mxu0 %v7382
        %10403 = vmatpush1.bf16.msra.mxu0 %v7381
        %10404 = vmatprep.subr.bf16.mxu0 %v7386
        %10405 = vmatpush1.bf16.msra.mxu0 %v7385
        %10406 = vmatprep.subr.bf16.mxu0 %v7390
        %10407 = vmatpush1.bf16.msra.mxu0 %v7389
        %10408 = vmatprep.subr.bf16.mxu0 %v7394
        %10409 = vmatpush1.bf16.msra.mxu0 %v7393
        %10410 = vmatprep.subr.bf16.mxu0 %v7398
        %10411 = vmatpush1.bf16.msra.mxu0 %v7397
        %10412 = vmatprep.subr.bf16.mxu0 %v7402
        %10413 = vmatpush1.bf16.msra.mxu0 %v7401
        %10414 = vmatprep.subr.bf16.mxu0 %v7406
        %10415 = vmatpush1.bf16.msra.mxu0 %v7405
        %10416 = vmatprep.subr.bf16.mxu0 %v7410
        %10417 = vmatpush1.bf16.msra.mxu0 %v7409
        %10418 = vmatprep.subr.bf16.mxu0 %v7414
        %10419 = vmatpush1.bf16.msra.mxu0 %v7413
        %10420 = vmatprep.subr.bf16.mxu0 %v7418
        %10421 = vmatpush1.bf16.msra.mxu0 %v7417
        %10422 = vmatprep.subr.bf16.mxu0 %v7422
        %10423 = vmatpush1.bf16.msra.mxu0 %v7421
        %10424 = vmatprep.subr.bf16.mxu0 %v7426
        %10425 = vmatpush1.bf16.msra.mxu0 %v7425
        %10426 = vmatprep.subr.bf16.mxu0 %v7430
        %10427 = vmatpush1.bf16.msra.mxu0 %v7429
        %10428 = vmatprep.subr.bf16.mxu0 %v7434
        %10429 = vmatpush1.bf16.msra.mxu0 %v7433
        %10430 = vmatprep.subr.bf16.mxu0 %v7438
        %10431 = vmatpush1.bf16.msra.mxu0 %v7437
        %10432 = vmatprep.subr.bf16.mxu0 %v7442
        %10433 = vmatpush1.bf16.msra.mxu0 %v7441
        %10434 = vmatprep.mubr.bf16.mxu0 %v750
        %10435 = vmatmul.mubr.bf16.gmra.mrb[0].mxu0 %v749
        %v10436 = vpop.f32.mrb[0].mxu0
        %v10437 = vadd.f32 %v10396, %v10436
        %v10438 = vpop.f32.mrb[0].mxu0
        %v10439 = vadd.f32 %v10398, %v10438
        %v10440 = vpop.f32.mrb[0].mxu0
        %v10441 = vpop.f32.mrb[0].mxu0
        %10442 = vdwg.mxu0
        %10443 = vmatprep.subr.bf16.mxu0 %v7446
        %10444 = vmatpush1.bf16.msra.mxu0 %v7445
        %10445 = vmatprep.subr.bf16.mxu0 %v7450
        %10446 = vmatpush1.bf16.msra.mxu0 %v7449
        %10447 = vmatprep.subr.bf16.mxu0 %v7454
        %10448 = vmatpush1.bf16.msra.mxu0 %v7453
        %10449 = vmatprep.subr.bf16.mxu0 %v7458
        %10450 = vmatpush1.bf16.msra.mxu0 %v7457
        %10451 = vmatprep.subr.bf16.mxu0 %v7462
        %10452 = vmatpush1.bf16.msra.mxu0 %v7461
        %10453 = vmatprep.subr.bf16.mxu0 %v7466
        %10454 = vmatpush1.bf16.msra.mxu0 %v7465
        %10455 = vmatprep.subr.bf16.mxu0 %v7470
        %10456 = vmatpush1.bf16.msra.mxu0 %v7469
        %10457 = vmatprep.subr.bf16.mxu0 %v7474
        %10458 = vmatpush1.bf16.msra.mxu0 %v7473
        %10459 = vmatprep.subr.bf16.mxu0 %v7478
        %10460 = vmatpush1.bf16.msra.mxu0 %v7477
        %10461 = vmatprep.subr.bf16.mxu0 %v7482
        %10462 = vmatpush1.bf16.msra.mxu0 %v7481
        %10463 = vmatprep.subr.bf16.mxu0 %v7486
        %10464 = vmatpush1.bf16.msra.mxu0 %v7485
        %10465 = vmatprep.subr.bf16.mxu0 %v7490
        %10466 = vmatpush1.bf16.msra.mxu0 %v7489
        %10467 = vmatprep.subr.bf16.mxu0 %v7494
        %10468 = vmatpush1.bf16.msra.mxu0 %v7493
        %10469 = vmatprep.subr.bf16.mxu0 %v7498
        %10470 = vmatpush1.bf16.msra.mxu0 %v7497
        %10471 = vmatprep.subr.bf16.mxu0 %v7502
        %10472 = vmatpush1.bf16.msra.mxu0 %v7501
        %10473 = vmatprep.subr.bf16.mxu0 %v7506
        %10474 = vmatpush1.bf16.msra.mxu0 %v7505
        %10475 = vmatprep.mubr.bf16.mxu0 %v752
        %10476 = vmatmul.mubr.bf16.gmra.mrb[0].mxu0 %v751
        %v10477 = vpop.f32.mrb[0].mxu0
        %v10478 = vadd.f32 %v10437, %v10477
        %v10479 = vpop.f32.mrb[0].mxu0
        %v10480 = vadd.f32 %v10439, %v10479
        %v10481 = vpop.f32.mrb[0].mxu0
        %v10482 = vpop.f32.mrb[0].mxu0
        %10483 = vdwg.mxu0
        %10484 = vmatprep.subr.bf16.mxu0 %v7510
        %10485 = vmatpush1.bf16.msra.mxu0 %v7509
        %10486 = vmatprep.subr.bf16.mxu0 %v7514
        %10487 = vmatpush1.bf16.msra.mxu0 %v7513
        %10488 = vmatprep.subr.bf16.mxu0 %v7518
        %10489 = vmatpush1.bf16.msra.mxu0 %v7517
        %10490 = vmatprep.subr.bf16.mxu0 %v7522
        %10491 = vmatpush1.bf16.msra.mxu0 %v7521
        %10492 = vmatprep.subr.bf16.mxu0 %v7526
        %10493 = vmatpush1.bf16.msra.mxu0 %v7525
        %10494 = vmatprep.subr.bf16.mxu0 %v7530
        %10495 = vmatpush1.bf16.msra.mxu0 %v7529
        %10496 = vmatprep.subr.bf16.mxu0 %v7534
        %10497 = vmatpush1.bf16.msra.mxu0 %v7533
        %10498 = vmatprep.subr.bf16.mxu0 %v7538
        %10499 = vmatpush1.bf16.msra.mxu0 %v7537
        %10500 = vmatprep.subr.bf16.mxu0 %v7542
        %10501 = vmatpush1.bf16.msra.mxu0 %v7541
        %10502 = vmatprep.subr.bf16.mxu0 %v7546
        %10503 = vmatpush1.bf16.msra.mxu0 %v7545
        %10504 = vmatprep.subr.bf16.mxu0 %v7550
        %10505 = vmatpush1.bf16.msra.mxu0 %v7549
        %10506 = vmatprep.subr.bf16.mxu0 %v7554
        %10507 = vmatpush1.bf16.msra.mxu0 %v7553
        %10508 = vmatprep.subr.bf16.mxu0 %v7558
        %10509 = vmatpush1.bf16.msra.mxu0 %v7557
        %10510 = vmatprep.subr.bf16.mxu0 %v7562
        %10511 = vmatpush1.bf16.msra.mxu0 %v7561
        %10512 = vmatprep.subr.bf16.mxu0 %v7566
        %10513 = vmatpush1.bf16.msra.mxu0 %v7565
        %10514 = vmatprep.subr.bf16.mxu0 %v7570
        %10515 = vmatpush1.bf16.msra.mxu0 %v7569
        %10516 = vmatprep.mubr.bf16.mxu0 %v754
        %10517 = vmatmul.mubr.bf16.gmra.mrb[0].mxu0 %v753
        %v10518 = vpop.f32.mrb[0].mxu0
        %v10519 = vadd.f32 %v10478, %v10518
        %v10520 = vpop.f32.mrb[0].mxu0
        %v10521 = vadd.f32 %v10480, %v10520
        %v10522 = vpop.f32.mrb[0].mxu0
        %v10523 = vpop.f32.mrb[0].mxu0
        %10524 = vdwg.mxu0
        %10525 = vmatprep.subr.bf16.mxu0 %v7574
        %10526 = vmatpush1.bf16.msra.mxu0 %v7573
        %10527 = vmatprep.subr.bf16.mxu0 %v7578
        %10528 = vmatpush1.bf16.msra.mxu0 %v7577
        %10529 = vmatprep.subr.bf16.mxu0 %v7582
        %10530 = vmatpush1.bf16.msra.mxu0 %v7581
        %10531 = vmatprep.subr.bf16.mxu0 %v7586
        %10532 = vmatpush1.bf16.msra.mxu0 %v7585
        %10533 = vmatprep.subr.bf16.mxu0 %v7590
        %10534 = vmatpush1.bf16.msra.mxu0 %v7589
        %10535 = vmatprep.subr.bf16.mxu0 %v7594
        %10536 = vmatpush1.bf16.msra.mxu0 %v7593
        %10537 = vmatprep.subr.bf16.mxu0 %v7598
        %10538 = vmatpush1.bf16.msra.mxu0 %v7597
        %10539 = vmatprep.subr.bf16.mxu0 %v7602
        %10540 = vmatpush1.bf16.msra.mxu0 %v7601
        %10541 = vmatprep.subr.bf16.mxu0 %v7606
        %10542 = vmatpush1.bf16.msra.mxu0 %v7605
        %10543 = vmatprep.subr.bf16.mxu0 %v7610
        %10544 = vmatpush1.bf16.msra.mxu0 %v7609
        %10545 = vmatprep.subr.bf16.mxu0 %v7614
        %10546 = vmatpush1.bf16.msra.mxu0 %v7613
        %10547 = vmatprep.subr.bf16.mxu0 %v7618
        %10548 = vmatpush1.bf16.msra.mxu0 %v7617
        %10549 = vmatprep.subr.bf16.mxu0 %v7622
        %10550 = vmatpush1.bf16.msra.mxu0 %v7621
        %10551 = vmatprep.subr.bf16.mxu0 %v7626
        %10552 = vmatpush1.bf16.msra.mxu0 %v7625
        %10553 = vmatprep.subr.bf16.mxu0 %v7630
        %10554 = vmatpush1.bf16.msra.mxu0 %v7629
        %10555 = vmatprep.subr.bf16.mxu0 %v7634
        %10556 = vmatpush1.bf16.msra.mxu0 %v7633
        %10557 = vmatprep.mubr.bf16.mxu0 %v756
        %10558 = vmatmul.mubr.bf16.gmra.mrb[0].mxu0 %v755
        %v10559 = vpop.f32.mrb[0].mxu0
        %v10560 = vadd.f32 %v10519, %v10559
        %v10561 = vpop.f32.mrb[0].mxu0
        %v10562 = vadd.f32 %v10521, %v10561
        %v10563 = vpop.f32.mrb[0].mxu0
        %v10564 = vpop.f32.mrb[0].mxu0
        %10565 = vdwg.mxu0
        %10566 = vmatprep.subr.bf16.mxu0 %v7638
        %10567 = vmatpush1.bf16.msra.mxu0 %v7637
        %10568 = vmatprep.subr.bf16.mxu0 %v7642
        %10569 = vmatpush1.bf16.msra.mxu0 %v7641
        %10570 = vmatprep.subr.bf16.mxu0 %v7646
        %10571 = vmatpush1.bf16.msra.mxu0 %v7645
        %10572 = vmatprep.subr.bf16.mxu0 %v7650
        %10573 = vmatpush1.bf16.msra.mxu0 %v7649
        %10574 = vmatprep.subr.bf16.mxu0 %v7654
        %10575 = vmatpush1.bf16.msra.mxu0 %v7653
        %10576 = vmatprep.subr.bf16.mxu0 %v7658
        %10577 = vmatpush1.bf16.msra.mxu0 %v7657
        %10578 = vmatprep.subr.bf16.mxu0 %v7662
        %10579 = vmatpush1.bf16.msra.mxu0 %v7661
        %10580 = vmatprep.subr.bf16.mxu0 %v7666
        %10581 = vmatpush1.bf16.msra.mxu0 %v7665
        %10582 = vmatprep.subr.bf16.mxu0 %v7670
        %10583 = vmatpush1.bf16.msra.mxu0 %v7669
        %10584 = vmatprep.subr.bf16.mxu0 %v7674
        %10585 = vmatpush1.bf16.msra.mxu0 %v7673
        %10586 = vmatprep.subr.bf16.mxu0 %v7678
        %10587 = vmatpush1.bf16.msra.mxu0 %v7677
        %10588 = vmatprep.subr.bf16.mxu0 %v7682
        %10589 = vmatpush1.bf16.msra.mxu0 %v7681
        %10590 = vmatprep.subr.bf16.mxu0 %v7686
        %10591 = vmatpush1.bf16.msra.mxu0 %v7685
        %10592 = vmatprep.subr.bf16.mxu0 %v7690
        %10593 = vmatpush1.bf16.msra.mxu0 %v7689
        %10594 = vmatprep.subr.bf16.mxu0 %v7694
        %10595 = vmatpush1.bf16.msra.mxu0 %v7693
        %10596 = vmatprep.subr.bf16.mxu0 %v7698
        %10597 = vmatpush1.bf16.msra.mxu0 %v7697
        %10598 = vmatprep.mubr.bf16.mxu0 %v758
        %10599 = vmatmul.mubr.bf16.gmra.mrb[0].mxu0 %v757
        %v10600 = vpop.f32.mrb[0].mxu0
        %v10601 = vadd.f32 %v10560, %v10600
        %v10602 = vpop.f32.mrb[0].mxu0
        %v10603 = vadd.f32 %v10562, %v10602
        %v10604 = vpop.f32.mrb[0].mxu0
        %v10605 = vpop.f32.mrb[0].mxu0
        %10606 = vdwg.mxu0
        %10607 = vmatprep.subr.bf16.mxu0 %v7702
        %10608 = vmatpush1.bf16.msra.mxu0 %v7701
        %10609 = vmatprep.subr.bf16.mxu0 %v7706
        %10610 = vmatpush1.bf16.msra.mxu0 %v7705
        %10611 = vmatprep.subr.bf16.mxu0 %v7710
        %10612 = vmatpush1.bf16.msra.mxu0 %v7709
        %10613 = vmatprep.subr.bf16.mxu0 %v7714
        %10614 = vmatpush1.bf16.msra.mxu0 %v7713
        %10615 = vmatprep.subr.bf16.mxu0 %v7718
        %10616 = vmatpush1.bf16.msra.mxu0 %v7717
        %10617 = vmatprep.subr.bf16.mxu0 %v7722
        %10618 = vmatpush1.bf16.msra.mxu0 %v7721
        %10619 = vmatprep.subr.bf16.mxu0 %v7726
        %10620 = vmatpush1.bf16.msra.mxu0 %v7725
        %10621 = vmatprep.subr.bf16.mxu0 %v7730
        %10622 = vmatpush1.bf16.msra.mxu0 %v7729
        %10623 = vmatprep.subr.bf16.mxu0 %v7734
        %10624 = vmatpush1.bf16.msra.mxu0 %v7733
        %10625 = vmatprep.subr.bf16.mxu0 %v7738
        %10626 = vmatpush1.bf16.msra.mxu0 %v7737
        %10627 = vmatprep.subr.bf16.mxu0 %v7742
        %10628 = vmatpush1.bf16.msra.mxu0 %v7741
        %10629 = vmatprep.subr.bf16.mxu0 %v7746
        %10630 = vmatpush1.bf16.msra.mxu0 %v7745
        %10631 = vmatprep.subr.bf16.mxu0 %v7750
        %10632 = vmatpush1.bf16.msra.mxu0 %v7749
        %10633 = vmatprep.subr.bf16.mxu0 %v7754
        %10634 = vmatpush1.bf16.msra.mxu0 %v7753
        %10635 = vmatprep.subr.bf16.mxu0 %v7758
        %10636 = vmatpush1.bf16.msra.mxu0 %v7757
        %10637 = vmatprep.subr.bf16.mxu0 %v7762
        %10638 = vmatpush1.bf16.msra.mxu0 %v7761
        %10639 = vmatprep.mubr.bf16.mxu0 %v760
        %10640 = vmatmul.mubr.bf16.gmra.mrb[0].mxu0 %v759
        %v10641 = vpop.f32.mrb[0].mxu0
        %v10642 = vadd.f32 %v10601, %v10641
        %v10643 = vpop.f32.mrb[0].mxu0
        %v10644 = vadd.f32 %v10603, %v10643
        %v10645 = vpop.f32.mrb[0].mxu0
        %v10646 = vpop.f32.mrb[0].mxu0
        %10647 = vdwg.mxu0
        %10648 = vmatprep.subr.bf16.mxu0 %v7766
        %10649 = vmatpush1.bf16.msra.mxu0 %v7765
        %10650 = vmatprep.subr.bf16.mxu0 %v7770
        %10651 = vmatpush1.bf16.msra.mxu0 %v7769
        %10652 = vmatprep.subr.bf16.mxu0 %v7774
        %10653 = vmatpush1.bf16.msra.mxu0 %v7773
        %10654 = vmatprep.subr.bf16.mxu0 %v7778
        %10655 = vmatpush1.bf16.msra.mxu0 %v7777
        %10656 = vmatprep.subr.bf16.mxu0 %v7782
        %10657 = vmatpush1.bf16.msra.mxu0 %v7781
        %10658 = vmatprep.subr.bf16.mxu0 %v7786
        %10659 = vmatpush1.bf16.msra.mxu0 %v7785
        %10660 = vmatprep.subr.bf16.mxu0 %v7790
        %10661 = vmatpush1.bf16.msra.mxu0 %v7789
        %10662 = vmatprep.subr.bf16.mxu0 %v7794
        %10663 = vmatpush1.bf16.msra.mxu0 %v7793
        %10664 = vmatprep.subr.bf16.mxu0 %v7798
        %10665 = vmatpush1.bf16.msra.mxu0 %v7797
        %10666 = vmatprep.subr.bf16.mxu0 %v7802
        %10667 = vmatpush1.bf16.msra.mxu0 %v7801
        %10668 = vmatprep.subr.bf16.mxu0 %v7806
        %10669 = vmatpush1.bf16.msra.mxu0 %v7805
        %10670 = vmatprep.subr.bf16.mxu0 %v7810
        %10671 = vmatpush1.bf16.msra.mxu0 %v7809
        %10672 = vmatprep.subr.bf16.mxu0 %v7814
        %10673 = vmatpush1.bf16.msra.mxu0 %v7813
        %10674 = vmatprep.subr.bf16.mxu0 %v7818
        %10675 = vmatpush1.bf16.msra.mxu0 %v7817
        %10676 = vmatprep.subr.bf16.mxu0 %v7822
        %10677 = vmatpush1.bf16.msra.mxu0 %v7821
        %10678 = vmatprep.subr.bf16.mxu0 %v7826
        %10679 = vmatpush1.bf16.msra.mxu0 %v7825
        %10680 = vmatprep.mubr.bf16.mxu0 %v762
        %10681 = vmatmul.mubr.bf16.gmra.mrb[0].mxu0 %v761
        %v10682 = vpop.f32.mrb[0].mxu0
        %v10683 = vadd.f32 %v10642, %v10682
        %v10684 = vpop.f32.mrb[0].mxu0
        %v10685 = vadd.f32 %v10644, %v10684
        %v10686 = vpop.f32.mrb[0].mxu0
        %v10687 = vpop.f32.mrb[0].mxu0
        %10688 = vdwg.mxu0
        %10689 = vmatprep.subr.bf16.mxu0 %v7830
        %10690 = vmatpush1.bf16.msra.mxu0 %v7829
        %10691 = vmatprep.subr.bf16.mxu0 %v7834
        %10692 = vmatpush1.bf16.msra.mxu0 %v7833
        %10693 = vmatprep.subr.bf16.mxu0 %v7838
        %10694 = vmatpush1.bf16.msra.mxu0 %v7837
        %10695 = vmatprep.subr.bf16.mxu0 %v7842
        %10696 = vmatpush1.bf16.msra.mxu0 %v7841
        %10697 = vmatprep.subr.bf16.mxu0 %v7846
        %10698 = vmatpush1.bf16.msra.mxu0 %v7845
        %10699 = vmatprep.subr.bf16.mxu0 %v7850
        %10700 = vmatpush1.bf16.msra.mxu0 %v7849
        %10701 = vmatprep.subr.bf16.mxu0 %v7854
        %10702 = vmatpush1.bf16.msra.mxu0 %v7853
        %10703 = vmatprep.subr.bf16.mxu0 %v7858
        %10704 = vmatpush1.bf16.msra.mxu0 %v7857
        %10705 = vmatprep.subr.bf16.mxu0 %v7862
        %10706 = vmatpush1.bf16.msra.mxu0 %v7861
        %10707 = vmatprep.subr.bf16.mxu0 %v7866
        %10708 = vmatpush1.bf16.msra.mxu0 %v7865
        %10709 = vmatprep.subr.bf16.mxu0 %v7870
        %10710 = vmatpush1.bf16.msra.mxu0 %v7869
        %10711 = vmatprep.subr.bf16.mxu0 %v7874
        %10712 = vmatpush1.bf16.msra.mxu0 %v7873
        %10713 = vmatprep.subr.bf16.mxu0 %v7878
        %10714 = vmatpush1.bf16.msra.mxu0 %v7877
        %10715 = vmatprep.subr.bf16.mxu0 %v7882
        %10716 = vmatpush1.bf16.msra.mxu0 %v7881
        %10717 = vmatprep.subr.bf16.mxu0 %v7886
        %10718 = vmatpush1.bf16.msra.mxu0 %v7885
        %10719 = vmatprep.subr.bf16.mxu0 %v7890
        %10720 = vmatpush1.bf16.msra.mxu0 %v7889
        %10721 = vmatprep.mubr.bf16.mxu0 %v764
        %10722 = vmatmul.mubr.bf16.gmra.mrb[0].mxu0 %v763
        %v10723 = vpop.f32.mrb[0].mxu0
        %v10724 = vadd.f32 %v10683, %v10723
        %v10725 = vpop.f32.mrb[0].mxu0
        %v10726 = vadd.f32 %v10685, %v10725
        %v10727 = vpop.f32.mrb[0].mxu0
        %v10728 = vpop.f32.mrb[0].mxu0
        %10729 = vdwg.mxu0
        %10730 = vmatprep.subr.bf16.mxu0 %v7894
        %10731 = vmatpush1.bf16.msra.mxu0 %v7893
        %10732 = vmatprep.subr.bf16.mxu0 %v7898
        %10733 = vmatpush1.bf16.msra.mxu0 %v7897
        %10734 = vmatprep.subr.bf16.mxu0 %v7902
        %10735 = vmatpush1.bf16.msra.mxu0 %v7901
        %10736 = vmatprep.subr.bf16.mxu0 %v7906
        %10737 = vmatpush1.bf16.msra.mxu0 %v7905
        %10738 = vmatprep.subr.bf16.mxu0 %v7910
        %10739 = vmatpush1.bf16.msra.mxu0 %v7909
        %10740 = vmatprep.subr.bf16.mxu0 %v7914
        %10741 = vmatpush1.bf16.msra.mxu0 %v7913
        %10742 = vmatprep.subr.bf16.mxu0 %v7918
        %10743 = vmatpush1.bf16.msra.mxu0 %v7917
        %10744 = vmatprep.subr.bf16.mxu0 %v7922
        %10745 = vmatpush1.bf16.msra.mxu0 %v7921
        %10746 = vmatprep.subr.bf16.mxu0 %v7926
        %10747 = vmatpush1.bf16.msra.mxu0 %v7925
        %10748 = vmatprep.subr.bf16.mxu0 %v7930
        %10749 = vmatpush1.bf16.msra.mxu0 %v7929
        %10750 = vmatprep.subr.bf16.mxu0 %v7934
        %10751 = vmatpush1.bf16.msra.mxu0 %v7933
        %10752 = vmatprep.subr.bf16.mxu0 %v7938
        %10753 = vmatpush1.bf16.msra.mxu0 %v7937
        %10754 = vmatprep.subr.bf16.mxu0 %v7942
        %10755 = vmatpush1.bf16.msra.mxu0 %v7941
        %10756 = vmatprep.subr.bf16.mxu0 %v7946
        %10757 = vmatpush1.bf16.msra.mxu0 %v7945
        %10758 = vmatprep.subr.bf16.mxu0 %v7950
        %10759 = vmatpush1.bf16.msra.mxu0 %v7949
        %10760 = vmatprep.subr.bf16.mxu0 %v7954
        %10761 = vmatpush1.bf16.msra.mxu0 %v7953
        %10762 = vmatprep.mubr.bf16.mxu0 %v766
        %10763 = vmatmul.mubr.bf16.gmra.mrb[0].mxu0 %v765
        %v10764 = vpop.f32.mrb[0].mxu0
        %v10765 = vadd.f32 %v10724, %v10764
        %v10766 = vpop.f32.mrb[0].mxu0
        %v10767 = vadd.f32 %v10726, %v10766
        %v10768 = vpop.f32.mrb[0].mxu0
        %v10769 = vpop.f32.mrb[0].mxu0
        %10770 = vdwg.mxu0
        %10771 = vmatprep.subr.bf16.mxu0 %v7958
        %10772 = vmatpush1.bf16.msra.mxu0 %v7957
        %10773 = vmatprep.subr.bf16.mxu0 %v7962
        %10774 = vmatpush1.bf16.msra.mxu0 %v7961
        %10775 = vmatprep.subr.bf16.mxu0 %v7966
        %10776 = vmatpush1.bf16.msra.mxu0 %v7965
        %10777 = vmatprep.subr.bf16.mxu0 %v7970
        %10778 = vmatpush1.bf16.msra.mxu0 %v7969
        %10779 = vmatprep.subr.bf16.mxu0 %v7974
        %10780 = vmatpush1.bf16.msra.mxu0 %v7973
        %10781 = vmatprep.subr.bf16.mxu0 %v7978
        %10782 = vmatpush1.bf16.msra.mxu0 %v7977
        %10783 = vmatprep.subr.bf16.mxu0 %v7982
        %10784 = vmatpush1.bf16.msra.mxu0 %v7981
        %10785 = vmatprep.subr.bf16.mxu0 %v7986
        %10786 = vmatpush1.bf16.msra.mxu0 %v7985
        %10787 = vmatprep.subr.bf16.mxu0 %v7990
        %10788 = vmatpush1.bf16.msra.mxu0 %v7989
        %10789 = vmatprep.subr.bf16.mxu0 %v7994
        %10790 = vmatpush1.bf16.msra.mxu0 %v7993
        %10791 = vmatprep.subr.bf16.mxu0 %v7998
        %10792 = vmatpush1.bf16.msra.mxu0 %v7997
        %10793 = vmatprep.subr.bf16.mxu0 %v8002
        %10794 = vmatpush1.bf16.msra.mxu0 %v8001
        %10795 = vmatprep.subr.bf16.mxu0 %v8006
        %10796 = vmatpush1.bf16.msra.mxu0 %v8005
        %10797 = vmatprep.subr.bf16.mxu0 %v8010
        %10798 = vmatpush1.bf16.msra.mxu0 %v8009
        %10799 = vmatprep.subr.bf16.mxu0 %v8014
        %10800 = vmatpush1.bf16.msra.mxu0 %v8013
        %10801 = vmatprep.subr.bf16.mxu0 %v8018
        %10802 = vmatpush1.bf16.msra.mxu0 %v8017
        %10803 = vmatprep.mubr.bf16.mxu0 %v768
        %10804 = vmatmul.mubr.bf16.gmra.mrb[0].mxu0 %v767
        %v10805 = vpop.f32.mrb[0].mxu0
        %v10806 = vadd.f32 %v10765, %v10805
        %v10807 = vpop.f32.mrb[0].mxu0
        %v10808 = vadd.f32 %v10767, %v10807
        %v10809 = vpop.f32.mrb[0].mxu0
        %v10810 = vpop.f32.mrb[0].mxu0
        %10811 = vdwg.mxu0
        %10812 = vmatprep.subr.bf16.mxu0 %v8022
        %10813 = vmatpush1.bf16.msra.mxu0 %v8021
        %10814 = vmatprep.subr.bf16.mxu0 %v8026
        %10815 = vmatpush1.bf16.msra.mxu0 %v8025
        %10816 = vmatprep.subr.bf16.mxu0 %v8030
        %10817 = vmatpush1.bf16.msra.mxu0 %v8029
        %10818 = vmatprep.subr.bf16.mxu0 %v8034
        %10819 = vmatpush1.bf16.msra.mxu0 %v8033
        %10820 = vmatprep.subr.bf16.mxu0 %v8038
        %10821 = vmatpush1.bf16.msra.mxu0 %v8037
        %10822 = vmatprep.subr.bf16.mxu0 %v8042
        %10823 = vmatpush1.bf16.msra.mxu0 %v8041
        %10824 = vmatprep.subr.bf16.mxu0 %v8046
        %10825 = vmatpush1.bf16.msra.mxu0 %v8045
        %10826 = vmatprep.subr.bf16.mxu0 %v8050
        %10827 = vmatpush1.bf16.msra.mxu0 %v8049
        %10828 = vmatprep.subr.bf16.mxu0 %v8054
        %10829 = vmatpush1.bf16.msra.mxu0 %v8053
        %10830 = vmatprep.subr.bf16.mxu0 %v8058
        %10831 = vmatpush1.bf16.msra.mxu0 %v8057
        %10832 = vmatprep.subr.bf16.mxu0 %v8062
        %10833 = vmatpush1.bf16.msra.mxu0 %v8061
        %10834 = vmatprep.subr.bf16.mxu0 %v8066
        %10835 = vmatpush1.bf16.msra.mxu0 %v8065
        %10836 = vmatprep.subr.bf16.mxu0 %v8070
        %10837 = vmatpush1.bf16.msra.mxu0 %v8069
        %10838 = vmatprep.subr.bf16.mxu0 %v8074
        %10839 = vmatpush1.bf16.msra.mxu0 %v8073
        %10840 = vmatprep.subr.bf16.mxu0 %v8078
        %10841 = vmatpush1.bf16.msra.mxu0 %v8077
        %10842 = vmatprep.subr.bf16.mxu0 %v8082
        %10843 = vmatpush1.bf16.msra.mxu0 %v8081
        %10844 = vmatprep.mubr.bf16.mxu0 %v770
        %10845 = vmatmul.mubr.bf16.gmra.mrb[0].mxu0 %v769
        %v10846 = vpop.f32.mrb[0].mxu0
        %v10847 = vadd.f32 %v10806, %v10846
        %v10848 = vpop.f32.mrb[0].mxu0
        %v10849 = vadd.f32 %v10808, %v10848
        %v10850 = vpop.f32.mrb[0].mxu0
        %v10851 = vpop.f32.mrb[0].mxu0
        %10852 = vdwg.mxu0
        %10853 = vmatprep.subr.bf16.mxu0 %v8086
        %10854 = vmatpush1.bf16.msra.mxu0 %v8085
        %10855 = vmatprep.subr.bf16.mxu0 %v8090
        %10856 = vmatpush1.bf16.msra.mxu0 %v8089
        %10857 = vmatprep.subr.bf16.mxu0 %v8094
        %10858 = vmatpush1.bf16.msra.mxu0 %v8093
        %10859 = vmatprep.subr.bf16.mxu0 %v8098
        %10860 = vmatpush1.bf16.msra.mxu0 %v8097
        %10861 = vmatprep.subr.bf16.mxu0 %v8102
        %10862 = vmatpush1.bf16.msra.mxu0 %v8101
        %10863 = vmatprep.subr.bf16.mxu0 %v8106
        %10864 = vmatpush1.bf16.msra.mxu0 %v8105
        %10865 = vmatprep.subr.bf16.mxu0 %v8110
        %10866 = vmatpush1.bf16.msra.mxu0 %v8109
        %10867 = vmatprep.subr.bf16.mxu0 %v8114
        %10868 = vmatpush1.bf16.msra.mxu0 %v8113
        %10869 = vmatprep.subr.bf16.mxu0 %v8118
        %10870 = vmatpush1.bf16.msra.mxu0 %v8117
        %10871 = vmatprep.subr.bf16.mxu0 %v8122
        %10872 = vmatpush1.bf16.msra.mxu0 %v8121
        %10873 = vmatprep.subr.bf16.mxu0 %v8126
        %10874 = vmatpush1.bf16.msra.mxu0 %v8125
        %10875 = vmatprep.subr.bf16.mxu0 %v8130
        %10876 = vmatpush1.bf16.msra.mxu0 %v8129
        %10877 = vmatprep.subr.bf16.mxu0 %v8134
        %10878 = vmatpush1.bf16.msra.mxu0 %v8133
        %10879 = vmatprep.subr.bf16.mxu0 %v8138
        %10880 = vmatpush1.bf16.msra.mxu0 %v8137
        %10881 = vmatprep.subr.bf16.mxu0 %v8142
        %10882 = vmatpush1.bf16.msra.mxu0 %v8141
        %10883 = vmatprep.subr.bf16.mxu0 %v8146
        %10884 = vmatpush1.bf16.msra.mxu0 %v8145
        %10885 = vmatprep.mubr.bf16.mxu0 %v772
        %10886 = vmatmul.mubr.bf16.gmra.mrb[0].mxu0 %v771
        %v10887 = vpop.f32.mrb[0].mxu0
        %v10888 = vadd.f32 %v10847, %v10887
        %v10889 = vpop.f32.mrb[0].mxu0
        %v10890 = vadd.f32 %v10849, %v10889
        %v10891 = vpop.f32.mrb[0].mxu0
        %v10892 = vpop.f32.mrb[0].mxu0
        %10893 = vdwg.mxu0
        %10894 = vmatprep.subr.bf16.mxu0 %v8150
        %10895 = vmatpush1.bf16.msra.mxu0 %v8149
        %10896 = vmatprep.subr.bf16.mxu0 %v8154
        %10897 = vmatpush1.bf16.msra.mxu0 %v8153
        %10898 = vmatprep.subr.bf16.mxu0 %v8158
        %10899 = vmatpush1.bf16.msra.mxu0 %v8157
        %10900 = vmatprep.subr.bf16.mxu0 %v8162
        %10901 = vmatpush1.bf16.msra.mxu0 %v8161
        %10902 = vmatprep.subr.bf16.mxu0 %v8166
        %10903 = vmatpush1.bf16.msra.mxu0 %v8165
        %10904 = vmatprep.subr.bf16.mxu0 %v8170
        %10905 = vmatpush1.bf16.msra.mxu0 %v8169
        %10906 = vmatprep.subr.bf16.mxu0 %v8174
        %10907 = vmatpush1.bf16.msra.mxu0 %v8173
        %10908 = vmatprep.subr.bf16.mxu0 %v8178
        %10909 = vmatpush1.bf16.msra.mxu0 %v8177
        %10910 = vmatprep.subr.bf16.mxu0 %v8182
        %10911 = vmatpush1.bf16.msra.mxu0 %v8181
        %10912 = vmatprep.subr.bf16.mxu0 %v8186
        %10913 = vmatpush1.bf16.msra.mxu0 %v8185
        %10914 = vmatprep.subr.bf16.mxu0 %v8190
        %10915 = vmatpush1.bf16.msra.mxu0 %v8189
        %10916 = vmatprep.subr.bf16.mxu0 %v8194
        %10917 = vmatpush1.bf16.msra.mxu0 %v8193
        %10918 = vmatprep.subr.bf16.mxu0 %v8198
        %10919 = vmatpush1.bf16.msra.mxu0 %v8197
        %10920 = vmatprep.subr.bf16.mxu0 %v8202
        %10921 = vmatpush1.bf16.msra.mxu0 %v8201
        %10922 = vmatprep.subr.bf16.mxu0 %v8206
        %10923 = vmatpush1.bf16.msra.mxu0 %v8205
        %10924 = vmatprep.subr.bf16.mxu0 %v8210
        %10925 = vmatpush1.bf16.msra.mxu0 %v8209
        %10926 = vmatprep.mubr.bf16.mxu0 %v774
        %10927 = vmatmul.mubr.bf16.gmra.mrb[0].mxu0 %v773
        %v10928 = vpop.f32.mrb[0].mxu0
        %v10929 = vadd.f32 %v10888, %v10928
        %v10930 = vpop.f32.mrb[0].mxu0
        %v10931 = vadd.f32 %v10890, %v10930
        %v10932 = vpop.f32.mrb[0].mxu0
        %v10933 = vpop.f32.mrb[0].mxu0
        %10934 = vdwg.mxu0
        %10935 = vmatprep.subr.bf16.mxu0 %v8214
        %10936 = vmatpush1.bf16.msra.mxu0 %v8213
        %10937 = vmatprep.subr.bf16.mxu0 %v8218
        %10938 = vmatpush1.bf16.msra.mxu0 %v8217
        %10939 = vmatprep.subr.bf16.mxu0 %v8222
        %10940 = vmatpush1.bf16.msra.mxu0 %v8221
        %10941 = vmatprep.subr.bf16.mxu0 %v8226
        %10942 = vmatpush1.bf16.msra.mxu0 %v8225
        %10943 = vmatprep.subr.bf16.mxu0 %v8230
        %10944 = vmatpush1.bf16.msra.mxu0 %v8229
        %10945 = vmatprep.subr.bf16.mxu0 %v8234
        %10946 = vmatpush1.bf16.msra.mxu0 %v8233
        %10947 = vmatprep.subr.bf16.mxu0 %v8238
        %10948 = vmatpush1.bf16.msra.mxu0 %v8237
        %10949 = vmatprep.subr.bf16.mxu0 %v8242
        %10950 = vmatpush1.bf16.msra.mxu0 %v8241
        %10951 = vmatprep.subr.bf16.mxu0 %v8246
        %10952 = vmatpush1.bf16.msra.mxu0 %v8245
        %10953 = vmatprep.subr.bf16.mxu0 %v8250
        %10954 = vmatpush1.bf16.msra.mxu0 %v8249
        %10955 = vmatprep.subr.bf16.mxu0 %v8254
        %10956 = vmatpush1.bf16.msra.mxu0 %v8253
        %10957 = vmatprep.subr.bf16.mxu0 %v8258
        %10958 = vmatpush1.bf16.msra.mxu0 %v8257
        %10959 = vmatprep.subr.bf16.mxu0 %v8262
        %10960 = vmatpush1.bf16.msra.mxu0 %v8261
        %10961 = vmatprep.subr.bf16.mxu0 %v8266
        %10962 = vmatpush1.bf16.msra.mxu0 %v8265
        %10963 = vmatprep.subr.bf16.mxu0 %v8270
        %10964 = vmatpush1.bf16.msra.mxu0 %v8269
        %10965 = vmatprep.subr.bf16.mxu0 %v8274
        %10966 = vmatpush1.bf16.msra.mxu0 %v8273
        %10967 = vmatprep.mubr.bf16.mxu0 %v776
        %10968 = vmatmul.mubr.bf16.gmra.mrb[0].mxu0 %v775
        %v10969 = vpop.f32.mrb[0].mxu0
        %v10970 = vadd.f32 %v10929, %v10969
        %v10971 = vpop.f32.mrb[0].mxu0
        %v10972 = vadd.f32 %v10931, %v10971
        %v10973 = vpop.f32.mrb[0].mxu0
        %v10974 = vpop.f32.mrb[0].mxu0
        %10975 = vdwg.mxu0
        %10976 = vmatprep.subr.bf16.mxu0 %v8278
        %10977 = vmatpush1.bf16.msra.mxu0 %v8277
        %10978 = vmatprep.subr.bf16.mxu0 %v8282
        %10979 = vmatpush1.bf16.msra.mxu0 %v8281
        %10980 = vmatprep.subr.bf16.mxu0 %v8286
        %10981 = vmatpush1.bf16.msra.mxu0 %v8285
        %10982 = vmatprep.subr.bf16.mxu0 %v8290
        %10983 = vmatpush1.bf16.msra.mxu0 %v8289
        %10984 = vmatprep.subr.bf16.mxu0 %v8294
        %10985 = vmatpush1.bf16.msra.mxu0 %v8293
        %10986 = vmatprep.subr.bf16.mxu0 %v8298
        %10987 = vmatpush1.bf16.msra.mxu0 %v8297
        %10988 = vmatprep.subr.bf16.mxu0 %v8302
        %10989 = vmatpush1.bf16.msra.mxu0 %v8301
        %10990 = vmatprep.subr.bf16.mxu0 %v8306
        %10991 = vmatpush1.bf16.msra.mxu0 %v8305
        %10992 = vmatprep.subr.bf16.mxu0 %v8310
        %10993 = vmatpush1.bf16.msra.mxu0 %v8309
        %10994 = vmatprep.subr.bf16.mxu0 %v8314
        %10995 = vmatpush1.bf16.msra.mxu0 %v8313
        %10996 = vmatprep.subr.bf16.mxu0 %v8318
        %10997 = vmatpush1.bf16.msra.mxu0 %v8317
        %10998 = vmatprep.subr.bf16.mxu0 %v8322
        %10999 = vmatpush1.bf16.msra.mxu0 %v8321
        %11000 = vmatprep.subr.bf16.mxu0 %v8326
        %11001 = vmatpush1.bf16.msra.mxu0 %v8325
        %11002 = vmatprep.subr.bf16.mxu0 %v8330
        %11003 = vmatpush1.bf16.msra.mxu0 %v8329
        %11004 = vmatprep.subr.bf16.mxu0 %v8334
        %11005 = vmatpush1.bf16.msra.mxu0 %v8333
        %11006 = vmatprep.subr.bf16.mxu0 %v8338
        %11007 = vmatpush1.bf16.msra.mxu0 %v8337
        %11008 = vmatprep.mubr.bf16.mxu0 %v778
        %11009 = vmatmul.mubr.bf16.gmra.mrb[0].mxu0 %v777
        %v11010 = vpop.f32.mrb[0].mxu0
        %v11011 = vadd.f32 %v10970, %v11010
        %v11012 = vpop.f32.mrb[0].mxu0
        %v11013 = vadd.f32 %v10972, %v11012
        %v11014 = vpop.f32.mrb[0].mxu0
        %v11015 = vpop.f32.mrb[0].mxu0
        %11016 = vdwg.mxu0
        %11017 = vmatprep.subr.bf16.mxu0 %v8342
        %11018 = vmatpush1.bf16.msra.mxu0 %v8341
        %11019 = vmatprep.subr.bf16.mxu0 %v8346
        %11020 = vmatpush1.bf16.msra.mxu0 %v8345
        %11021 = vmatprep.subr.bf16.mxu0 %v8350
        %11022 = vmatpush1.bf16.msra.mxu0 %v8349
        %11023 = vmatprep.subr.bf16.mxu0 %v8354
        %11024 = vmatpush1.bf16.msra.mxu0 %v8353
        %11025 = vmatprep.subr.bf16.mxu0 %v8358
        %11026 = vmatpush1.bf16.msra.mxu0 %v8357
        %11027 = vmatprep.subr.bf16.mxu0 %v8362
        %11028 = vmatpush1.bf16.msra.mxu0 %v8361
        %11029 = vmatprep.subr.bf16.mxu0 %v8366
        %11030 = vmatpush1.bf16.msra.mxu0 %v8365
        %11031 = vmatprep.subr.bf16.mxu0 %v8370
        %11032 = vmatpush1.bf16.msra.mxu0 %v8369
        %11033 = vmatprep.subr.bf16.mxu0 %v8374
        %11034 = vmatpush1.bf16.msra.mxu0 %v8373
        %11035 = vmatprep.subr.bf16.mxu0 %v8378
        %11036 = vmatpush1.bf16.msra.mxu0 %v8377
        %11037 = vmatprep.subr.bf16.mxu0 %v8382
        %11038 = vmatpush1.bf16.msra.mxu0 %v8381
        %11039 = vmatprep.subr.bf16.mxu0 %v8386
        %11040 = vmatpush1.bf16.msra.mxu0 %v8385
        %11041 = vmatprep.subr.bf16.mxu0 %v8390
        %11042 = vmatpush1.bf16.msra.mxu0 %v8389
        %11043 = vmatprep.subr.bf16.mxu0 %v8394
        %11044 = vmatpush1.bf16.msra.mxu0 %v8393
        %11045 = vmatprep.subr.bf16.mxu0 %v8398
        %11046 = vmatpush1.bf16.msra.mxu0 %v8397
        %11047 = vmatprep.subr.bf16.mxu0 %v8402
        %11048 = vmatpush1.bf16.msra.mxu0 %v8401
        %11049 = vmatprep.mubr.bf16.mxu0 %v780
        %11050 = vmatmul.mubr.bf16.gmra.mrb[0].mxu0 %v779
        %v11051 = vpop.f32.mrb[0].mxu0
        %v11052 = vadd.f32 %v11011, %v11051
        %v11053 = vpop.f32.mrb[0].mxu0
        %v11054 = vadd.f32 %v11013, %v11053
        %v11055 = vpop.f32.mrb[0].mxu0
        %v11056 = vpop.f32.mrb[0].mxu0
        %11057 = vdwg.mxu0
        %11058 = vmatprep.subr.bf16.mxu0 %v8406
        %11059 = vmatpush1.bf16.msra.mxu0 %v8405
        %11060 = vmatprep.subr.bf16.mxu0 %v8410
        %11061 = vmatpush1.bf16.msra.mxu0 %v8409
        %11062 = vmatprep.subr.bf16.mxu0 %v8414
        %11063 = vmatpush1.bf16.msra.mxu0 %v8413
        %11064 = vmatprep.subr.bf16.mxu0 %v8418
        %11065 = vmatpush1.bf16.msra.mxu0 %v8417
        %11066 = vmatprep.subr.bf16.mxu0 %v8422
        %11067 = vmatpush1.bf16.msra.mxu0 %v8421
        %11068 = vmatprep.subr.bf16.mxu0 %v8426
        %11069 = vmatpush1.bf16.msra.mxu0 %v8425
        %11070 = vmatprep.subr.bf16.mxu0 %v8430
        %11071 = vmatpush1.bf16.msra.mxu0 %v8429
        %11072 = vmatprep.subr.bf16.mxu0 %v8434
        %11073 = vmatpush1.bf16.msra.mxu0 %v8433
        %11074 = vmatprep.subr.bf16.mxu0 %v8438
        %11075 = vmatpush1.bf16.msra.mxu0 %v8437
        %11076 = vmatprep.subr.bf16.mxu0 %v8442
        %11077 = vmatpush1.bf16.msra.mxu0 %v8441
        %11078 = vmatprep.subr.bf16.mxu0 %v8446
        %11079 = vmatpush1.bf16.msra.mxu0 %v8445
        %11080 = vmatprep.subr.bf16.mxu0 %v8450
        %11081 = vmatpush1.bf16.msra.mxu0 %v8449
        %11082 = vmatprep.subr.bf16.mxu0 %v8454
        %11083 = vmatpush1.bf16.msra.mxu0 %v8453
        %11084 = vmatprep.subr.bf16.mxu0 %v8458
        %11085 = vmatpush1.bf16.msra.mxu0 %v8457
        %11086 = vmatprep.subr.bf16.mxu0 %v8462
        %11087 = vmatpush1.bf16.msra.mxu0 %v8461
        %11088 = vmatprep.subr.bf16.mxu0 %v8466
        %11089 = vmatpush1.bf16.msra.mxu0 %v8465
        %11090 = vmatprep.mubr.bf16.mxu0 %v782
        %11091 = vmatmul.mubr.bf16.gmra.mrb[0].mxu0 %v781
        %v11092 = vpop.f32.mrb[0].mxu0
        %v11093 = vadd.f32 %v11052, %v11092
        %v11094 = vpop.f32.mrb[0].mxu0
        %v11095 = vadd.f32 %v11054, %v11094
        %v11096 = vpop.f32.mrb[0].mxu0
        %v11097 = vpop.f32.mrb[0].mxu0
        %11098 = vdwg.mxu0
        %11099 = vmatprep.subr.bf16.mxu0 %v8470
        %11100 = vmatpush1.bf16.msra.mxu0 %v8469
        %11101 = vmatprep.subr.bf16.mxu0 %v8474
        %11102 = vmatpush1.bf16.msra.mxu0 %v8473
        %11103 = vmatprep.subr.bf16.mxu0 %v8478
        %11104 = vmatpush1.bf16.msra.mxu0 %v8477
        %11105 = vmatprep.subr.bf16.mxu0 %v8482
        %11106 = vmatpush1.bf16.msra.mxu0 %v8481
        %11107 = vmatprep.subr.bf16.mxu0 %v8486
        %11108 = vmatpush1.bf16.msra.mxu0 %v8485
        %11109 = vmatprep.subr.bf16.mxu0 %v8490
        %11110 = vmatpush1.bf16.msra.mxu0 %v8489
        %11111 = vmatprep.subr.bf16.mxu0 %v8494
        %11112 = vmatpush1.bf16.msra.mxu0 %v8493
        %11113 = vmatprep.subr.bf16.mxu0 %v8498
        %11114 = vmatpush1.bf16.msra.mxu0 %v8497
        %11115 = vmatprep.subr.bf16.mxu0 %v8502
        %11116 = vmatpush1.bf16.msra.mxu0 %v8501
        %11117 = vmatprep.subr.bf16.mxu0 %v8506
        %11118 = vmatpush1.bf16.msra.mxu0 %v8505
        %11119 = vmatprep.subr.bf16.mxu0 %v8510
        %11120 = vmatpush1.bf16.msra.mxu0 %v8509
        %11121 = vmatprep.subr.bf16.mxu0 %v8514
        %11122 = vmatpush1.bf16.msra.mxu0 %v8513
        %11123 = vmatprep.subr.bf16.mxu0 %v8518
        %11124 = vmatpush1.bf16.msra.mxu0 %v8517
        %11125 = vmatprep.subr.bf16.mxu0 %v8522
        %11126 = vmatpush1.bf16.msra.mxu0 %v8521
        %11127 = vmatprep.subr.bf16.mxu0 %v8526
        %11128 = vmatpush1.bf16.msra.mxu0 %v8525
        %11129 = vmatprep.subr.bf16.mxu0 %v8530
        %11130 = vmatpush1.bf16.msra.mxu0 %v8529
        %11131 = vmatprep.mubr.bf16.mxu0 %v784
        %11132 = vmatmul.mubr.bf16.gmra.mrb[0].mxu0 %v783
        %v11133 = vpop.f32.mrb[0].mxu0
        %v11134 = vadd.f32 %v11093, %v11133
        %v11135 = vpop.f32.mrb[0].mxu0
        %v11136 = vadd.f32 %v11095, %v11135
        %v11137 = vpop.f32.mrb[0].mxu0
        %v11138 = vpop.f32.mrb[0].mxu0
        %11139 = vdwg.mxu0
        %11140 = vmatprep.subr.bf16.mxu0 %v8534
        %11141 = vmatpush1.bf16.msra.mxu0 %v8533
        %11142 = vmatprep.subr.bf16.mxu0 %v8538
        %11143 = vmatpush1.bf16.msra.mxu0 %v8537
        %11144 = vmatprep.subr.bf16.mxu0 %v8542
        %11145 = vmatpush1.bf16.msra.mxu0 %v8541
        %11146 = vmatprep.subr.bf16.mxu0 %v8546
        %11147 = vmatpush1.bf16.msra.mxu0 %v8545
        %11148 = vmatprep.subr.bf16.mxu0 %v8550
        %11149 = vmatpush1.bf16.msra.mxu0 %v8549
        %11150 = vmatprep.subr.bf16.mxu0 %v8554
        %11151 = vmatpush1.bf16.msra.mxu0 %v8553
        %11152 = vmatprep.subr.bf16.mxu0 %v8558
        %11153 = vmatpush1.bf16.msra.mxu0 %v8557
        %11154 = vmatprep.subr.bf16.mxu0 %v8562
        %11155 = vmatpush1.bf16.msra.mxu0 %v8561
        %11156 = vmatprep.subr.bf16.mxu0 %v8566
        %11157 = vmatpush1.bf16.msra.mxu0 %v8565
        %11158 = vmatprep.subr.bf16.mxu0 %v8570
        %11159 = vmatpush1.bf16.msra.mxu0 %v8569
        %11160 = vmatprep.subr.bf16.mxu0 %v8574
        %11161 = vmatpush1.bf16.msra.mxu0 %v8573
        %11162 = vmatprep.subr.bf16.mxu0 %v8578
        %11163 = vmatpush1.bf16.msra.mxu0 %v8577
        %11164 = vmatprep.subr.bf16.mxu0 %v8582
        %11165 = vmatpush1.bf16.msra.mxu0 %v8581
        %11166 = vmatprep.subr.bf16.mxu0 %v8586
        %11167 = vmatpush1.bf16.msra.mxu0 %v8585
        %11168 = vmatprep.subr.bf16.mxu0 %v8590
        %11169 = vmatpush1.bf16.msra.mxu0 %v8589
        %11170 = vmatprep.subr.bf16.mxu0 %v8594
        %11171 = vmatpush1.bf16.msra.mxu0 %v8593
        %11172 = vmatprep.mubr.bf16.mxu0 %v786
        %11173 = vmatmul.mubr.bf16.gmra.mrb[0].mxu0 %v785
        %v11174 = vpop.f32.mrb[0].mxu0
        %v11175 = vadd.f32 %v11134, %v11174
        %v11176 = vpop.f32.mrb[0].mxu0
        %v11177 = vadd.f32 %v11136, %v11176
        %v11178 = vpop.f32.mrb[0].mxu0
        %v11179 = vpop.f32.mrb[0].mxu0
        %11180 = vdwg.mxu0
        %11181 = vmatprep.subr.bf16.mxu0 %v8598
        %11182 = vmatpush1.bf16.msra.mxu0 %v8597
        %11183 = vmatprep.subr.bf16.mxu0 %v8602
        %11184 = vmatpush1.bf16.msra.mxu0 %v8601
        %11185 = vmatprep.subr.bf16.mxu0 %v8606
        %11186 = vmatpush1.bf16.msra.mxu0 %v8605
        %11187 = vmatprep.subr.bf16.mxu0 %v8610
        %11188 = vmatpush1.bf16.msra.mxu0 %v8609
        %11189 = vmatprep.subr.bf16.mxu0 %v8614
        %11190 = vmatpush1.bf16.msra.mxu0 %v8613
        %11191 = vmatprep.subr.bf16.mxu0 %v8618
        %11192 = vmatpush1.bf16.msra.mxu0 %v8617
        %11193 = vmatprep.subr.bf16.mxu0 %v8622
        %11194 = vmatpush1.bf16.msra.mxu0 %v8621
        %11195 = vmatprep.subr.bf16.mxu0 %v8626
        %11196 = vmatpush1.bf16.msra.mxu0 %v8625
        %11197 = vmatprep.subr.bf16.mxu0 0
        %11198 = vmatpush1.bf16.msra.mxu0 0
        %11199 = vmatprep.subr.bf16.mxu0 0
        %11200 = vmatpush1.bf16.msra.mxu0 0
        %11201 = vmatprep.subr.bf16.mxu0 0
        %11202 = vmatpush1.bf16.msra.mxu0 0
        %11203 = vmatprep.subr.bf16.mxu0 0
        %11204 = vmatpush1.bf16.msra.mxu0 0
        %11205 = vmatprep.subr.bf16.mxu0 0
        %11206 = vmatpush1.bf16.msra.mxu0 0
        %11207 = vmatprep.subr.bf16.mxu0 0
        %11208 = vmatpush1.bf16.msra.mxu0 0
        %11209 = vmatprep.subr.bf16.mxu0 0
        %11210 = vmatpush1.bf16.msra.mxu0 0
        %11211 = vmatprep.subr.bf16.mxu0 0
        %11212 = vmatpush1.bf16.msra.mxu0 0
        %11213 = vmatprep.mubr.bf16.mxu0 0
        %11214 = vmatmul.mubr.bf16.gmra.mrb[0].mxu0 %v787
        %v11215 = vpop.f32.mrb[0].mxu0
        %v11216 = vadd.f32 %v11175, %v11215
        %v11217 = vpop.f32.mrb[0].mxu0
        %v11218 = vadd.f32 %v11177, %v11217
        %v11219 = vpop.f32.mrb[0].mxu0
        %v11220 = vpop.f32.mrb[0].mxu0
        %11221 = vdwg.mxu0
        %11222 = vmatprep.subr.bf16.mxu0 %v7064
        %11223 = vmatpush1.bf16.msra.mxu0 %v7063
        %11224 = vmatprep.subr.bf16.mxu0 %v7068
        %11225 = vmatpush1.bf16.msra.mxu0 %v7067
        %11226 = vmatprep.subr.bf16.mxu0 %v7072
        %11227 = vmatpush1.bf16.msra.mxu0 %v7071
        %11228 = vmatprep.subr.bf16.mxu0 %v7076
        %11229 = vmatpush1.bf16.msra.mxu0 %v7075
        %11230 = vmatprep.subr.bf16.mxu0 %v7080
        %11231 = vmatpush1.bf16.msra.mxu0 %v7079
        %11232 = vmatprep.subr.bf16.mxu0 %v7084
        %11233 = vmatpush1.bf16.msra.mxu0 %v7083
        %11234 = vmatprep.subr.bf16.mxu0 %v7088
        %11235 = vmatpush1.bf16.msra.mxu0 %v7087
        %11236 = vmatprep.subr.bf16.mxu0 %v7092
        %11237 = vmatpush1.bf16.msra.mxu0 %v7091
        %11238 = vmatprep.subr.bf16.mxu0 %v7096
        %11239 = vmatpush1.bf16.msra.mxu0 %v7095
        %11240 = vmatprep.subr.bf16.mxu0 %v7100
        %11241 = vmatpush1.bf16.msra.mxu0 %v7099
        %11242 = vmatprep.subr.bf16.mxu0 %v7104
        %11243 = vmatpush1.bf16.msra.mxu0 %v7103
        %11244 = vmatprep.subr.bf16.mxu0 %v7108
        %11245 = vmatpush1.bf16.msra.mxu0 %v7107
        %11246 = vmatprep.subr.bf16.mxu0 %v7112
        %11247 = vmatpush1.bf16.msra.mxu0 %v7111
        %11248 = vmatprep.subr.bf16.mxu0 %v7116
        %11249 = vmatpush1.bf16.msra.mxu0 %v7115
        %11250 = vmatprep.subr.bf16.mxu0 %v7120
        %11251 = vmatpush1.bf16.msra.mxu0 %v7119
        %11252 = vmatprep.subr.bf16.mxu0 %v7124
        %11253 = vmatpush1.bf16.msra.mxu0 %v7123
        %11254 = vmatprep.mubr.bf16.mxu0 %v740
        %11255 = vmatmul.mubr.bf16.gmra.mrb[0].mxu0 %v739
        %v11256 = vpop.f32.mrb[0].mxu0
        %v11257 = vadd.f32 0.0, %v11256
        %v11258 = vpop.f32.mrb[0].mxu0
        %v11259 = vadd.f32 0.0, %v11258
        %v11260 = vpop.f32.mrb[0].mxu0
        %v11261 = vpop.f32.mrb[0].mxu0
        %11262 = vdwg.mxu0
        %11263 = vmatprep.subr.bf16.mxu0 %v7128
        %11264 = vmatpush1.bf16.msra.mxu0 %v7127
        %11265 = vmatprep.subr.bf16.mxu0 %v7132
        %11266 = vmatpush1.bf16.msra.mxu0 %v7131
        %11267 = vmatprep.subr.bf16.mxu0 %v7136
        %11268 = vmatpush1.bf16.msra.mxu0 %v7135
        %11269 = vmatprep.subr.bf16.mxu0 %v7140
        %11270 = vmatpush1.bf16.msra.mxu0 %v7139
        %11271 = vmatprep.subr.bf16.mxu0 %v7144
        %11272 = vmatpush1.bf16.msra.mxu0 %v7143
        %11273 = vmatprep.subr.bf16.mxu0 %v7148
        %11274 = vmatpush1.bf16.msra.mxu0 %v7147
        %11275 = vmatprep.subr.bf16.mxu0 %v7152
        %11276 = vmatpush1.bf16.msra.mxu0 %v7151
        %11277 = vmatprep.subr.bf16.mxu0 %v7156
        %11278 = vmatpush1.bf16.msra.mxu0 %v7155
        %11279 = vmatprep.subr.bf16.mxu0 %v7160
        %11280 = vmatpush1.bf16.msra.mxu0 %v7159
        %11281 = vmatprep.subr.bf16.mxu0 %v7164
        %11282 = vmatpush1.bf16.msra.mxu0 %v7163
        %11283 = vmatprep.subr.bf16.mxu0 %v7168
        %11284 = vmatpush1.bf16.msra.mxu0 %v7167
        %11285 = vmatprep.subr.bf16.mxu0 %v7172
        %11286 = vmatpush1.bf16.msra.mxu0 %v7171
        %11287 = vmatprep.subr.bf16.mxu0 %v7176
        %11288 = vmatpush1.bf16.msra.mxu0 %v7175
        %11289 = vmatprep.subr.bf16.mxu0 %v7180
        %11290 = vmatpush1.bf16.msra.mxu0 %v7179
        %11291 = vmatprep.subr.bf16.mxu0 %v7184
        %11292 = vmatpush1.bf16.msra.mxu0 %v7183
        %11293 = vmatprep.subr.bf16.mxu0 %v7188
        %11294 = vmatpush1.bf16.msra.mxu0 %v7187
        %11295 = vmatprep.mubr.bf16.mxu0 %v742
        %11296 = vmatmul.mubr.bf16.gmra.mrb[0].mxu0 %v741
        %v11297 = vpop.f32.mrb[0].mxu0
        %v11298 = vadd.f32 %v11257, %v11297
        %v11299 = vpop.f32.mrb[0].mxu0
        %v11300 = vadd.f32 %v11259, %v11299
        %v11301 = vpop.f32.mrb[0].mxu0
        %v11302 = vpop.f32.mrb[0].mxu0
        %11303 = vdwg.mxu0
        %11304 = vmatprep.subr.bf16.mxu0 %v7192
        %11305 = vmatpush1.bf16.msra.mxu0 %v7191
        %11306 = vmatprep.subr.bf16.mxu0 %v7196
        %11307 = vmatpush1.bf16.msra.mxu0 %v7195
        %11308 = vmatprep.subr.bf16.mxu0 %v7200
        %11309 = vmatpush1.bf16.msra.mxu0 %v7199
        %11310 = vmatprep.subr.bf16.mxu0 %v7204
        %11311 = vmatpush1.bf16.msra.mxu0 %v7203
        %11312 = vmatprep.subr.bf16.mxu0 %v7208
        %11313 = vmatpush1.bf16.msra.mxu0 %v7207
        %11314 = vmatprep.subr.bf16.mxu0 %v7212
        %11315 = vmatpush1.bf16.msra.mxu0 %v7211
        %11316 = vmatprep.subr.bf16.mxu0 %v7216
        %11317 = vmatpush1.bf16.msra.mxu0 %v7215
        %11318 = vmatprep.subr.bf16.mxu0 %v7220
        %11319 = vmatpush1.bf16.msra.mxu0 %v7219
        %11320 = vmatprep.subr.bf16.mxu0 %v7224
        %11321 = vmatpush1.bf16.msra.mxu0 %v7223
        %11322 = vmatprep.subr.bf16.mxu0 %v7228
        %11323 = vmatpush1.bf16.msra.mxu0 %v7227
        %11324 = vmatprep.subr.bf16.mxu0 %v7232
        %11325 = vmatpush1.bf16.msra.mxu0 %v7231
        %11326 = vmatprep.subr.bf16.mxu0 %v7236
        %11327 = vmatpush1.bf16.msra.mxu0 %v7235
        %11328 = vmatprep.subr.bf16.mxu0 %v7240
        %11329 = vmatpush1.bf16.msra.mxu0 %v7239
        %11330 = vmatprep.subr.bf16.mxu0 %v7244
        %11331 = vmatpush1.bf16.msra.mxu0 %v7243
        %11332 = vmatprep.subr.bf16.mxu0 %v7248
        %11333 = vmatpush1.bf16.msra.mxu0 %v7247
        %11334 = vmatprep.subr.bf16.mxu0 %v7252
        %11335 = vmatpush1.bf16.msra.mxu0 %v7251
        %11336 = vmatprep.mubr.bf16.mxu0 %v744
        %11337 = vmatmul.mubr.bf16.gmra.mrb[0].mxu0 %v743
        %v11338 = vpop.f32.mrb[0].mxu0
        %v11339 = vadd.f32 %v11298, %v11338
        %v11340 = vpop.f32.mrb[0].mxu0
        %v11341 = vadd.f32 %v11300, %v11340
        %v11342 = vpop.f32.mrb[0].mxu0
        %v11343 = vpop.f32.mrb[0].mxu0
        %11344 = vdwg.mxu0
        %11345 = vmatprep.subr.bf16.mxu0 %v7256
        %11346 = vmatpush1.bf16.msra.mxu0 %v7255
        %11347 = vmatprep.subr.bf16.mxu0 %v7260
        %11348 = vmatpush1.bf16.msra.mxu0 %v7259
        %11349 = vmatprep.subr.bf16.mxu0 %v7264
        %11350 = vmatpush1.bf16.msra.mxu0 %v7263
        %11351 = vmatprep.subr.bf16.mxu0 %v7268
        %11352 = vmatpush1.bf16.msra.mxu0 %v7267
        %11353 = vmatprep.subr.bf16.mxu0 %v7272
        %11354 = vmatpush1.bf16.msra.mxu0 %v7271
        %11355 = vmatprep.subr.bf16.mxu0 %v7276
        %11356 = vmatpush1.bf16.msra.mxu0 %v7275
        %11357 = vmatprep.subr.bf16.mxu0 %v7280
        %11358 = vmatpush1.bf16.msra.mxu0 %v7279
        %11359 = vmatprep.subr.bf16.mxu0 %v7284
        %11360 = vmatpush1.bf16.msra.mxu0 %v7283
        %11361 = vmatprep.subr.bf16.mxu0 %v7288
        %11362 = vmatpush1.bf16.msra.mxu0 %v7287
        %11363 = vmatprep.subr.bf16.mxu0 %v7292
        %11364 = vmatpush1.bf16.msra.mxu0 %v7291
        %11365 = vmatprep.subr.bf16.mxu0 %v7296
        %11366 = vmatpush1.bf16.msra.mxu0 %v7295
        %11367 = vmatprep.subr.bf16.mxu0 %v7300
        %11368 = vmatpush1.bf16.msra.mxu0 %v7299
        %11369 = vmatprep.subr.bf16.mxu0 %v7304
        %11370 = vmatpush1.bf16.msra.mxu0 %v7303
        %11371 = vmatprep.subr.bf16.mxu0 %v7308
        %11372 = vmatpush1.bf16.msra.mxu0 %v7307
        %11373 = vmatprep.subr.bf16.mxu0 %v7312
        %11374 = vmatpush1.bf16.msra.mxu0 %v7311
        %11375 = vmatprep.subr.bf16.mxu0 %v7316
        %11376 = vmatpush1.bf16.msra.mxu0 %v7315
        %11377 = vmatprep.mubr.bf16.mxu0 %v746
        %11378 = vmatmul.mubr.bf16.gmra.mrb[0].mxu0 %v745
        %v11379 = vpop.f32.mrb[0].mxu0
        %v11380 = vadd.f32 %v11339, %v11379
        %v11381 = vpop.f32.mrb[0].mxu0
        %v11382 = vadd.f32 %v11341, %v11381
        %v11383 = vpop.f32.mrb[0].mxu0
        %v11384 = vpop.f32.mrb[0].mxu0
        %11385 = vdwg.mxu0
        %11386 = vmatprep.subr.bf16.mxu0 %v7320
        %11387 = vmatpush1.bf16.msra.mxu0 %v7319
        %11388 = vmatprep.subr.bf16.mxu0 %v7324
        %11389 = vmatpush1.bf16.msra.mxu0 %v7323
        %11390 = vmatprep.subr.bf16.mxu0 %v7328
        %11391 = vmatpush1.bf16.msra.mxu0 %v7327
        %11392 = vmatprep.subr.bf16.mxu0 %v7332
        %11393 = vmatpush1.bf16.msra.mxu0 %v7331
        %11394 = vmatprep.subr.bf16.mxu0 %v7336
        %11395 = vmatpush1.bf16.msra.mxu0 %v7335
        %11396 = vmatprep.subr.bf16.mxu0 %v7340
        %11397 = vmatpush1.bf16.msra.mxu0 %v7339
        %11398 = vmatprep.subr.bf16.mxu0 %v7344
        %11399 = vmatpush1.bf16.msra.mxu0 %v7343
        %11400 = vmatprep.subr.bf16.mxu0 %v7348
        %11401 = vmatpush1.bf16.msra.mxu0 %v7347
        %11402 = vmatprep.subr.bf16.mxu0 %v7352
        %11403 = vmatpush1.bf16.msra.mxu0 %v7351
        %11404 = vmatprep.subr.bf16.mxu0 %v7356
        %11405 = vmatpush1.bf16.msra.mxu0 %v7355
        %11406 = vmatprep.subr.bf16.mxu0 %v7360
        %11407 = vmatpush1.bf16.msra.mxu0 %v7359
        %11408 = vmatprep.subr.bf16.mxu0 %v7364
        %11409 = vmatpush1.bf16.msra.mxu0 %v7363
        %11410 = vmatprep.subr.bf16.mxu0 %v7368
        %11411 = vmatpush1.bf16.msra.mxu0 %v7367
        %11412 = vmatprep.subr.bf16.mxu0 %v7372
        %11413 = vmatpush1.bf16.msra.mxu0 %v7371
        %11414 = vmatprep.subr.bf16.mxu0 %v7376
        %11415 = vmatpush1.bf16.msra.mxu0 %v7375
        %11416 = vmatprep.subr.bf16.mxu0 %v7380
        %11417 = vmatpush1.bf16.msra.mxu0 %v7379
        %11418 = vmatprep.mubr.bf16.mxu0 %v748
        %11419 = vmatmul.mubr.bf16.gmra.mrb[0].mxu0 %v747
        %v11420 = vpop.f32.mrb[0].mxu0
        %v11421 = vadd.f32 %v11380, %v11420
        %v11422 = vpop.f32.mrb[0].mxu0
        %v11423 = vadd.f32 %v11382, %v11422
        %v11424 = vpop.f32.mrb[0].mxu0
        %v11425 = vpop.f32.mrb[0].mxu0
        %11426 = vdwg.mxu0
        %11427 = vmatprep.subr.bf16.mxu0 %v7384
        %11428 = vmatpush1.bf16.msra.mxu0 %v7383
        %11429 = vmatprep.subr.bf16.mxu0 %v7388
        %11430 = vmatpush1.bf16.msra.mxu0 %v7387
        %11431 = vmatprep.subr.bf16.mxu0 %v7392
        %11432 = vmatpush1.bf16.msra.mxu0 %v7391
        %11433 = vmatprep.subr.bf16.mxu0 %v7396
        %11434 = vmatpush1.bf16.msra.mxu0 %v7395
        %11435 = vmatprep.subr.bf16.mxu0 %v7400
        %11436 = vmatpush1.bf16.msra.mxu0 %v7399
        %11437 = vmatprep.subr.bf16.mxu0 %v7404
        %11438 = vmatpush1.bf16.msra.mxu0 %v7403
        %11439 = vmatprep.subr.bf16.mxu0 %v7408
        %11440 = vmatpush1.bf16.msra.mxu0 %v7407
        %11441 = vmatprep.subr.bf16.mxu0 %v7412
        %11442 = vmatpush1.bf16.msra.mxu0 %v7411
        %11443 = vmatprep.subr.bf16.mxu0 %v7416
        %11444 = vmatpush1.bf16.msra.mxu0 %v7415
        %11445 = vmatprep.subr.bf16.mxu0 %v7420
        %11446 = vmatpush1.bf16.msra.mxu0 %v7419
        %11447 = vmatprep.subr.bf16.mxu0 %v7424
        %11448 = vmatpush1.bf16.msra.mxu0 %v7423
        %11449 = vmatprep.subr.bf16.mxu0 %v7428
        %11450 = vmatpush1.bf16.msra.mxu0 %v7427
        %11451 = vmatprep.subr.bf16.mxu0 %v7432
        %11452 = vmatpush1.bf16.msra.mxu0 %v7431
        %11453 = vmatprep.subr.bf16.mxu0 %v7436
        %11454 = vmatpush1.bf16.msra.mxu0 %v7435
        %11455 = vmatprep.subr.bf16.mxu0 %v7440
        %11456 = vmatpush1.bf16.msra.mxu0 %v7439
        %11457 = vmatprep.subr.bf16.mxu0 %v7444
        %11458 = vmatpush1.bf16.msra.mxu0 %v7443
        %11459 = vmatprep.mubr.bf16.mxu0 %v750
        %11460 = vmatmul.mubr.bf16.gmra.mrb[0].mxu0 %v749
        %v11461 = vpop.f32.mrb[0].mxu0
        %v11462 = vadd.f32 %v11421, %v11461
        %v11463 = vpop.f32.mrb[0].mxu0
        %v11464 = vadd.f32 %v11423, %v11463
        %v11465 = vpop.f32.mrb[0].mxu0
        %v11466 = vpop.f32.mrb[0].mxu0
        %11467 = vdwg.mxu0
        %11468 = vmatprep.subr.bf16.mxu0 %v7448
        %11469 = vmatpush1.bf16.msra.mxu0 %v7447
        %11470 = vmatprep.subr.bf16.mxu0 %v7452
        %11471 = vmatpush1.bf16.msra.mxu0 %v7451
        %11472 = vmatprep.subr.bf16.mxu0 %v7456
        %11473 = vmatpush1.bf16.msra.mxu0 %v7455
        %11474 = vmatprep.subr.bf16.mxu0 %v7460
        %11475 = vmatpush1.bf16.msra.mxu0 %v7459
        %11476 = vmatprep.subr.bf16.mxu0 %v7464
        %11477 = vmatpush1.bf16.msra.mxu0 %v7463
        %11478 = vmatprep.subr.bf16.mxu0 %v7468
        %11479 = vmatpush1.bf16.msra.mxu0 %v7467
        %11480 = vmatprep.subr.bf16.mxu0 %v7472
        %11481 = vmatpush1.bf16.msra.mxu0 %v7471
        %11482 = vmatprep.subr.bf16.mxu0 %v7476
        %11483 = vmatpush1.bf16.msra.mxu0 %v7475
        %11484 = vmatprep.subr.bf16.mxu0 %v7480
        %11485 = vmatpush1.bf16.msra.mxu0 %v7479
        %11486 = vmatprep.subr.bf16.mxu0 %v7484
        %11487 = vmatpush1.bf16.msra.mxu0 %v7483
        %11488 = vmatprep.subr.bf16.mxu0 %v7488
        %11489 = vmatpush1.bf16.msra.mxu0 %v7487
        %11490 = vmatprep.subr.bf16.mxu0 %v7492
        %11491 = vmatpush1.bf16.msra.mxu0 %v7491
        %11492 = vmatprep.subr.bf16.mxu0 %v7496
        %11493 = vmatpush1.bf16.msra.mxu0 %v7495
        %11494 = vmatprep.subr.bf16.mxu0 %v7500
        %11495 = vmatpush1.bf16.msra.mxu0 %v7499
        %11496 = vmatprep.subr.bf16.mxu0 %v7504
        %11497 = vmatpush1.bf16.msra.mxu0 %v7503
        %11498 = vmatprep.subr.bf16.mxu0 %v7508
        %11499 = vmatpush1.bf16.msra.mxu0 %v7507
        %11500 = vmatprep.mubr.bf16.mxu0 %v752
        %11501 = vmatmul.mubr.bf16.gmra.mrb[0].mxu0 %v751
        %v11502 = vpop.f32.mrb[0].mxu0
        %v11503 = vadd.f32 %v11462, %v11502
        %v11504 = vpop.f32.mrb[0].mxu0
        %v11505 = vadd.f32 %v11464, %v11504
        %v11506 = vpop.f32.mrb[0].mxu0
        %v11507 = vpop.f32.mrb[0].mxu0
        %11508 = vdwg.mxu0
        %11509 = vmatprep.subr.bf16.mxu0 %v7512
        %11510 = vmatpush1.bf16.msra.mxu0 %v7511
        %11511 = vmatprep.subr.bf16.mxu0 %v7516
        %11512 = vmatpush1.bf16.msra.mxu0 %v7515
        %11513 = vmatprep.subr.bf16.mxu0 %v7520
        %11514 = vmatpush1.bf16.msra.mxu0 %v7519
        %11515 = vmatprep.subr.bf16.mxu0 %v7524
        %11516 = vmatpush1.bf16.msra.mxu0 %v7523
        %11517 = vmatprep.subr.bf16.mxu0 %v7528
        %11518 = vmatpush1.bf16.msra.mxu0 %v7527
        %11519 = vmatprep.subr.bf16.mxu0 %v7532
        %11520 = vmatpush1.bf16.msra.mxu0 %v7531
        %11521 = vmatprep.subr.bf16.mxu0 %v7536
        %11522 = vmatpush1.bf16.msra.mxu0 %v7535
        %11523 = vmatprep.subr.bf16.mxu0 %v7540
        %11524 = vmatpush1.bf16.msra.mxu0 %v7539
        %11525 = vmatprep.subr.bf16.mxu0 %v7544
        %11526 = vmatpush1.bf16.msra.mxu0 %v7543
        %11527 = vmatprep.subr.bf16.mxu0 %v7548
        %11528 = vmatpush1.bf16.msra.mxu0 %v7547
        %11529 = vmatprep.subr.bf16.mxu0 %v7552
        %11530 = vmatpush1.bf16.msra.mxu0 %v7551
        %11531 = vmatprep.subr.bf16.mxu0 %v7556
        %11532 = vmatpush1.bf16.msra.mxu0 %v7555
        %11533 = vmatprep.subr.bf16.mxu0 %v7560
        %11534 = vmatpush1.bf16.msra.mxu0 %v7559
        %11535 = vmatprep.subr.bf16.mxu0 %v7564
        %11536 = vmatpush1.bf16.msra.mxu0 %v7563
        %11537 = vmatprep.subr.bf16.mxu0 %v7568
        %11538 = vmatpush1.bf16.msra.mxu0 %v7567
        %11539 = vmatprep.subr.bf16.mxu0 %v7572
        %11540 = vmatpush1.bf16.msra.mxu0 %v7571
        %11541 = vmatprep.mubr.bf16.mxu0 %v754
        %11542 = vmatmul.mubr.bf16.gmra.mrb[0].mxu0 %v753
        %v11543 = vpop.f32.mrb[0].mxu0
        %v11544 = vadd.f32 %v11503, %v11543
        %v11545 = vpop.f32.mrb[0].mxu0
        %v11546 = vadd.f32 %v11505, %v11545
        %v11547 = vpop.f32.mrb[0].mxu0
        %v11548 = vpop.f32.mrb[0].mxu0
        %11549 = vdwg.mxu0
        %11550 = vmatprep.subr.bf16.mxu0 %v7576
        %11551 = vmatpush1.bf16.msra.mxu0 %v7575
        %11552 = vmatprep.subr.bf16.mxu0 %v7580
        %11553 = vmatpush1.bf16.msra.mxu0 %v7579
        %11554 = vmatprep.subr.bf16.mxu0 %v7584
        %11555 = vmatpush1.bf16.msra.mxu0 %v7583
        %11556 = vmatprep.subr.bf16.mxu0 %v7588
        %11557 = vmatpush1.bf16.msra.mxu0 %v7587
        %11558 = vmatprep.subr.bf16.mxu0 %v7592
        %11559 = vmatpush1.bf16.msra.mxu0 %v7591
        %11560 = vmatprep.subr.bf16.mxu0 %v7596
        %11561 = vmatpush1.bf16.msra.mxu0 %v7595
        %11562 = vmatprep.subr.bf16.mxu0 %v7600
        %11563 = vmatpush1.bf16.msra.mxu0 %v7599
        %11564 = vmatprep.subr.bf16.mxu0 %v7604
        %11565 = vmatpush1.bf16.msra.mxu0 %v7603
        %11566 = vmatprep.subr.bf16.mxu0 %v7608
        %11567 = vmatpush1.bf16.msra.mxu0 %v7607
        %11568 = vmatprep.subr.bf16.mxu0 %v7612
        %11569 = vmatpush1.bf16.msra.mxu0 %v7611
        %11570 = vmatprep.subr.bf16.mxu0 %v7616
        %11571 = vmatpush1.bf16.msra.mxu0 %v7615
        %11572 = vmatprep.subr.bf16.mxu0 %v7620
        %11573 = vmatpush1.bf16.msra.mxu0 %v7619
        %11574 = vmatprep.subr.bf16.mxu0 %v7624
        %11575 = vmatpush1.bf16.msra.mxu0 %v7623
        %11576 = vmatprep.subr.bf16.mxu0 %v7628
        %11577 = vmatpush1.bf16.msra.mxu0 %v7627
        %11578 = vmatprep.subr.bf16.mxu0 %v7632
        %11579 = vmatpush1.bf16.msra.mxu0 %v7631
        %11580 = vmatprep.subr.bf16.mxu0 %v7636
        %11581 = vmatpush1.bf16.msra.mxu0 %v7635
        %11582 = vmatprep.mubr.bf16.mxu0 %v756
        %11583 = vmatmul.mubr.bf16.gmra.mrb[0].mxu0 %v755
        %v11584 = vpop.f32.mrb[0].mxu0
        %v11585 = vadd.f32 %v11544, %v11584
        %v11586 = vpop.f32.mrb[0].mxu0
        %v11587 = vadd.f32 %v11546, %v11586
        %v11588 = vpop.f32.mrb[0].mxu0
        %v11589 = vpop.f32.mrb[0].mxu0
        %11590 = vdwg.mxu0
        %11591 = vmatprep.subr.bf16.mxu0 %v7640
        %11592 = vmatpush1.bf16.msra.mxu0 %v7639
        %11593 = vmatprep.subr.bf16.mxu0 %v7644
        %11594 = vmatpush1.bf16.msra.mxu0 %v7643
        %11595 = vmatprep.subr.bf16.mxu0 %v7648
        %11596 = vmatpush1.bf16.msra.mxu0 %v7647
        %11597 = vmatprep.subr.bf16.mxu0 %v7652
        %11598 = vmatpush1.bf16.msra.mxu0 %v7651
        %11599 = vmatprep.subr.bf16.mxu0 %v7656
        %11600 = vmatpush1.bf16.msra.mxu0 %v7655
        %11601 = vmatprep.subr.bf16.mxu0 %v7660
        %11602 = vmatpush1.bf16.msra.mxu0 %v7659
        %11603 = vmatprep.subr.bf16.mxu0 %v7664
        %11604 = vmatpush1.bf16.msra.mxu0 %v7663
        %11605 = vmatprep.subr.bf16.mxu0 %v7668
        %11606 = vmatpush1.bf16.msra.mxu0 %v7667
        %11607 = vmatprep.subr.bf16.mxu0 %v7672
        %11608 = vmatpush1.bf16.msra.mxu0 %v7671
        %11609 = vmatprep.subr.bf16.mxu0 %v7676
        %11610 = vmatpush1.bf16.msra.mxu0 %v7675
        %11611 = vmatprep.subr.bf16.mxu0 %v7680
        %11612 = vmatpush1.bf16.msra.mxu0 %v7679
        %11613 = vmatprep.subr.bf16.mxu0 %v7684
        %11614 = vmatpush1.bf16.msra.mxu0 %v7683
        %11615 = vmatprep.subr.bf16.mxu0 %v7688
        %11616 = vmatpush1.bf16.msra.mxu0 %v7687
        %11617 = vmatprep.subr.bf16.mxu0 %v7692
        %11618 = vmatpush1.bf16.msra.mxu0 %v7691
        %11619 = vmatprep.subr.bf16.mxu0 %v7696
        %11620 = vmatpush1.bf16.msra.mxu0 %v7695
        %11621 = vmatprep.subr.bf16.mxu0 %v7700
        %11622 = vmatpush1.bf16.msra.mxu0 %v7699
        %11623 = vmatprep.mubr.bf16.mxu0 %v758
        %11624 = vmatmul.mubr.bf16.gmra.mrb[0].mxu0 %v757
        %v11625 = vpop.f32.mrb[0].mxu0
        %v11626 = vadd.f32 %v11585, %v11625
        %v11627 = vpop.f32.mrb[0].mxu0
        %v11628 = vadd.f32 %v11587, %v11627
        %v11629 = vpop.f32.mrb[0].mxu0
        %v11630 = vpop.f32.mrb[0].mxu0
        %11631 = vdwg.mxu0
        %11632 = vmatprep.subr.bf16.mxu0 %v7704
        %11633 = vmatpush1.bf16.msra.mxu0 %v7703
        %11634 = vmatprep.subr.bf16.mxu0 %v7708
        %11635 = vmatpush1.bf16.msra.mxu0 %v7707
        %11636 = vmatprep.subr.bf16.mxu0 %v7712
        %11637 = vmatpush1.bf16.msra.mxu0 %v7711
        %11638 = vmatprep.subr.bf16.mxu0 %v7716
        %11639 = vmatpush1.bf16.msra.mxu0 %v7715
        %11640 = vmatprep.subr.bf16.mxu0 %v7720
        %11641 = vmatpush1.bf16.msra.mxu0 %v7719
        %11642 = vmatprep.subr.bf16.mxu0 %v7724
        %11643 = vmatpush1.bf16.msra.mxu0 %v7723
        %11644 = vmatprep.subr.bf16.mxu0 %v7728
        %11645 = vmatpush1.bf16.msra.mxu0 %v7727
        %11646 = vmatprep.subr.bf16.mxu0 %v7732
        %11647 = vmatpush1.bf16.msra.mxu0 %v7731
        %11648 = vmatprep.subr.bf16.mxu0 %v7736
        %11649 = vmatpush1.bf16.msra.mxu0 %v7735
        %11650 = vmatprep.subr.bf16.mxu0 %v7740
        %11651 = vmatpush1.bf16.msra.mxu0 %v7739
        %11652 = vmatprep.subr.bf16.mxu0 %v7744
        %11653 = vmatpush1.bf16.msra.mxu0 %v7743
        %11654 = vmatprep.subr.bf16.mxu0 %v7748
        %11655 = vmatpush1.bf16.msra.mxu0 %v7747
        %11656 = vmatprep.subr.bf16.mxu0 %v7752
        %11657 = vmatpush1.bf16.msra.mxu0 %v7751
        %11658 = vmatprep.subr.bf16.mxu0 %v7756
        %11659 = vmatpush1.bf16.msra.mxu0 %v7755
        %11660 = vmatprep.subr.bf16.mxu0 %v7760
        %11661 = vmatpush1.bf16.msra.mxu0 %v7759
        %11662 = vmatprep.subr.bf16.mxu0 %v7764
        %11663 = vmatpush1.bf16.msra.mxu0 %v7763
        %11664 = vmatprep.mubr.bf16.mxu0 %v760
        %11665 = vmatmul.mubr.bf16.gmra.mrb[0].mxu0 %v759
        %v11666 = vpop.f32.mrb[0].mxu0
        %v11667 = vadd.f32 %v11626, %v11666
        %v11668 = vpop.f32.mrb[0].mxu0
        %v11669 = vadd.f32 %v11628, %v11668
        %v11670 = vpop.f32.mrb[0].mxu0
        %v11671 = vpop.f32.mrb[0].mxu0
        %11672 = vdwg.mxu0
        %11673 = vmatprep.subr.bf16.mxu0 %v7768
        %11674 = vmatpush1.bf16.msra.mxu0 %v7767
        %11675 = vmatprep.subr.bf16.mxu0 %v7772
        %11676 = vmatpush1.bf16.msra.mxu0 %v7771
        %11677 = vmatprep.subr.bf16.mxu0 %v7776
        %11678 = vmatpush1.bf16.msra.mxu0 %v7775
        %11679 = vmatprep.subr.bf16.mxu0 %v7780
        %11680 = vmatpush1.bf16.msra.mxu0 %v7779
        %11681 = vmatprep.subr.bf16.mxu0 %v7784
        %11682 = vmatpush1.bf16.msra.mxu0 %v7783
        %11683 = vmatprep.subr.bf16.mxu0 %v7788
        %11684 = vmatpush1.bf16.msra.mxu0 %v7787
        %11685 = vmatprep.subr.bf16.mxu0 %v7792
        %11686 = vmatpush1.bf16.msra.mxu0 %v7791
        %11687 = vmatprep.subr.bf16.mxu0 %v7796
        %11688 = vmatpush1.bf16.msra.mxu0 %v7795
        %11689 = vmatprep.subr.bf16.mxu0 %v7800
        %11690 = vmatpush1.bf16.msra.mxu0 %v7799
        %11691 = vmatprep.subr.bf16.mxu0 %v7804
        %11692 = vmatpush1.bf16.msra.mxu0 %v7803
        %11693 = vmatprep.subr.bf16.mxu0 %v7808
        %11694 = vmatpush1.bf16.msra.mxu0 %v7807
        %11695 = vmatprep.subr.bf16.mxu0 %v7812
        %11696 = vmatpush1.bf16.msra.mxu0 %v7811
        %11697 = vmatprep.subr.bf16.mxu0 %v7816
        %11698 = vmatpush1.bf16.msra.mxu0 %v7815
        %11699 = vmatprep.subr.bf16.mxu0 %v7820
        %11700 = vmatpush1.bf16.msra.mxu0 %v7819
        %11701 = vmatprep.subr.bf16.mxu0 %v7824
        %11702 = vmatpush1.bf16.msra.mxu0 %v7823
        %11703 = vmatprep.subr.bf16.mxu0 %v7828
        %11704 = vmatpush1.bf16.msra.mxu0 %v7827
        %11705 = vmatprep.mubr.bf16.mxu0 %v762
        %11706 = vmatmul.mubr.bf16.gmra.mrb[0].mxu0 %v761
        %v11707 = vpop.f32.mrb[0].mxu0
        %v11708 = vadd.f32 %v11667, %v11707
        %v11709 = vpop.f32.mrb[0].mxu0
        %v11710 = vadd.f32 %v11669, %v11709
        %v11711 = vpop.f32.mrb[0].mxu0
        %v11712 = vpop.f32.mrb[0].mxu0
        %11713 = vdwg.mxu0
        %11714 = vmatprep.subr.bf16.mxu0 %v7832
        %11715 = vmatpush1.bf16.msra.mxu0 %v7831
        %11716 = vmatprep.subr.bf16.mxu0 %v7836
        %11717 = vmatpush1.bf16.msra.mxu0 %v7835
        %11718 = vmatprep.subr.bf16.mxu0 %v7840
        %11719 = vmatpush1.bf16.msra.mxu0 %v7839
        %11720 = vmatprep.subr.bf16.mxu0 %v7844
        %11721 = vmatpush1.bf16.msra.mxu0 %v7843
        %11722 = vmatprep.subr.bf16.mxu0 %v7848
        %11723 = vmatpush1.bf16.msra.mxu0 %v7847
        %11724 = vmatprep.subr.bf16.mxu0 %v7852
        %11725 = vmatpush1.bf16.msra.mxu0 %v7851
        %11726 = vmatprep.subr.bf16.mxu0 %v7856
        %11727 = vmatpush1.bf16.msra.mxu0 %v7855
        %11728 = vmatprep.subr.bf16.mxu0 %v7860
        %11729 = vmatpush1.bf16.msra.mxu0 %v7859
        %11730 = vmatprep.subr.bf16.mxu0 %v7864
        %11731 = vmatpush1.bf16.msra.mxu0 %v7863
        %11732 = vmatprep.subr.bf16.mxu0 %v7868
        %11733 = vmatpush1.bf16.msra.mxu0 %v7867
        %11734 = vmatprep.subr.bf16.mxu0 %v7872
        %11735 = vmatpush1.bf16.msra.mxu0 %v7871
        %11736 = vmatprep.subr.bf16.mxu0 %v7876
        %11737 = vmatpush1.bf16.msra.mxu0 %v7875
        %11738 = vmatprep.subr.bf16.mxu0 %v7880
        %11739 = vmatpush1.bf16.msra.mxu0 %v7879
        %11740 = vmatprep.subr.bf16.mxu0 %v7884
        %11741 = vmatpush1.bf16.msra.mxu0 %v7883
        %11742 = vmatprep.subr.bf16.mxu0 %v7888
        %11743 = vmatpush1.bf16.msra.mxu0 %v7887
        %11744 = vmatprep.subr.bf16.mxu0 %v7892
        %11745 = vmatpush1.bf16.msra.mxu0 %v7891
        %11746 = vmatprep.mubr.bf16.mxu0 %v764
        %11747 = vmatmul.mubr.bf16.gmra.mrb[0].mxu0 %v763
        %v11748 = vpop.f32.mrb[0].mxu0
        %v11749 = vadd.f32 %v11708, %v11748
        %v11750 = vpop.f32.mrb[0].mxu0
        %v11751 = vadd.f32 %v11710, %v11750
        %v11752 = vpop.f32.mrb[0].mxu0
        %v11753 = vpop.f32.mrb[0].mxu0
        %11754 = vdwg.mxu0
        %11755 = vmatprep.subr.bf16.mxu0 %v7896
        %11756 = vmatpush1.bf16.msra.mxu0 %v7895
        %11757 = vmatprep.subr.bf16.mxu0 %v7900
        %11758 = vmatpush1.bf16.msra.mxu0 %v7899
        %11759 = vmatprep.subr.bf16.mxu0 %v7904
        %11760 = vmatpush1.bf16.msra.mxu0 %v7903
        %11761 = vmatprep.subr.bf16.mxu0 %v7908
        %11762 = vmatpush1.bf16.msra.mxu0 %v7907
        %11763 = vmatprep.subr.bf16.mxu0 %v7912
        %11764 = vmatpush1.bf16.msra.mxu0 %v7911
        %11765 = vmatprep.subr.bf16.mxu0 %v7916
        %11766 = vmatpush1.bf16.msra.mxu0 %v7915
        %11767 = vmatprep.subr.bf16.mxu0 %v7920
        %11768 = vmatpush1.bf16.msra.mxu0 %v7919
        %11769 = vmatprep.subr.bf16.mxu0 %v7924
        %11770 = vmatpush1.bf16.msra.mxu0 %v7923
        %11771 = vmatprep.subr.bf16.mxu0 %v7928
        %11772 = vmatpush1.bf16.msra.mxu0 %v7927
        %11773 = vmatprep.subr.bf16.mxu0 %v7932
        %11774 = vmatpush1.bf16.msra.mxu0 %v7931
        %11775 = vmatprep.subr.bf16.mxu0 %v7936
        %11776 = vmatpush1.bf16.msra.mxu0 %v7935
        %11777 = vmatprep.subr.bf16.mxu0 %v7940
        %11778 = vmatpush1.bf16.msra.mxu0 %v7939
        %11779 = vmatprep.subr.bf16.mxu0 %v7944
        %11780 = vmatpush1.bf16.msra.mxu0 %v7943
        %11781 = vmatprep.subr.bf16.mxu0 %v7948
        %11782 = vmatpush1.bf16.msra.mxu0 %v7947
        %11783 = vmatprep.subr.bf16.mxu0 %v7952
        %11784 = vmatpush1.bf16.msra.mxu0 %v7951
        %11785 = vmatprep.subr.bf16.mxu0 %v7956
        %11786 = vmatpush1.bf16.msra.mxu0 %v7955
        %11787 = vmatprep.mubr.bf16.mxu0 %v766
        %11788 = vmatmul.mubr.bf16.gmra.mrb[0].mxu0 %v765
        %v11789 = vpop.f32.mrb[0].mxu0
        %v11790 = vadd.f32 %v11749, %v11789
        %v11791 = vpop.f32.mrb[0].mxu0
        %v11792 = vadd.f32 %v11751, %v11791
        %v11793 = vpop.f32.mrb[0].mxu0
        %v11794 = vpop.f32.mrb[0].mxu0
        %11795 = vdwg.mxu0
        %11796 = vmatprep.subr.bf16.mxu0 %v7960
        %11797 = vmatpush1.bf16.msra.mxu0 %v7959
        %11798 = vmatprep.subr.bf16.mxu0 %v7964
        %11799 = vmatpush1.bf16.msra.mxu0 %v7963
        %11800 = vmatprep.subr.bf16.mxu0 %v7968
        %11801 = vmatpush1.bf16.msra.mxu0 %v7967
        %11802 = vmatprep.subr.bf16.mxu0 %v7972
        %11803 = vmatpush1.bf16.msra.mxu0 %v7971
        %11804 = vmatprep.subr.bf16.mxu0 %v7976
        %11805 = vmatpush1.bf16.msra.mxu0 %v7975
        %11806 = vmatprep.subr.bf16.mxu0 %v7980
        %11807 = vmatpush1.bf16.msra.mxu0 %v7979
        %11808 = vmatprep.subr.bf16.mxu0 %v7984
        %11809 = vmatpush1.bf16.msra.mxu0 %v7983
        %11810 = vmatprep.subr.bf16.mxu0 %v7988
        %11811 = vmatpush1.bf16.msra.mxu0 %v7987
        %11812 = vmatprep.subr.bf16.mxu0 %v7992
        %11813 = vmatpush1.bf16.msra.mxu0 %v7991
        %11814 = vmatprep.subr.bf16.mxu0 %v7996
        %11815 = vmatpush1.bf16.msra.mxu0 %v7995
        %11816 = vmatprep.subr.bf16.mxu0 %v8000
        %11817 = vmatpush1.bf16.msra.mxu0 %v7999
        %11818 = vmatprep.subr.bf16.mxu0 %v8004
        %11819 = vmatpush1.bf16.msra.mxu0 %v8003
        %11820 = vmatprep.subr.bf16.mxu0 %v8008
        %11821 = vmatpush1.bf16.msra.mxu0 %v8007
        %11822 = vmatprep.subr.bf16.mxu0 %v8012
        %11823 = vmatpush1.bf16.msra.mxu0 %v8011
        %11824 = vmatprep.subr.bf16.mxu0 %v8016
        %11825 = vmatpush1.bf16.msra.mxu0 %v8015
        %11826 = vmatprep.subr.bf16.mxu0 %v8020
        %11827 = vmatpush1.bf16.msra.mxu0 %v8019
        %11828 = vmatprep.mubr.bf16.mxu0 %v768
        %11829 = vmatmul.mubr.bf16.gmra.mrb[0].mxu0 %v767
        %v11830 = vpop.f32.mrb[0].mxu0
        %v11831 = vadd.f32 %v11790, %v11830
        %v11832 = vpop.f32.mrb[0].mxu0
        %v11833 = vadd.f32 %v11792, %v11832
        %v11834 = vpop.f32.mrb[0].mxu0
        %v11835 = vpop.f32.mrb[0].mxu0
        %11836 = vdwg.mxu0
        %11837 = vmatprep.subr.bf16.mxu0 %v8024
        %11838 = vmatpush1.bf16.msra.mxu0 %v8023
        %11839 = vmatprep.subr.bf16.mxu0 %v8028
        %11840 = vmatpush1.bf16.msra.mxu0 %v8027
        %11841 = vmatprep.subr.bf16.mxu0 %v8032
        %11842 = vmatpush1.bf16.msra.mxu0 %v8031
        %11843 = vmatprep.subr.bf16.mxu0 %v8036
        %11844 = vmatpush1.bf16.msra.mxu0 %v8035
        %11845 = vmatprep.subr.bf16.mxu0 %v8040
        %11846 = vmatpush1.bf16.msra.mxu0 %v8039
        %11847 = vmatprep.subr.bf16.mxu0 %v8044
        %11848 = vmatpush1.bf16.msra.mxu0 %v8043
        %11849 = vmatprep.subr.bf16.mxu0 %v8048
        %11850 = vmatpush1.bf16.msra.mxu0 %v8047
        %11851 = vmatprep.subr.bf16.mxu0 %v8052
        %11852 = vmatpush1.bf16.msra.mxu0 %v8051
        %11853 = vmatprep.subr.bf16.mxu0 %v8056
        %11854 = vmatpush1.bf16.msra.mxu0 %v8055
        %11855 = vmatprep.subr.bf16.mxu0 %v8060
        %11856 = vmatpush1.bf16.msra.mxu0 %v8059
        %11857 = vmatprep.subr.bf16.mxu0 %v8064
        %11858 = vmatpush1.bf16.msra.mxu0 %v8063
        %11859 = vmatprep.subr.bf16.mxu0 %v8068
        %11860 = vmatpush1.bf16.msra.mxu0 %v8067
        %11861 = vmatprep.subr.bf16.mxu0 %v8072
        %11862 = vmatpush1.bf16.msra.mxu0 %v8071
        %11863 = vmatprep.subr.bf16.mxu0 %v8076
        %11864 = vmatpush1.bf16.msra.mxu0 %v8075
        %11865 = vmatprep.subr.bf16.mxu0 %v8080
        %11866 = vmatpush1.bf16.msra.mxu0 %v8079
        %11867 = vmatprep.subr.bf16.mxu0 %v8084
        %11868 = vmatpush1.bf16.msra.mxu0 %v8083
        %11869 = vmatprep.mubr.bf16.mxu0 %v770
        %11870 = vmatmul.mubr.bf16.gmra.mrb[0].mxu0 %v769
        %v11871 = vpop.f32.mrb[0].mxu0
        %v11872 = vadd.f32 %v11831, %v11871
        %v11873 = vpop.f32.mrb[0].mxu0
        %v11874 = vadd.f32 %v11833, %v11873
        %v11875 = vpop.f32.mrb[0].mxu0
        %v11876 = vpop.f32.mrb[0].mxu0
        %11877 = vdwg.mxu0
        %11878 = vmatprep.subr.bf16.mxu0 %v8088
        %11879 = vmatpush1.bf16.msra.mxu0 %v8087
        %11880 = vmatprep.subr.bf16.mxu0 %v8092
        %11881 = vmatpush1.bf16.msra.mxu0 %v8091
        %11882 = vmatprep.subr.bf16.mxu0 %v8096
        %11883 = vmatpush1.bf16.msra.mxu0 %v8095
        %11884 = vmatprep.subr.bf16.mxu0 %v8100
        %11885 = vmatpush1.bf16.msra.mxu0 %v8099
        %11886 = vmatprep.subr.bf16.mxu0 %v8104
        %11887 = vmatpush1.bf16.msra.mxu0 %v8103
        %11888 = vmatprep.subr.bf16.mxu0 %v8108
        %11889 = vmatpush1.bf16.msra.mxu0 %v8107
        %11890 = vmatprep.subr.bf16.mxu0 %v8112
        %11891 = vmatpush1.bf16.msra.mxu0 %v8111
        %11892 = vmatprep.subr.bf16.mxu0 %v8116
        %11893 = vmatpush1.bf16.msra.mxu0 %v8115
        %11894 = vmatprep.subr.bf16.mxu0 %v8120
        %11895 = vmatpush1.bf16.msra.mxu0 %v8119
        %11896 = vmatprep.subr.bf16.mxu0 %v8124
        %11897 = vmatpush1.bf16.msra.mxu0 %v8123
        %11898 = vmatprep.subr.bf16.mxu0 %v8128
        %11899 = vmatpush1.bf16.msra.mxu0 %v8127
        %11900 = vmatprep.subr.bf16.mxu0 %v8132
        %11901 = vmatpush1.bf16.msra.mxu0 %v8131
        %11902 = vmatprep.subr.bf16.mxu0 %v8136
        %11903 = vmatpush1.bf16.msra.mxu0 %v8135
        %11904 = vmatprep.subr.bf16.mxu0 %v8140
        %11905 = vmatpush1.bf16.msra.mxu0 %v8139
        %11906 = vmatprep.subr.bf16.mxu0 %v8144
        %11907 = vmatpush1.bf16.msra.mxu0 %v8143
        %11908 = vmatprep.subr.bf16.mxu0 %v8148
        %11909 = vmatpush1.bf16.msra.mxu0 %v8147
        %11910 = vmatprep.mubr.bf16.mxu0 %v772
        %11911 = vmatmul.mubr.bf16.gmra.mrb[0].mxu0 %v771
        %v11912 = vpop.f32.mrb[0].mxu0
        %v11913 = vadd.f32 %v11872, %v11912
        %v11914 = vpop.f32.mrb[0].mxu0
        %v11915 = vadd.f32 %v11874, %v11914
        %v11916 = vpop.f32.mrb[0].mxu0
        %v11917 = vpop.f32.mrb[0].mxu0
        %11918 = vdwg.mxu0
        %11919 = vmatprep.subr.bf16.mxu0 %v8152
        %11920 = vmatpush1.bf16.msra.mxu0 %v8151
        %11921 = vmatprep.subr.bf16.mxu0 %v8156
        %11922 = vmatpush1.bf16.msra.mxu0 %v8155
        %11923 = vmatprep.subr.bf16.mxu0 %v8160
        %11924 = vmatpush1.bf16.msra.mxu0 %v8159
        %11925 = vmatprep.subr.bf16.mxu0 %v8164
        %11926 = vmatpush1.bf16.msra.mxu0 %v8163
        %11927 = vmatprep.subr.bf16.mxu0 %v8168
        %11928 = vmatpush1.bf16.msra.mxu0 %v8167
        %11929 = vmatprep.subr.bf16.mxu0 %v8172
        %11930 = vmatpush1.bf16.msra.mxu0 %v8171
        %11931 = vmatprep.subr.bf16.mxu0 %v8176
        %11932 = vmatpush1.bf16.msra.mxu0 %v8175
        %11933 = vmatprep.subr.bf16.mxu0 %v8180
        %11934 = vmatpush1.bf16.msra.mxu0 %v8179
        %11935 = vmatprep.subr.bf16.mxu0 %v8184
        %11936 = vmatpush1.bf16.msra.mxu0 %v8183
        %11937 = vmatprep.subr.bf16.mxu0 %v8188
        %11938 = vmatpush1.bf16.msra.mxu0 %v8187
        %11939 = vmatprep.subr.bf16.mxu0 %v8192
        %11940 = vmatpush1.bf16.msra.mxu0 %v8191
        %11941 = vmatprep.subr.bf16.mxu0 %v8196
        %11942 = vmatpush1.bf16.msra.mxu0 %v8195
        %11943 = vmatprep.subr.bf16.mxu0 %v8200
        %11944 = vmatpush1.bf16.msra.mxu0 %v8199
        %11945 = vmatprep.subr.bf16.mxu0 %v8204
        %11946 = vmatpush1.bf16.msra.mxu0 %v8203
        %11947 = vmatprep.subr.bf16.mxu0 %v8208
        %11948 = vmatpush1.bf16.msra.mxu0 %v8207
        %11949 = vmatprep.subr.bf16.mxu0 %v8212
        %11950 = vmatpush1.bf16.msra.mxu0 %v8211
        %11951 = vmatprep.mubr.bf16.mxu0 %v774
        %11952 = vmatmul.mubr.bf16.gmra.mrb[0].mxu0 %v773
        %v11953 = vpop.f32.mrb[0].mxu0
        %v11954 = vadd.f32 %v11913, %v11953
        %v11955 = vpop.f32.mrb[0].mxu0
        %v11956 = vadd.f32 %v11915, %v11955
        %v11957 = vpop.f32.mrb[0].mxu0
        %v11958 = vpop.f32.mrb[0].mxu0
        %11959 = vdwg.mxu0
        %11960 = vmatprep.subr.bf16.mxu0 %v8216
        %11961 = vmatpush1.bf16.msra.mxu0 %v8215
        %11962 = vmatprep.subr.bf16.mxu0 %v8220
        %11963 = vmatpush1.bf16.msra.mxu0 %v8219
        %11964 = vmatprep.subr.bf16.mxu0 %v8224
        %11965 = vmatpush1.bf16.msra.mxu0 %v8223
        %11966 = vmatprep.subr.bf16.mxu0 %v8228
        %11967 = vmatpush1.bf16.msra.mxu0 %v8227
        %11968 = vmatprep.subr.bf16.mxu0 %v8232
        %11969 = vmatpush1.bf16.msra.mxu0 %v8231
        %11970 = vmatprep.subr.bf16.mxu0 %v8236
        %11971 = vmatpush1.bf16.msra.mxu0 %v8235
        %11972 = vmatprep.subr.bf16.mxu0 %v8240
        %11973 = vmatpush1.bf16.msra.mxu0 %v8239
        %11974 = vmatprep.subr.bf16.mxu0 %v8244
        %11975 = vmatpush1.bf16.msra.mxu0 %v8243
        %11976 = vmatprep.subr.bf16.mxu0 %v8248
        %11977 = vmatpush1.bf16.msra.mxu0 %v8247
        %11978 = vmatprep.subr.bf16.mxu0 %v8252
        %11979 = vmatpush1.bf16.msra.mxu0 %v8251
        %11980 = vmatprep.subr.bf16.mxu0 %v8256
        %11981 = vmatpush1.bf16.msra.mxu0 %v8255
        %11982 = vmatprep.subr.bf16.mxu0 %v8260
        %11983 = vmatpush1.bf16.msra.mxu0 %v8259
        %11984 = vmatprep.subr.bf16.mxu0 %v8264
        %11985 = vmatpush1.bf16.msra.mxu0 %v8263
        %11986 = vmatprep.subr.bf16.mxu0 %v8268
        %11987 = vmatpush1.bf16.msra.mxu0 %v8267
        %11988 = vmatprep.subr.bf16.mxu0 %v8272
        %11989 = vmatpush1.bf16.msra.mxu0 %v8271
        %11990 = vmatprep.subr.bf16.mxu0 %v8276
        %11991 = vmatpush1.bf16.msra.mxu0 %v8275
        %11992 = vmatprep.mubr.bf16.mxu0 %v776
        %11993 = vmatmul.mubr.bf16.gmra.mrb[0].mxu0 %v775
        %v11994 = vpop.f32.mrb[0].mxu0
        %v11995 = vadd.f32 %v11954, %v11994
        %v11996 = vpop.f32.mrb[0].mxu0
        %v11997 = vadd.f32 %v11956, %v11996
        %v11998 = vpop.f32.mrb[0].mxu0
        %v11999 = vpop.f32.mrb[0].mxu0
        %12000 = vdwg.mxu0
        %12001 = vmatprep.subr.bf16.mxu0 %v8280
        %12002 = vmatpush1.bf16.msra.mxu0 %v8279
        %12003 = vmatprep.subr.bf16.mxu0 %v8284
        %12004 = vmatpush1.bf16.msra.mxu0 %v8283
        %12005 = vmatprep.subr.bf16.mxu0 %v8288
        %12006 = vmatpush1.bf16.msra.mxu0 %v8287
        %12007 = vmatprep.subr.bf16.mxu0 %v8292
        %12008 = vmatpush1.bf16.msra.mxu0 %v8291
        %12009 = vmatprep.subr.bf16.mxu0 %v8296
        %12010 = vmatpush1.bf16.msra.mxu0 %v8295
        %12011 = vmatprep.subr.bf16.mxu0 %v8300
        %12012 = vmatpush1.bf16.msra.mxu0 %v8299
        %12013 = vmatprep.subr.bf16.mxu0 %v8304
        %12014 = vmatpush1.bf16.msra.mxu0 %v8303
        %12015 = vmatprep.subr.bf16.mxu0 %v8308
        %12016 = vmatpush1.bf16.msra.mxu0 %v8307
        %12017 = vmatprep.subr.bf16.mxu0 %v8312
        %12018 = vmatpush1.bf16.msra.mxu0 %v8311
        %12019 = vmatprep.subr.bf16.mxu0 %v8316
        %12020 = vmatpush1.bf16.msra.mxu0 %v8315
        %12021 = vmatprep.subr.bf16.mxu0 %v8320
        %12022 = vmatpush1.bf16.msra.mxu0 %v8319
        %12023 = vmatprep.subr.bf16.mxu0 %v8324
        %12024 = vmatpush1.bf16.msra.mxu0 %v8323
        %12025 = vmatprep.subr.bf16.mxu0 %v8328
        %12026 = vmatpush1.bf16.msra.mxu0 %v8327
        %12027 = vmatprep.subr.bf16.mxu0 %v8332
        %12028 = vmatpush1.bf16.msra.mxu0 %v8331
        %12029 = vmatprep.subr.bf16.mxu0 %v8336
        %12030 = vmatpush1.bf16.msra.mxu0 %v8335
        %12031 = vmatprep.subr.bf16.mxu0 %v8340
        %12032 = vmatpush1.bf16.msra.mxu0 %v8339
        %12033 = vmatprep.mubr.bf16.mxu0 %v778
        %12034 = vmatmul.mubr.bf16.gmra.mrb[0].mxu0 %v777
        %v12035 = vpop.f32.mrb[0].mxu0
        %v12036 = vadd.f32 %v11995, %v12035
        %v12037 = vpop.f32.mrb[0].mxu0
        %v12038 = vadd.f32 %v11997, %v12037
        %v12039 = vpop.f32.mrb[0].mxu0
        %v12040 = vpop.f32.mrb[0].mxu0
        %12041 = vdwg.mxu0
        %12042 = vmatprep.subr.bf16.mxu0 %v8344
        %12043 = vmatpush1.bf16.msra.mxu0 %v8343
        %12044 = vmatprep.subr.bf16.mxu0 %v8348
        %12045 = vmatpush1.bf16.msra.mxu0 %v8347
        %12046 = vmatprep.subr.bf16.mxu0 %v8352
        %12047 = vmatpush1.bf16.msra.mxu0 %v8351
        %12048 = vmatprep.subr.bf16.mxu0 %v8356
        %12049 = vmatpush1.bf16.msra.mxu0 %v8355
        %12050 = vmatprep.subr.bf16.mxu0 %v8360
        %12051 = vmatpush1.bf16.msra.mxu0 %v8359
        %12052 = vmatprep.subr.bf16.mxu0 %v8364
        %12053 = vmatpush1.bf16.msra.mxu0 %v8363
        %12054 = vmatprep.subr.bf16.mxu0 %v8368
        %12055 = vmatpush1.bf16.msra.mxu0 %v8367
        %12056 = vmatprep.subr.bf16.mxu0 %v8372
        %12057 = vmatpush1.bf16.msra.mxu0 %v8371
        %12058 = vmatprep.subr.bf16.mxu0 %v8376
        %12059 = vmatpush1.bf16.msra.mxu0 %v8375
        %12060 = vmatprep.subr.bf16.mxu0 %v8380
        %12061 = vmatpush1.bf16.msra.mxu0 %v8379
        %12062 = vmatprep.subr.bf16.mxu0 %v8384
        %12063 = vmatpush1.bf16.msra.mxu0 %v8383
        %12064 = vmatprep.subr.bf16.mxu0 %v8388
        %12065 = vmatpush1.bf16.msra.mxu0 %v8387
        %12066 = vmatprep.subr.bf16.mxu0 %v8392
        %12067 = vmatpush1.bf16.msra.mxu0 %v8391
        %12068 = vmatprep.subr.bf16.mxu0 %v8396
        %12069 = vmatpush1.bf16.msra.mxu0 %v8395
        %12070 = vmatprep.subr.bf16.mxu0 %v8400
        %12071 = vmatpush1.bf16.msra.mxu0 %v8399
        %12072 = vmatprep.subr.bf16.mxu0 %v8404
        %12073 = vmatpush1.bf16.msra.mxu0 %v8403
        %12074 = vmatprep.mubr.bf16.mxu0 %v780
        %12075 = vmatmul.mubr.bf16.gmra.mrb[0].mxu0 %v779
        %v12076 = vpop.f32.mrb[0].mxu0
        %v12077 = vadd.f32 %v12036, %v12076
        %v12078 = vpop.f32.mrb[0].mxu0
        %v12079 = vadd.f32 %v12038, %v12078
        %v12080 = vpop.f32.mrb[0].mxu0
        %v12081 = vpop.f32.mrb[0].mxu0
        %12082 = vdwg.mxu0
        %12083 = vmatprep.subr.bf16.mxu0 %v8408
        %12084 = vmatpush1.bf16.msra.mxu0 %v8407
        %12085 = vmatprep.subr.bf16.mxu0 %v8412
        %12086 = vmatpush1.bf16.msra.mxu0 %v8411
        %12087 = vmatprep.subr.bf16.mxu0 %v8416
        %12088 = vmatpush1.bf16.msra.mxu0 %v8415
        %12089 = vmatprep.subr.bf16.mxu0 %v8420
        %12090 = vmatpush1.bf16.msra.mxu0 %v8419
        %12091 = vmatprep.subr.bf16.mxu0 %v8424
        %12092 = vmatpush1.bf16.msra.mxu0 %v8423
        %12093 = vmatprep.subr.bf16.mxu0 %v8428
        %12094 = vmatpush1.bf16.msra.mxu0 %v8427
        %12095 = vmatprep.subr.bf16.mxu0 %v8432
        %12096 = vmatpush1.bf16.msra.mxu0 %v8431
        %12097 = vmatprep.subr.bf16.mxu0 %v8436
        %12098 = vmatpush1.bf16.msra.mxu0 %v8435
        %12099 = vmatprep.subr.bf16.mxu0 %v8440
        %12100 = vmatpush1.bf16.msra.mxu0 %v8439
        %12101 = vmatprep.subr.bf16.mxu0 %v8444
        %12102 = vmatpush1.bf16.msra.mxu0 %v8443
        %12103 = vmatprep.subr.bf16.mxu0 %v8448
        %12104 = vmatpush1.bf16.msra.mxu0 %v8447
        %12105 = vmatprep.subr.bf16.mxu0 %v8452
        %12106 = vmatpush1.bf16.msra.mxu0 %v8451
        %12107 = vmatprep.subr.bf16.mxu0 %v8456
        %12108 = vmatpush1.bf16.msra.mxu0 %v8455
        %12109 = vmatprep.subr.bf16.mxu0 %v8460
        %12110 = vmatpush1.bf16.msra.mxu0 %v8459
        %12111 = vmatprep.subr.bf16.mxu0 %v8464
        %12112 = vmatpush1.bf16.msra.mxu0 %v8463
        %12113 = vmatprep.subr.bf16.mxu0 %v8468
        %12114 = vmatpush1.bf16.msra.mxu0 %v8467
        %12115 = vmatprep.mubr.bf16.mxu0 %v782
        %12116 = vmatmul.mubr.bf16.gmra.mrb[0].mxu0 %v781
        %v12117 = vpop.f32.mrb[0].mxu0
        %v12118 = vadd.f32 %v12077, %v12117
        %v12119 = vpop.f32.mrb[0].mxu0
        %v12120 = vadd.f32 %v12079, %v12119
        %v12121 = vpop.f32.mrb[0].mxu0
        %v12122 = vpop.f32.mrb[0].mxu0
        %12123 = vdwg.mxu0
        %12124 = vmatprep.subr.bf16.mxu0 %v8472
        %12125 = vmatpush1.bf16.msra.mxu0 %v8471
        %12126 = vmatprep.subr.bf16.mxu0 %v8476
        %12127 = vmatpush1.bf16.msra.mxu0 %v8475
        %12128 = vmatprep.subr.bf16.mxu0 %v8480
        %12129 = vmatpush1.bf16.msra.mxu0 %v8479
        %12130 = vmatprep.subr.bf16.mxu0 %v8484
        %12131 = vmatpush1.bf16.msra.mxu0 %v8483
        %12132 = vmatprep.subr.bf16.mxu0 %v8488
        %12133 = vmatpush1.bf16.msra.mxu0 %v8487
        %12134 = vmatprep.subr.bf16.mxu0 %v8492
        %12135 = vmatpush1.bf16.msra.mxu0 %v8491
        %12136 = vmatprep.subr.bf16.mxu0 %v8496
        %12137 = vmatpush1.bf16.msra.mxu0 %v8495
        %12138 = vmatprep.subr.bf16.mxu0 %v8500
        %12139 = vmatpush1.bf16.msra.mxu0 %v8499
        %12140 = vmatprep.subr.bf16.mxu0 %v8504
        %12141 = vmatpush1.bf16.msra.mxu0 %v8503
        %12142 = vmatprep.subr.bf16.mxu0 %v8508
        %12143 = vmatpush1.bf16.msra.mxu0 %v8507
        %12144 = vmatprep.subr.bf16.mxu0 %v8512
        %12145 = vmatpush1.bf16.msra.mxu0 %v8511
        %12146 = vmatprep.subr.bf16.mxu0 %v8516
        %12147 = vmatpush1.bf16.msra.mxu0 %v8515
        %12148 = vmatprep.subr.bf16.mxu0 %v8520
        %12149 = vmatpush1.bf16.msra.mxu0 %v8519
        %12150 = vmatprep.subr.bf16.mxu0 %v8524
        %12151 = vmatpush1.bf16.msra.mxu0 %v8523
        %12152 = vmatprep.subr.bf16.mxu0 %v8528
        %12153 = vmatpush1.bf16.msra.mxu0 %v8527
        %12154 = vmatprep.subr.bf16.mxu0 %v8532
        %12155 = vmatpush1.bf16.msra.mxu0 %v8531
        %12156 = vmatprep.mubr.bf16.mxu0 %v784
        %12157 = vmatmul.mubr.bf16.gmra.mrb[0].mxu0 %v783
        %v12158 = vpop.f32.mrb[0].mxu0
        %v12159 = vadd.f32 %v12118, %v12158
        %v12160 = vpop.f32.mrb[0].mxu0
        %v12161 = vadd.f32 %v12120, %v12160
        %v12162 = vpop.f32.mrb[0].mxu0
        %v12163 = vpop.f32.mrb[0].mxu0
        %12164 = vdwg.mxu0
        %12165 = vmatprep.subr.bf16.mxu0 %v8536
        %12166 = vmatpush1.bf16.msra.mxu0 %v8535
        %12167 = vmatprep.subr.bf16.mxu0 %v8540
        %12168 = vmatpush1.bf16.msra.mxu0 %v8539
        %12169 = vmatprep.subr.bf16.mxu0 %v8544
        %12170 = vmatpush1.bf16.msra.mxu0 %v8543
        %12171 = vmatprep.subr.bf16.mxu0 %v8548
        %12172 = vmatpush1.bf16.msra.mxu0 %v8547
        %12173 = vmatprep.subr.bf16.mxu0 %v8552
        %12174 = vmatpush1.bf16.msra.mxu0 %v8551
        %12175 = vmatprep.subr.bf16.mxu0 %v8556
        %12176 = vmatpush1.bf16.msra.mxu0 %v8555
        %12177 = vmatprep.subr.bf16.mxu0 %v8560
        %12178 = vmatpush1.bf16.msra.mxu0 %v8559
        %12179 = vmatprep.subr.bf16.mxu0 %v8564
        %12180 = vmatpush1.bf16.msra.mxu0 %v8563
        %12181 = vmatprep.subr.bf16.mxu0 %v8568
        %12182 = vmatpush1.bf16.msra.mxu0 %v8567
        %12183 = vmatprep.subr.bf16.mxu0 %v8572
        %12184 = vmatpush1.bf16.msra.mxu0 %v8571
        %12185 = vmatprep.subr.bf16.mxu0 %v8576
        %12186 = vmatpush1.bf16.msra.mxu0 %v8575
        %12187 = vmatprep.subr.bf16.mxu0 %v8580
        %12188 = vmatpush1.bf16.msra.mxu0 %v8579
        %12189 = vmatprep.subr.bf16.mxu0 %v8584
        %12190 = vmatpush1.bf16.msra.mxu0 %v8583
        %12191 = vmatprep.subr.bf16.mxu0 %v8588
        %12192 = vmatpush1.bf16.msra.mxu0 %v8587
        %12193 = vmatprep.subr.bf16.mxu0 %v8592
        %12194 = vmatpush1.bf16.msra.mxu0 %v8591
        %12195 = vmatprep.subr.bf16.mxu0 %v8596
        %12196 = vmatpush1.bf16.msra.mxu0 %v8595
        %12197 = vmatprep.mubr.bf16.mxu0 %v786
        %12198 = vmatmul.mubr.bf16.gmra.mrb[0].mxu0 %v785
        %v12199 = vpop.f32.mrb[0].mxu0
        %v12200 = vadd.f32 %v12159, %v12199
        %v12201 = vpop.f32.mrb[0].mxu0
        %v12202 = vadd.f32 %v12161, %v12201
        %v12203 = vpop.f32.mrb[0].mxu0
        %v12204 = vpop.f32.mrb[0].mxu0
        %12205 = vdwg.mxu0
        %12206 = vmatprep.subr.bf16.mxu0 %v8600
        %12207 = vmatpush1.bf16.msra.mxu0 %v8599
        %12208 = vmatprep.subr.bf16.mxu0 %v8604
        %12209 = vmatpush1.bf16.msra.mxu0 %v8603
        %12210 = vmatprep.subr.bf16.mxu0 %v8608
        %12211 = vmatpush1.bf16.msra.mxu0 %v8607
        %12212 = vmatprep.subr.bf16.mxu0 %v8612
        %12213 = vmatpush1.bf16.msra.mxu0 %v8611
        %12214 = vmatprep.subr.bf16.mxu0 %v8616
        %12215 = vmatpush1.bf16.msra.mxu0 %v8615
        %12216 = vmatprep.subr.bf16.mxu0 %v8620
        %12217 = vmatpush1.bf16.msra.mxu0 %v8619
        %12218 = vmatprep.subr.bf16.mxu0 %v8624
        %12219 = vmatpush1.bf16.msra.mxu0 %v8623
        %12220 = vmatprep.subr.bf16.mxu0 %v8628
        %12221 = vmatpush1.bf16.msra.mxu0 %v8627
        %12222 = vmatprep.subr.bf16.mxu0 0
        %12223 = vmatpush1.bf16.msra.mxu0 0
        %12224 = vmatprep.subr.bf16.mxu0 0
        %12225 = vmatpush1.bf16.msra.mxu0 0
        %12226 = vmatprep.subr.bf16.mxu0 0
        %12227 = vmatpush1.bf16.msra.mxu0 0
        %12228 = vmatprep.subr.bf16.mxu0 0
        %12229 = vmatpush1.bf16.msra.mxu0 0
        %12230 = vmatprep.subr.bf16.mxu0 0
        %12231 = vmatpush1.bf16.msra.mxu0 0
        %12232 = vmatprep.subr.bf16.mxu0 0
        %12233 = vmatpush1.bf16.msra.mxu0 0
        %12234 = vmatprep.subr.bf16.mxu0 0
        %12235 = vmatpush1.bf16.msra.mxu0 0
        %12236 = vmatprep.subr.bf16.mxu0 0
        %12237 = vmatpush1.bf16.msra.mxu0 0
        %12238 = vmatprep.mubr.bf16.mxu0 0
        %12239 = vmatmul.mubr.bf16.gmra.mrb[0].mxu0 %v787
        %v12240 = vpop.f32.mrb[0].mxu0
        %v12241 = vadd.f32 %v12200, %v12240
        %v12242 = vpop.f32.mrb[0].mxu0
        %v12243 = vadd.f32 %v12202, %v12242
        %v12244 = vpop.f32.mrb[0].mxu0
        %v12245 = vpop.f32.mrb[0].mxu0
        %12246 = vdwg.mxu0
        %v12251 = vcombine.low %v11216, %v11218
        %v12252 = vcombine.low %v12241, %v12243
        %v12254 = vunpack.c.l.s4 1983009808
        %v12255 = vunpack.c.0.s8 %v12254
        %v12256 = vlaneseq
        %v12257 = vshrl.u32 %v12256, 7
        %v12258 = vsub.s32 %v12255, %v12257
        %v12259 = vrot.slane %v12251, %v12258
        %v12261 = vunpack.c.l.s4 1983009808
        %v12262 = vunpack.c.0.s8 %v12261
        %v12263 = vlaneseq
        %v12264 = vshrl.u32 %v12263, 7
        %v12265 = vsub.s32 %v12262, %v12264
        %v12266 = vrot.slane %v12252, %v12265
        %v12267 = vcombine.low %v12259, %v12266
        %v12269 = vadd.f32 %v788, %v12267
        %12270 = vst [vmem:[#allocation2] sm:$0xff] %v12269
        %p12271 = scmp.eq.s32.totalorder %s26, 3
        // Predicated region
        $region57: #{model_forward.1} parent=47 // pred_check
          %p12272 = pneg %p12271
        $region58: #{model_forward.1} parent=47 // pred_check_branch
          %12274 = sbr.rel (%p12272) target = $region60
        $region59: #{model_forward.1} parent=47 // pred_region
          %v12275 = vld [vmem:[#allocation2] sm:$0xff]
          %v12276 = vmax.f32 %v12275, 0.0
          %v12277 = vld [vmem:[%s389] sm:$0xff]
          %v12278 = vld [vmem:[%s389 + $0x8] sm:$0xff]
          %v12279 = vld [vmem:[%s389 + $0x10] sm:$0xff]
          %v12280 = vld [vmem:[%s389 + $0x18] sm:$0xff]
          %v12281 = vld [vmem:[%s389 + $0x20] sm:$0xff]
          %v12282 = vld [vmem:[%s389 + $0x28] sm:$0xff]
          %v12283 = vld [vmem:[%s389 + $0x30] sm:$0xff]
          %v12284 = vld [vmem:[%s389 + $0x38] sm:$0xff]
          %v12285 = vld [vmem:[%s389 + $0x40] sm:$0xff]
          %v12286 = vld [vmem:[%s389 + $0x48] sm:$0xff]
          %v12287 = vld [vmem:[%s389 + $0x50] sm:$0xff]
          %v12288 = vld [vmem:[%s389 + $0x58] sm:$0xff]
          %v12289 = vld [vmem:[%s389 + $0x60] sm:$0xff]
          %v12290 = vld [vmem:[%s389 + $0x68] sm:$0xff]
          %v12291 = vld [vmem:[%s389 + $0x70] sm:$0xff]
          %v12292 = vld [vmem:[%s389 + $0x78] sm:$0xff]
          %v12293 = vld [vmem:[%s389 + $0x80] sm:$0xff]
          %v12294 = vld [vmem:[%s389 + $0x88] sm:$0xff]
          %v12295 = vld [vmem:[%s389 + $0x90] sm:$0xff]
          %v12296 = vld [vmem:[%s389 + $0x98] sm:$0xff]
          %v12297 = vld [vmem:[%s389 + $0xa0] sm:$0xff]
          %v12298 = vld [vmem:[%s389 + $0xa8] sm:$0xff]
          %v12299 = vld [vmem:[%s389 + $0xb0] sm:$0xff]
          %v12300 = vld [vmem:[%s389 + $0xb8] sm:$0xff]
          %v12301 = vld [vmem:[%s389 + $0xc0] sm:$0xff]
          %v12302 = vld [vmem:[%s389 + $0xc8] sm:$0xff]
          %v12303 = vld [vmem:[%s389 + $0xd0] sm:$0xff]
          %v12304 = vld [vmem:[%s389 + $0xd8] sm:$0xff]
          %v12305 = vld [vmem:[%s389 + $0xe0] sm:$0xff]
          %v12306 = vld [vmem:[%s389 + $0xe8] sm:$0xff]
          %v12307 = vld [vmem:[%s389 + $0xf0] sm:$0xff]
          %v12308 = vld [vmem:[%s389 + $0xf8] sm:$0xff]
          %v12309 = vld [vmem:[%s389 + $0x100] sm:$0xff]
          %v12310 = vld [vmem:[%s389 + $0x108] sm:$0xff]
          %v12311 = vld [vmem:[%s389 + $0x110] sm:$0xff]
          %v12312 = vld [vmem:[%s389 + $0x118] sm:$0xff]
          %v12313 = vld [vmem:[%s389 + $0x120] sm:$0xff]
          %v12314 = vld [vmem:[%s389 + $0x128] sm:$0xff]
          %v12315 = vld [vmem:[%s389 + $0x130] sm:$0xff]
          %v12316 = vld [vmem:[%s389 + $0x138] sm:$0xff]
          %v12317 = vld [vmem:[%s389 + $0x140] sm:$0xff]
          %v12318 = vld [vmem:[%s389 + $0x148] sm:$0xff]
          %v12319 = vld [vmem:[%s389 + $0x150] sm:$0xff]
          %v12320 = vld [vmem:[%s389 + $0x158] sm:$0xff]
          %v12321 = vld [vmem:[%s389 + $0x160] sm:$0xff]
          %v12322 = vld [vmem:[%s389 + $0x168] sm:$0xff]
          %v12323 = vld [vmem:[%s389 + $0x170] sm:$0xff]
          %v12324 = vld [vmem:[%s389 + $0x178] sm:$0xff]
          %v12325 = vld [vmem:[%s389 + $0x180] sm:$0xff]
          %v12326 = vld [vmem:[%s389 + $0x188] sm:$0xff]
          %v12327 = vld [vmem:[%s389 + $0x190] sm:$0xff]
          %v12328 = vld [vmem:[%s389 + $0x198] sm:$0xff]
          %v12329 = vld [vmem:[%s389 + $0x1a0] sm:$0xff]
          %v12330 = vld [vmem:[%s389 + $0x1a8] sm:$0xff]
          %v12331 = vld [vmem:[%s389 + $0x1b0] sm:$0xff]
          %v12332 = vld [vmem:[%s389 + $0x1b8] sm:$0xff]
          %v12333 = vld [vmem:[%s389 + $0x1c0] sm:$0xff]
          %v12334 = vld [vmem:[%s389 + $0x1c8] sm:$0xff]
          %v12335 = vld [vmem:[%s389 + $0x1d0] sm:$0xff]
          %v12336 = vld [vmem:[%s389 + $0x1d8] sm:$0xff]
          %v12337 = vld [vmem:[%s389 + $0x1e0] sm:$0xff]
          %v12338 = vld [vmem:[%s389 + $0x1e8] sm:$0xff]
          %v12339 = vld [vmem:[%s389 + $0x1f0] sm:$0xff]
          %v12340 = vld [vmem:[%s389 + $0x1f8] sm:$0xff]
          %v12341 = vld [vmem:[%s389 + $0x200] sm:$0xff]
          %v12342 = vld [vmem:[%s389 + $0x208] sm:$0xff]
          %v12343 = vld [vmem:[%s389 + $0x210] sm:$0xff]
          %v12344 = vld [vmem:[%s389 + $0x218] sm:$0xff]
          %v12345 = vld [vmem:[%s389 + $0x220] sm:$0xff]
          %v12346 = vld [vmem:[%s389 + $0x228] sm:$0xff]
          %v12347 = vld [vmem:[%s389 + $0x230] sm:$0xff]
          %v12348 = vld [vmem:[%s389 + $0x238] sm:$0xff]
          %v12349 = vld [vmem:[%s389 + $0x240] sm:$0xff]
          %v12350 = vld [vmem:[%s389 + $0x248] sm:$0xff]
          %v12351 = vld [vmem:[%s389 + $0x250] sm:$0xff]
          %v12352 = vld [vmem:[%s389 + $0x258] sm:$0xff]
          %v12353 = vld [vmem:[%s389 + $0x260] sm:$0xff]
          %v12354 = vld [vmem:[%s389 + $0x268] sm:$0xff]
          %v12355 = vld [vmem:[%s389 + $0x270] sm:$0xff]
          %v12356 = vld [vmem:[%s389 + $0x278] sm:$0xff]
          %v12357 = vld [vmem:[%s389 + $0x280] sm:$0xff]
          %v12358 = vld [vmem:[%s389 + $0x288] sm:$0xff]
          %v12359 = vld [vmem:[%s389 + $0x290] sm:$0xff]
          %v12360 = vld [vmem:[%s389 + $0x298] sm:$0xff]
          %v12361 = vld [vmem:[%s389 + $0x2a0] sm:$0xff]
          %v12362 = vld [vmem:[%s389 + $0x2a8] sm:$0xff]
          %v12363 = vld [vmem:[%s389 + $0x2b0] sm:$0xff]
          %v12364 = vld [vmem:[%s389 + $0x2b8] sm:$0xff]
          %v12365 = vld [vmem:[%s389 + $0x2c0] sm:$0xff]
          %v12366 = vld [vmem:[%s389 + $0x2c8] sm:$0xff]
          %v12367 = vld [vmem:[%s389 + $0x2d0] sm:$0xff]
          %v12368 = vld [vmem:[%s389 + $0x2d8] sm:$0xff]
          %v12369 = vld [vmem:[%s389 + $0x2e0] sm:$0xff]
          %v12370 = vld [vmem:[%s389 + $0x2e8] sm:$0xff]
          %v12371 = vld [vmem:[%s389 + $0x2f0] sm:$0xff]
          %v12372 = vld [vmem:[%s389 + $0x2f8] sm:$0xff]
          %v12373 = vld [vmem:[%s389 + $0x300] sm:$0xff]
          %v12374 = vld [vmem:[%s389 + $0x308] sm:$0xff]
          %v12375 = vld [vmem:[%s389 + $0x310] sm:$0xff]
          %v12376 = vld [vmem:[%s389 + $0x318] sm:$0xff]
          %v12377 = vld [vmem:[%s389 + $0x320] sm:$0xff]
          %v12378 = vld [vmem:[%s389 + $0x328] sm:$0xff]
          %v12379 = vld [vmem:[%s389 + $0x330] sm:$0xff]
          %v12380 = vld [vmem:[%s389 + $0x338] sm:$0xff]
          %v12381 = vld [vmem:[%s389 + $0x340] sm:$0xff]
          %v12382 = vld [vmem:[%s389 + $0x348] sm:$0xff]
          %v12383 = vld [vmem:[%s389 + $0x350] sm:$0xff]
          %v12384 = vld [vmem:[%s389 + $0x358] sm:$0xff]
          %v12385 = vld [vmem:[%s389 + $0x360] sm:$0xff]
          %v12386 = vld [vmem:[%s389 + $0x368] sm:$0xff]
          %v12387 = vld [vmem:[%s389 + $0x370] sm:$0xff]
          %v12388 = vld [vmem:[%s389 + $0x378] sm:$0xff]
          %v12389 = vld [vmem:[%s389 + $0x380] sm:$0xff]
          %v12390 = vld [vmem:[%s389 + $0x388] sm:$0xff]
          %v12391 = vld [vmem:[%s389 + $0x390] sm:$0xff]
          %v12392 = vld [vmem:[%s389 + $0x398] sm:$0xff]
          %v12393 = vld [vmem:[%s389 + $0x3a0] sm:$0xff]
          %v12394 = vld [vmem:[%s389 + $0x3a8] sm:$0xff]
          %v12395 = vld [vmem:[%s389 + $0x3b0] sm:$0xff]
          %v12396 = vld [vmem:[%s389 + $0x3b8] sm:$0xff]
          %v12397 = vld [vmem:[%s389 + $0x3c0] sm:$0xff]
          %v12398 = vld [vmem:[%s389 + $0x3c8] sm:$0xff]
          %v12399 = vld [vmem:[%s389 + $0x3d0] sm:$0xff]
          %v12400 = vld [vmem:[%s389 + $0x3d8] sm:$0xff]
          %v12401 = vld [vmem:[%s389 + $0x3e0] sm:$0xff]
          %v12402 = vld [vmem:[%s389 + $0x3e8] sm:$0xff]
          %v12403 = vld [vmem:[%s389 + $0x3f0] sm:$0xff]
          %v12404 = vld [vmem:[%s389 + $0x3f8] sm:$0xff]
          %v12405 = vld [vmem:[%s389 + $0x400] sm:$0xff]
          %v12406 = vld [vmem:[%s389 + $0x408] sm:$0xff]
          %v12407 = vld [vmem:[%s389 + $0x410] sm:$0xff]
          %v12408 = vld [vmem:[%s389 + $0x418] sm:$0xff]
          %v12409 = vld [vmem:[%s389 + $0x420] sm:$0xff]
          %v12410 = vld [vmem:[%s389 + $0x428] sm:$0xff]
          %v12411 = vld [vmem:[%s389 + $0x430] sm:$0xff]
          %v12412 = vld [vmem:[%s389 + $0x438] sm:$0xff]
          %v12413 = vld [vmem:[%s389 + $0x440] sm:$0xff]
          %v12414 = vld [vmem:[%s389 + $0x448] sm:$0xff]
          %v12415 = vld [vmem:[%s389 + $0x450] sm:$0xff]
          %v12416 = vld [vmem:[%s389 + $0x458] sm:$0xff]
          %v12417 = vld [vmem:[%s389 + $0x460] sm:$0xff]
          %v12418 = vld [vmem:[%s389 + $0x468] sm:$0xff]
          %v12419 = vld [vmem:[%s389 + $0x470] sm:$0xff]
          %v12420 = vld [vmem:[%s389 + $0x478] sm:$0xff]
          %v12421 = vld [vmem:[%s389 + $0x480] sm:$0xff]
          %v12422 = vld [vmem:[%s389 + $0x488] sm:$0xff]
          %v12423 = vld [vmem:[%s389 + $0x490] sm:$0xff]
          %v12424 = vld [vmem:[%s389 + $0x498] sm:$0xff]
          %v12425 = vld [vmem:[%s389 + $0x4a0] sm:$0xff]
          %v12426 = vld [vmem:[%s389 + $0x4a8] sm:$0xff]
          %v12427 = vld [vmem:[%s389 + $0x4b0] sm:$0xff]
          %v12428 = vld [vmem:[%s389 + $0x4b8] sm:$0xff]
          %v12429 = vld [vmem:[%s389 + $0x4c0] sm:$0xff]
          %v12430 = vld [vmem:[%s389 + $0x4c8] sm:$0xff]
          %v12431 = vld [vmem:[%s389 + $0x4d0] sm:$0xff]
          %v12432 = vld [vmem:[%s389 + $0x4d8] sm:$0xff]
          %v12433 = vld [vmem:[%s389 + $0x4e0] sm:$0xff]
          %v12434 = vld [vmem:[%s389 + $0x4e8] sm:$0xff]
          %v12435 = vld [vmem:[%s389 + $0x4f0] sm:$0xff]
          %v12436 = vld [vmem:[%s389 + $0x4f8] sm:$0xff]
          %v12437 = vld [vmem:[%s389 + $0x500] sm:$0xff]
          %v12438 = vld [vmem:[%s389 + $0x508] sm:$0xff]
          %v12439 = vld [vmem:[%s389 + $0x510] sm:$0xff]
          %v12440 = vld [vmem:[%s389 + $0x518] sm:$0xff]
          %v12441 = vld [vmem:[%s389 + $0x520] sm:$0xff]
          %v12442 = vld [vmem:[%s389 + $0x528] sm:$0xff]
          %v12443 = vld [vmem:[%s389 + $0x530] sm:$0xff]
          %v12444 = vld [vmem:[%s389 + $0x538] sm:$0xff]
          %v12445 = vld [vmem:[%s389 + $0x540] sm:$0xff]
          %v12446 = vld [vmem:[%s389 + $0x548] sm:$0xff]
          %v12447 = vld [vmem:[%s389 + $0x550] sm:$0xff]
          %v12448 = vld [vmem:[%s389 + $0x558] sm:$0xff]
          %v12449 = vld [vmem:[%s389 + $0x560] sm:$0xff]
          %v12450 = vld [vmem:[%s389 + $0x568] sm:$0xff]
          %v12451 = vld [vmem:[%s389 + $0x570] sm:$0xff]
          %v12452 = vld [vmem:[%s389 + $0x578] sm:$0xff]
          %v12453 = vld [vmem:[%s389 + $0x580] sm:$0xff]
          %v12454 = vld [vmem:[%s389 + $0x588] sm:$0xff]
          %v12455 = vld [vmem:[%s389 + $0x590] sm:$0xff]
          %v12456 = vld [vmem:[%s389 + $0x598] sm:$0xff]
          %v12457 = vld [vmem:[%s389 + $0x5a0] sm:$0xff]
          %v12458 = vld [vmem:[%s389 + $0x5a8] sm:$0xff]
          %v12459 = vld [vmem:[%s389 + $0x5b0] sm:$0xff]
          %v12460 = vld [vmem:[%s389 + $0x5b8] sm:$0xff]
          %v12461 = vld [vmem:[%s389 + $0x5c0] sm:$0xff]
          %v12462 = vld [vmem:[%s389 + $0x5c8] sm:$0xff]
          %v12463 = vld [vmem:[%s389 + $0x5d0] sm:$0xff]
          %v12464 = vld [vmem:[%s389 + $0x5d8] sm:$0xff]
          %v12465 = vld [vmem:[%s389 + $0x5e0] sm:$0xff]
          %v12466 = vld [vmem:[%s389 + $0x5e8] sm:$0xff]
          %v12467 = vld [vmem:[%s389 + $0x5f0] sm:$0xff]
          %v12468 = vld [vmem:[%s389 + $0x5f8] sm:$0xff]
          %v12469 = vld [vmem:[%s389 + $0x600] sm:$0xff]
          %v12470 = vld [vmem:[%s389 + $0x608] sm:$0xff]
          %v12471 = vld [vmem:[%s389 + $0x610] sm:$0xff]
          %v12472 = vld [vmem:[%s389 + $0x618] sm:$0xff]
          %v12473 = vld [vmem:[%s389 + $0x620] sm:$0xff]
          %v12474 = vld [vmem:[%s389 + $0x628] sm:$0xff]
          %v12475 = vld [vmem:[%s389 + $0x630] sm:$0xff]
          %v12476 = vld [vmem:[%s389 + $0x638] sm:$0xff]
          %v12477 = vld [vmem:[%s389 + $0x640] sm:$0xff]
          %v12478 = vld [vmem:[%s389 + $0x648] sm:$0xff]
          %v12479 = vld [vmem:[%s389 + $0x650] sm:$0xff]
          %v12480 = vld [vmem:[%s389 + $0x658] sm:$0xff]
          %v12481 = vld [vmem:[%s389 + $0x660] sm:$0xff]
          %v12482 = vld [vmem:[%s389 + $0x668] sm:$0xff]
          %v12483 = vld [vmem:[%s389 + $0x670] sm:$0xff]
          %v12484 = vld [vmem:[%s389 + $0x678] sm:$0xff]
          %v12485 = vld [vmem:[%s389 + $0x680] sm:$0xff]
          %v12486 = vld [vmem:[%s389 + $0x688] sm:$0xff]
          %v12487 = vld [vmem:[%s389 + $0x690] sm:$0xff]
          %v12488 = vld [vmem:[%s389 + $0x698] sm:$0xff]
          %v12489 = vld [vmem:[%s389 + $0x6a0] sm:$0xff]
          %v12490 = vld [vmem:[%s389 + $0x6a8] sm:$0xff]
          %v12491 = vld [vmem:[%s389 + $0x6b0] sm:$0xff]
          %v12492 = vld [vmem:[%s389 + $0x6b8] sm:$0xff]
          %v12493 = vld [vmem:[%s389 + $0x6c0] sm:$0xff]
          %v12494 = vld [vmem:[%s389 + $0x6c8] sm:$0xff]
          %v12495 = vld [vmem:[%s389 + $0x6d0] sm:$0xff]
          %v12496 = vld [vmem:[%s389 + $0x6d8] sm:$0xff]
          %v12497 = vld [vmem:[%s389 + $0x6e0] sm:$0xff]
          %v12498 = vld [vmem:[%s389 + $0x6e8] sm:$0xff]
          %v12499 = vld [vmem:[%s389 + $0x6f0] sm:$0xff]
          %v12500 = vld [vmem:[%s389 + $0x6f8] sm:$0xff]
          %v12501 = vld [vmem:[%s389 + $0x700] sm:$0xff]
          %v12502 = vld [vmem:[%s389 + $0x708] sm:$0xff]
          %v12503 = vld [vmem:[%s389 + $0x710] sm:$0xff]
          %v12504 = vld [vmem:[%s389 + $0x718] sm:$0xff]
          %v12505 = vld [vmem:[%s389 + $0x720] sm:$0xff]
          %v12506 = vld [vmem:[%s389 + $0x728] sm:$0xff]
          %v12507 = vld [vmem:[%s389 + $0x730] sm:$0xff]
          %v12508 = vld [vmem:[%s389 + $0x738] sm:$0xff]
          %v12509 = vld [vmem:[%s389 + $0x740] sm:$0xff]
          %v12510 = vld [vmem:[%s389 + $0x748] sm:$0xff]
          %v12511 = vld [vmem:[%s389 + $0x750] sm:$0xff]
          %v12512 = vld [vmem:[%s389 + $0x758] sm:$0xff]
          %v12513 = vld [vmem:[%s389 + $0x760] sm:$0xff]
          %v12514 = vld [vmem:[%s389 + $0x768] sm:$0xff]
          %v12515 = vld [vmem:[%s389 + $0x770] sm:$0xff]
          %v12516 = vld [vmem:[%s389 + $0x778] sm:$0xff]
          %v12517 = vld [vmem:[%s389 + $0x780] sm:$0xff]
          %v12518 = vld [vmem:[%s389 + $0x788] sm:$0xff]
          %v12519 = vld [vmem:[%s389 + $0x790] sm:$0xff]
          %v12520 = vld [vmem:[%s389 + $0x798] sm:$0xff]
          %v12521 = vld [vmem:[%s389 + $0x7a0] sm:$0xff]
          %v12522 = vld [vmem:[%s389 + $0x7a8] sm:$0xff]
          %v12523 = vld [vmem:[%s389 + $0x7b0] sm:$0xff]
          %v12524 = vld [vmem:[%s389 + $0x7b8] sm:$0xff]
          %v12525 = vld [vmem:[%s389 + $0x7c0] sm:$0xff]
          %v12526 = vld [vmem:[%s389 + $0x7c8] sm:$0xff]
          %v12527 = vld [vmem:[%s389 + $0x7d0] sm:$0xff]
          %v12528 = vld [vmem:[%s389 + $0x7d8] sm:$0xff]
          %v12529 = vld [vmem:[%s389 + $0x7e0] sm:$0xff]
          %v12530 = vld [vmem:[%s389 + $0x7e8] sm:$0xff]
          %v12531 = vld [vmem:[%s389 + $0x7f0] sm:$0xff]
          %v12532 = vld [vmem:[%s389 + $0x7f8] sm:$0xff]
          %v12533 = vld [vmem:[%s393] sm:$0xf]
          %v12535 = vlaneseq
          %v12536 = vshrl.u32 %v12535, 7
          %v12537 = vsub.s32 0, %v12536
          %v12538 = vrot.slane %v12533, %v12537
          %v12539 = vlaneseq
          %v12540 = vshrl.u32 %v12539, 7
          %v12541 = vsub.s32 1, %v12540
          %v12542 = vrot.slane %v12533, %v12541
          %v12543 = vlaneseq
          %v12544 = vshrl.u32 %v12543, 7
          %v12545 = vsub.s32 2, %v12544
          %v12546 = vrot.slane %v12533, %v12545
          %v12547 = vlaneseq
          %v12548 = vshrl.u32 %v12547, 7
          %v12549 = vsub.s32 3, %v12548
          %v12550 = vrot.slane %v12533, %v12549
          %v12556 = vcombine.high %v12276, %v12276
          %v12558 = vunpack.c.l.s4 1983009808
          %v12559 = vunpack.c.0.s8 %v12558
          %v12560 = vlaneseq
          %v12561 = vshrl.u32 %v12560, 7
          %v12562 = vsub.s32 %v12559, %v12561
          %v12563 = vrot.slane %v12276, %v12562
          %v12565 = vunpack.c.l.s4 1983009808
          %v12566 = vunpack.c.0.s8 %v12565
          %v12567 = vlaneseq
          %v12568 = vshrl.u32 %v12567, 7
          %v12569 = vsub.s32 %v12566, %v12568
          %v12570 = vrot.slane %v12556, %v12569
          %v12571 = vcombine.high %v12563, %v12563
          %v12572 = vcombine.high %v12570, %v12570
          %12577 = vmatprep.subr.mxu0 %v12278
          %12578 = vmatpush1.msra.mxu0 %v12277
          %12579 = vmatprep.subr.mxu0 %v12282
          %12580 = vmatpush1.msra.mxu0 %v12281
          %12581 = vmatprep.subr.mxu0 %v12286
          %12582 = vmatpush1.msra.mxu0 %v12285
          %12583 = vmatprep.subr.mxu0 %v12290
          %12584 = vmatpush1.msra.mxu0 %v12289
          %12585 = vmatprep.subr.mxu0 %v12294
          %12586 = vmatpush1.msra.mxu0 %v12293
          %12587 = vmatprep.subr.mxu0 %v12298
          %12588 = vmatpush1.msra.mxu0 %v12297
          %12589 = vmatprep.subr.mxu0 %v12302
          %12590 = vmatpush1.msra.mxu0 %v12301
          %12591 = vmatprep.subr.mxu0 %v12306
          %12592 = vmatpush1.msra.mxu0 %v12305
          %12593 = vmatprep.subr.mxu0 %v12310
          %12594 = vmatpush1.msra.mxu0 %v12309
          %12595 = vmatprep.subr.mxu0 %v12314
          %12596 = vmatpush1.msra.mxu0 %v12313
          %12597 = vmatprep.subr.mxu0 %v12318
          %12598 = vmatpush1.msra.mxu0 %v12317
          %12599 = vmatprep.subr.mxu0 %v12322
          %12600 = vmatpush1.msra.mxu0 %v12321
          %12601 = vmatprep.subr.mxu0 %v12326
          %12602 = vmatpush1.msra.mxu0 %v12325
          %12603 = vmatprep.subr.mxu0 %v12330
          %12604 = vmatpush1.msra.mxu0 %v12329
          %12605 = vmatprep.subr.mxu0 %v12334
          %12606 = vmatpush1.msra.mxu0 %v12333
          %12607 = vmatprep.subr.mxu0 %v12338
          %12608 = vmatpush1.msra.mxu0 %v12337
          %12609 = vmatprep.subr.mxu0 %v12342
          %12610 = vmatpush1.msra.mxu0 %v12341
          %12611 = vmatprep.subr.mxu0 %v12346
          %12612 = vmatpush1.msra.mxu0 %v12345
          %12613 = vmatprep.subr.mxu0 %v12350
          %12614 = vmatpush1.msra.mxu0 %v12349
          %12615 = vmatprep.subr.mxu0 %v12354
          %12616 = vmatpush1.msra.mxu0 %v12353
          %12617 = vmatprep.subr.mxu0 %v12358
          %12618 = vmatpush1.msra.mxu0 %v12357
          %12619 = vmatprep.subr.mxu0 %v12362
          %12620 = vmatpush1.msra.mxu0 %v12361
          %12621 = vmatprep.subr.mxu0 %v12366
          %12622 = vmatpush1.msra.mxu0 %v12365
          %12623 = vmatprep.subr.mxu0 %v12370
          %12624 = vmatpush1.msra.mxu0 %v12369
          %12625 = vmatprep.subr.mxu0 %v12374
          %12626 = vmatpush1.msra.mxu0 %v12373
          %12627 = vmatprep.subr.mxu0 %v12378
          %12628 = vmatpush1.msra.mxu0 %v12377
          %12629 = vmatprep.subr.mxu0 %v12382
          %12630 = vmatpush1.msra.mxu0 %v12381
          %12631 = vmatprep.subr.mxu0 %v12386
          %12632 = vmatpush1.msra.mxu0 %v12385
          %12633 = vmatprep.subr.mxu0 %v12390
          %12634 = vmatpush1.msra.mxu0 %v12389
          %12635 = vmatprep.subr.mxu0 %v12394
          %12636 = vmatpush1.msra.mxu0 %v12393
          %12637 = vmatprep.subr.mxu0 %v12398
          %12638 = vmatpush1.msra.mxu0 %v12397
          %12639 = vmatprep.subr.mxu0 %v12402
          %12640 = vmatpush1.msra.mxu0 %v12401
          %12641 = vmatprep.mubr.f32.mxu0 %v12571
          %12642 = vmatmul.mubr.f32.gmra.mrb[0].mxu0 %v12563
          %v12643 = vpop.f32.mrb[0].mxu0
          %v12644 = vadd.f32 %v12538, %v12643
          %v12645 = vpop.f32.mrb[0].mxu0
          %v12646 = vadd.f32 %v12542, %v12645
          %12647 = vdwg.mxu0
          %12648 = vmatprep.subr.mxu0 %v12406
          %12649 = vmatpush1.msra.mxu0 %v12405
          %12650 = vmatprep.subr.mxu0 %v12410
          %12651 = vmatpush1.msra.mxu0 %v12409
          %12652 = vmatprep.subr.mxu0 %v12414
          %12653 = vmatpush1.msra.mxu0 %v12413
          %12654 = vmatprep.subr.mxu0 %v12418
          %12655 = vmatpush1.msra.mxu0 %v12417
          %12656 = vmatprep.subr.mxu0 %v12422
          %12657 = vmatpush1.msra.mxu0 %v12421
          %12658 = vmatprep.subr.mxu0 %v12426
          %12659 = vmatpush1.msra.mxu0 %v12425
          %12660 = vmatprep.subr.mxu0 %v12430
          %12661 = vmatpush1.msra.mxu0 %v12429
          %12662 = vmatprep.subr.mxu0 %v12434
          %12663 = vmatpush1.msra.mxu0 %v12433
          %12664 = vmatprep.subr.mxu0 %v12438
          %12665 = vmatpush1.msra.mxu0 %v12437
          %12666 = vmatprep.subr.mxu0 %v12442
          %12667 = vmatpush1.msra.mxu0 %v12441
          %12668 = vmatprep.subr.mxu0 %v12446
          %12669 = vmatpush1.msra.mxu0 %v12445
          %12670 = vmatprep.subr.mxu0 %v12450
          %12671 = vmatpush1.msra.mxu0 %v12449
          %12672 = vmatprep.subr.mxu0 %v12454
          %12673 = vmatpush1.msra.mxu0 %v12453
          %12674 = vmatprep.subr.mxu0 %v12458
          %12675 = vmatpush1.msra.mxu0 %v12457
          %12676 = vmatprep.subr.mxu0 %v12462
          %12677 = vmatpush1.msra.mxu0 %v12461
          %12678 = vmatprep.subr.mxu0 %v12466
          %12679 = vmatpush1.msra.mxu0 %v12465
          %12680 = vmatprep.subr.mxu0 %v12470
          %12681 = vmatpush1.msra.mxu0 %v12469
          %12682 = vmatprep.subr.mxu0 %v12474
          %12683 = vmatpush1.msra.mxu0 %v12473
          %12684 = vmatprep.subr.mxu0 %v12478
          %12685 = vmatpush1.msra.mxu0 %v12477
          %12686 = vmatprep.subr.mxu0 %v12482
          %12687 = vmatpush1.msra.mxu0 %v12481
          %12688 = vmatprep.subr.mxu0 %v12486
          %12689 = vmatpush1.msra.mxu0 %v12485
          %12690 = vmatprep.subr.mxu0 %v12490
          %12691 = vmatpush1.msra.mxu0 %v12489
          %12692 = vmatprep.subr.mxu0 %v12494
          %12693 = vmatpush1.msra.mxu0 %v12493
          %12694 = vmatprep.subr.mxu0 %v12498
          %12695 = vmatpush1.msra.mxu0 %v12497
          %12696 = vmatprep.subr.mxu0 %v12502
          %12697 = vmatpush1.msra.mxu0 %v12501
          %12698 = vmatprep.subr.mxu0 %v12506
          %12699 = vmatpush1.msra.mxu0 %v12505
          %12700 = vmatprep.subr.mxu0 %v12510
          %12701 = vmatpush1.msra.mxu0 %v12509
          %12702 = vmatprep.subr.mxu0 %v12514
          %12703 = vmatpush1.msra.mxu0 %v12513
          %12704 = vmatprep.subr.mxu0 %v12518
          %12705 = vmatpush1.msra.mxu0 %v12517
          %12706 = vmatprep.subr.mxu0 %v12522
          %12707 = vmatpush1.msra.mxu0 %v12521
          %12708 = vmatprep.subr.mxu0 %v12526
          %12709 = vmatpush1.msra.mxu0 %v12525
          %12710 = vmatprep.subr.mxu0 %v12530
          %12711 = vmatpush1.msra.mxu0 %v12529
          %12712 = vmatprep.mubr.f32.mxu0 %v12572
          %12713 = vmatmul.mubr.f32.gmra.mrb[0].mxu0 %v12570
          %v12714 = vpop.f32.mrb[0].mxu0
          %v12715 = vadd.f32 %v12644, %v12714
          %v12716 = vpop.f32.mrb[0].mxu0
          %v12717 = vadd.f32 %v12646, %v12716
          %12718 = vdwg.mxu0
          %12719 = vmatprep.subr.mxu0 %v12280
          %12720 = vmatpush1.msra.mxu0 %v12279
          %12721 = vmatprep.subr.mxu0 %v12284
          %12722 = vmatpush1.msra.mxu0 %v12283
          %12723 = vmatprep.subr.mxu0 %v12288
          %12724 = vmatpush1.msra.mxu0 %v12287
          %12725 = vmatprep.subr.mxu0 %v12292
          %12726 = vmatpush1.msra.mxu0 %v12291
          %12727 = vmatprep.subr.mxu0 %v12296
          %12728 = vmatpush1.msra.mxu0 %v12295
          %12729 = vmatprep.subr.mxu0 %v12300
          %12730 = vmatpush1.msra.mxu0 %v12299
          %12731 = vmatprep.subr.mxu0 %v12304
          %12732 = vmatpush1.msra.mxu0 %v12303
          %12733 = vmatprep.subr.mxu0 %v12308
          %12734 = vmatpush1.msra.mxu0 %v12307
          %12735 = vmatprep.subr.mxu0 %v12312
          %12736 = vmatpush1.msra.mxu0 %v12311
          %12737 = vmatprep.subr.mxu0 %v12316
          %12738 = vmatpush1.msra.mxu0 %v12315
          %12739 = vmatprep.subr.mxu0 %v12320
          %12740 = vmatpush1.msra.mxu0 %v12319
          %12741 = vmatprep.subr.mxu0 %v12324
          %12742 = vmatpush1.msra.mxu0 %v12323
          %12743 = vmatprep.subr.mxu0 %v12328
          %12744 = vmatpush1.msra.mxu0 %v12327
          %12745 = vmatprep.subr.mxu0 %v12332
          %12746 = vmatpush1.msra.mxu0 %v12331
          %12747 = vmatprep.subr.mxu0 %v12336
          %12748 = vmatpush1.msra.mxu0 %v12335
          %12749 = vmatprep.subr.mxu0 %v12340
          %12750 = vmatpush1.msra.mxu0 %v12339
          %12751 = vmatprep.subr.mxu0 %v12344
          %12752 = vmatpush1.msra.mxu0 %v12343
          %12753 = vmatprep.subr.mxu0 %v12348
          %12754 = vmatpush1.msra.mxu0 %v12347
          %12755 = vmatprep.subr.mxu0 %v12352
          %12756 = vmatpush1.msra.mxu0 %v12351
          %12757 = vmatprep.subr.mxu0 %v12356
          %12758 = vmatpush1.msra.mxu0 %v12355
          %12759 = vmatprep.subr.mxu0 %v12360
          %12760 = vmatpush1.msra.mxu0 %v12359
          %12761 = vmatprep.subr.mxu0 %v12364
          %12762 = vmatpush1.msra.mxu0 %v12363
          %12763 = vmatprep.subr.mxu0 %v12368
          %12764 = vmatpush1.msra.mxu0 %v12367
          %12765 = vmatprep.subr.mxu0 %v12372
          %12766 = vmatpush1.msra.mxu0 %v12371
          %12767 = vmatprep.subr.mxu0 %v12376
          %12768 = vmatpush1.msra.mxu0 %v12375
          %12769 = vmatprep.subr.mxu0 %v12380
          %12770 = vmatpush1.msra.mxu0 %v12379
          %12771 = vmatprep.subr.mxu0 %v12384
          %12772 = vmatpush1.msra.mxu0 %v12383
          %12773 = vmatprep.subr.mxu0 %v12388
          %12774 = vmatpush1.msra.mxu0 %v12387
          %12775 = vmatprep.subr.mxu0 %v12392
          %12776 = vmatpush1.msra.mxu0 %v12391
          %12777 = vmatprep.subr.mxu0 %v12396
          %12778 = vmatpush1.msra.mxu0 %v12395
          %12779 = vmatprep.subr.mxu0 %v12400
          %12780 = vmatpush1.msra.mxu0 %v12399
          %12781 = vmatprep.subr.mxu0 %v12404
          %12782 = vmatpush1.msra.mxu0 %v12403
          %12783 = vmatprep.mubr.f32.mxu0 %v12571
          %12784 = vmatmul.mubr.f32.gmra.mrb[0].mxu0 %v12563
          %v12785 = vpop.f32.mrb[0].mxu0
          %v12786 = vadd.f32 %v12546, %v12785
          %v12787 = vpop.f32.mrb[0].mxu0
          %v12788 = vadd.f32 %v12550, %v12787
          %12789 = vdwg.mxu0
          %12790 = vmatprep.subr.mxu0 %v12408
          %12791 = vmatpush1.msra.mxu0 %v12407
          %12792 = vmatprep.subr.mxu0 %v12412
          %12793 = vmatpush1.msra.mxu0 %v12411
          %12794 = vmatprep.subr.mxu0 %v12416
          %12795 = vmatpush1.msra.mxu0 %v12415
          %12796 = vmatprep.subr.mxu0 %v12420
          %12797 = vmatpush1.msra.mxu0 %v12419
          %12798 = vmatprep.subr.mxu0 %v12424
          %12799 = vmatpush1.msra.mxu0 %v12423
          %12800 = vmatprep.subr.mxu0 %v12428
          %12801 = vmatpush1.msra.mxu0 %v12427
          %12802 = vmatprep.subr.mxu0 %v12432
          %12803 = vmatpush1.msra.mxu0 %v12431
          %12804 = vmatprep.subr.mxu0 %v12436
          %12805 = vmatpush1.msra.mxu0 %v12435
          %12806 = vmatprep.subr.mxu0 %v12440
          %12807 = vmatpush1.msra.mxu0 %v12439
          %12808 = vmatprep.subr.mxu0 %v12444
          %12809 = vmatpush1.msra.mxu0 %v12443
          %12810 = vmatprep.subr.mxu0 %v12448
          %12811 = vmatpush1.msra.mxu0 %v12447
          %12812 = vmatprep.subr.mxu0 %v12452
          %12813 = vmatpush1.msra.mxu0 %v12451
          %12814 = vmatprep.subr.mxu0 %v12456
          %12815 = vmatpush1.msra.mxu0 %v12455
          %12816 = vmatprep.subr.mxu0 %v12460
          %12817 = vmatpush1.msra.mxu0 %v12459
          %12818 = vmatprep.subr.mxu0 %v12464
          %12819 = vmatpush1.msra.mxu0 %v12463
          %12820 = vmatprep.subr.mxu0 %v12468
          %12821 = vmatpush1.msra.mxu0 %v12467
          %12822 = vmatprep.subr.mxu0 %v12472
          %12823 = vmatpush1.msra.mxu0 %v12471
          %12824 = vmatprep.subr.mxu0 %v12476
          %12825 = vmatpush1.msra.mxu0 %v12475
          %12826 = vmatprep.subr.mxu0 %v12480
          %12827 = vmatpush1.msra.mxu0 %v12479
          %12828 = vmatprep.subr.mxu0 %v12484
          %12829 = vmatpush1.msra.mxu0 %v12483
          %12830 = vmatprep.subr.mxu0 %v12488
          %12831 = vmatpush1.msra.mxu0 %v12487
          %12832 = vmatprep.subr.mxu0 %v12492
          %12833 = vmatpush1.msra.mxu0 %v12491
          %12834 = vmatprep.subr.mxu0 %v12496
          %12835 = vmatpush1.msra.mxu0 %v12495
          %12836 = vmatprep.subr.mxu0 %v12500
          %12837 = vmatpush1.msra.mxu0 %v12499
          %12838 = vmatprep.subr.mxu0 %v12504
          %12839 = vmatpush1.msra.mxu0 %v12503
          %12840 = vmatprep.subr.mxu0 %v12508
          %12841 = vmatpush1.msra.mxu0 %v12507
          %12842 = vmatprep.subr.mxu0 %v12512
          %12843 = vmatpush1.msra.mxu0 %v12511
          %12844 = vmatprep.subr.mxu0 %v12516
          %12845 = vmatpush1.msra.mxu0 %v12515
          %12846 = vmatprep.subr.mxu0 %v12520
          %12847 = vmatpush1.msra.mxu0 %v12519
          %12848 = vmatprep.subr.mxu0 %v12524
          %12849 = vmatpush1.msra.mxu0 %v12523
          %12850 = vmatprep.subr.mxu0 %v12528
          %12851 = vmatpush1.msra.mxu0 %v12527
          %12852 = vmatprep.subr.mxu0 %v12532
          %12853 = vmatpush1.msra.mxu0 %v12531
          %12854 = vmatprep.mubr.f32.mxu0 %v12572
          %12855 = vmatmul.mubr.f32.gmra.mrb[0].mxu0 %v12570
          %v12856 = vpop.f32.mrb[0].mxu0
          %v12857 = vadd.f32 %v12786, %v12856
          %v12858 = vpop.f32.mrb[0].mxu0
          %v12859 = vadd.f32 %v12788, %v12858
          %12860 = vdwg.mxu0
          %v12861 = vmax.f32 %v12715, 0.0
          %v12862 = vmax.f32 %v12717, 0.0
          %v12863 = vmax.f32 %v12857, 0.0
          %v12864 = vmax.f32 %v12859, 0.0
          %v12865 = vld [vmem:[%s398] sm:$0xff]
          %v12866 = vld [vmem:[%s398 + $0x8] sm:$0xff]
          %v12867 = vld [vmem:[%s398 + $0x10] sm:$0xff]
          %v12868 = vld [vmem:[%s398 + $0x18] sm:$0xff]
          %v12869 = vld [vmem:[%s398 + $0x20] sm:$0xff]
          %v12870 = vld [vmem:[%s398 + $0x28] sm:$0xff]
          %v12871 = vld [vmem:[%s398 + $0x30] sm:$0xff]
          %v12872 = vld [vmem:[%s398 + $0x38] sm:$0xff]
          %v12873 = vld [vmem:[%s398 + $0x40] sm:$0xff]
          %v12874 = vld [vmem:[%s398 + $0x48] sm:$0xff]
          %v12875 = vld [vmem:[%s398 + $0x50] sm:$0xff]
          %v12876 = vld [vmem:[%s398 + $0x58] sm:$0xff]
          %v12877 = vld [vmem:[%s398 + $0x60] sm:$0xff]
          %v12878 = vld [vmem:[%s398 + $0x68] sm:$0xff]
          %v12879 = vld [vmem:[%s398 + $0x70] sm:$0xff]
          %v12880 = vld [vmem:[%s398 + $0x78] sm:$0xff]
          %v12881 = vld [vmem:[%s398 + $0x80] sm:$0xff]
          %v12882 = vld [vmem:[%s398 + $0x88] sm:$0xff]
          %v12883 = vld [vmem:[%s398 + $0x90] sm:$0xff]
          %v12884 = vld [vmem:[%s398 + $0x98] sm:$0xff]
          %v12885 = vld [vmem:[%s398 + $0xa0] sm:$0xff]
          %v12886 = vld [vmem:[%s398 + $0xa8] sm:$0xff]
          %v12887 = vld [vmem:[%s398 + $0xb0] sm:$0xff]
          %v12888 = vld [vmem:[%s398 + $0xb8] sm:$0xff]
          %v12889 = vld [vmem:[%s398 + $0xc0] sm:$0xff]
          %v12890 = vld [vmem:[%s398 + $0xc8] sm:$0xff]
          %v12891 = vld [vmem:[%s398 + $0xd0] sm:$0xff]
          %v12892 = vld [vmem:[%s398 + $0xd8] sm:$0xff]
          %v12893 = vld [vmem:[%s398 + $0xe0] sm:$0xff]
          %v12894 = vld [vmem:[%s398 + $0xe8] sm:$0xff]
          %v12895 = vld [vmem:[%s398 + $0xf0] sm:$0xff]
          %v12896 = vld [vmem:[%s398 + $0xf8] sm:$0xff]
          %v12897 = vld [vmem:[%s398 + $0x100] sm:$0xff]
          %v12898 = vld [vmem:[%s398 + $0x108] sm:$0xff]
          %v12899 = vld [vmem:[%s398 + $0x110] sm:$0xff]
          %v12900 = vld [vmem:[%s398 + $0x118] sm:$0xff]
          %v12901 = vld [vmem:[%s398 + $0x120] sm:$0xff]
          %v12902 = vld [vmem:[%s398 + $0x128] sm:$0xff]
          %v12903 = vld [vmem:[%s398 + $0x130] sm:$0xff]
          %v12904 = vld [vmem:[%s398 + $0x138] sm:$0xff]
          %v12905 = vld [vmem:[%s398 + $0x140] sm:$0xff]
          %v12906 = vld [vmem:[%s398 + $0x148] sm:$0xff]
          %v12907 = vld [vmem:[%s398 + $0x150] sm:$0xff]
          %v12908 = vld [vmem:[%s398 + $0x158] sm:$0xff]
          %v12909 = vld [vmem:[%s398 + $0x160] sm:$0xff]
          %v12910 = vld [vmem:[%s398 + $0x168] sm:$0xff]
          %v12911 = vld [vmem:[%s398 + $0x170] sm:$0xff]
          %v12912 = vld [vmem:[%s398 + $0x178] sm:$0xff]
          %v12913 = vld [vmem:[%s398 + $0x180] sm:$0xff]
          %v12914 = vld [vmem:[%s398 + $0x188] sm:$0xff]
          %v12915 = vld [vmem:[%s398 + $0x190] sm:$0xff]
          %v12916 = vld [vmem:[%s398 + $0x198] sm:$0xff]
          %v12917 = vld [vmem:[%s398 + $0x1a0] sm:$0xff]
          %v12918 = vld [vmem:[%s398 + $0x1a8] sm:$0xff]
          %v12919 = vld [vmem:[%s398 + $0x1b0] sm:$0xff]
          %v12920 = vld [vmem:[%s398 + $0x1b8] sm:$0xff]
          %v12921 = vld [vmem:[%s398 + $0x1c0] sm:$0xff]
          %v12922 = vld [vmem:[%s398 + $0x1c8] sm:$0xff]
          %v12923 = vld [vmem:[%s398 + $0x1d0] sm:$0xff]
          %v12924 = vld [vmem:[%s398 + $0x1d8] sm:$0xff]
          %v12925 = vld [vmem:[%s398 + $0x1e0] sm:$0xff]
          %v12926 = vld [vmem:[%s398 + $0x1e8] sm:$0xff]
          %v12927 = vld [vmem:[%s398 + $0x1f0] sm:$0xff]
          %v12928 = vld [vmem:[%s398 + $0x1f8] sm:$0xff]
          %v12929 = vld [vmem:[%s401] sm:$0x1]
          %v12931 = vlaneseq
          %v12932 = vshrl.u32 %v12931, 7
          %v12933 = vsub.s32 0, %v12932
          %v12934 = vrot.slane %v12929, %v12933
          %12936 = vmatprep.subr.mxu0 0.0
          %12937 = vmatpush1.msra.mxu0 %v12865
          %12938 = vmatprep.subr.mxu0 0.0
          %12939 = vmatpush1.msra.mxu0 %v12866
          %12940 = vmatprep.subr.mxu0 0.0
          %12941 = vmatpush1.msra.mxu0 %v12867
          %12942 = vmatprep.subr.mxu0 0.0
          %12943 = vmatpush1.msra.mxu0 %v12868
          %12944 = vmatprep.subr.mxu0 0.0
          %12945 = vmatpush1.msra.mxu0 %v12869
          %12946 = vmatprep.subr.mxu0 0.0
          %12947 = vmatpush1.msra.mxu0 %v12870
          %12948 = vmatprep.subr.mxu0 0.0
          %12949 = vmatpush1.msra.mxu0 %v12871
          %12950 = vmatprep.subr.mxu0 0.0
          %12951 = vmatpush1.msra.mxu0 %v12872
          %12952 = vmatprep.subr.mxu0 0.0
          %12953 = vmatpush1.msra.mxu0 %v12873
          %12954 = vmatprep.subr.mxu0 0.0
          %12955 = vmatpush1.msra.mxu0 %v12874
          %12956 = vmatprep.subr.mxu0 0.0
          %12957 = vmatpush1.msra.mxu0 %v12875
          %12958 = vmatprep.subr.mxu0 0.0
          %12959 = vmatpush1.msra.mxu0 %v12876
          %12960 = vmatprep.subr.mxu0 0.0
          %12961 = vmatpush1.msra.mxu0 %v12877
          %12962 = vmatprep.subr.mxu0 0.0
          %12963 = vmatpush1.msra.mxu0 %v12878
          %12964 = vmatprep.subr.mxu0 0.0
          %12965 = vmatpush1.msra.mxu0 %v12879
          %12966 = vmatprep.subr.mxu0 0.0
          %12967 = vmatpush1.msra.mxu0 %v12880
          %12968 = vmatprep.subr.mxu0 0.0
          %12969 = vmatpush1.msra.mxu0 %v12881
          %12970 = vmatprep.subr.mxu0 0.0
          %12971 = vmatpush1.msra.mxu0 %v12882
          %12972 = vmatprep.subr.mxu0 0.0
          %12973 = vmatpush1.msra.mxu0 %v12883
          %12974 = vmatprep.subr.mxu0 0.0
          %12975 = vmatpush1.msra.mxu0 %v12884
          %12976 = vmatprep.subr.mxu0 0.0
          %12977 = vmatpush1.msra.mxu0 %v12885
          %12978 = vmatprep.subr.mxu0 0.0
          %12979 = vmatpush1.msra.mxu0 %v12886
          %12980 = vmatprep.subr.mxu0 0.0
          %12981 = vmatpush1.msra.mxu0 %v12887
          %12982 = vmatprep.subr.mxu0 0.0
          %12983 = vmatpush1.msra.mxu0 %v12888
          %12984 = vmatprep.subr.mxu0 0.0
          %12985 = vmatpush1.msra.mxu0 %v12889
          %12986 = vmatprep.subr.mxu0 0.0
          %12987 = vmatpush1.msra.mxu0 %v12890
          %12988 = vmatprep.subr.mxu0 0.0
          %12989 = vmatpush1.msra.mxu0 %v12891
          %12990 = vmatprep.subr.mxu0 0.0
          %12991 = vmatpush1.msra.mxu0 %v12892
          %12992 = vmatprep.subr.mxu0 0.0
          %12993 = vmatpush1.msra.mxu0 %v12893
          %12994 = vmatprep.subr.mxu0 0.0
          %12995 = vmatpush1.msra.mxu0 %v12894
          %12996 = vmatprep.subr.mxu0 0.0
          %12997 = vmatpush1.msra.mxu0 %v12895
          %12998 = vmatprep.subr.mxu0 0.0
          %12999 = vmatpush1.msra.mxu0 %v12896
          %13000 = vmatprep.mubr.f32.mxu0 %v12862
          %13001 = vmatmul.mubr.f32.gmra.mrb[0].mxu0 %v12861
          %v13002 = vpop.f32.mrb[0].mxu0
          %v13003 = vadd.f32 %v12934, %v13002
          %v13004 = vpop.f32.mrb[0].mxu0
          %13005 = vdwg.mxu0
          %13006 = vmatprep.subr.mxu0 0.0
          %13007 = vmatpush1.msra.mxu0 %v12897
          %13008 = vmatprep.subr.mxu0 0.0
          %13009 = vmatpush1.msra.mxu0 %v12898
          %13010 = vmatprep.subr.mxu0 0.0
          %13011 = vmatpush1.msra.mxu0 %v12899
          %13012 = vmatprep.subr.mxu0 0.0
          %13013 = vmatpush1.msra.mxu0 %v12900
          %13014 = vmatprep.subr.mxu0 0.0
          %13015 = vmatpush1.msra.mxu0 %v12901
          %13016 = vmatprep.subr.mxu0 0.0
          %13017 = vmatpush1.msra.mxu0 %v12902
          %13018 = vmatprep.subr.mxu0 0.0
          %13019 = vmatpush1.msra.mxu0 %v12903
          %13020 = vmatprep.subr.mxu0 0.0
          %13021 = vmatpush1.msra.mxu0 %v12904
          %13022 = vmatprep.subr.mxu0 0.0
          %13023 = vmatpush1.msra.mxu0 %v12905
          %13024 = vmatprep.subr.mxu0 0.0
          %13025 = vmatpush1.msra.mxu0 %v12906
          %13026 = vmatprep.subr.mxu0 0.0
          %13027 = vmatpush1.msra.mxu0 %v12907
          %13028 = vmatprep.subr.mxu0 0.0
          %13029 = vmatpush1.msra.mxu0 %v12908
          %13030 = vmatprep.subr.mxu0 0.0
          %13031 = vmatpush1.msra.mxu0 %v12909
          %13032 = vmatprep.subr.mxu0 0.0
          %13033 = vmatpush1.msra.mxu0 %v12910
          %13034 = vmatprep.subr.mxu0 0.0
          %13035 = vmatpush1.msra.mxu0 %v12911
          %13036 = vmatprep.subr.mxu0 0.0
          %13037 = vmatpush1.msra.mxu0 %v12912
          %13038 = vmatprep.subr.mxu0 0.0
          %13039 = vmatpush1.msra.mxu0 %v12913
          %13040 = vmatprep.subr.mxu0 0.0
          %13041 = vmatpush1.msra.mxu0 %v12914
          %13042 = vmatprep.subr.mxu0 0.0
          %13043 = vmatpush1.msra.mxu0 %v12915
          %13044 = vmatprep.subr.mxu0 0.0
          %13045 = vmatpush1.msra.mxu0 %v12916
          %13046 = vmatprep.subr.mxu0 0.0
          %13047 = vmatpush1.msra.mxu0 %v12917
          %13048 = vmatprep.subr.mxu0 0.0
          %13049 = vmatpush1.msra.mxu0 %v12918
          %13050 = vmatprep.subr.mxu0 0.0
          %13051 = vmatpush1.msra.mxu0 %v12919
          %13052 = vmatprep.subr.mxu0 0.0
          %13053 = vmatpush1.msra.mxu0 %v12920
          %13054 = vmatprep.subr.mxu0 0.0
          %13055 = vmatpush1.msra.mxu0 %v12921
          %13056 = vmatprep.subr.mxu0 0.0
          %13057 = vmatpush1.msra.mxu0 %v12922
          %13058 = vmatprep.subr.mxu0 0.0
          %13059 = vmatpush1.msra.mxu0 %v12923
          %13060 = vmatprep.subr.mxu0 0.0
          %13061 = vmatpush1.msra.mxu0 %v12924
          %13062 = vmatprep.subr.mxu0 0.0
          %13063 = vmatpush1.msra.mxu0 %v12925
          %13064 = vmatprep.subr.mxu0 0.0
          %13065 = vmatpush1.msra.mxu0 %v12926
          %13066 = vmatprep.subr.mxu0 0.0
          %13067 = vmatpush1.msra.mxu0 %v12927
          %13068 = vmatprep.subr.mxu0 0.0
          %13069 = vmatpush1.msra.mxu0 %v12928
          %13070 = vmatprep.mubr.f32.mxu0 %v12864
          %13071 = vmatmul.mubr.f32.gmra.mrb[0].mxu0 %v12863
          %v13072 = vpop.f32.mrb[0].mxu0
          %v13073 = vadd.f32 %v13003, %v13072
          %v13074 = vpop.f32.mrb[0].mxu0
          %13075 = vdwg.mxu0
          %13076 = vst [vmem:[%s405] sm:$0x3] %v13073
        $region60: #{model_forward.1} parent=47 // pred_fallthru
          _
        %p13077 = scmp.lt.s32.totalorder %s25, 2
        %s13078 = scalar_select %p13077, %s25, 2
        %s13079 = smul.addr %s13078, 2
        %s13080 = scalar_lea.vmem %s7, %s13079
        // Predicated region
        $region61: #{model_forward.1} parent=47 // pred_check
          %p13081 = pneg %p230
        $region62: #{model_forward.1} parent=47 // pred_check_branch
          %13083 = sbr.rel (%p13081) target = $region64
        $region63: #{model_forward.1} parent=47 // pred_region
          _
        $region64: #{model_forward.1} parent=47 // pred_fallthru
          _
      $region48: #{model_forward.1} parent=5 // pred_fallthru
        _
      %p13084 = scmp.le.s32.totalorder 2, %s16
      // Predicated region
      $region65: #{model_forward.1} parent=5 // pred_check
        %p13085 = pneg %p13084
      $region66: #{model_forward.1} parent=5 // pred_check_branch
        %13087 = sbr.rel (%p13085) target = $region68
      $region67: #{model_forward.1} parent=5 // pred_region
        %s13088 = ssub.s32 %s16, 2
        // Predicated region
        $region69: #{model_forward.1} parent=67 // pred_check
          %p13089 = pneg %p236
        $region70: #{model_forward.1} parent=67 // pred_check_branch
          %13091 = sbr.rel (%p13089) target = $region72
        $region71: #{model_forward.1} parent=67 // pred_region
          %p13092 = scmp.lt.s32.totalorder %s27, 2
          %s13093 = scalar_select %p13092, %s27, 2
          %s13094 = smul.addr %s13093, 2
          %s13095 = scalar_lea.vmem %s7, %s13094
        $region72: #{model_forward.1} parent=67 // pred_fallthru
          _
      $region68: #{model_forward.1} parent=5 // pred_fallthru
        _
    $region6: #{model_forward.1} parent=1 // loop_footer
      %s20 = sadd.s32 1, %s16
    $region7: #{model_forward.1} parent=1 // loop_footer_branch
      %15 = sbr.rel target = $region3
    $region8: #{model_forward.1} parent=1 // loop_exit
      _
    %13096 = vsyncpa [#allocation4], 1
    %s13097 = scalar_lea.sflag [#allocation4], 1
    %13098 = vsyncpa %s13097, 1

</llo_original>
